<compile_context>
chip_gen: v5e
topology: v5e:2x2
jax: 0.10.0
libtpu: 0.0.40
codegen_flags: <defaults>
</compile_context>

<pallas_src>
import math

import jax
import jax.numpy as jnp
from jax.experimental import pallas as pl
from jax.experimental.pallas import tpu as pltpu

# ---- problem sizes (small, consistent with the module) ----
B = 2          # batch
S = 8          # source sequence length
T = 8          # target sequence length
D = 32         # d_model (layer.size)
N_LAYERS = 2   # N identical layers for encoder and decoder
N_HEADS = 4
DK = D // N_HEADS
D_FF = 64
EPS = 1e-6     # LayerNorm eps from the module


# ======================================================================================
# Pallas kernel: full encoder-decoder forward in ONE grid-less invocation.
# ======================================================================================
def encdec_kernel(src_ref, tgt_ref, smask_ref, tmask_ref, *prefs):
    (ea1, eb1, ewqkv, ebqkv, ewo, ebo, ea2, eb2, ew1, eb1f, ew2, eb2f, eaf, ebf,
     da1, db1, dwqkv, dbqkv, dwo1, dbo1, da2, db2, dwq, dbq, dwkv, dbkv, dwo2, dbo2,
     da3, db3, dw1, db1f, dw2, db2f, daf, dbf) = prefs[:-1]
    o_ref = prefs[-1]

    def layer_norm(x, a, b):
        # matches the module's LayerNorm: mean, unbiased std, a*(x-mean)/(std+eps)+b
        mean = jnp.mean(x, axis=-1, keepdims=True)
        var = jnp.sum((x - mean) ** 2, axis=-1, keepdims=True) / (x.shape[-1] - 1)
        return a * (x - mean) / (jnp.sqrt(var) + EPS) + b

    def project(y, w_h, b_h):
        # y: (Tq, D); w_h: (H, D, E); b_h: (H, 1, E)  ->  (H, Tq, E)
        y_b = jnp.broadcast_to(y[None], (N_HEADS,) + y.shape)
        out = jax.lax.dot_general(y_b, w_h, (((2,), (1,)), ((0,), (0,))),
                                  preferred_element_type=jnp.float32)
        return out + b_h

    def attend(qh, kh, vh, bias):
        # qh: (H, Tq, DK); kh, vh: (H, Tk, DK); bias: (1 or Tq, Tk) additive (-1e9 masked)
        s = jax.lax.dot_general(qh, kh, (((2,), (2,)), ((0,), (0,))),
                                preferred_element_type=jnp.float32)        # (H, Tq, Tk)
        s = s + bias                                                       # broadcast over heads
        s = s - jnp.max(s, axis=-1, keepdims=True)                         # stable softmax
        p = jnp.exp(s)
        p = p * pl.reciprocal(jnp.sum(p, axis=-1, keepdims=True), approx=True)
        return jax.lax.dot_general(p, vh, (((2,), (1,)), ((0,), (0,))),
                                   preferred_element_type=jnp.float32)     # (H, Tq, DK)

    def merge(ctx_h, wo_h, bo):
        # ctx_h: (H, Tq, DK); wo_h: (H, DK, D) -> sum over heads == concat(heads) @ WO
        out = jax.lax.dot_general(ctx_h, wo_h, (((2,), (1,)), ((0,), (0,))),
                                  preferred_element_type=jnp.float32)      # (H, Tq, D)
        return jnp.sum(out, axis=0) + bo

    def ffn(x, w1, b1, w2, b2):
        h = jnp.maximum(jnp.dot(x, w1, preferred_element_type=jnp.float32) + b1, 0.0)
        return jnp.dot(h, w2, preferred_element_type=jnp.float32) + b2

    outs = []
    # B = 2: unrolled straight-line code inside a single invocation (no grid overhead,
    # weights are loaded into VMEM exactly once for both batch elements).
    for b in range(B):
        # mask biases hoisted out of all layer/head loops (computed once per batch element)
        sbias = jnp.where(smask_ref[b] < 0.5, -1e9, 0.0)     # (1, S)
        tbias = jnp.where(tmask_ref[b] < 0.5, -1e9, 0.0)     # (T, T)

        # ------------------------------ encoder ------------------------------
        x = src_ref[b]                                        # (S, D)
        for l in range(N_LAYERS):
            y = layer_norm(x, ea1[l], eb1[l])
            qkv = project(y, ewqkv[l], ebqkv[l])              # (H, S, 3*DK), scale folded in Q
            ctx = attend(qkv[:, :, :DK], qkv[:, :, DK:2 * DK], qkv[:, :, 2 * DK:], sbias)
            x = x + merge(ctx, ewo[l], ebo[l])                # dropout == identity
            y = layer_norm(x, ea2[l], eb2[l])
            x = x + ffn(y, ew1[l], eb1f[l], ew2[l], eb2f[l])
        mem = layer_norm(x, eaf[...], ebf[...])               # (S, D) encoder memory

        # ------------------------------ decoder ------------------------------
        y = tgt_ref[b]                                        # (T, D)
        for l in range(N_LAYERS):
            # masked self-attention
            z = layer_norm(y, da1[l], db1[l])
            qkv = project(z, dwqkv[l], dbqkv[l])              # (H, T, 3*DK)
            ctx = attend(qkv[:, :, :DK], qkv[:, :, DK:2 * DK], qkv[:, :, 2 * DK:], tbias)
            y = y + merge(ctx, dwo1[l], dbo1[l])
            # cross-attention over encoder memory
            z = layer_norm(y, da2[l], db2[l])
            qh = project(z, dwq[l], dbq[l])                   # (H, T, DK)
            kv = project(mem, dwkv[l], dbkv[l])               # (H, S, 2*DK)
            ctx = attend(qh, kv[:, :, :DK], kv[:, :, DK:], sbias)
            y = y + merge(ctx, dwo2[l], dbo2[l])
            # feed-forward
            z = layer_norm(y, da3[l], db3[l])
            y = y + ffn(z, dw1[l], db1f[l], dw2[l], db2f[l])
        outs.append(layer_norm(y, daf[...], dbf[...]))        # (T, D)

    o_ref[...] = jnp.stack(outs, axis=0)                      # single (B, T, D) store


def encoder_decoder_forward(src, tgt, src_mask, tgt_mask, packed_params):
    # Grid-less pallas_call: every operand is a whole-array VMEM block, single invocation.
    # (Per feedback: drop grid=(B,) entirely; no vmem_limit / Buffered tuning needed.)
    return pl.pallas_call(
        encdec_kernel,
        out_shape=jax.ShapeDtypeStruct((B, T, D), jnp.float32),
    )(src, tgt, src_mask, tgt_mask, *packed_params)


# ======================================================================================
# Parameter construction (raw, PyTorch-layout) + host-side packing into head-major,
# scale-folded, QKV-fused tensors consumed by the kernel.
# ======================================================================================
def _dense(key, d_in, d_out):
    kw, kb = jax.random.split(key)
    return (0.05 * jax.random.normal(kw, (d_in, d_out), jnp.float32),
            0.05 * jax.random.normal(kb, (d_out,), jnp.float32))


def _ln(key):
    ka, kb = jax.random.split(key)
    return (1.0 + 0.1 * jax.random.normal(ka, (D,), jnp.float32),
            0.05 * jax.random.normal(kb, (D,), jnp.float32))


def _attn(key):
    kq, kk, kv, ko = jax.random.split(key, 4)
    return {"q": _dense(kq, D, D), "k": _dense(kk, D, D),
            "v": _dense(kv, D, D), "o": _dense(ko, D, D)}


def _ffn(key):
    k1, k2 = jax.random.split(key)
    return (_dense(k1, D, D_FF), _dense(k2, D_FF, D))


def _enc_layer(key):
    k1, k2, k3, k4 = jax.random.split(key, 4)
    return {"ln1": _ln(k1), "attn": _attn(k2), "ln2": _ln(k3), "ffn": _ffn(k4)}


def _dec_layer(key):
    k1, k2, k3, k4, k5, k6 = jax.random.split(key, 6)
    return {"ln1": _ln(k1), "self": _attn(k2), "ln2": _ln(k3),
            "cross": _attn(k4), "ln3": _ln(k5), "ffn": _ffn(k6)}


def pack_params(enc_layers, enc_ln, dec_layers, dec_ln):
    scale = 1.0 / math.sqrt(DK)

    def heads_in(w):        # (D, D) -> (H, D, DK): head h uses columns h*DK:(h+1)*DK
        return jnp.transpose(w.reshape(D, N_HEADS, -1), (1, 0, 2))

    def heads_bias(bias):   # (E,) -> (H, 1, E//H)
        return bias.reshape(N_HEADS, 1, -1)

    def heads_out(w):       # (D, D) -> (H, DK, D): head h uses rows h*DK:(h+1)*DK
        return w.reshape(N_HEADS, DK, D)

    def fused_qkv(attn):    # fuse Q/K/V per head; fold 1/sqrt(DK) into Q
        (wq, bq), (wk, bk), (wv, bv) = attn["q"], attn["k"], attn["v"]
        w = jnp.concatenate([heads_in(wq) * scale, heads_in(wk), heads_in(wv)], axis=-1)
        b = jnp.concatenate([heads_bias(bq) * scale, heads_bias(bk), heads_bias(bv)], axis=-1)
        return w, b

    def fused_kv(attn):
        (wk, bk), (wv, bv) = attn["k"], attn["v"]
        return (jnp.concatenate([heads_in(wk), heads_in(wv)], axis=-1),
                jnp.concatenate([heads_bias(bk), heads_bias(bv)], axis=-1))

    def S_(layers, fn):
        return jnp.stack([fn(lp) for lp in layers], axis=0)

    EL, DL = enc_layers, dec_layers
    return [
        # -------- encoder layers (14) --------
        S_(EL, lambda lp: lp["ln1"][0][None, :]), S_(EL, lambda lp: lp["ln1"][1][None, :]),
        S_(EL, lambda lp: fused_qkv(lp["attn"])[0]), S_(EL, lambda lp: fused_qkv(lp["attn"])[1]),
        S_(EL, lambda lp: heads_out(lp["attn"]["o"][0])), S_(EL, lambda lp: lp["attn"]["o"][1][None, :]),
        S_(EL, lambda lp: lp["ln2"][0][None, :]), S_(EL, lambda lp: lp["ln2"][1][None, :]),
        S_(EL, lambda lp: lp["ffn"][0][0]), S_(EL, lambda lp: lp["ffn"][0][1][None, :]),
        S_(EL, lambda lp: lp["ffn"][1][0]), S_(EL, lambda lp: lp["ffn"][1][1][None, :]),
        enc_ln[0][None, :], enc_ln[1][None, :],
        # -------- decoder layers (22) --------
        S_(DL, lambda lp: lp["ln1"][0][None, :]), S_(DL, lambda lp: lp["ln1"][1][None, :]),
        S_(DL, lambda lp: fused_qkv(lp["self"])[0]), S_(DL, lambda lp: fused_qkv(lp["self"])[1]),
        S_(DL, lambda lp: heads_out(lp["self"]["o"][0])), S_(DL, lambda lp: lp["self"]["o"][1][None, :]),
        S_(DL, lambda lp: lp["ln2"][0][None, :]), S_(DL, lambda lp: lp["ln2"][1][None, :]),
        S_(DL, lambda lp: heads_in(lp["cross"]["q"][0]) * scale),
        S_(DL, lambda lp: heads_bias(lp["cross"]["q"][1]) * scale),
        S_(DL, lambda lp: fused_kv(lp["cross"])[0]), S_(DL, lambda lp: fused_kv(lp["cross"])[1]),
        S_(DL, lambda lp: heads_out(lp["cross"]["o"][0])), S_(DL, lambda lp: lp["cross"]["o"][1][None, :]),
        S_(DL, lambda lp: lp["ln3"][0][None, :]), S_(DL, lambda lp: lp["ln3"][1][None, :]),
        S_(DL, lambda lp: lp["ffn"][0][0]), S_(DL, lambda lp: lp["ffn"][0][1][None, :]),
        S_(DL, lambda lp: lp["ffn"][1][0]), S_(DL, lambda lp: lp["ffn"][1][1][None, :]),
        dec_ln[0][None, :], dec_ln[1][None, :],
    ]


# ======================================================================================
# Pure-JAX reference, written to mirror the PyTorch module structure exactly
# (unfused per-head slices, masked_fill(-1e9), softmax, unbiased-std LayerNorm).
# ======================================================================================
def _ln_ref(x, p):
    a, b = p
    mean = x.mean(-1, keepdims=True)
    var = ((x - mean) ** 2).sum(-1, keepdims=True) / (x.shape[-1] - 1)
    return a * (x - mean) / (jnp.sqrt(var) + EPS) + b


def _mha_ref(q_in, kv_in, mask, p):
    (wq, bq), (wk, bk), (wv, bv), (wo, bo) = p["q"], p["k"], p["v"], p["o"]
    q = q_in @ wq + bq
    k = kv_in @ wk + bk
    v = kv_in @ wv + bv
    heads = []
    for h in range(N_HEADS):
        sl = slice(h * DK, (h + 1) * DK)
        s = (q[:, sl] @ k[:, sl].T) / math.sqrt(DK)
        s = jnp.where(mask == 0, -1e9, s)
        heads.append(jax.nn.softmax(s, axis=-1) @ v[:, sl])
    return jnp.concatenate(heads, axis=-1) @ wo + bo


def encdec_ref(src, tgt, src_mask, tgt_mask, enc_layers, enc_ln, dec_layers, dec_ln):
    outs = []
    for b in range(B):
        x, sm = src[b], src_mask[b]                       # (S, D), (1, S)
        for lp in enc_layers:
            y = _ln_ref(x, lp["ln1"])
            x = x + _mha_ref(y, y, sm, lp["attn"])
            y = _ln_ref(x, lp["ln2"])
            (w1, b1), (w2, b2) = lp["ffn"]
            x = x + (jnp.maximum(y @ w1 + b1, 0.0) @ w2 + b2)
        mem = _ln_ref(x, enc_ln)

        y, tm = tgt[b], tgt_mask[b]                       # (T, D), (T, T)
        for lp in dec_layers:
            z = _ln_ref(y, lp["ln1"])
            y = y + _mha_ref(z, z, tm, lp["self"])
            z = _ln_ref(y, lp["ln2"])
            y = y + _mha_ref(z, mem, sm, lp["cross"])
            z = _ln_ref(y, lp["ln3"])
            (w1, b1), (w2, b2) = lp["ffn"]
            y = y + (jnp.maximum(z @ w1 + b1, 0.0) @ w2 + b2)
        outs.append(_ln_ref(y, dec_ln))
    return jnp.stack(outs, axis=0)


# ======================================================================================
if __name__ == "__main__":
    root = jax.random.PRNGKey(0)
    k_enc, k_dec, k_eln, k_dln, k_src, k_tgt = jax.random.split(root, 6)

    enc_layers = [_enc_layer(k) for k in jax.random.split(k_enc, N_LAYERS)]
    dec_layers = [_dec_layer(k) for k in jax.random.split(k_dec, N_LAYERS)]
    enc_ln = _ln(k_eln)
    dec_ln = _ln(k_dln)

    src = jax.random.normal(k_src, (B, S, D), dtype=jnp.float32)
    tgt = jax.random.normal(k_tgt, (B, T, D), dtype=jnp.float32)

    # src_mask: (B, 1, S) key-padding mask; tgt_mask: (B, T, T) = padding & subsequent mask
    src_pad = jnp.array([[1] * S, [1] * (S - 2) + [0] * 2], dtype=jnp.float32)   # (B, S)
    src_mask = src_pad[:, None, :]
    causal = jnp.tril(jnp.ones((T, T), jnp.float32))
    tgt_pad = jnp.array([[1] * T, [1] * (T - 3) + [0] * 3], dtype=jnp.float32)   # (B, T)
    tgt_mask = causal[None, :, :] * tgt_pad[:, None, :]                          # (B, T, T)

    packed = pack_params(enc_layers, enc_ln, dec_layers, dec_ln)

    out = encoder_decoder_forward(src, tgt, src_mask, tgt_mask, packed)
    out = jax.block_until_ready(out)

    ref = encdec_ref(src, tgt, src_mask, tgt_mask, enc_layers, enc_ln, dec_layers, dec_ln)
    assert out.shape == (B, T, D)
    max_err = float(jnp.max(jnp.abs(out - ref)))
    # tolerance loosened slightly (2e-3) to accommodate pl.reciprocal(approx=True) (~2^-12 rel)
    assert jnp.allclose(out, ref, atol=2e-3, rtol=2e-3), f"mismatch vs reference, max|err|={max_err}"

    print("KERNEL_OK")
</pallas_src>

<mosaic_0001>
module attributes {stable_mosaic.version = 11 : i64} {
  func.func @encdec_kernel(%arg0: memref<2x8x32xf32, #tpu.memory_space<vmem>>, %arg1: memref<2x8x32xf32, #tpu.memory_space<vmem>>, %arg2: memref<2x1x8xf32, #tpu.memory_space<vmem>>, %arg3: memref<2x8x8xf32, #tpu.memory_space<vmem>>, %arg4: memref<2x1x32xf32, #tpu.memory_space<vmem>>, %arg5: memref<2x1x32xf32, #tpu.memory_space<vmem>>, %arg6: memref<2x4x32x24xf32, #tpu.memory_space<vmem>>, %arg7: memref<2x4x1x24xf32, #tpu.memory_space<vmem>>, %arg8: memref<2x4x8x32xf32, #tpu.memory_space<vmem>>, %arg9: memref<2x1x32xf32, #tpu.memory_space<vmem>>, %arg10: memref<2x1x32xf32, #tpu.memory_space<vmem>>, %arg11: memref<2x1x32xf32, #tpu.memory_space<vmem>>, %arg12: memref<2x32x64xf32, #tpu.memory_space<vmem>>, %arg13: memref<2x1x64xf32, #tpu.memory_space<vmem>>, %arg14: memref<2x64x32xf32, #tpu.memory_space<vmem>>, %arg15: memref<2x1x32xf32, #tpu.memory_space<vmem>>, %arg16: memref<1x32xf32, #tpu.memory_space<vmem>>, %arg17: memref<1x32xf32, #tpu.memory_space<vmem>>, %arg18: memref<2x1x32xf32, #tpu.memory_space<vmem>>, %arg19: memref<2x1x32xf32, #tpu.memory_space<vmem>>, %arg20: memref<2x4x32x24xf32, #tpu.memory_space<vmem>>, %arg21: memref<2x4x1x24xf32, #tpu.memory_space<vmem>>, %arg22: memref<2x4x8x32xf32, #tpu.memory_space<vmem>>, %arg23: memref<2x1x32xf32, #tpu.memory_space<vmem>>, %arg24: memref<2x1x32xf32, #tpu.memory_space<vmem>>, %arg25: memref<2x1x32xf32, #tpu.memory_space<vmem>>, %arg26: memref<2x4x32x8xf32, #tpu.memory_space<vmem>>, %arg27: memref<2x4x1x8xf32, #tpu.memory_space<vmem>>, %arg28: memref<2x4x32x16xf32, #tpu.memory_space<vmem>>, %arg29: memref<2x4x1x16xf32, #tpu.memory_space<vmem>>, %arg30: memref<2x4x8x32xf32, #tpu.memory_space<vmem>>, %arg31: memref<2x1x32xf32, #tpu.memory_space<vmem>>, %arg32: memref<2x1x32xf32, #tpu.memory_space<vmem>>, %arg33: memref<2x1x32xf32, #tpu.memory_space<vmem>>, %arg34: memref<2x32x64xf32, #tpu.memory_space<vmem>>, %arg35: memref<2x1x64xf32, #tpu.memory_space<vmem>>, %arg36: memref<2x64x32xf32, #tpu.memory_space<vmem>>, %arg37: memref<2x1x32xf32, #tpu.memory_space<vmem>>, %arg38: memref<1x32xf32, #tpu.memory_space<vmem>>, %arg39: memref<1x32xf32, #tpu.memory_space<vmem>>, %arg40: memref<2x8x32xf32, #tpu.memory_space<vmem>>) attributes {dimension_semantics = [], scalar_prefetch = 0 : i64, scratch_operands = 0 : i64, tpu.core_type = #tpu.core_type<tc>} {
    %c0 = arith.constant 0 : index
    %c0_0 = arith.constant 0 : index
    %c0_1 = arith.constant 0 : index
    %0 = vector.load %arg2[%c0, %c0_0, %c0_1] : memref<2x1x8xf32, #tpu.memory_space<vmem>>, vector<1x1x8xf32>
    %1 = vector.shape_cast %0 : vector<1x1x8xf32> to vector<1x8xf32>
    %cst = arith.constant 5.000000e-01 : f32
    %2 = vector.broadcast %cst : f32 to vector<1x8xf32>
    %3 = arith.cmpf olt, %1, %2 : vector<1x8xf32>
    %cst_2 = arith.constant -1.000000e+09 : f32
    %cst_3 = arith.constant 0.000000e+00 : f32
    %4 = vector.broadcast %cst_2 : f32 to vector<1x8xf32>
    %5 = vector.broadcast %cst_3 : f32 to vector<1x8xf32>
    %6 = arith.select %3, %4, %5 : vector<1x8xi1>, vector<1x8xf32>
    %c0_4 = arith.constant 0 : index
    %c0_5 = arith.constant 0 : index
    %c0_6 = arith.constant 0 : index
    %7 = vector.load %arg3[%c0_4, %c0_5, %c0_6] : memref<2x8x8xf32, #tpu.memory_space<vmem>>, vector<1x8x8xf32>
    %8 = vector.shape_cast %7 : vector<1x8x8xf32> to vector<8x8xf32>
    %cst_7 = arith.constant 5.000000e-01 : f32
    %9 = vector.broadcast %cst_7 : f32 to vector<8x8xf32>
    %10 = arith.cmpf olt, %8, %9 : vector<8x8xf32>
    %cst_8 = arith.constant -1.000000e+09 : f32
    %cst_9 = arith.constant 0.000000e+00 : f32
    %11 = vector.broadcast %cst_8 : f32 to vector<8x8xf32>
    %12 = vector.broadcast %cst_9 : f32 to vector<8x8xf32>
    %13 = arith.select %10, %11, %12 : vector<8x8xi1>, vector<8x8xf32>
    %c0_10 = arith.constant 0 : index
    %c0_11 = arith.constant 0 : index
    %c0_12 = arith.constant 0 : index
    %14 = vector.load %arg0[%c0_10, %c0_11, %c0_12] : memref<2x8x32xf32, #tpu.memory_space<vmem>>, vector<1x8x32xf32>
    %15 = vector.shape_cast %14 : vector<1x8x32xf32> to vector<8x32xf32>
    %c0_13 = arith.constant 0 : index
    %c0_14 = arith.constant 0 : index
    %c0_15 = arith.constant 0 : index
    %16 = vector.load %arg4[%c0_13, %c0_14, %c0_15] : memref<2x1x32xf32, #tpu.memory_space<vmem>>, vector<1x1x32xf32>
    %17 = vector.shape_cast %16 : vector<1x1x32xf32> to vector<1x32xf32>
    %c0_16 = arith.constant 0 : index
    %c0_17 = arith.constant 0 : index
    %c0_18 = arith.constant 0 : index
    %18 = vector.load %arg5[%c0_16, %c0_17, %c0_18] : memref<2x1x32xf32, #tpu.memory_space<vmem>>, vector<1x1x32xf32>
    %19 = vector.shape_cast %18 : vector<1x1x32xf32> to vector<1x32xf32>
    %cst_19 = arith.constant dense<0.000000e+00> : vector<8xf32>
    %20 = vector.multi_reduction <add>, %15, %cst_19 [1] : vector<8x32xf32> to vector<8xf32>
    %21 = vector.shape_cast %20 : vector<8xf32> to vector<8x1xf32>
    %cst_20 = arith.constant 3.200000e+01 : f32
    %22 = vector.broadcast %cst_20 : f32 to vector<8x1xf32>
    %23 = arith.divf %21, %22 : vector<8x1xf32>
    %24 = vector.broadcast %23 : vector<8x1xf32> to vector<8x32xf32>
    %25 = arith.subf %15, %24 : vector<8x32xf32>
    %26 = arith.mulf %25, %25 : vector<8x32xf32>
    %cst_21 = arith.constant dense<0.000000e+00> : vector<8xf32>
    %27 = vector.multi_reduction <add>, %26, %cst_21 [1] : vector<8x32xf32> to vector<8xf32>
    %28 = vector.shape_cast %27 : vector<8xf32> to vector<8x1xf32>
    %cst_22 = arith.constant 3.100000e+01 : f32
    %29 = vector.broadcast %cst_22 : f32 to vector<8x1xf32>
    %30 = arith.divf %28, %29 : vector<8x1xf32>
    %31 = vector.broadcast %23 : vector<8x1xf32> to vector<8x32xf32>
    %32 = arith.subf %15, %31 : vector<8x32xf32>
    %33 = vector.broadcast %17 : vector<1x32xf32> to vector<8x32xf32>
    %34 = arith.mulf %33, %32 : vector<8x32xf32>
    %35 = math.sqrt %30 : vector<8x1xf32>
    %cst_23 = arith.constant 9.99999997E-7 : f32
    %36 = vector.broadcast %cst_23 : f32 to vector<8x1xf32>
    %37 = arith.addf %35, %36 : vector<8x1xf32>
    %38 = vector.broadcast %37 : vector<8x1xf32> to vector<8x32xf32>
    %39 = arith.divf %34, %38 : vector<8x32xf32>
    %40 = vector.broadcast %19 : vector<1x32xf32> to vector<8x32xf32>
    %41 = arith.addf %39, %40 : vector<8x32xf32>
    %c0_24 = arith.constant 0 : index
    %c0_25 = arith.constant 0 : index
    %c0_26 = arith.constant 0 : index
    %c0_27 = arith.constant 0 : index
    %42 = vector.load %arg6[%c0_24, %c0_25, %c0_26, %c0_27] : memref<2x4x32x24xf32, #tpu.memory_space<vmem>>, vector<1x4x32x24xf32>
    %43 = vector.shape_cast %42 : vector<1x4x32x24xf32> to vector<4x32x24xf32>
    %c0_28 = arith.constant 0 : index
    %c0_29 = arith.constant 0 : index
    %c0_30 = arith.constant 0 : index
    %c0_31 = arith.constant 0 : index
    %44 = vector.load %arg7[%c0_28, %c0_29, %c0_30, %c0_31] : memref<2x4x1x24xf32, #tpu.memory_space<vmem>>, vector<1x4x1x24xf32>
    %45 = vector.shape_cast %44 : vector<1x4x1x24xf32> to vector<4x1x24xf32>
    %46 = vector.shape_cast %41 : vector<8x32xf32> to vector<1x8x32xf32>
    %47 = vector.shape_cast %46 : vector<1x8x32xf32> to vector<1x8x32xf32>
    %48 = vector.broadcast %47 : vector<1x8x32xf32> to vector<4x8x32xf32>
    %cst_32 = arith.constant dense<0.000000e+00> : vector<4x8x24xf32>
    %49 = tpu.matmul %48, %43, %cst_32 {dimension_numbers = #tpu.dot_dimension_numbers<[2], [1], [1], [2], [0, 0, 0, 1, 1, 2], [0], [0]>} : vector<4x8x32xf32>, vector<4x32x24xf32>, vector<4x8x24xf32> -> vector<4x8x24xf32>
    %50 = vector.broadcast %45 : vector<4x1x24xf32> to vector<4x8x24xf32>
    %51 = arith.addf %49, %50 : vector<4x8x24xf32>
    %52 = vector.extract_strided_slice %51 {offsets = [0, 0, 0], sizes = [4, 8, 8], strides = [1, 1, 1]} : vector<4x8x24xf32> to vector<4x8x8xf32>
    %53 = vector.extract_strided_slice %51 {offsets = [0, 0, 8], sizes = [4, 8, 8], strides = [1, 1, 1]} : vector<4x8x24xf32> to vector<4x8x8xf32>
    %54 = vector.extract_strided_slice %51 {offsets = [0, 0, 16], sizes = [4, 8, 8], strides = [1, 1, 1]} : vector<4x8x24xf32> to vector<4x8x8xf32>
    %cst_33 = arith.constant dense<0.000000e+00> : vector<4x8x8xf32>
    %55 = tpu.matmul %52, %53, %cst_33 {dimension_numbers = #tpu.dot_dimension_numbers<[2], [2], [1], [1], [0, 0, 0, 1, 1, 1], [0], [0]>} : vector<4x8x8xf32>, vector<4x8x8xf32>, vector<4x8x8xf32> -> vector<4x8x8xf32>
    %56 = vector.shape_cast %6 : vector<1x8xf32> to vector<1x1x8xf32>
    %57 = vector.broadcast %56 : vector<1x1x8xf32> to vector<4x8x8xf32>
    %58 = arith.addf %55, %57 : vector<4x8x8xf32>
    %cst_34 = arith.constant dense<0xFF800000> : vector<4x8xf32>
    %59 = vector.multi_reduction <maximumf>, %58, %cst_34 [2] : vector<4x8x8xf32> to vector<4x8xf32>
    %60 = vector.shape_cast %59 : vector<4x8xf32> to vector<4x8x1xf32>
    %61 = vector.broadcast %60 : vector<4x8x1xf32> to vector<4x8x8xf32>
    %62 = arith.subf %58, %61 : vector<4x8x8xf32>
    %63 = math.exp %62 : vector<4x8x8xf32>
    %cst_35 = arith.constant dense<0.000000e+00> : vector<4x8xf32>
    %64 = vector.multi_reduction <add>, %63, %cst_35 [2] : vector<4x8x8xf32> to vector<4x8xf32>
    %65 = vector.shape_cast %64 : vector<4x8xf32> to vector<4x8x1xf32>
    %66 = tpu.reciprocal %65 {approx = true} : vector<4x8x1xf32> -> vector<4x8x1xf32>
    %67 = vector.broadcast %66 : vector<4x8x1xf32> to vector<4x8x8xf32>
    %68 = arith.mulf %63, %67 : vector<4x8x8xf32>
    %cst_36 = arith.constant dense<0.000000e+00> : vector<4x8x8xf32>
    %69 = tpu.matmul %68, %54, %cst_36 {dimension_numbers = #tpu.dot_dimension_numbers<[2], [1], [1], [2], [0, 0, 0, 1, 1, 2], [0], [0]>} : vector<4x8x8xf32>, vector<4x8x8xf32>, vector<4x8x8xf32> -> vector<4x8x8xf32>
    %c0_37 = arith.constant 0 : index
    %c0_38 = arith.constant 0 : index
    %c0_39 = arith.constant 0 : index
    %c0_40 = arith.constant 0 : index
    %70 = vector.load %arg8[%c0_37, %c0_38, %c0_39, %c0_40] : memref<2x4x8x32xf32, #tpu.memory_space<vmem>>, vector<1x4x8x32xf32>
    %71 = vector.shape_cast %70 : vector<1x4x8x32xf32> to vector<4x8x32xf32>
    %c0_41 = arith.constant 0 : index
    %c0_42 = arith.constant 0 : index
    %c0_43 = arith.constant 0 : index
    %72 = vector.load %arg9[%c0_41, %c0_42, %c0_43] : memref<2x1x32xf32, #tpu.memory_space<vmem>>, vector<1x1x32xf32>
    %73 = vector.shape_cast %72 : vector<1x1x32xf32> to vector<1x32xf32>
    %cst_44 = arith.constant dense<0.000000e+00> : vector<4x8x32xf32>
    %74 = tpu.matmul %69, %71, %cst_44 {dimension_numbers = #tpu.dot_dimension_numbers<[2], [1], [1], [2], [0, 0, 0, 1, 1, 2], [0], [0]>} : vector<4x8x8xf32>, vector<4x8x32xf32>, vector<4x8x32xf32> -> vector<4x8x32xf32>
    %cst_45 = arith.constant dense<0.000000e+00> : vector<8x32xf32>
    %75 = vector.multi_reduction <add>, %74, %cst_45 [0] : vector<4x8x32xf32> to vector<8x32xf32>
    %76 = vector.broadcast %73 : vector<1x32xf32> to vector<8x32xf32>
    %77 = arith.addf %75, %76 : vector<8x32xf32>
    %78 = arith.addf %15, %77 : vector<8x32xf32>
    %c0_46 = arith.constant 0 : index
    %c0_47 = arith.constant 0 : index
    %c0_48 = arith.constant 0 : index
    %79 = vector.load %arg10[%c0_46, %c0_47, %c0_48] : memref<2x1x32xf32, #tpu.memory_space<vmem>>, vector<1x1x32xf32>
    %80 = vector.shape_cast %79 : vector<1x1x32xf32> to vector<1x32xf32>
    %c0_49 = arith.constant 0 : index
    %c0_50 = arith.constant 0 : index
    %c0_51 = arith.constant 0 : index
    %81 = vector.load %arg11[%c0_49, %c0_50, %c0_51] : memref<2x1x32xf32, #tpu.memory_space<vmem>>, vector<1x1x32xf32>
    %82 = vector.shape_cast %81 : vector<1x1x32xf32> to vector<1x32xf32>
    %cst_52 = arith.constant dense<0.000000e+00> : vector<8xf32>
    %83 = vector.multi_reduction <add>, %78, %cst_52 [1] : vector<8x32xf32> to vector<8xf32>
    %84 = vector.shape_cast %83 : vector<8xf32> to vector<8x1xf32>
    %cst_53 = arith.constant 3.200000e+01 : f32
    %85 = vector.broadcast %cst_53 : f32 to vector<8x1xf32>
    %86 = arith.divf %84, %85 : vector<8x1xf32>
    %87 = vector.broadcast %86 : vector<8x1xf32> to vector<8x32xf32>
    %88 = arith.subf %78, %87 : vector<8x32xf32>
    %89 = arith.mulf %88, %88 : vector<8x32xf32>
    %cst_54 = arith.constant dense<0.000000e+00> : vector<8xf32>
    %90 = vector.multi_reduction <add>, %89, %cst_54 [1] : vector<8x32xf32> to vector<8xf32>
    %91 = vector.shape_cast %90 : vector<8xf32> to vector<8x1xf32>
    %cst_55 = arith.constant 3.100000e+01 : f32
    %92 = vector.broadcast %cst_55 : f32 to vector<8x1xf32>
    %93 = arith.divf %91, %92 : vector<8x1xf32>
    %94 = vector.broadcast %86 : vector<8x1xf32> to vector<8x32xf32>
    %95 = arith.subf %78, %94 : vector<8x32xf32>
    %96 = vector.broadcast %80 : vector<1x32xf32> to vector<8x32xf32>
    %97 = arith.mulf %96, %95 : vector<8x32xf32>
    %98 = math.sqrt %93 : vector<8x1xf32>
    %cst_56 = arith.constant 9.99999997E-7 : f32
    %99 = vector.broadcast %cst_56 : f32 to vector<8x1xf32>
    %100 = arith.addf %98, %99 : vector<8x1xf32>
    %101 = vector.broadcast %100 : vector<8x1xf32> to vector<8x32xf32>
    %102 = arith.divf %97, %101 : vector<8x32xf32>
    %103 = vector.broadcast %82 : vector<1x32xf32> to vector<8x32xf32>
    %104 = arith.addf %102, %103 : vector<8x32xf32>
    %c0_57 = arith.constant 0 : index
    %c0_58 = arith.constant 0 : index
    %c0_59 = arith.constant 0 : index
    %105 = vector.load %arg12[%c0_57, %c0_58, %c0_59] : memref<2x32x64xf32, #tpu.memory_space<vmem>>, vector<1x32x64xf32>
    %106 = vector.shape_cast %105 : vector<1x32x64xf32> to vector<32x64xf32>
    %c0_60 = arith.constant 0 : index
    %c0_61 = arith.constant 0 : index
    %c0_62 = arith.constant 0 : index
    %107 = vector.load %arg13[%c0_60, %c0_61, %c0_62] : memref<2x1x64xf32, #tpu.memory_space<vmem>>, vector<1x1x64xf32>
    %108 = vector.shape_cast %107 : vector<1x1x64xf32> to vector<1x64xf32>
    %c0_63 = arith.constant 0 : index
    %c0_64 = arith.constant 0 : index
    %c0_65 = arith.constant 0 : index
    %109 = vector.load %arg14[%c0_63, %c0_64, %c0_65] : memref<2x64x32xf32, #tpu.memory_space<vmem>>, vector<1x64x32xf32>
    %110 = vector.shape_cast %109 : vector<1x64x32xf32> to vector<64x32xf32>
    %c0_66 = arith.constant 0 : index
    %c0_67 = arith.constant 0 : index
    %c0_68 = arith.constant 0 : index
    %111 = vector.load %arg15[%c0_66, %c0_67, %c0_68] : memref<2x1x32xf32, #tpu.memory_space<vmem>>, vector<1x1x32xf32>
    %112 = vector.shape_cast %111 : vector<1x1x32xf32> to vector<1x32xf32>
    %cst_69 = arith.constant dense<0.000000e+00> : vector<8x64xf32>
    %113 = tpu.matmul %104, %106, %cst_69 {dimension_numbers = #tpu.dot_dimension_numbers<[1], [0], [0], [1], [0, 0, 1, 1], [], []>} : vector<8x32xf32>, vector<32x64xf32>, vector<8x64xf32> -> vector<8x64xf32>
    %114 = vector.broadcast %108 : vector<1x64xf32> to vector<8x64xf32>
    %115 = arith.addf %113, %114 : vector<8x64xf32>
    %cst_70 = arith.constant 0.000000e+00 : f32
    %116 = vector.broadcast %cst_70 : f32 to vector<8x64xf32>
    %117 = arith.maximumf %115, %116 : vector<8x64xf32>
    %cst_71 = arith.constant dense<0.000000e+00> : vector<8x32xf32>
    %118 = tpu.matmul %117, %110, %cst_71 {dimension_numbers = #tpu.dot_dimension_numbers<[1], [0], [0], [1], [0, 0, 1, 1], [], []>} : vector<8x64xf32>, vector<64x32xf32>, vector<8x32xf32> -> vector<8x32xf32>
    %119 = vector.broadcast %112 : vector<1x32xf32> to vector<8x32xf32>
    %120 = arith.addf %118, %119 : vector<8x32xf32>
    %121 = arith.addf %78, %120 : vector<8x32xf32>
    %c1 = arith.constant 1 : index
    %c0_72 = arith.constant 0 : index
    %c0_73 = arith.constant 0 : index
    %122 = vector.load %arg4[%c1, %c0_72, %c0_73] : memref<2x1x32xf32, #tpu.memory_space<vmem>>, vector<1x1x32xf32>
    %123 = vector.shape_cast %122 : vector<1x1x32xf32> to vector<1x32xf32>
    %c1_74 = arith.constant 1 : index
    %c0_75 = arith.constant 0 : index
    %c0_76 = arith.constant 0 : index
    %124 = vector.load %arg5[%c1_74, %c0_75, %c0_76] : memref<2x1x32xf32, #tpu.memory_space<vmem>>, vector<1x1x32xf32>
    %125 = vector.shape_cast %124 : vector<1x1x32xf32> to vector<1x32xf32>
    %cst_77 = arith.constant dense<0.000000e+00> : vector<8xf32>
    %126 = vector.multi_reduction <add>, %121, %cst_77 [1] : vector<8x32xf32> to vector<8xf32>
    %127 = vector.shape_cast %126 : vector<8xf32> to vector<8x1xf32>
    %cst_78 = arith.constant 3.200000e+01 : f32
    %128 = vector.broadcast %cst_78 : f32 to vector<8x1xf32>
    %129 = arith.divf %127, %128 : vector<8x1xf32>
    %130 = vector.broadcast %129 : vector<8x1xf32> to vector<8x32xf32>
    %131 = arith.subf %121, %130 : vector<8x32xf32>
    %132 = arith.mulf %131, %131 : vector<8x32xf32>
    %cst_79 = arith.constant dense<0.000000e+00> : vector<8xf32>
    %133 = vector.multi_reduction <add>, %132, %cst_79 [1] : vector<8x32xf32> to vector<8xf32>
    %134 = vector.shape_cast %133 : vector<8xf32> to vector<8x1xf32>
    %cst_80 = arith.constant 3.100000e+01 : f32
    %135 = vector.broadcast %cst_80 : f32 to vector<8x1xf32>
    %136 = arith.divf %134, %135 : vector<8x1xf32>
    %137 = vector.broadcast %129 : vector<8x1xf32> to vector<8x32xf32>
    %138 = arith.subf %121, %137 : vector<8x32xf32>
    %139 = vector.broadcast %123 : vector<1x32xf32> to vector<8x32xf32>
    %140 = arith.mulf %139, %138 : vector<8x32xf32>
    %141 = math.sqrt %136 : vector<8x1xf32>
    %cst_81 = arith.constant 9.99999997E-7 : f32
    %142 = vector.broadcast %cst_81 : f32 to vector<8x1xf32>
    %143 = arith.addf %141, %142 : vector<8x1xf32>
    %144 = vector.broadcast %143 : vector<8x1xf32> to vector<8x32xf32>
    %145 = arith.divf %140, %144 : vector<8x32xf32>
    %146 = vector.broadcast %125 : vector<1x32xf32> to vector<8x32xf32>
    %147 = arith.addf %145, %146 : vector<8x32xf32>
    %c1_82 = arith.constant 1 : index
    %c0_83 = arith.constant 0 : index
    %c0_84 = arith.constant 0 : index
    %c0_85 = arith.constant 0 : index
    %148 = vector.load %arg6[%c1_82, %c0_83, %c0_84, %c0_85] : memref<2x4x32x24xf32, #tpu.memory_space<vmem>>, vector<1x4x32x24xf32>
    %149 = vector.shape_cast %148 : vector<1x4x32x24xf32> to vector<4x32x24xf32>
    %c1_86 = arith.constant 1 : index
    %c0_87 = arith.constant 0 : index
    %c0_88 = arith.constant 0 : index
    %c0_89 = arith.constant 0 : index
    %150 = vector.load %arg7[%c1_86, %c0_87, %c0_88, %c0_89] : memref<2x4x1x24xf32, #tpu.memory_space<vmem>>, vector<1x4x1x24xf32>
    %151 = vector.shape_cast %150 : vector<1x4x1x24xf32> to vector<4x1x24xf32>
    %152 = vector.shape_cast %147 : vector<8x32xf32> to vector<1x8x32xf32>
    %153 = vector.shape_cast %152 : vector<1x8x32xf32> to vector<1x8x32xf32>
    %154 = vector.broadcast %153 : vector<1x8x32xf32> to vector<4x8x32xf32>
    %cst_90 = arith.constant dense<0.000000e+00> : vector<4x8x24xf32>
    %155 = tpu.matmul %154, %149, %cst_90 {dimension_numbers = #tpu.dot_dimension_numbers<[2], [1], [1], [2], [0, 0, 0, 1, 1, 2], [0], [0]>} : vector<4x8x32xf32>, vector<4x32x24xf32>, vector<4x8x24xf32> -> vector<4x8x24xf32>
    %156 = vector.broadcast %151 : vector<4x1x24xf32> to vector<4x8x24xf32>
    %157 = arith.addf %155, %156 : vector<4x8x24xf32>
    %158 = vector.extract_strided_slice %157 {offsets = [0, 0, 0], sizes = [4, 8, 8], strides = [1, 1, 1]} : vector<4x8x24xf32> to vector<4x8x8xf32>
    %159 = vector.extract_strided_slice %157 {offsets = [0, 0, 8], sizes = [4, 8, 8], strides = [1, 1, 1]} : vector<4x8x24xf32> to vector<4x8x8xf32>
    %160 = vector.extract_strided_slice %157 {offsets = [0, 0, 16], sizes = [4, 8, 8], strides = [1, 1, 1]} : vector<4x8x24xf32> to vector<4x8x8xf32>
    %cst_91 = arith.constant dense<0.000000e+00> : vector<4x8x8xf32>
    %161 = tpu.matmul %158, %159, %cst_91 {dimension_numbers = #tpu.dot_dimension_numbers<[2], [2], [1], [1], [0, 0, 0, 1, 1, 1], [0], [0]>} : vector<4x8x8xf32>, vector<4x8x8xf32>, vector<4x8x8xf32> -> vector<4x8x8xf32>
    %162 = vector.shape_cast %6 : vector<1x8xf32> to vector<1x1x8xf32>
    %163 = vector.broadcast %162 : vector<1x1x8xf32> to vector<4x8x8xf32>
    %164 = arith.addf %161, %163 : vector<4x8x8xf32>
    %cst_92 = arith.constant dense<0xFF800000> : vector<4x8xf32>
    %165 = vector.multi_reduction <maximumf>, %164, %cst_92 [2] : vector<4x8x8xf32> to vector<4x8xf32>
    %166 = vector.shape_cast %165 : vector<4x8xf32> to vector<4x8x1xf32>
    %167 = vector.broadcast %166 : vector<4x8x1xf32> to vector<4x8x8xf32>
    %168 = arith.subf %164, %167 : vector<4x8x8xf32>
    %169 = math.exp %168 : vector<4x8x8xf32>
    %cst_93 = arith.constant dense<0.000000e+00> : vector<4x8xf32>
    %170 = vector.multi_reduction <add>, %169, %cst_93 [2] : vector<4x8x8xf32> to vector<4x8xf32>
    %171 = vector.shape_cast %170 : vector<4x8xf32> to vector<4x8x1xf32>
    %172 = tpu.reciprocal %171 {approx = true} : vector<4x8x1xf32> -> vector<4x8x1xf32>
    %173 = vector.broadcast %172 : vector<4x8x1xf32> to vector<4x8x8xf32>
    %174 = arith.mulf %169, %173 : vector<4x8x8xf32>
    %cst_94 = arith.constant dense<0.000000e+00> : vector<4x8x8xf32>
    %175 = tpu.matmul %174, %160, %cst_94 {dimension_numbers = #tpu.dot_dimension_numbers<[2], [1], [1], [2], [0, 0, 0, 1, 1, 2], [0], [0]>} : vector<4x8x8xf32>, vector<4x8x8xf32>, vector<4x8x8xf32> -> vector<4x8x8xf32>
    %c1_95 = arith.constant 1 : index
    %c0_96 = arith.constant 0 : index
    %c0_97 = arith.constant 0 : index
    %c0_98 = arith.constant 0 : index
    %176 = vector.load %arg8[%c1_95, %c0_96, %c0_97, %c0_98] : memref<2x4x8x32xf32, #tpu.memory_space<vmem>>, vector<1x4x8x32xf32>
    %177 = vector.shape_cast %176 : vector<1x4x8x32xf32> to vector<4x8x32xf32>
    %c1_99 = arith.constant 1 : index
    %c0_100 = arith.constant 0 : index
    %c0_101 = arith.constant 0 : index
    %178 = vector.load %arg9[%c1_99, %c0_100, %c0_101] : memref<2x1x32xf32, #tpu.memory_space<vmem>>, vector<1x1x32xf32>
    %179 = vector.shape_cast %178 : vector<1x1x32xf32> to vector<1x32xf32>
    %cst_102 = arith.constant dense<0.000000e+00> : vector<4x8x32xf32>
    %180 = tpu.matmul %175, %177, %cst_102 {dimension_numbers = #tpu.dot_dimension_numbers<[2], [1], [1], [2], [0, 0, 0, 1, 1, 2], [0], [0]>} : vector<4x8x8xf32>, vector<4x8x32xf32>, vector<4x8x32xf32> -> vector<4x8x32xf32>
    %cst_103 = arith.constant dense<0.000000e+00> : vector<8x32xf32>
    %181 = vector.multi_reduction <add>, %180, %cst_103 [0] : vector<4x8x32xf32> to vector<8x32xf32>
    %182 = vector.broadcast %179 : vector<1x32xf32> to vector<8x32xf32>
    %183 = arith.addf %181, %182 : vector<8x32xf32>
    %184 = arith.addf %121, %183 : vector<8x32xf32>
    %c1_104 = arith.constant 1 : index
    %c0_105 = arith.constant 0 : index
    %c0_106 = arith.constant 0 : index
    %185 = vector.load %arg10[%c1_104, %c0_105, %c0_106] : memref<2x1x32xf32, #tpu.memory_space<vmem>>, vector<1x1x32xf32>
    %186 = vector.shape_cast %185 : vector<1x1x32xf32> to vector<1x32xf32>
    %c1_107 = arith.constant 1 : index
    %c0_108 = arith.constant 0 : index
    %c0_109 = arith.constant 0 : index
    %187 = vector.load %arg11[%c1_107, %c0_108, %c0_109] : memref<2x1x32xf32, #tpu.memory_space<vmem>>, vector<1x1x32xf32>
    %188 = vector.shape_cast %187 : vector<1x1x32xf32> to vector<1x32xf32>
    %cst_110 = arith.constant dense<0.000000e+00> : vector<8xf32>
    %189 = vector.multi_reduction <add>, %184, %cst_110 [1] : vector<8x32xf32> to vector<8xf32>
    %190 = vector.shape_cast %189 : vector<8xf32> to vector<8x1xf32>
    %cst_111 = arith.constant 3.200000e+01 : f32
    %191 = vector.broadcast %cst_111 : f32 to vector<8x1xf32>
    %192 = arith.divf %190, %191 : vector<8x1xf32>
    %193 = vector.broadcast %192 : vector<8x1xf32> to vector<8x32xf32>
    %194 = arith.subf %184, %193 : vector<8x32xf32>
    %195 = arith.mulf %194, %194 : vector<8x32xf32>
    %cst_112 = arith.constant dense<0.000000e+00> : vector<8xf32>
    %196 = vector.multi_reduction <add>, %195, %cst_112 [1] : vector<8x32xf32> to vector<8xf32>
    %197 = vector.shape_cast %196 : vector<8xf32> to vector<8x1xf32>
    %cst_113 = arith.constant 3.100000e+01 : f32
    %198 = vector.broadcast %cst_113 : f32 to vector<8x1xf32>
    %199 = arith.divf %197, %198 : vector<8x1xf32>
    %200 = vector.broadcast %192 : vector<8x1xf32> to vector<8x32xf32>
    %201 = arith.subf %184, %200 : vector<8x32xf32>
    %202 = vector.broadcast %186 : vector<1x32xf32> to vector<8x32xf32>
    %203 = arith.mulf %202, %201 : vector<8x32xf32>
    %204 = math.sqrt %199 : vector<8x1xf32>
    %cst_114 = arith.constant 9.99999997E-7 : f32
    %205 = vector.broadcast %cst_114 : f32 to vector<8x1xf32>
    %206 = arith.addf %204, %205 : vector<8x1xf32>
    %207 = vector.broadcast %206 : vector<8x1xf32> to vector<8x32xf32>
    %208 = arith.divf %203, %207 : vector<8x32xf32>
    %209 = vector.broadcast %188 : vector<1x32xf32> to vector<8x32xf32>
    %210 = arith.addf %208, %209 : vector<8x32xf32>
    %c1_115 = arith.constant 1 : index
    %c0_116 = arith.constant 0 : index
    %c0_117 = arith.constant 0 : index
    %211 = vector.load %arg12[%c1_115, %c0_116, %c0_117] : memref<2x32x64xf32, #tpu.memory_space<vmem>>, vector<1x32x64xf32>
    %212 = vector.shape_cast %211 : vector<1x32x64xf32> to vector<32x64xf32>
    %c1_118 = arith.constant 1 : index
    %c0_119 = arith.constant 0 : index
    %c0_120 = arith.constant 0 : index
    %213 = vector.load %arg13[%c1_118, %c0_119, %c0_120] : memref<2x1x64xf32, #tpu.memory_space<vmem>>, vector<1x1x64xf32>
    %214 = vector.shape_cast %213 : vector<1x1x64xf32> to vector<1x64xf32>
    %c1_121 = arith.constant 1 : index
    %c0_122 = arith.constant 0 : index
    %c0_123 = arith.constant 0 : index
    %215 = vector.load %arg14[%c1_121, %c0_122, %c0_123] : memref<2x64x32xf32, #tpu.memory_space<vmem>>, vector<1x64x32xf32>
    %216 = vector.shape_cast %215 : vector<1x64x32xf32> to vector<64x32xf32>
    %c1_124 = arith.constant 1 : index
    %c0_125 = arith.constant 0 : index
    %c0_126 = arith.constant 0 : index
    %217 = vector.load %arg15[%c1_124, %c0_125, %c0_126] : memref<2x1x32xf32, #tpu.memory_space<vmem>>, vector<1x1x32xf32>
    %218 = vector.shape_cast %217 : vector<1x1x32xf32> to vector<1x32xf32>
    %cst_127 = arith.constant dense<0.000000e+00> : vector<8x64xf32>
    %219 = tpu.matmul %210, %212, %cst_127 {dimension_numbers = #tpu.dot_dimension_numbers<[1], [0], [0], [1], [0, 0, 1, 1], [], []>} : vector<8x32xf32>, vector<32x64xf32>, vector<8x64xf32> -> vector<8x64xf32>
    %220 = vector.broadcast %214 : vector<1x64xf32> to vector<8x64xf32>
    %221 = arith.addf %219, %220 : vector<8x64xf32>
    %cst_128 = arith.constant 0.000000e+00 : f32
    %222 = vector.broadcast %cst_128 : f32 to vector<8x64xf32>
    %223 = arith.maximumf %221, %222 : vector<8x64xf32>
    %cst_129 = arith.constant dense<0.000000e+00> : vector<8x32xf32>
    %224 = tpu.matmul %223, %216, %cst_129 {dimension_numbers = #tpu.dot_dimension_numbers<[1], [0], [0], [1], [0, 0, 1, 1], [], []>} : vector<8x64xf32>, vector<64x32xf32>, vector<8x32xf32> -> vector<8x32xf32>
    %225 = vector.broadcast %218 : vector<1x32xf32> to vector<8x32xf32>
    %226 = arith.addf %224, %225 : vector<8x32xf32>
    %227 = arith.addf %184, %226 : vector<8x32xf32>
    %c0_130 = arith.constant 0 : index
    %c0_131 = arith.constant 0 : index
    %228 = vector.load %arg16[%c0_130, %c0_131] : memref<1x32xf32, #tpu.memory_space<vmem>>, vector<1x32xf32>
    %c0_132 = arith.constant 0 : index
    %c0_133 = arith.constant 0 : index
    %229 = vector.load %arg17[%c0_132, %c0_133] : memref<1x32xf32, #tpu.memory_space<vmem>>, vector<1x32xf32>
    %cst_134 = arith.constant dense<0.000000e+00> : vector<8xf32>
    %230 = vector.multi_reduction <add>, %227, %cst_134 [1] : vector<8x32xf32> to vector<8xf32>
    %231 = vector.shape_cast %230 : vector<8xf32> to vector<8x1xf32>
    %cst_135 = arith.constant 3.200000e+01 : f32
    %232 = vector.broadcast %cst_135 : f32 to vector<8x1xf32>
    %233 = arith.divf %231, %232 : vector<8x1xf32>
    %234 = vector.broadcast %233 : vector<8x1xf32> to vector<8x32xf32>
    %235 = arith.subf %227, %234 : vector<8x32xf32>
    %236 = arith.mulf %235, %235 : vector<8x32xf32>
    %cst_136 = arith.constant dense<0.000000e+00> : vector<8xf32>
    %237 = vector.multi_reduction <add>, %236, %cst_136 [1] : vector<8x32xf32> to vector<8xf32>
    %238 = vector.shape_cast %237 : vector<8xf32> to vector<8x1xf32>
    %cst_137 = arith.constant 3.100000e+01 : f32
    %239 = vector.broadcast %cst_137 : f32 to vector<8x1xf32>
    %240 = arith.divf %238, %239 : vector<8x1xf32>
    %241 = vector.broadcast %233 : vector<8x1xf32> to vector<8x32xf32>
    %242 = arith.subf %227, %241 : vector<8x32xf32>
    %243 = vector.broadcast %228 : vector<1x32xf32> to vector<8x32xf32>
    %244 = arith.mulf %243, %242 : vector<8x32xf32>
    %245 = math.sqrt %240 : vector<8x1xf32>
    %cst_138 = arith.constant 9.99999997E-7 : f32
    %246 = vector.broadcast %cst_138 : f32 to vector<8x1xf32>
    %247 = arith.addf %245, %246 : vector<8x1xf32>
    %248 = vector.broadcast %247 : vector<8x1xf32> to vector<8x32xf32>
    %249 = arith.divf %244, %248 : vector<8x32xf32>
    %250 = vector.broadcast %229 : vector<1x32xf32> to vector<8x32xf32>
    %251 = arith.addf %249, %250 : vector<8x32xf32>
    %c0_139 = arith.constant 0 : index
    %c0_140 = arith.constant 0 : index
    %c0_141 = arith.constant 0 : index
    %252 = vector.load %arg1[%c0_139, %c0_140, %c0_141] : memref<2x8x32xf32, #tpu.memory_space<vmem>>, vector<1x8x32xf32>
    %253 = vector.shape_cast %252 : vector<1x8x32xf32> to vector<8x32xf32>
    %c0_142 = arith.constant 0 : index
    %c0_143 = arith.constant 0 : index
    %c0_144 = arith.constant 0 : index
    %254 = vector.load %arg18[%c0_142, %c0_143, %c0_144] : memref<2x1x32xf32, #tpu.memory_space<vmem>>, vector<1x1x32xf32>
    %255 = vector.shape_cast %254 : vector<1x1x32xf32> to vector<1x32xf32>
    %c0_145 = arith.constant 0 : index
    %c0_146 = arith.constant 0 : index
    %c0_147 = arith.constant 0 : index
    %256 = vector.load %arg19[%c0_145, %c0_146, %c0_147] : memref<2x1x32xf32, #tpu.memory_space<vmem>>, vector<1x1x32xf32>
    %257 = vector.shape_cast %256 : vector<1x1x32xf32> to vector<1x32xf32>
    %cst_148 = arith.constant dense<0.000000e+00> : vector<8xf32>
    %258 = vector.multi_reduction <add>, %253, %cst_148 [1] : vector<8x32xf32> to vector<8xf32>
    %259 = vector.shape_cast %258 : vector<8xf32> to vector<8x1xf32>
    %cst_149 = arith.constant 3.200000e+01 : f32
    %260 = vector.broadcast %cst_149 : f32 to vector<8x1xf32>
    %261 = arith.divf %259, %260 : vector<8x1xf32>
    %262 = vector.broadcast %261 : vector<8x1xf32> to vector<8x32xf32>
    %263 = arith.subf %253, %262 : vector<8x32xf32>
    %264 = arith.mulf %263, %263 : vector<8x32xf32>
    %cst_150 = arith.constant dense<0.000000e+00> : vector<8xf32>
    %265 = vector.multi_reduction <add>, %264, %cst_150 [1] : vector<8x32xf32> to vector<8xf32>
    %266 = vector.shape_cast %265 : vector<8xf32> to vector<8x1xf32>
    %cst_151 = arith.constant 3.100000e+01 : f32
    %267 = vector.broadcast %cst_151 : f32 to vector<8x1xf32>
    %268 = arith.divf %266, %267 : vector<8x1xf32>
    %269 = vector.broadcast %261 : vector<8x1xf32> to vector<8x32xf32>
    %270 = arith.subf %253, %269 : vector<8x32xf32>
    %271 = vector.broadcast %255 : vector<1x32xf32> to vector<8x32xf32>
    %272 = arith.mulf %271, %270 : vector<8x32xf32>
    %273 = math.sqrt %268 : vector<8x1xf32>
    %cst_152 = arith.constant 9.99999997E-7 : f32
    %274 = vector.broadcast %cst_152 : f32 to vector<8x1xf32>
    %275 = arith.addf %273, %274 : vector<8x1xf32>
    %276 = vector.broadcast %275 : vector<8x1xf32> to vector<8x32xf32>
    %277 = arith.divf %272, %276 : vector<8x32xf32>
    %278 = vector.broadcast %257 : vector<1x32xf32> to vector<8x32xf32>
    %279 = arith.addf %277, %278 : vector<8x32xf32>
    %c0_153 = arith.constant 0 : index
    %c0_154 = arith.constant 0 : index
    %c0_155 = arith.constant 0 : index
    %c0_156 = arith.constant 0 : index
    %280 = vector.load %arg20[%c0_153, %c0_154, %c0_155, %c0_156] : memref<2x4x32x24xf32, #tpu.memory_space<vmem>>, vector<1x4x32x24xf32>
    %281 = vector.shape_cast %280 : vector<1x4x32x24xf32> to vector<4x32x24xf32>
    %c0_157 = arith.constant 0 : index
    %c0_158 = arith.constant 0 : index
    %c0_159 = arith.constant 0 : index
    %c0_160 = arith.constant 0 : index
    %282 = vector.load %arg21[%c0_157, %c0_158, %c0_159, %c0_160] : memref<2x4x1x24xf32, #tpu.memory_space<vmem>>, vector<1x4x1x24xf32>
    %283 = vector.shape_cast %282 : vector<1x4x1x24xf32> to vector<4x1x24xf32>
    %284 = vector.shape_cast %279 : vector<8x32xf32> to vector<1x8x32xf32>
    %285 = vector.shape_cast %284 : vector<1x8x32xf32> to vector<1x8x32xf32>
    %286 = vector.broadcast %285 : vector<1x8x32xf32> to vector<4x8x32xf32>
    %cst_161 = arith.constant dense<0.000000e+00> : vector<4x8x24xf32>
    %287 = tpu.matmul %286, %281, %cst_161 {dimension_numbers = #tpu.dot_dimension_numbers<[2], [1], [1], [2], [0, 0, 0, 1, 1, 2], [0], [0]>} : vector<4x8x32xf32>, vector<4x32x24xf32>, vector<4x8x24xf32> -> vector<4x8x24xf32>
    %288 = vector.broadcast %283 : vector<4x1x24xf32> to vector<4x8x24xf32>
    %289 = arith.addf %287, %288 : vector<4x8x24xf32>
    %290 = vector.extract_strided_slice %289 {offsets = [0, 0, 0], sizes = [4, 8, 8], strides = [1, 1, 1]} : vector<4x8x24xf32> to vector<4x8x8xf32>
    %291 = vector.extract_strided_slice %289 {offsets = [0, 0, 8], sizes = [4, 8, 8], strides = [1, 1, 1]} : vector<4x8x24xf32> to vector<4x8x8xf32>
    %292 = vector.extract_strided_slice %289 {offsets = [0, 0, 16], sizes = [4, 8, 8], strides = [1, 1, 1]} : vector<4x8x24xf32> to vector<4x8x8xf32>
    %cst_162 = arith.constant dense<0.000000e+00> : vector<4x8x8xf32>
    %293 = tpu.matmul %290, %291, %cst_162 {dimension_numbers = #tpu.dot_dimension_numbers<[2], [2], [1], [1], [0, 0, 0, 1, 1, 1], [0], [0]>} : vector<4x8x8xf32>, vector<4x8x8xf32>, vector<4x8x8xf32> -> vector<4x8x8xf32>
    %294 = vector.shape_cast %13 : vector<8x8xf32> to vector<1x8x8xf32>
    %295 = vector.broadcast %294 : vector<1x8x8xf32> to vector<4x8x8xf32>
    %296 = arith.addf %293, %295 : vector<4x8x8xf32>
    %cst_163 = arith.constant dense<0xFF800000> : vector<4x8xf32>
    %297 = vector.multi_reduction <maximumf>, %296, %cst_163 [2] : vector<4x8x8xf32> to vector<4x8xf32>
    %298 = vector.shape_cast %297 : vector<4x8xf32> to vector<4x8x1xf32>
    %299 = vector.broadcast %298 : vector<4x8x1xf32> to vector<4x8x8xf32>
    %300 = arith.subf %296, %299 : vector<4x8x8xf32>
    %301 = math.exp %300 : vector<4x8x8xf32>
    %cst_164 = arith.constant dense<0.000000e+00> : vector<4x8xf32>
    %302 = vector.multi_reduction <add>, %301, %cst_164 [2] : vector<4x8x8xf32> to vector<4x8xf32>
    %303 = vector.shape_cast %302 : vector<4x8xf32> to vector<4x8x1xf32>
    %304 = tpu.reciprocal %303 {approx = true} : vector<4x8x1xf32> -> vector<4x8x1xf32>
    %305 = vector.broadcast %304 : vector<4x8x1xf32> to vector<4x8x8xf32>
    %306 = arith.mulf %301, %305 : vector<4x8x8xf32>
    %cst_165 = arith.constant dense<0.000000e+00> : vector<4x8x8xf32>
    %307 = tpu.matmul %306, %292, %cst_165 {dimension_numbers = #tpu.dot_dimension_numbers<[2], [1], [1], [2], [0, 0, 0, 1, 1, 2], [0], [0]>} : vector<4x8x8xf32>, vector<4x8x8xf32>, vector<4x8x8xf32> -> vector<4x8x8xf32>
    %c0_166 = arith.constant 0 : index
    %c0_167 = arith.constant 0 : index
    %c0_168 = arith.constant 0 : index
    %c0_169 = arith.constant 0 : index
    %308 = vector.load %arg22[%c0_166, %c0_167, %c0_168, %c0_169] : memref<2x4x8x32xf32, #tpu.memory_space<vmem>>, vector<1x4x8x32xf32>
    %309 = vector.shape_cast %308 : vector<1x4x8x32xf32> to vector<4x8x32xf32>
    %c0_170 = arith.constant 0 : index
    %c0_171 = arith.constant 0 : index
    %c0_172 = arith.constant 0 : index
    %310 = vector.load %arg23[%c0_170, %c0_171, %c0_172] : memref<2x1x32xf32, #tpu.memory_space<vmem>>, vector<1x1x32xf32>
    %311 = vector.shape_cast %310 : vector<1x1x32xf32> to vector<1x32xf32>
    %cst_173 = arith.constant dense<0.000000e+00> : vector<4x8x32xf32>
    %312 = tpu.matmul %307, %309, %cst_173 {dimension_numbers = #tpu.dot_dimension_numbers<[2], [1], [1], [2], [0, 0, 0, 1, 1, 2], [0], [0]>} : vector<4x8x8xf32>, vector<4x8x32xf32>, vector<4x8x32xf32> -> vector<4x8x32xf32>
    %cst_174 = arith.constant dense<0.000000e+00> : vector<8x32xf32>
    %313 = vector.multi_reduction <add>, %312, %cst_174 [0] : vector<4x8x32xf32> to vector<8x32xf32>
    %314 = vector.broadcast %311 : vector<1x32xf32> to vector<8x32xf32>
    %315 = arith.addf %313, %314 : vector<8x32xf32>
    %316 = arith.addf %253, %315 : vector<8x32xf32>
    %c0_175 = arith.constant 0 : index
    %c0_176 = arith.constant 0 : index
    %c0_177 = arith.constant 0 : index
    %317 = vector.load %arg24[%c0_175, %c0_176, %c0_177] : memref<2x1x32xf32, #tpu.memory_space<vmem>>, vector<1x1x32xf32>
    %318 = vector.shape_cast %317 : vector<1x1x32xf32> to vector<1x32xf32>
    %c0_178 = arith.constant 0 : index
    %c0_179 = arith.constant 0 : index
    %c0_180 = arith.constant 0 : index
    %319 = vector.load %arg25[%c0_178, %c0_179, %c0_180] : memref<2x1x32xf32, #tpu.memory_space<vmem>>, vector<1x1x32xf32>
    %320 = vector.shape_cast %319 : vector<1x1x32xf32> to vector<1x32xf32>
    %cst_181 = arith.constant dense<0.000000e+00> : vector<8xf32>
    %321 = vector.multi_reduction <add>, %316, %cst_181 [1] : vector<8x32xf32> to vector<8xf32>
    %322 = vector.shape_cast %321 : vector<8xf32> to vector<8x1xf32>
    %cst_182 = arith.constant 3.200000e+01 : f32
    %323 = vector.broadcast %cst_182 : f32 to vector<8x1xf32>
    %324 = arith.divf %322, %323 : vector<8x1xf32>
    %325 = vector.broadcast %324 : vector<8x1xf32> to vector<8x32xf32>
    %326 = arith.subf %316, %325 : vector<8x32xf32>
    %327 = arith.mulf %326, %326 : vector<8x32xf32>
    %cst_183 = arith.constant dense<0.000000e+00> : vector<8xf32>
    %328 = vector.multi_reduction <add>, %327, %cst_183 [1] : vector<8x32xf32> to vector<8xf32>
    %329 = vector.shape_cast %328 : vector<8xf32> to vector<8x1xf32>
    %cst_184 = arith.constant 3.100000e+01 : f32
    %330 = vector.broadcast %cst_184 : f32 to vector<8x1xf32>
    %331 = arith.divf %329, %330 : vector<8x1xf32>
    %332 = vector.broadcast %324 : vector<8x1xf32> to vector<8x32xf32>
    %333 = arith.subf %316, %332 : vector<8x32xf32>
    %334 = vector.broadcast %318 : vector<1x32xf32> to vector<8x32xf32>
    %335 = arith.mulf %334, %333 : vector<8x32xf32>
    %336 = math.sqrt %331 : vector<8x1xf32>
    %cst_185 = arith.constant 9.99999997E-7 : f32
    %337 = vector.broadcast %cst_185 : f32 to vector<8x1xf32>
    %338 = arith.addf %336, %337 : vector<8x1xf32>
    %339 = vector.broadcast %338 : vector<8x1xf32> to vector<8x32xf32>
    %340 = arith.divf %335, %339 : vector<8x32xf32>
    %341 = vector.broadcast %320 : vector<1x32xf32> to vector<8x32xf32>
    %342 = arith.addf %340, %341 : vector<8x32xf32>
    %c0_186 = arith.constant 0 : index
    %c0_187 = arith.constant 0 : index
    %c0_188 = arith.constant 0 : index
    %c0_189 = arith.constant 0 : index
    %343 = vector.load %arg26[%c0_186, %c0_187, %c0_188, %c0_189] : memref<2x4x32x8xf32, #tpu.memory_space<vmem>>, vector<1x4x32x8xf32>
    %344 = vector.shape_cast %343 : vector<1x4x32x8xf32> to vector<4x32x8xf32>
    %c0_190 = arith.constant 0 : index
    %c0_191 = arith.constant 0 : index
    %c0_192 = arith.constant 0 : index
    %c0_193 = arith.constant 0 : index
    %345 = vector.load %arg27[%c0_190, %c0_191, %c0_192, %c0_193] : memref<2x4x1x8xf32, #tpu.memory_space<vmem>>, vector<1x4x1x8xf32>
    %346 = vector.shape_cast %345 : vector<1x4x1x8xf32> to vector<4x1x8xf32>
    %347 = vector.shape_cast %342 : vector<8x32xf32> to vector<1x8x32xf32>
    %348 = vector.shape_cast %347 : vector<1x8x32xf32> to vector<1x8x32xf32>
    %349 = vector.broadcast %348 : vector<1x8x32xf32> to vector<4x8x32xf32>
    %cst_194 = arith.constant dense<0.000000e+00> : vector<4x8x8xf32>
    %350 = tpu.matmul %349, %344, %cst_194 {dimension_numbers = #tpu.dot_dimension_numbers<[2], [1], [1], [2], [0, 0, 0, 1, 1, 2], [0], [0]>} : vector<4x8x32xf32>, vector<4x32x8xf32>, vector<4x8x8xf32> -> vector<4x8x8xf32>
    %351 = vector.broadcast %346 : vector<4x1x8xf32> to vector<4x8x8xf32>
    %352 = arith.addf %350, %351 : vector<4x8x8xf32>
    %c0_195 = arith.constant 0 : index
    %c0_196 = arith.constant 0 : index
    %c0_197 = arith.constant 0 : index
    %c0_198 = arith.constant 0 : index
    %353 = vector.load %arg28[%c0_195, %c0_196, %c0_197, %c0_198] : memref<2x4x32x16xf32, #tpu.memory_space<vmem>>, vector<1x4x32x16xf32>
    %354 = vector.shape_cast %353 : vector<1x4x32x16xf32> to vector<4x32x16xf32>
    %c0_199 = arith.constant 0 : index
    %c0_200 = arith.constant 0 : index
    %c0_201 = arith.constant 0 : index
    %c0_202 = arith.constant 0 : index
    %355 = vector.load %arg29[%c0_199, %c0_200, %c0_201, %c0_202] : memref<2x4x1x16xf32, #tpu.memory_space<vmem>>, vector<1x4x1x16xf32>
    %356 = vector.shape_cast %355 : vector<1x4x1x16xf32> to vector<4x1x16xf32>
    %357 = vector.shape_cast %251 : vector<8x32xf32> to vector<1x8x32xf32>
    %358 = vector.shape_cast %357 : vector<1x8x32xf32> to vector<1x8x32xf32>
    %359 = vector.broadcast %358 : vector<1x8x32xf32> to vector<4x8x32xf32>
    %cst_203 = arith.constant dense<0.000000e+00> : vector<4x8x16xf32>
    %360 = tpu.matmul %359, %354, %cst_203 {dimension_numbers = #tpu.dot_dimension_numbers<[2], [1], [1], [2], [0, 0, 0, 1, 1, 2], [0], [0]>} : vector<4x8x32xf32>, vector<4x32x16xf32>, vector<4x8x16xf32> -> vector<4x8x16xf32>
    %361 = vector.broadcast %356 : vector<4x1x16xf32> to vector<4x8x16xf32>
    %362 = arith.addf %360, %361 : vector<4x8x16xf32>
    %363 = vector.extract_strided_slice %362 {offsets = [0, 0, 0], sizes = [4, 8, 8], strides = [1, 1, 1]} : vector<4x8x16xf32> to vector<4x8x8xf32>
    %364 = vector.extract_strided_slice %362 {offsets = [0, 0, 8], sizes = [4, 8, 8], strides = [1, 1, 1]} : vector<4x8x16xf32> to vector<4x8x8xf32>
    %cst_204 = arith.constant dense<0.000000e+00> : vector<4x8x8xf32>
    %365 = tpu.matmul %352, %363, %cst_204 {dimension_numbers = #tpu.dot_dimension_numbers<[2], [2], [1], [1], [0, 0, 0, 1, 1, 1], [0], [0]>} : vector<4x8x8xf32>, vector<4x8x8xf32>, vector<4x8x8xf32> -> vector<4x8x8xf32>
    %366 = vector.shape_cast %6 : vector<1x8xf32> to vector<1x1x8xf32>
    %367 = vector.broadcast %366 : vector<1x1x8xf32> to vector<4x8x8xf32>
    %368 = arith.addf %365, %367 : vector<4x8x8xf32>
    %cst_205 = arith.constant dense<0xFF800000> : vector<4x8xf32>
    %369 = vector.multi_reduction <maximumf>, %368, %cst_205 [2] : vector<4x8x8xf32> to vector<4x8xf32>
    %370 = vector.shape_cast %369 : vector<4x8xf32> to vector<4x8x1xf32>
    %371 = vector.broadcast %370 : vector<4x8x1xf32> to vector<4x8x8xf32>
    %372 = arith.subf %368, %371 : vector<4x8x8xf32>
    %373 = math.exp %372 : vector<4x8x8xf32>
    %cst_206 = arith.constant dense<0.000000e+00> : vector<4x8xf32>
    %374 = vector.multi_reduction <add>, %373, %cst_206 [2] : vector<4x8x8xf32> to vector<4x8xf32>
    %375 = vector.shape_cast %374 : vector<4x8xf32> to vector<4x8x1xf32>
    %376 = tpu.reciprocal %375 {approx = true} : vector<4x8x1xf32> -> vector<4x8x1xf32>
    %377 = vector.broadcast %376 : vector<4x8x1xf32> to vector<4x8x8xf32>
    %378 = arith.mulf %373, %377 : vector<4x8x8xf32>
    %cst_207 = arith.constant dense<0.000000e+00> : vector<4x8x8xf32>
    %379 = tpu.matmul %378, %364, %cst_207 {dimension_numbers = #tpu.dot_dimension_numbers<[2], [1], [1], [2], [0, 0, 0, 1, 1, 2], [0], [0]>} : vector<4x8x8xf32>, vector<4x8x8xf32>, vector<4x8x8xf32> -> vector<4x8x8xf32>
    %c0_208 = arith.constant 0 : index
    %c0_209 = arith.constant 0 : index
    %c0_210 = arith.constant 0 : index
    %c0_211 = arith.constant 0 : index
    %380 = vector.load %arg30[%c0_208, %c0_209, %c0_210, %c0_211] : memref<2x4x8x32xf32, #tpu.memory_space<vmem>>, vector<1x4x8x32xf32>
    %381 = vector.shape_cast %380 : vector<1x4x8x32xf32> to vector<4x8x32xf32>
    %c0_212 = arith.constant 0 : index
    %c0_213 = arith.constant 0 : index
    %c0_214 = arith.constant 0 : index
    %382 = vector.load %arg31[%c0_212, %c0_213, %c0_214] : memref<2x1x32xf32, #tpu.memory_space<vmem>>, vector<1x1x32xf32>
    %383 = vector.shape_cast %382 : vector<1x1x32xf32> to vector<1x32xf32>
    %cst_215 = arith.constant dense<0.000000e+00> : vector<4x8x32xf32>
    %384 = tpu.matmul %379, %381, %cst_215 {dimension_numbers = #tpu.dot_dimension_numbers<[2], [1], [1], [2], [0, 0, 0, 1, 1, 2], [0], [0]>} : vector<4x8x8xf32>, vector<4x8x32xf32>, vector<4x8x32xf32> -> vector<4x8x32xf32>
    %cst_216 = arith.constant dense<0.000000e+00> : vector<8x32xf32>
    %385 = vector.multi_reduction <add>, %384, %cst_216 [0] : vector<4x8x32xf32> to vector<8x32xf32>
    %386 = vector.broadcast %383 : vector<1x32xf32> to vector<8x32xf32>
    %387 = arith.addf %385, %386 : vector<8x32xf32>
    %388 = arith.addf %316, %387 : vector<8x32xf32>
    %c0_217 = arith.constant 0 : index
    %c0_218 = arith.constant 0 : index
    %c0_219 = arith.constant 0 : index
    %389 = vector.load %arg32[%c0_217, %c0_218, %c0_219] : memref<2x1x32xf32, #tpu.memory_space<vmem>>, vector<1x1x32xf32>
    %390 = vector.shape_cast %389 : vector<1x1x32xf32> to vector<1x32xf32>
    %c0_220 = arith.constant 0 : index
    %c0_221 = arith.constant 0 : index
    %c0_222 = arith.constant 0 : index
    %391 = vector.load %arg33[%c0_220, %c0_221, %c0_222] : memref<2x1x32xf32, #tpu.memory_space<vmem>>, vector<1x1x32xf32>
    %392 = vector.shape_cast %391 : vector<1x1x32xf32> to vector<1x32xf32>
    %cst_223 = arith.constant dense<0.000000e+00> : vector<8xf32>
    %393 = vector.multi_reduction <add>, %388, %cst_223 [1] : vector<8x32xf32> to vector<8xf32>
    %394 = vector.shape_cast %393 : vector<8xf32> to vector<8x1xf32>
    %cst_224 = arith.constant 3.200000e+01 : f32
    %395 = vector.broadcast %cst_224 : f32 to vector<8x1xf32>
    %396 = arith.divf %394, %395 : vector<8x1xf32>
    %397 = vector.broadcast %396 : vector<8x1xf32> to vector<8x32xf32>
    %398 = arith.subf %388, %397 : vector<8x32xf32>
    %399 = arith.mulf %398, %398 : vector<8x32xf32>
    %cst_225 = arith.constant dense<0.000000e+00> : vector<8xf32>
    %400 = vector.multi_reduction <add>, %399, %cst_225 [1] : vector<8x32xf32> to vector<8xf32>
    %401 = vector.shape_cast %400 : vector<8xf32> to vector<8x1xf32>
    %cst_226 = arith.constant 3.100000e+01 : f32
    %402 = vector.broadcast %cst_226 : f32 to vector<8x1xf32>
    %403 = arith.divf %401, %402 : vector<8x1xf32>
    %404 = vector.broadcast %396 : vector<8x1xf32> to vector<8x32xf32>
    %405 = arith.subf %388, %404 : vector<8x32xf32>
    %406 = vector.broadcast %390 : vector<1x32xf32> to vector<8x32xf32>
    %407 = arith.mulf %406, %405 : vector<8x32xf32>
    %408 = math.sqrt %403 : vector<8x1xf32>
    %cst_227 = arith.constant 9.99999997E-7 : f32
    %409 = vector.broadcast %cst_227 : f32 to vector<8x1xf32>
    %410 = arith.addf %408, %409 : vector<8x1xf32>
    %411 = vector.broadcast %410 : vector<8x1xf32> to vector<8x32xf32>
    %412 = arith.divf %407, %411 : vector<8x32xf32>
    %413 = vector.broadcast %392 : vector<1x32xf32> to vector<8x32xf32>
    %414 = arith.addf %412, %413 : vector<8x32xf32>
    %c0_228 = arith.constant 0 : index
    %c0_229 = arith.constant 0 : index
    %c0_230 = arith.constant 0 : index
    %415 = vector.load %arg34[%c0_228, %c0_229, %c0_230] : memref<2x32x64xf32, #tpu.memory_space<vmem>>, vector<1x32x64xf32>
    %416 = vector.shape_cast %415 : vector<1x32x64xf32> to vector<32x64xf32>
    %c0_231 = arith.constant 0 : index
    %c0_232 = arith.constant 0 : index
    %c0_233 = arith.constant 0 : index
    %417 = vector.load %arg35[%c0_231, %c0_232, %c0_233] : memref<2x1x64xf32, #tpu.memory_space<vmem>>, vector<1x1x64xf32>
    %418 = vector.shape_cast %417 : vector<1x1x64xf32> to vector<1x64xf32>
    %c0_234 = arith.constant 0 : index
    %c0_235 = arith.constant 0 : index
    %c0_236 = arith.constant 0 : index
    %419 = vector.load %arg36[%c0_234, %c0_235, %c0_236] : memref<2x64x32xf32, #tpu.memory_space<vmem>>, vector<1x64x32xf32>
    %420 = vector.shape_cast %419 : vector<1x64x32xf32> to vector<64x32xf32>
    %c0_237 = arith.constant 0 : index
    %c0_238 = arith.constant 0 : index
    %c0_239 = arith.constant 0 : index
    %421 = vector.load %arg37[%c0_237, %c0_238, %c0_239] : memref<2x1x32xf32, #tpu.memory_space<vmem>>, vector<1x1x32xf32>
    %422 = vector.shape_cast %421 : vector<1x1x32xf32> to vector<1x32xf32>
    %cst_240 = arith.constant dense<0.000000e+00> : vector<8x64xf32>
    %423 = tpu.matmul %414, %416, %cst_240 {dimension_numbers = #tpu.dot_dimension_numbers<[1], [0], [0], [1], [0, 0, 1, 1], [], []>} : vector<8x32xf32>, vector<32x64xf32>, vector<8x64xf32> -> vector<8x64xf32>
    %424 = vector.broadcast %418 : vector<1x64xf32> to vector<8x64xf32>
    %425 = arith.addf %423, %424 : vector<8x64xf32>
    %cst_241 = arith.constant 0.000000e+00 : f32
    %426 = vector.broadcast %cst_241 : f32 to vector<8x64xf32>
    %427 = arith.maximumf %425, %426 : vector<8x64xf32>
    %cst_242 = arith.constant dense<0.000000e+00> : vector<8x32xf32>
    %428 = tpu.matmul %427, %420, %cst_242 {dimension_numbers = #tpu.dot_dimension_numbers<[1], [0], [0], [1], [0, 0, 1, 1], [], []>} : vector<8x64xf32>, vector<64x32xf32>, vector<8x32xf32> -> vector<8x32xf32>
    %429 = vector.broadcast %422 : vector<1x32xf32> to vector<8x32xf32>
    %430 = arith.addf %428, %429 : vector<8x32xf32>
    %431 = arith.addf %388, %430 : vector<8x32xf32>
    %c1_243 = arith.constant 1 : index
    %c0_244 = arith.constant 0 : index
    %c0_245 = arith.constant 0 : index
    %432 = vector.load %arg18[%c1_243, %c0_244, %c0_245] : memref<2x1x32xf32, #tpu.memory_space<vmem>>, vector<1x1x32xf32>
    %433 = vector.shape_cast %432 : vector<1x1x32xf32> to vector<1x32xf32>
    %c1_246 = arith.constant 1 : index
    %c0_247 = arith.constant 0 : index
    %c0_248 = arith.constant 0 : index
    %434 = vector.load %arg19[%c1_246, %c0_247, %c0_248] : memref<2x1x32xf32, #tpu.memory_space<vmem>>, vector<1x1x32xf32>
    %435 = vector.shape_cast %434 : vector<1x1x32xf32> to vector<1x32xf32>
    %cst_249 = arith.constant dense<0.000000e+00> : vector<8xf32>
    %436 = vector.multi_reduction <add>, %431, %cst_249 [1] : vector<8x32xf32> to vector<8xf32>
    %437 = vector.shape_cast %436 : vector<8xf32> to vector<8x1xf32>
    %cst_250 = arith.constant 3.200000e+01 : f32
    %438 = vector.broadcast %cst_250 : f32 to vector<8x1xf32>
    %439 = arith.divf %437, %438 : vector<8x1xf32>
    %440 = vector.broadcast %439 : vector<8x1xf32> to vector<8x32xf32>
    %441 = arith.subf %431, %440 : vector<8x32xf32>
    %442 = arith.mulf %441, %441 : vector<8x32xf32>
    %cst_251 = arith.constant dense<0.000000e+00> : vector<8xf32>
    %443 = vector.multi_reduction <add>, %442, %cst_251 [1] : vector<8x32xf32> to vector<8xf32>
    %444 = vector.shape_cast %443 : vector<8xf32> to vector<8x1xf32>
    %cst_252 = arith.constant 3.100000e+01 : f32
    %445 = vector.broadcast %cst_252 : f32 to vector<8x1xf32>
    %446 = arith.divf %444, %445 : vector<8x1xf32>
    %447 = vector.broadcast %439 : vector<8x1xf32> to vector<8x32xf32>
    %448 = arith.subf %431, %447 : vector<8x32xf32>
    %449 = vector.broadcast %433 : vector<1x32xf32> to vector<8x32xf32>
    %450 = arith.mulf %449, %448 : vector<8x32xf32>
    %451 = math.sqrt %446 : vector<8x1xf32>
    %cst_253 = arith.constant 9.99999997E-7 : f32
    %452 = vector.broadcast %cst_253 : f32 to vector<8x1xf32>
    %453 = arith.addf %451, %452 : vector<8x1xf32>
    %454 = vector.broadcast %453 : vector<8x1xf32> to vector<8x32xf32>
    %455 = arith.divf %450, %454 : vector<8x32xf32>
    %456 = vector.broadcast %435 : vector<1x32xf32> to vector<8x32xf32>
    %457 = arith.addf %455, %456 : vector<8x32xf32>
    %c1_254 = arith.constant 1 : index
    %c0_255 = arith.constant 0 : index
    %c0_256 = arith.constant 0 : index
    %c0_257 = arith.constant 0 : index
    %458 = vector.load %arg20[%c1_254, %c0_255, %c0_256, %c0_257] : memref<2x4x32x24xf32, #tpu.memory_space<vmem>>, vector<1x4x32x24xf32>
    %459 = vector.shape_cast %458 : vector<1x4x32x24xf32> to vector<4x32x24xf32>
    %c1_258 = arith.constant 1 : index
    %c0_259 = arith.constant 0 : index
    %c0_260 = arith.constant 0 : index
    %c0_261 = arith.constant 0 : index
    %460 = vector.load %arg21[%c1_258, %c0_259, %c0_260, %c0_261] : memref<2x4x1x24xf32, #tpu.memory_space<vmem>>, vector<1x4x1x24xf32>
    %461 = vector.shape_cast %460 : vector<1x4x1x24xf32> to vector<4x1x24xf32>
    %462 = vector.shape_cast %457 : vector<8x32xf32> to vector<1x8x32xf32>
    %463 = vector.shape_cast %462 : vector<1x8x32xf32> to vector<1x8x32xf32>
    %464 = vector.broadcast %463 : vector<1x8x32xf32> to vector<4x8x32xf32>
    %cst_262 = arith.constant dense<0.000000e+00> : vector<4x8x24xf32>
    %465 = tpu.matmul %464, %459, %cst_262 {dimension_numbers = #tpu.dot_dimension_numbers<[2], [1], [1], [2], [0, 0, 0, 1, 1, 2], [0], [0]>} : vector<4x8x32xf32>, vector<4x32x24xf32>, vector<4x8x24xf32> -> vector<4x8x24xf32>
    %466 = vector.broadcast %461 : vector<4x1x24xf32> to vector<4x8x24xf32>
    %467 = arith.addf %465, %466 : vector<4x8x24xf32>
    %468 = vector.extract_strided_slice %467 {offsets = [0, 0, 0], sizes = [4, 8, 8], strides = [1, 1, 1]} : vector<4x8x24xf32> to vector<4x8x8xf32>
    %469 = vector.extract_strided_slice %467 {offsets = [0, 0, 8], sizes = [4, 8, 8], strides = [1, 1, 1]} : vector<4x8x24xf32> to vector<4x8x8xf32>
    %470 = vector.extract_strided_slice %467 {offsets = [0, 0, 16], sizes = [4, 8, 8], strides = [1, 1, 1]} : vector<4x8x24xf32> to vector<4x8x8xf32>
    %cst_263 = arith.constant dense<0.000000e+00> : vector<4x8x8xf32>
    %471 = tpu.matmul %468, %469, %cst_263 {dimension_numbers = #tpu.dot_dimension_numbers<[2], [2], [1], [1], [0, 0, 0, 1, 1, 1], [0], [0]>} : vector<4x8x8xf32>, vector<4x8x8xf32>, vector<4x8x8xf32> -> vector<4x8x8xf32>
    %472 = vector.shape_cast %13 : vector<8x8xf32> to vector<1x8x8xf32>
    %473 = vector.broadcast %472 : vector<1x8x8xf32> to vector<4x8x8xf32>
    %474 = arith.addf %471, %473 : vector<4x8x8xf32>
    %cst_264 = arith.constant dense<0xFF800000> : vector<4x8xf32>
    %475 = vector.multi_reduction <maximumf>, %474, %cst_264 [2] : vector<4x8x8xf32> to vector<4x8xf32>
    %476 = vector.shape_cast %475 : vector<4x8xf32> to vector<4x8x1xf32>
    %477 = vector.broadcast %476 : vector<4x8x1xf32> to vector<4x8x8xf32>
    %478 = arith.subf %474, %477 : vector<4x8x8xf32>
    %479 = math.exp %478 : vector<4x8x8xf32>
    %cst_265 = arith.constant dense<0.000000e+00> : vector<4x8xf32>
    %480 = vector.multi_reduction <add>, %479, %cst_265 [2] : vector<4x8x8xf32> to vector<4x8xf32>
    %481 = vector.shape_cast %480 : vector<4x8xf32> to vector<4x8x1xf32>
    %482 = tpu.reciprocal %481 {approx = true} : vector<4x8x1xf32> -> vector<4x8x1xf32>
    %483 = vector.broadcast %482 : vector<4x8x1xf32> to vector<4x8x8xf32>
    %484 = arith.mulf %479, %483 : vector<4x8x8xf32>
    %cst_266 = arith.constant dense<0.000000e+00> : vector<4x8x8xf32>
    %485 = tpu.matmul %484, %470, %cst_266 {dimension_numbers = #tpu.dot_dimension_numbers<[2], [1], [1], [2], [0, 0, 0, 1, 1, 2], [0], [0]>} : vector<4x8x8xf32>, vector<4x8x8xf32>, vector<4x8x8xf32> -> vector<4x8x8xf32>
    %c1_267 = arith.constant 1 : index
    %c0_268 = arith.constant 0 : index
    %c0_269 = arith.constant 0 : index
    %c0_270 = arith.constant 0 : index
    %486 = vector.load %arg22[%c1_267, %c0_268, %c0_269, %c0_270] : memref<2x4x8x32xf32, #tpu.memory_space<vmem>>, vector<1x4x8x32xf32>
    %487 = vector.shape_cast %486 : vector<1x4x8x32xf32> to vector<4x8x32xf32>
    %c1_271 = arith.constant 1 : index
    %c0_272 = arith.constant 0 : index
    %c0_273 = arith.constant 0 : index
    %488 = vector.load %arg23[%c1_271, %c0_272, %c0_273] : memref<2x1x32xf32, #tpu.memory_space<vmem>>, vector<1x1x32xf32>
    %489 = vector.shape_cast %488 : vector<1x1x32xf32> to vector<1x32xf32>
    %cst_274 = arith.constant dense<0.000000e+00> : vector<4x8x32xf32>
    %490 = tpu.matmul %485, %487, %cst_274 {dimension_numbers = #tpu.dot_dimension_numbers<[2], [1], [1], [2], [0, 0, 0, 1, 1, 2], [0], [0]>} : vector<4x8x8xf32>, vector<4x8x32xf32>, vector<4x8x32xf32> -> vector<4x8x32xf32>
    %cst_275 = arith.constant dense<0.000000e+00> : vector<8x32xf32>
    %491 = vector.multi_reduction <add>, %490, %cst_275 [0] : vector<4x8x32xf32> to vector<8x32xf32>
    %492 = vector.broadcast %489 : vector<1x32xf32> to vector<8x32xf32>
    %493 = arith.addf %491, %492 : vector<8x32xf32>
    %494 = arith.addf %431, %493 : vector<8x32xf32>
    %c1_276 = arith.constant 1 : index
    %c0_277 = arith.constant 0 : index
    %c0_278 = arith.constant 0 : index
    %495 = vector.load %arg24[%c1_276, %c0_277, %c0_278] : memref<2x1x32xf32, #tpu.memory_space<vmem>>, vector<1x1x32xf32>
    %496 = vector.shape_cast %495 : vector<1x1x32xf32> to vector<1x32xf32>
    %c1_279 = arith.constant 1 : index
    %c0_280 = arith.constant 0 : index
    %c0_281 = arith.constant 0 : index
    %497 = vector.load %arg25[%c1_279, %c0_280, %c0_281] : memref<2x1x32xf32, #tpu.memory_space<vmem>>, vector<1x1x32xf32>
    %498 = vector.shape_cast %497 : vector<1x1x32xf32> to vector<1x32xf32>
    %cst_282 = arith.constant dense<0.000000e+00> : vector<8xf32>
    %499 = vector.multi_reduction <add>, %494, %cst_282 [1] : vector<8x32xf32> to vector<8xf32>
    %500 = vector.shape_cast %499 : vector<8xf32> to vector<8x1xf32>
    %cst_283 = arith.constant 3.200000e+01 : f32
    %501 = vector.broadcast %cst_283 : f32 to vector<8x1xf32>
    %502 = arith.divf %500, %501 : vector<8x1xf32>
    %503 = vector.broadcast %502 : vector<8x1xf32> to vector<8x32xf32>
    %504 = arith.subf %494, %503 : vector<8x32xf32>
    %505 = arith.mulf %504, %504 : vector<8x32xf32>
    %cst_284 = arith.constant dense<0.000000e+00> : vector<8xf32>
    %506 = vector.multi_reduction <add>, %505, %cst_284 [1] : vector<8x32xf32> to vector<8xf32>
    %507 = vector.shape_cast %506 : vector<8xf32> to vector<8x1xf32>
    %cst_285 = arith.constant 3.100000e+01 : f32
    %508 = vector.broadcast %cst_285 : f32 to vector<8x1xf32>
    %509 = arith.divf %507, %508 : vector<8x1xf32>
    %510 = vector.broadcast %502 : vector<8x1xf32> to vector<8x32xf32>
    %511 = arith.subf %494, %510 : vector<8x32xf32>
    %512 = vector.broadcast %496 : vector<1x32xf32> to vector<8x32xf32>
    %513 = arith.mulf %512, %511 : vector<8x32xf32>
    %514 = math.sqrt %509 : vector<8x1xf32>
    %cst_286 = arith.constant 9.99999997E-7 : f32
    %515 = vector.broadcast %cst_286 : f32 to vector<8x1xf32>
    %516 = arith.addf %514, %515 : vector<8x1xf32>
    %517 = vector.broadcast %516 : vector<8x1xf32> to vector<8x32xf32>
    %518 = arith.divf %513, %517 : vector<8x32xf32>
    %519 = vector.broadcast %498 : vector<1x32xf32> to vector<8x32xf32>
    %520 = arith.addf %518, %519 : vector<8x32xf32>
    %c1_287 = arith.constant 1 : index
    %c0_288 = arith.constant 0 : index
    %c0_289 = arith.constant 0 : index
    %c0_290 = arith.constant 0 : index
    %521 = vector.load %arg26[%c1_287, %c0_288, %c0_289, %c0_290] : memref<2x4x32x8xf32, #tpu.memory_space<vmem>>, vector<1x4x32x8xf32>
    %522 = vector.shape_cast %521 : vector<1x4x32x8xf32> to vector<4x32x8xf32>
    %c1_291 = arith.constant 1 : index
    %c0_292 = arith.constant 0 : index
    %c0_293 = arith.constant 0 : index
    %c0_294 = arith.constant 0 : index
    %523 = vector.load %arg27[%c1_291, %c0_292, %c0_293, %c0_294] : memref<2x4x1x8xf32, #tpu.memory_space<vmem>>, vector<1x4x1x8xf32>
    %524 = vector.shape_cast %523 : vector<1x4x1x8xf32> to vector<4x1x8xf32>
    %525 = vector.shape_cast %520 : vector<8x32xf32> to vector<1x8x32xf32>
    %526 = vector.shape_cast %525 : vector<1x8x32xf32> to vector<1x8x32xf32>
    %527 = vector.broadcast %526 : vector<1x8x32xf32> to vector<4x8x32xf32>
    %cst_295 = arith.constant dense<0.000000e+00> : vector<4x8x8xf32>
    %528 = tpu.matmul %527, %522, %cst_295 {dimension_numbers = #tpu.dot_dimension_numbers<[2], [1], [1], [2], [0, 0, 0, 1, 1, 2], [0], [0]>} : vector<4x8x32xf32>, vector<4x32x8xf32>, vector<4x8x8xf32> -> vector<4x8x8xf32>
    %529 = vector.broadcast %524 : vector<4x1x8xf32> to vector<4x8x8xf32>
    %530 = arith.addf %528, %529 : vector<4x8x8xf32>
    %c1_296 = arith.constant 1 : index
    %c0_297 = arith.constant 0 : index
    %c0_298 = arith.constant 0 : index
    %c0_299 = arith.constant 0 : index
    %531 = vector.load %arg28[%c1_296, %c0_297, %c0_298, %c0_299] : memref<2x4x32x16xf32, #tpu.memory_space<vmem>>, vector<1x4x32x16xf32>
    %532 = vector.shape_cast %531 : vector<1x4x32x16xf32> to vector<4x32x16xf32>
    %c1_300 = arith.constant 1 : index
    %c0_301 = arith.constant 0 : index
    %c0_302 = arith.constant 0 : index
    %c0_303 = arith.constant 0 : index
    %533 = vector.load %arg29[%c1_300, %c0_301, %c0_302, %c0_303] : memref<2x4x1x16xf32, #tpu.memory_space<vmem>>, vector<1x4x1x16xf32>
    %534 = vector.shape_cast %533 : vector<1x4x1x16xf32> to vector<4x1x16xf32>
    %535 = vector.shape_cast %251 : vector<8x32xf32> to vector<1x8x32xf32>
    %536 = vector.shape_cast %535 : vector<1x8x32xf32> to vector<1x8x32xf32>
    %537 = vector.broadcast %536 : vector<1x8x32xf32> to vector<4x8x32xf32>
    %cst_304 = arith.constant dense<0.000000e+00> : vector<4x8x16xf32>
    %538 = tpu.matmul %537, %532, %cst_304 {dimension_numbers = #tpu.dot_dimension_numbers<[2], [1], [1], [2], [0, 0, 0, 1, 1, 2], [0], [0]>} : vector<4x8x32xf32>, vector<4x32x16xf32>, vector<4x8x16xf32> -> vector<4x8x16xf32>
    %539 = vector.broadcast %534 : vector<4x1x16xf32> to vector<4x8x16xf32>
    %540 = arith.addf %538, %539 : vector<4x8x16xf32>
    %541 = vector.extract_strided_slice %540 {offsets = [0, 0, 0], sizes = [4, 8, 8], strides = [1, 1, 1]} : vector<4x8x16xf32> to vector<4x8x8xf32>
    %542 = vector.extract_strided_slice %540 {offsets = [0, 0, 8], sizes = [4, 8, 8], strides = [1, 1, 1]} : vector<4x8x16xf32> to vector<4x8x8xf32>
    %cst_305 = arith.constant dense<0.000000e+00> : vector<4x8x8xf32>
    %543 = tpu.matmul %530, %541, %cst_305 {dimension_numbers = #tpu.dot_dimension_numbers<[2], [2], [1], [1], [0, 0, 0, 1, 1, 1], [0], [0]>} : vector<4x8x8xf32>, vector<4x8x8xf32>, vector<4x8x8xf32> -> vector<4x8x8xf32>
    %544 = vector.shape_cast %6 : vector<1x8xf32> to vector<1x1x8xf32>
    %545 = vector.broadcast %544 : vector<1x1x8xf32> to vector<4x8x8xf32>
    %546 = arith.addf %543, %545 : vector<4x8x8xf32>
    %cst_306 = arith.constant dense<0xFF800000> : vector<4x8xf32>
    %547 = vector.multi_reduction <maximumf>, %546, %cst_306 [2] : vector<4x8x8xf32> to vector<4x8xf32>
    %548 = vector.shape_cast %547 : vector<4x8xf32> to vector<4x8x1xf32>
    %549 = vector.broadcast %548 : vector<4x8x1xf32> to vector<4x8x8xf32>
    %550 = arith.subf %546, %549 : vector<4x8x8xf32>
    %551 = math.exp %550 : vector<4x8x8xf32>
    %cst_307 = arith.constant dense<0.000000e+00> : vector<4x8xf32>
    %552 = vector.multi_reduction <add>, %551, %cst_307 [2] : vector<4x8x8xf32> to vector<4x8xf32>
    %553 = vector.shape_cast %552 : vector<4x8xf32> to vector<4x8x1xf32>
    %554 = tpu.reciprocal %553 {approx = true} : vector<4x8x1xf32> -> vector<4x8x1xf32>
    %555 = vector.broadcast %554 : vector<4x8x1xf32> to vector<4x8x8xf32>
    %556 = arith.mulf %551, %555 : vector<4x8x8xf32>
    %cst_308 = arith.constant dense<0.000000e+00> : vector<4x8x8xf32>
    %557 = tpu.matmul %556, %542, %cst_308 {dimension_numbers = #tpu.dot_dimension_numbers<[2], [1], [1], [2], [0, 0, 0, 1, 1, 2], [0], [0]>} : vector<4x8x8xf32>, vector<4x8x8xf32>, vector<4x8x8xf32> -> vector<4x8x8xf32>
    %c1_309 = arith.constant 1 : index
    %c0_310 = arith.constant 0 : index
    %c0_311 = arith.constant 0 : index
    %c0_312 = arith.constant 0 : index
    %558 = vector.load %arg30[%c1_309, %c0_310, %c0_311, %c0_312] : memref<2x4x8x32xf32, #tpu.memory_space<vmem>>, vector<1x4x8x32xf32>
    %559 = vector.shape_cast %558 : vector<1x4x8x32xf32> to vector<4x8x32xf32>
    %c1_313 = arith.constant 1 : index
    %c0_314 = arith.constant 0 : index
    %c0_315 = arith.constant 0 : index
    %560 = vector.load %arg31[%c1_313, %c0_314, %c0_315] : memref<2x1x32xf32, #tpu.memory_space<vmem>>, vector<1x1x32xf32>
    %561 = vector.shape_cast %560 : vector<1x1x32xf32> to vector<1x32xf32>
    %cst_316 = arith.constant dense<0.000000e+00> : vector<4x8x32xf32>
    %562 = tpu.matmul %557, %559, %cst_316 {dimension_numbers = #tpu.dot_dimension_numbers<[2], [1], [1], [2], [0, 0, 0, 1, 1, 2], [0], [0]>} : vector<4x8x8xf32>, vector<4x8x32xf32>, vector<4x8x32xf32> -> vector<4x8x32xf32>
    %cst_317 = arith.constant dense<0.000000e+00> : vector<8x32xf32>
    %563 = vector.multi_reduction <add>, %562, %cst_317 [0] : vector<4x8x32xf32> to vector<8x32xf32>
    %564 = vector.broadcast %561 : vector<1x32xf32> to vector<8x32xf32>
    %565 = arith.addf %563, %564 : vector<8x32xf32>
    %566 = arith.addf %494, %565 : vector<8x32xf32>
    %c1_318 = arith.constant 1 : index
    %c0_319 = arith.constant 0 : index
    %c0_320 = arith.constant 0 : index
    %567 = vector.load %arg32[%c1_318, %c0_319, %c0_320] : memref<2x1x32xf32, #tpu.memory_space<vmem>>, vector<1x1x32xf32>
    %568 = vector.shape_cast %567 : vector<1x1x32xf32> to vector<1x32xf32>
    %c1_321 = arith.constant 1 : index
    %c0_322 = arith.constant 0 : index
    %c0_323 = arith.constant 0 : index
    %569 = vector.load %arg33[%c1_321, %c0_322, %c0_323] : memref<2x1x32xf32, #tpu.memory_space<vmem>>, vector<1x1x32xf32>
    %570 = vector.shape_cast %569 : vector<1x1x32xf32> to vector<1x32xf32>
    %cst_324 = arith.constant dense<0.000000e+00> : vector<8xf32>
    %571 = vector.multi_reduction <add>, %566, %cst_324 [1] : vector<8x32xf32> to vector<8xf32>
    %572 = vector.shape_cast %571 : vector<8xf32> to vector<8x1xf32>
    %cst_325 = arith.constant 3.200000e+01 : f32
    %573 = vector.broadcast %cst_325 : f32 to vector<8x1xf32>
    %574 = arith.divf %572, %573 : vector<8x1xf32>
    %575 = vector.broadcast %574 : vector<8x1xf32> to vector<8x32xf32>
    %576 = arith.subf %566, %575 : vector<8x32xf32>
    %577 = arith.mulf %576, %576 : vector<8x32xf32>
    %cst_326 = arith.constant dense<0.000000e+00> : vector<8xf32>
    %578 = vector.multi_reduction <add>, %577, %cst_326 [1] : vector<8x32xf32> to vector<8xf32>
    %579 = vector.shape_cast %578 : vector<8xf32> to vector<8x1xf32>
    %cst_327 = arith.constant 3.100000e+01 : f32
    %580 = vector.broadcast %cst_327 : f32 to vector<8x1xf32>
    %581 = arith.divf %579, %580 : vector<8x1xf32>
    %582 = vector.broadcast %574 : vector<8x1xf32> to vector<8x32xf32>
    %583 = arith.subf %566, %582 : vector<8x32xf32>
    %584 = vector.broadcast %568 : vector<1x32xf32> to vector<8x32xf32>
    %585 = arith.mulf %584, %583 : vector<8x32xf32>
    %586 = math.sqrt %581 : vector<8x1xf32>
    %cst_328 = arith.constant 9.99999997E-7 : f32
    %587 = vector.broadcast %cst_328 : f32 to vector<8x1xf32>
    %588 = arith.addf %586, %587 : vector<8x1xf32>
    %589 = vector.broadcast %588 : vector<8x1xf32> to vector<8x32xf32>
    %590 = arith.divf %585, %589 : vector<8x32xf32>
    %591 = vector.broadcast %570 : vector<1x32xf32> to vector<8x32xf32>
    %592 = arith.addf %590, %591 : vector<8x32xf32>
    %c1_329 = arith.constant 1 : index
    %c0_330 = arith.constant 0 : index
    %c0_331 = arith.constant 0 : index
    %593 = vector.load %arg34[%c1_329, %c0_330, %c0_331] : memref<2x32x64xf32, #tpu.memory_space<vmem>>, vector<1x32x64xf32>
    %594 = vector.shape_cast %593 : vector<1x32x64xf32> to vector<32x64xf32>
    %c1_332 = arith.constant 1 : index
    %c0_333 = arith.constant 0 : index
    %c0_334 = arith.constant 0 : index
    %595 = vector.load %arg35[%c1_332, %c0_333, %c0_334] : memref<2x1x64xf32, #tpu.memory_space<vmem>>, vector<1x1x64xf32>
    %596 = vector.shape_cast %595 : vector<1x1x64xf32> to vector<1x64xf32>
    %c1_335 = arith.constant 1 : index
    %c0_336 = arith.constant 0 : index
    %c0_337 = arith.constant 0 : index
    %597 = vector.load %arg36[%c1_335, %c0_336, %c0_337] : memref<2x64x32xf32, #tpu.memory_space<vmem>>, vector<1x64x32xf32>
    %598 = vector.shape_cast %597 : vector<1x64x32xf32> to vector<64x32xf32>
    %c1_338 = arith.constant 1 : index
    %c0_339 = arith.constant 0 : index
    %c0_340 = arith.constant 0 : index
    %599 = vector.load %arg37[%c1_338, %c0_339, %c0_340] : memref<2x1x32xf32, #tpu.memory_space<vmem>>, vector<1x1x32xf32>
    %600 = vector.shape_cast %599 : vector<1x1x32xf32> to vector<1x32xf32>
    %cst_341 = arith.constant dense<0.000000e+00> : vector<8x64xf32>
    %601 = tpu.matmul %592, %594, %cst_341 {dimension_numbers = #tpu.dot_dimension_numbers<[1], [0], [0], [1], [0, 0, 1, 1], [], []>} : vector<8x32xf32>, vector<32x64xf32>, vector<8x64xf32> -> vector<8x64xf32>
    %602 = vector.broadcast %596 : vector<1x64xf32> to vector<8x64xf32>
    %603 = arith.addf %601, %602 : vector<8x64xf32>
    %cst_342 = arith.constant 0.000000e+00 : f32
    %604 = vector.broadcast %cst_342 : f32 to vector<8x64xf32>
    %605 = arith.maximumf %603, %604 : vector<8x64xf32>
    %cst_343 = arith.constant dense<0.000000e+00> : vector<8x32xf32>
    %606 = tpu.matmul %605, %598, %cst_343 {dimension_numbers = #tpu.dot_dimension_numbers<[1], [0], [0], [1], [0, 0, 1, 1], [], []>} : vector<8x64xf32>, vector<64x32xf32>, vector<8x32xf32> -> vector<8x32xf32>
    %607 = vector.broadcast %600 : vector<1x32xf32> to vector<8x32xf32>
    %608 = arith.addf %606, %607 : vector<8x32xf32>
    %609 = arith.addf %566, %608 : vector<8x32xf32>
    %c0_344 = arith.constant 0 : index
    %c0_345 = arith.constant 0 : index
    %610 = vector.load %arg38[%c0_344, %c0_345] : memref<1x32xf32, #tpu.memory_space<vmem>>, vector<1x32xf32>
    %c0_346 = arith.constant 0 : index
    %c0_347 = arith.constant 0 : index
    %611 = vector.load %arg39[%c0_346, %c0_347] : memref<1x32xf32, #tpu.memory_space<vmem>>, vector<1x32xf32>
    %cst_348 = arith.constant dense<0.000000e+00> : vector<8xf32>
    %612 = vector.multi_reduction <add>, %609, %cst_348 [1] : vector<8x32xf32> to vector<8xf32>
    %613 = vector.shape_cast %612 : vector<8xf32> to vector<8x1xf32>
    %cst_349 = arith.constant 3.200000e+01 : f32
    %614 = vector.broadcast %cst_349 : f32 to vector<8x1xf32>
    %615 = arith.divf %613, %614 : vector<8x1xf32>
    %616 = vector.broadcast %615 : vector<8x1xf32> to vector<8x32xf32>
    %617 = arith.subf %609, %616 : vector<8x32xf32>
    %618 = arith.mulf %617, %617 : vector<8x32xf32>
    %cst_350 = arith.constant dense<0.000000e+00> : vector<8xf32>
    %619 = vector.multi_reduction <add>, %618, %cst_350 [1] : vector<8x32xf32> to vector<8xf32>
    %620 = vector.shape_cast %619 : vector<8xf32> to vector<8x1xf32>
    %cst_351 = arith.constant 3.100000e+01 : f32
    %621 = vector.broadcast %cst_351 : f32 to vector<8x1xf32>
    %622 = arith.divf %620, %621 : vector<8x1xf32>
    %623 = vector.broadcast %615 : vector<8x1xf32> to vector<8x32xf32>
    %624 = arith.subf %609, %623 : vector<8x32xf32>
    %625 = vector.broadcast %610 : vector<1x32xf32> to vector<8x32xf32>
    %626 = arith.mulf %625, %624 : vector<8x32xf32>
    %627 = math.sqrt %622 : vector<8x1xf32>
    %cst_352 = arith.constant 9.99999997E-7 : f32
    %628 = vector.broadcast %cst_352 : f32 to vector<8x1xf32>
    %629 = arith.addf %627, %628 : vector<8x1xf32>
    %630 = vector.broadcast %629 : vector<8x1xf32> to vector<8x32xf32>
    %631 = arith.divf %626, %630 : vector<8x32xf32>
    %632 = vector.broadcast %611 : vector<1x32xf32> to vector<8x32xf32>
    %633 = arith.addf %631, %632 : vector<8x32xf32>
    %c1_353 = arith.constant 1 : index
    %c0_354 = arith.constant 0 : index
    %c0_355 = arith.constant 0 : index
    %634 = vector.load %arg2[%c1_353, %c0_354, %c0_355] : memref<2x1x8xf32, #tpu.memory_space<vmem>>, vector<1x1x8xf32>
    %635 = vector.shape_cast %634 : vector<1x1x8xf32> to vector<1x8xf32>
    %cst_356 = arith.constant 5.000000e-01 : f32
    %636 = vector.broadcast %cst_356 : f32 to vector<1x8xf32>
    %637 = arith.cmpf olt, %635, %636 : vector<1x8xf32>
    %cst_357 = arith.constant -1.000000e+09 : f32
    %cst_358 = arith.constant 0.000000e+00 : f32
    %638 = vector.broadcast %cst_357 : f32 to vector<1x8xf32>
    %639 = vector.broadcast %cst_358 : f32 to vector<1x8xf32>
    %640 = arith.select %637, %638, %639 : vector<1x8xi1>, vector<1x8xf32>
    %c1_359 = arith.constant 1 : index
    %c0_360 = arith.constant 0 : index
    %c0_361 = arith.constant 0 : index
    %641 = vector.load %arg3[%c1_359, %c0_360, %c0_361] : memref<2x8x8xf32, #tpu.memory_space<vmem>>, vector<1x8x8xf32>
    %642 = vector.shape_cast %641 : vector<1x8x8xf32> to vector<8x8xf32>
    %cst_362 = arith.constant 5.000000e-01 : f32
    %643 = vector.broadcast %cst_362 : f32 to vector<8x8xf32>
    %644 = arith.cmpf olt, %642, %643 : vector<8x8xf32>
    %cst_363 = arith.constant -1.000000e+09 : f32
    %cst_364 = arith.constant 0.000000e+00 : f32
    %645 = vector.broadcast %cst_363 : f32 to vector<8x8xf32>
    %646 = vector.broadcast %cst_364 : f32 to vector<8x8xf32>
    %647 = arith.select %644, %645, %646 : vector<8x8xi1>, vector<8x8xf32>
    %c1_365 = arith.constant 1 : index
    %c0_366 = arith.constant 0 : index
    %c0_367 = arith.constant 0 : index
    %648 = vector.load %arg0[%c1_365, %c0_366, %c0_367] : memref<2x8x32xf32, #tpu.memory_space<vmem>>, vector<1x8x32xf32>
    %649 = vector.shape_cast %648 : vector<1x8x32xf32> to vector<8x32xf32>
    %c0_368 = arith.constant 0 : index
    %c0_369 = arith.constant 0 : index
    %c0_370 = arith.constant 0 : index
    %650 = vector.load %arg4[%c0_368, %c0_369, %c0_370] : memref<2x1x32xf32, #tpu.memory_space<vmem>>, vector<1x1x32xf32>
    %651 = vector.shape_cast %650 : vector<1x1x32xf32> to vector<1x32xf32>
    %c0_371 = arith.constant 0 : index
    %c0_372 = arith.constant 0 : index
    %c0_373 = arith.constant 0 : index
    %652 = vector.load %arg5[%c0_371, %c0_372, %c0_373] : memref<2x1x32xf32, #tpu.memory_space<vmem>>, vector<1x1x32xf32>
    %653 = vector.shape_cast %652 : vector<1x1x32xf32> to vector<1x32xf32>
    %cst_374 = arith.constant dense<0.000000e+00> : vector<8xf32>
    %654 = vector.multi_reduction <add>, %649, %cst_374 [1] : vector<8x32xf32> to vector<8xf32>
    %655 = vector.shape_cast %654 : vector<8xf32> to vector<8x1xf32>
    %cst_375 = arith.constant 3.200000e+01 : f32
    %656 = vector.broadcast %cst_375 : f32 to vector<8x1xf32>
    %657 = arith.divf %655, %656 : vector<8x1xf32>
    %658 = vector.broadcast %657 : vector<8x1xf32> to vector<8x32xf32>
    %659 = arith.subf %649, %658 : vector<8x32xf32>
    %660 = arith.mulf %659, %659 : vector<8x32xf32>
    %cst_376 = arith.constant dense<0.000000e+00> : vector<8xf32>
    %661 = vector.multi_reduction <add>, %660, %cst_376 [1] : vector<8x32xf32> to vector<8xf32>
    %662 = vector.shape_cast %661 : vector<8xf32> to vector<8x1xf32>
    %cst_377 = arith.constant 3.100000e+01 : f32
    %663 = vector.broadcast %cst_377 : f32 to vector<8x1xf32>
    %664 = arith.divf %662, %663 : vector<8x1xf32>
    %665 = vector.broadcast %657 : vector<8x1xf32> to vector<8x32xf32>
    %666 = arith.subf %649, %665 : vector<8x32xf32>
    %667 = vector.broadcast %651 : vector<1x32xf32> to vector<8x32xf32>
    %668 = arith.mulf %667, %666 : vector<8x32xf32>
    %669 = math.sqrt %664 : vector<8x1xf32>
    %cst_378 = arith.constant 9.99999997E-7 : f32
    %670 = vector.broadcast %cst_378 : f32 to vector<8x1xf32>
    %671 = arith.addf %669, %670 : vector<8x1xf32>
    %672 = vector.broadcast %671 : vector<8x1xf32> to vector<8x32xf32>
    %673 = arith.divf %668, %672 : vector<8x32xf32>
    %674 = vector.broadcast %653 : vector<1x32xf32> to vector<8x32xf32>
    %675 = arith.addf %673, %674 : vector<8x32xf32>
    %c0_379 = arith.constant 0 : index
    %c0_380 = arith.constant 0 : index
    %c0_381 = arith.constant 0 : index
    %c0_382 = arith.constant 0 : index
    %676 = vector.load %arg6[%c0_379, %c0_380, %c0_381, %c0_382] : memref<2x4x32x24xf32, #tpu.memory_space<vmem>>, vector<1x4x32x24xf32>
    %677 = vector.shape_cast %676 : vector<1x4x32x24xf32> to vector<4x32x24xf32>
    %c0_383 = arith.constant 0 : index
    %c0_384 = arith.constant 0 : index
    %c0_385 = arith.constant 0 : index
    %c0_386 = arith.constant 0 : index
    %678 = vector.load %arg7[%c0_383, %c0_384, %c0_385, %c0_386] : memref<2x4x1x24xf32, #tpu.memory_space<vmem>>, vector<1x4x1x24xf32>
    %679 = vector.shape_cast %678 : vector<1x4x1x24xf32> to vector<4x1x24xf32>
    %680 = vector.shape_cast %675 : vector<8x32xf32> to vector<1x8x32xf32>
    %681 = vector.shape_cast %680 : vector<1x8x32xf32> to vector<1x8x32xf32>
    %682 = vector.broadcast %681 : vector<1x8x32xf32> to vector<4x8x32xf32>
    %cst_387 = arith.constant dense<0.000000e+00> : vector<4x8x24xf32>
    %683 = tpu.matmul %682, %677, %cst_387 {dimension_numbers = #tpu.dot_dimension_numbers<[2], [1], [1], [2], [0, 0, 0, 1, 1, 2], [0], [0]>} : vector<4x8x32xf32>, vector<4x32x24xf32>, vector<4x8x24xf32> -> vector<4x8x24xf32>
    %684 = vector.broadcast %679 : vector<4x1x24xf32> to vector<4x8x24xf32>
    %685 = arith.addf %683, %684 : vector<4x8x24xf32>
    %686 = vector.extract_strided_slice %685 {offsets = [0, 0, 0], sizes = [4, 8, 8], strides = [1, 1, 1]} : vector<4x8x24xf32> to vector<4x8x8xf32>
    %687 = vector.extract_strided_slice %685 {offsets = [0, 0, 8], sizes = [4, 8, 8], strides = [1, 1, 1]} : vector<4x8x24xf32> to vector<4x8x8xf32>
    %688 = vector.extract_strided_slice %685 {offsets = [0, 0, 16], sizes = [4, 8, 8], strides = [1, 1, 1]} : vector<4x8x24xf32> to vector<4x8x8xf32>
    %cst_388 = arith.constant dense<0.000000e+00> : vector<4x8x8xf32>
    %689 = tpu.matmul %686, %687, %cst_388 {dimension_numbers = #tpu.dot_dimension_numbers<[2], [2], [1], [1], [0, 0, 0, 1, 1, 1], [0], [0]>} : vector<4x8x8xf32>, vector<4x8x8xf32>, vector<4x8x8xf32> -> vector<4x8x8xf32>
    %690 = vector.shape_cast %640 : vector<1x8xf32> to vector<1x1x8xf32>
    %691 = vector.broadcast %690 : vector<1x1x8xf32> to vector<4x8x8xf32>
    %692 = arith.addf %689, %691 : vector<4x8x8xf32>
    %cst_389 = arith.constant dense<0xFF800000> : vector<4x8xf32>
    %693 = vector.multi_reduction <maximumf>, %692, %cst_389 [2] : vector<4x8x8xf32> to vector<4x8xf32>
    %694 = vector.shape_cast %693 : vector<4x8xf32> to vector<4x8x1xf32>
    %695 = vector.broadcast %694 : vector<4x8x1xf32> to vector<4x8x8xf32>
    %696 = arith.subf %692, %695 : vector<4x8x8xf32>
    %697 = math.exp %696 : vector<4x8x8xf32>
    %cst_390 = arith.constant dense<0.000000e+00> : vector<4x8xf32>
    %698 = vector.multi_reduction <add>, %697, %cst_390 [2] : vector<4x8x8xf32> to vector<4x8xf32>
    %699 = vector.shape_cast %698 : vector<4x8xf32> to vector<4x8x1xf32>
    %700 = tpu.reciprocal %699 {approx = true} : vector<4x8x1xf32> -> vector<4x8x1xf32>
    %701 = vector.broadcast %700 : vector<4x8x1xf32> to vector<4x8x8xf32>
    %702 = arith.mulf %697, %701 : vector<4x8x8xf32>
    %cst_391 = arith.constant dense<0.000000e+00> : vector<4x8x8xf32>
    %703 = tpu.matmul %702, %688, %cst_391 {dimension_numbers = #tpu.dot_dimension_numbers<[2], [1], [1], [2], [0, 0, 0, 1, 1, 2], [0], [0]>} : vector<4x8x8xf32>, vector<4x8x8xf32>, vector<4x8x8xf32> -> vector<4x8x8xf32>
    %c0_392 = arith.constant 0 : index
    %c0_393 = arith.constant 0 : index
    %c0_394 = arith.constant 0 : index
    %c0_395 = arith.constant 0 : index
    %704 = vector.load %arg8[%c0_392, %c0_393, %c0_394, %c0_395] : memref<2x4x8x32xf32, #tpu.memory_space<vmem>>, vector<1x4x8x32xf32>
    %705 = vector.shape_cast %704 : vector<1x4x8x32xf32> to vector<4x8x32xf32>
    %c0_396 = arith.constant 0 : index
    %c0_397 = arith.constant 0 : index
    %c0_398 = arith.constant 0 : index
    %706 = vector.load %arg9[%c0_396, %c0_397, %c0_398] : memref<2x1x32xf32, #tpu.memory_space<vmem>>, vector<1x1x32xf32>
    %707 = vector.shape_cast %706 : vector<1x1x32xf32> to vector<1x32xf32>
    %cst_399 = arith.constant dense<0.000000e+00> : vector<4x8x32xf32>
    %708 = tpu.matmul %703, %705, %cst_399 {dimension_numbers = #tpu.dot_dimension_numbers<[2], [1], [1], [2], [0, 0, 0, 1, 1, 2], [0], [0]>} : vector<4x8x8xf32>, vector<4x8x32xf32>, vector<4x8x32xf32> -> vector<4x8x32xf32>
    %cst_400 = arith.constant dense<0.000000e+00> : vector<8x32xf32>
    %709 = vector.multi_reduction <add>, %708, %cst_400 [0] : vector<4x8x32xf32> to vector<8x32xf32>
    %710 = vector.broadcast %707 : vector<1x32xf32> to vector<8x32xf32>
    %711 = arith.addf %709, %710 : vector<8x32xf32>
    %712 = arith.addf %649, %711 : vector<8x32xf32>
    %c0_401 = arith.constant 0 : index
    %c0_402 = arith.constant 0 : index
    %c0_403 = arith.constant 0 : index
    %713 = vector.load %arg10[%c0_401, %c0_402, %c0_403] : memref<2x1x32xf32, #tpu.memory_space<vmem>>, vector<1x1x32xf32>
    %714 = vector.shape_cast %713 : vector<1x1x32xf32> to vector<1x32xf32>
    %c0_404 = arith.constant 0 : index
    %c0_405 = arith.constant 0 : index
    %c0_406 = arith.constant 0 : index
    %715 = vector.load %arg11[%c0_404, %c0_405, %c0_406] : memref<2x1x32xf32, #tpu.memory_space<vmem>>, vector<1x1x32xf32>
    %716 = vector.shape_cast %715 : vector<1x1x32xf32> to vector<1x32xf32>
    %cst_407 = arith.constant dense<0.000000e+00> : vector<8xf32>
    %717 = vector.multi_reduction <add>, %712, %cst_407 [1] : vector<8x32xf32> to vector<8xf32>
    %718 = vector.shape_cast %717 : vector<8xf32> to vector<8x1xf32>
    %cst_408 = arith.constant 3.200000e+01 : f32
    %719 = vector.broadcast %cst_408 : f32 to vector<8x1xf32>
    %720 = arith.divf %718, %719 : vector<8x1xf32>
    %721 = vector.broadcast %720 : vector<8x1xf32> to vector<8x32xf32>
    %722 = arith.subf %712, %721 : vector<8x32xf32>
    %723 = arith.mulf %722, %722 : vector<8x32xf32>
    %cst_409 = arith.constant dense<0.000000e+00> : vector<8xf32>
    %724 = vector.multi_reduction <add>, %723, %cst_409 [1] : vector<8x32xf32> to vector<8xf32>
    %725 = vector.shape_cast %724 : vector<8xf32> to vector<8x1xf32>
    %cst_410 = arith.constant 3.100000e+01 : f32
    %726 = vector.broadcast %cst_410 : f32 to vector<8x1xf32>
    %727 = arith.divf %725, %726 : vector<8x1xf32>
    %728 = vector.broadcast %720 : vector<8x1xf32> to vector<8x32xf32>
    %729 = arith.subf %712, %728 : vector<8x32xf32>
    %730 = vector.broadcast %714 : vector<1x32xf32> to vector<8x32xf32>
    %731 = arith.mulf %730, %729 : vector<8x32xf32>
    %732 = math.sqrt %727 : vector<8x1xf32>
    %cst_411 = arith.constant 9.99999997E-7 : f32
    %733 = vector.broadcast %cst_411 : f32 to vector<8x1xf32>
    %734 = arith.addf %732, %733 : vector<8x1xf32>
    %735 = vector.broadcast %734 : vector<8x1xf32> to vector<8x32xf32>
    %736 = arith.divf %731, %735 : vector<8x32xf32>
    %737 = vector.broadcast %716 : vector<1x32xf32> to vector<8x32xf32>
    %738 = arith.addf %736, %737 : vector<8x32xf32>
    %c0_412 = arith.constant 0 : index
    %c0_413 = arith.constant 0 : index
    %c0_414 = arith.constant 0 : index
    %739 = vector.load %arg12[%c0_412, %c0_413, %c0_414] : memref<2x32x64xf32, #tpu.memory_space<vmem>>, vector<1x32x64xf32>
    %740 = vector.shape_cast %739 : vector<1x32x64xf32> to vector<32x64xf32>
    %c0_415 = arith.constant 0 : index
    %c0_416 = arith.constant 0 : index
    %c0_417 = arith.constant 0 : index
    %741 = vector.load %arg13[%c0_415, %c0_416, %c0_417] : memref<2x1x64xf32, #tpu.memory_space<vmem>>, vector<1x1x64xf32>
    %742 = vector.shape_cast %741 : vector<1x1x64xf32> to vector<1x64xf32>
    %c0_418 = arith.constant 0 : index
    %c0_419 = arith.constant 0 : index
    %c0_420 = arith.constant 0 : index
    %743 = vector.load %arg14[%c0_418, %c0_419, %c0_420] : memref<2x64x32xf32, #tpu.memory_space<vmem>>, vector<1x64x32xf32>
    %744 = vector.shape_cast %743 : vector<1x64x32xf32> to vector<64x32xf32>
    %c0_421 = arith.constant 0 : index
    %c0_422 = arith.constant 0 : index
    %c0_423 = arith.constant 0 : index
    %745 = vector.load %arg15[%c0_421, %c0_422, %c0_423] : memref<2x1x32xf32, #tpu.memory_space<vmem>>, vector<1x1x32xf32>
    %746 = vector.shape_cast %745 : vector<1x1x32xf32> to vector<1x32xf32>
    %cst_424 = arith.constant dense<0.000000e+00> : vector<8x64xf32>
    %747 = tpu.matmul %738, %740, %cst_424 {dimension_numbers = #tpu.dot_dimension_numbers<[1], [0], [0], [1], [0, 0, 1, 1], [], []>} : vector<8x32xf32>, vector<32x64xf32>, vector<8x64xf32> -> vector<8x64xf32>
    %748 = vector.broadcast %742 : vector<1x64xf32> to vector<8x64xf32>
    %749 = arith.addf %747, %748 : vector<8x64xf32>
    %cst_425 = arith.constant 0.000000e+00 : f32
    %750 = vector.broadcast %cst_425 : f32 to vector<8x64xf32>
    %751 = arith.maximumf %749, %750 : vector<8x64xf32>
    %cst_426 = arith.constant dense<0.000000e+00> : vector<8x32xf32>
    %752 = tpu.matmul %751, %744, %cst_426 {dimension_numbers = #tpu.dot_dimension_numbers<[1], [0], [0], [1], [0, 0, 1, 1], [], []>} : vector<8x64xf32>, vector<64x32xf32>, vector<8x32xf32> -> vector<8x32xf32>
    %753 = vector.broadcast %746 : vector<1x32xf32> to vector<8x32xf32>
    %754 = arith.addf %752, %753 : vector<8x32xf32>
    %755 = arith.addf %712, %754 : vector<8x32xf32>
    %c1_427 = arith.constant 1 : index
    %c0_428 = arith.constant 0 : index
    %c0_429 = arith.constant 0 : index
    %756 = vector.load %arg4[%c1_427, %c0_428, %c0_429] : memref<2x1x32xf32, #tpu.memory_space<vmem>>, vector<1x1x32xf32>
    %757 = vector.shape_cast %756 : vector<1x1x32xf32> to vector<1x32xf32>
    %c1_430 = arith.constant 1 : index
    %c0_431 = arith.constant 0 : index
    %c0_432 = arith.constant 0 : index
    %758 = vector.load %arg5[%c1_430, %c0_431, %c0_432] : memref<2x1x32xf32, #tpu.memory_space<vmem>>, vector<1x1x32xf32>
    %759 = vector.shape_cast %758 : vector<1x1x32xf32> to vector<1x32xf32>
    %cst_433 = arith.constant dense<0.000000e+00> : vector<8xf32>
    %760 = vector.multi_reduction <add>, %755, %cst_433 [1] : vector<8x32xf32> to vector<8xf32>
    %761 = vector.shape_cast %760 : vector<8xf32> to vector<8x1xf32>
    %cst_434 = arith.constant 3.200000e+01 : f32
    %762 = vector.broadcast %cst_434 : f32 to vector<8x1xf32>
    %763 = arith.divf %761, %762 : vector<8x1xf32>
    %764 = vector.broadcast %763 : vector<8x1xf32> to vector<8x32xf32>
    %765 = arith.subf %755, %764 : vector<8x32xf32>
    %766 = arith.mulf %765, %765 : vector<8x32xf32>
    %cst_435 = arith.constant dense<0.000000e+00> : vector<8xf32>
    %767 = vector.multi_reduction <add>, %766, %cst_435 [1] : vector<8x32xf32> to vector<8xf32>
    %768 = vector.shape_cast %767 : vector<8xf32> to vector<8x1xf32>
    %cst_436 = arith.constant 3.100000e+01 : f32
    %769 = vector.broadcast %cst_436 : f32 to vector<8x1xf32>
    %770 = arith.divf %768, %769 : vector<8x1xf32>
    %771 = vector.broadcast %763 : vector<8x1xf32> to vector<8x32xf32>
    %772 = arith.subf %755, %771 : vector<8x32xf32>
    %773 = vector.broadcast %757 : vector<1x32xf32> to vector<8x32xf32>
    %774 = arith.mulf %773, %772 : vector<8x32xf32>
    %775 = math.sqrt %770 : vector<8x1xf32>
    %cst_437 = arith.constant 9.99999997E-7 : f32
    %776 = vector.broadcast %cst_437 : f32 to vector<8x1xf32>
    %777 = arith.addf %775, %776 : vector<8x1xf32>
    %778 = vector.broadcast %777 : vector<8x1xf32> to vector<8x32xf32>
    %779 = arith.divf %774, %778 : vector<8x32xf32>
    %780 = vector.broadcast %759 : vector<1x32xf32> to vector<8x32xf32>
    %781 = arith.addf %779, %780 : vector<8x32xf32>
    %c1_438 = arith.constant 1 : index
    %c0_439 = arith.constant 0 : index
    %c0_440 = arith.constant 0 : index
    %c0_441 = arith.constant 0 : index
    %782 = vector.load %arg6[%c1_438, %c0_439, %c0_440, %c0_441] : memref<2x4x32x24xf32, #tpu.memory_space<vmem>>, vector<1x4x32x24xf32>
    %783 = vector.shape_cast %782 : vector<1x4x32x24xf32> to vector<4x32x24xf32>
    %c1_442 = arith.constant 1 : index
    %c0_443 = arith.constant 0 : index
    %c0_444 = arith.constant 0 : index
    %c0_445 = arith.constant 0 : index
    %784 = vector.load %arg7[%c1_442, %c0_443, %c0_444, %c0_445] : memref<2x4x1x24xf32, #tpu.memory_space<vmem>>, vector<1x4x1x24xf32>
    %785 = vector.shape_cast %784 : vector<1x4x1x24xf32> to vector<4x1x24xf32>
    %786 = vector.shape_cast %781 : vector<8x32xf32> to vector<1x8x32xf32>
    %787 = vector.shape_cast %786 : vector<1x8x32xf32> to vector<1x8x32xf32>
    %788 = vector.broadcast %787 : vector<1x8x32xf32> to vector<4x8x32xf32>
    %cst_446 = arith.constant dense<0.000000e+00> : vector<4x8x24xf32>
    %789 = tpu.matmul %788, %783, %cst_446 {dimension_numbers = #tpu.dot_dimension_numbers<[2], [1], [1], [2], [0, 0, 0, 1, 1, 2], [0], [0]>} : vector<4x8x32xf32>, vector<4x32x24xf32>, vector<4x8x24xf32> -> vector<4x8x24xf32>
    %790 = vector.broadcast %785 : vector<4x1x24xf32> to vector<4x8x24xf32>
    %791 = arith.addf %789, %790 : vector<4x8x24xf32>
    %792 = vector.extract_strided_slice %791 {offsets = [0, 0, 0], sizes = [4, 8, 8], strides = [1, 1, 1]} : vector<4x8x24xf32> to vector<4x8x8xf32>
    %793 = vector.extract_strided_slice %791 {offsets = [0, 0, 8], sizes = [4, 8, 8], strides = [1, 1, 1]} : vector<4x8x24xf32> to vector<4x8x8xf32>
    %794 = vector.extract_strided_slice %791 {offsets = [0, 0, 16], sizes = [4, 8, 8], strides = [1, 1, 1]} : vector<4x8x24xf32> to vector<4x8x8xf32>
    %cst_447 = arith.constant dense<0.000000e+00> : vector<4x8x8xf32>
    %795 = tpu.matmul %792, %793, %cst_447 {dimension_numbers = #tpu.dot_dimension_numbers<[2], [2], [1], [1], [0, 0, 0, 1, 1, 1], [0], [0]>} : vector<4x8x8xf32>, vector<4x8x8xf32>, vector<4x8x8xf32> -> vector<4x8x8xf32>
    %796 = vector.shape_cast %640 : vector<1x8xf32> to vector<1x1x8xf32>
    %797 = vector.broadcast %796 : vector<1x1x8xf32> to vector<4x8x8xf32>
    %798 = arith.addf %795, %797 : vector<4x8x8xf32>
    %cst_448 = arith.constant dense<0xFF800000> : vector<4x8xf32>
    %799 = vector.multi_reduction <maximumf>, %798, %cst_448 [2] : vector<4x8x8xf32> to vector<4x8xf32>
    %800 = vector.shape_cast %799 : vector<4x8xf32> to vector<4x8x1xf32>
    %801 = vector.broadcast %800 : vector<4x8x1xf32> to vector<4x8x8xf32>
    %802 = arith.subf %798, %801 : vector<4x8x8xf32>
    %803 = math.exp %802 : vector<4x8x8xf32>
    %cst_449 = arith.constant dense<0.000000e+00> : vector<4x8xf32>
    %804 = vector.multi_reduction <add>, %803, %cst_449 [2] : vector<4x8x8xf32> to vector<4x8xf32>
    %805 = vector.shape_cast %804 : vector<4x8xf32> to vector<4x8x1xf32>
    %806 = tpu.reciprocal %805 {approx = true} : vector<4x8x1xf32> -> vector<4x8x1xf32>
    %807 = vector.broadcast %806 : vector<4x8x1xf32> to vector<4x8x8xf32>
    %808 = arith.mulf %803, %807 : vector<4x8x8xf32>
    %cst_450 = arith.constant dense<0.000000e+00> : vector<4x8x8xf32>
    %809 = tpu.matmul %808, %794, %cst_450 {dimension_numbers = #tpu.dot_dimension_numbers<[2], [1], [1], [2], [0, 0, 0, 1, 1, 2], [0], [0]>} : vector<4x8x8xf32>, vector<4x8x8xf32>, vector<4x8x8xf32> -> vector<4x8x8xf32>
    %c1_451 = arith.constant 1 : index
    %c0_452 = arith.constant 0 : index
    %c0_453 = arith.constant 0 : index
    %c0_454 = arith.constant 0 : index
    %810 = vector.load %arg8[%c1_451, %c0_452, %c0_453, %c0_454] : memref<2x4x8x32xf32, #tpu.memory_space<vmem>>, vector<1x4x8x32xf32>
    %811 = vector.shape_cast %810 : vector<1x4x8x32xf32> to vector<4x8x32xf32>
    %c1_455 = arith.constant 1 : index
    %c0_456 = arith.constant 0 : index
    %c0_457 = arith.constant 0 : index
    %812 = vector.load %arg9[%c1_455, %c0_456, %c0_457] : memref<2x1x32xf32, #tpu.memory_space<vmem>>, vector<1x1x32xf32>
    %813 = vector.shape_cast %812 : vector<1x1x32xf32> to vector<1x32xf32>
    %cst_458 = arith.constant dense<0.000000e+00> : vector<4x8x32xf32>
    %814 = tpu.matmul %809, %811, %cst_458 {dimension_numbers = #tpu.dot_dimension_numbers<[2], [1], [1], [2], [0, 0, 0, 1, 1, 2], [0], [0]>} : vector<4x8x8xf32>, vector<4x8x32xf32>, vector<4x8x32xf32> -> vector<4x8x32xf32>
    %cst_459 = arith.constant dense<0.000000e+00> : vector<8x32xf32>
    %815 = vector.multi_reduction <add>, %814, %cst_459 [0] : vector<4x8x32xf32> to vector<8x32xf32>
    %816 = vector.broadcast %813 : vector<1x32xf32> to vector<8x32xf32>
    %817 = arith.addf %815, %816 : vector<8x32xf32>
    %818 = arith.addf %755, %817 : vector<8x32xf32>
    %c1_460 = arith.constant 1 : index
    %c0_461 = arith.constant 0 : index
    %c0_462 = arith.constant 0 : index
    %819 = vector.load %arg10[%c1_460, %c0_461, %c0_462] : memref<2x1x32xf32, #tpu.memory_space<vmem>>, vector<1x1x32xf32>
    %820 = vector.shape_cast %819 : vector<1x1x32xf32> to vector<1x32xf32>
    %c1_463 = arith.constant 1 : index
    %c0_464 = arith.constant 0 : index
    %c0_465 = arith.constant 0 : index
    %821 = vector.load %arg11[%c1_463, %c0_464, %c0_465] : memref<2x1x32xf32, #tpu.memory_space<vmem>>, vector<1x1x32xf32>
    %822 = vector.shape_cast %821 : vector<1x1x32xf32> to vector<1x32xf32>
    %cst_466 = arith.constant dense<0.000000e+00> : vector<8xf32>
    %823 = vector.multi_reduction <add>, %818, %cst_466 [1] : vector<8x32xf32> to vector<8xf32>
    %824 = vector.shape_cast %823 : vector<8xf32> to vector<8x1xf32>
    %cst_467 = arith.constant 3.200000e+01 : f32
    %825 = vector.broadcast %cst_467 : f32 to vector<8x1xf32>
    %826 = arith.divf %824, %825 : vector<8x1xf32>
    %827 = vector.broadcast %826 : vector<8x1xf32> to vector<8x32xf32>
    %828 = arith.subf %818, %827 : vector<8x32xf32>
    %829 = arith.mulf %828, %828 : vector<8x32xf32>
    %cst_468 = arith.constant dense<0.000000e+00> : vector<8xf32>
    %830 = vector.multi_reduction <add>, %829, %cst_468 [1] : vector<8x32xf32> to vector<8xf32>
    %831 = vector.shape_cast %830 : vector<8xf32> to vector<8x1xf32>
    %cst_469 = arith.constant 3.100000e+01 : f32
    %832 = vector.broadcast %cst_469 : f32 to vector<8x1xf32>
    %833 = arith.divf %831, %832 : vector<8x1xf32>
    %834 = vector.broadcast %826 : vector<8x1xf32> to vector<8x32xf32>
    %835 = arith.subf %818, %834 : vector<8x32xf32>
    %836 = vector.broadcast %820 : vector<1x32xf32> to vector<8x32xf32>
    %837 = arith.mulf %836, %835 : vector<8x32xf32>
    %838 = math.sqrt %833 : vector<8x1xf32>
    %cst_470 = arith.constant 9.99999997E-7 : f32
    %839 = vector.broadcast %cst_470 : f32 to vector<8x1xf32>
    %840 = arith.addf %838, %839 : vector<8x1xf32>
    %841 = vector.broadcast %840 : vector<8x1xf32> to vector<8x32xf32>
    %842 = arith.divf %837, %841 : vector<8x32xf32>
    %843 = vector.broadcast %822 : vector<1x32xf32> to vector<8x32xf32>
    %844 = arith.addf %842, %843 : vector<8x32xf32>
    %c1_471 = arith.constant 1 : index
    %c0_472 = arith.constant 0 : index
    %c0_473 = arith.constant 0 : index
    %845 = vector.load %arg12[%c1_471, %c0_472, %c0_473] : memref<2x32x64xf32, #tpu.memory_space<vmem>>, vector<1x32x64xf32>
    %846 = vector.shape_cast %845 : vector<1x32x64xf32> to vector<32x64xf32>
    %c1_474 = arith.constant 1 : index
    %c0_475 = arith.constant 0 : index
    %c0_476 = arith.constant 0 : index
    %847 = vector.load %arg13[%c1_474, %c0_475, %c0_476] : memref<2x1x64xf32, #tpu.memory_space<vmem>>, vector<1x1x64xf32>
    %848 = vector.shape_cast %847 : vector<1x1x64xf32> to vector<1x64xf32>
    %c1_477 = arith.constant 1 : index
    %c0_478 = arith.constant 0 : index
    %c0_479 = arith.constant 0 : index
    %849 = vector.load %arg14[%c1_477, %c0_478, %c0_479] : memref<2x64x32xf32, #tpu.memory_space<vmem>>, vector<1x64x32xf32>
    %850 = vector.shape_cast %849 : vector<1x64x32xf32> to vector<64x32xf32>
    %c1_480 = arith.constant 1 : index
    %c0_481 = arith.constant 0 : index
    %c0_482 = arith.constant 0 : index
    %851 = vector.load %arg15[%c1_480, %c0_481, %c0_482] : memref<2x1x32xf32, #tpu.memory_space<vmem>>, vector<1x1x32xf32>
    %852 = vector.shape_cast %851 : vector<1x1x32xf32> to vector<1x32xf32>
    %cst_483 = arith.constant dense<0.000000e+00> : vector<8x64xf32>
    %853 = tpu.matmul %844, %846, %cst_483 {dimension_numbers = #tpu.dot_dimension_numbers<[1], [0], [0], [1], [0, 0, 1, 1], [], []>} : vector<8x32xf32>, vector<32x64xf32>, vector<8x64xf32> -> vector<8x64xf32>
    %854 = vector.broadcast %848 : vector<1x64xf32> to vector<8x64xf32>
    %855 = arith.addf %853, %854 : vector<8x64xf32>
    %cst_484 = arith.constant 0.000000e+00 : f32
    %856 = vector.broadcast %cst_484 : f32 to vector<8x64xf32>
    %857 = arith.maximumf %855, %856 : vector<8x64xf32>
    %cst_485 = arith.constant dense<0.000000e+00> : vector<8x32xf32>
    %858 = tpu.matmul %857, %850, %cst_485 {dimension_numbers = #tpu.dot_dimension_numbers<[1], [0], [0], [1], [0, 0, 1, 1], [], []>} : vector<8x64xf32>, vector<64x32xf32>, vector<8x32xf32> -> vector<8x32xf32>
    %859 = vector.broadcast %852 : vector<1x32xf32> to vector<8x32xf32>
    %860 = arith.addf %858, %859 : vector<8x32xf32>
    %861 = arith.addf %818, %860 : vector<8x32xf32>
    %c0_486 = arith.constant 0 : index
    %c0_487 = arith.constant 0 : index
    %862 = vector.load %arg16[%c0_486, %c0_487] : memref<1x32xf32, #tpu.memory_space<vmem>>, vector<1x32xf32>
    %c0_488 = arith.constant 0 : index
    %c0_489 = arith.constant 0 : index
    %863 = vector.load %arg17[%c0_488, %c0_489] : memref<1x32xf32, #tpu.memory_space<vmem>>, vector<1x32xf32>
    %cst_490 = arith.constant dense<0.000000e+00> : vector<8xf32>
    %864 = vector.multi_reduction <add>, %861, %cst_490 [1] : vector<8x32xf32> to vector<8xf32>
    %865 = vector.shape_cast %864 : vector<8xf32> to vector<8x1xf32>
    %cst_491 = arith.constant 3.200000e+01 : f32
    %866 = vector.broadcast %cst_491 : f32 to vector<8x1xf32>
    %867 = arith.divf %865, %866 : vector<8x1xf32>
    %868 = vector.broadcast %867 : vector<8x1xf32> to vector<8x32xf32>
    %869 = arith.subf %861, %868 : vector<8x32xf32>
    %870 = arith.mulf %869, %869 : vector<8x32xf32>
    %cst_492 = arith.constant dense<0.000000e+00> : vector<8xf32>
    %871 = vector.multi_reduction <add>, %870, %cst_492 [1] : vector<8x32xf32> to vector<8xf32>
    %872 = vector.shape_cast %871 : vector<8xf32> to vector<8x1xf32>
    %cst_493 = arith.constant 3.100000e+01 : f32
    %873 = vector.broadcast %cst_493 : f32 to vector<8x1xf32>
    %874 = arith.divf %872, %873 : vector<8x1xf32>
    %875 = vector.broadcast %867 : vector<8x1xf32> to vector<8x32xf32>
    %876 = arith.subf %861, %875 : vector<8x32xf32>
    %877 = vector.broadcast %862 : vector<1x32xf32> to vector<8x32xf32>
    %878 = arith.mulf %877, %876 : vector<8x32xf32>
    %879 = math.sqrt %874 : vector<8x1xf32>
    %cst_494 = arith.constant 9.99999997E-7 : f32
    %880 = vector.broadcast %cst_494 : f32 to vector<8x1xf32>
    %881 = arith.addf %879, %880 : vector<8x1xf32>
    %882 = vector.broadcast %881 : vector<8x1xf32> to vector<8x32xf32>
    %883 = arith.divf %878, %882 : vector<8x32xf32>
    %884 = vector.broadcast %863 : vector<1x32xf32> to vector<8x32xf32>
    %885 = arith.addf %883, %884 : vector<8x32xf32>
    %c1_495 = arith.constant 1 : index
    %c0_496 = arith.constant 0 : index
    %c0_497 = arith.constant 0 : index
    %886 = vector.load %arg1[%c1_495, %c0_496, %c0_497] : memref<2x8x32xf32, #tpu.memory_space<vmem>>, vector<1x8x32xf32>
    %887 = vector.shape_cast %886 : vector<1x8x32xf32> to vector<8x32xf32>
    %c0_498 = arith.constant 0 : index
    %c0_499 = arith.constant 0 : index
    %c0_500 = arith.constant 0 : index
    %888 = vector.load %arg18[%c0_498, %c0_499, %c0_500] : memref<2x1x32xf32, #tpu.memory_space<vmem>>, vector<1x1x32xf32>
    %889 = vector.shape_cast %888 : vector<1x1x32xf32> to vector<1x32xf32>
    %c0_501 = arith.constant 0 : index
    %c0_502 = arith.constant 0 : index
    %c0_503 = arith.constant 0 : index
    %890 = vector.load %arg19[%c0_501, %c0_502, %c0_503] : memref<2x1x32xf32, #tpu.memory_space<vmem>>, vector<1x1x32xf32>
    %891 = vector.shape_cast %890 : vector<1x1x32xf32> to vector<1x32xf32>
    %cst_504 = arith.constant dense<0.000000e+00> : vector<8xf32>
    %892 = vector.multi_reduction <add>, %887, %cst_504 [1] : vector<8x32xf32> to vector<8xf32>
    %893 = vector.shape_cast %892 : vector<8xf32> to vector<8x1xf32>
    %cst_505 = arith.constant 3.200000e+01 : f32
    %894 = vector.broadcast %cst_505 : f32 to vector<8x1xf32>
    %895 = arith.divf %893, %894 : vector<8x1xf32>
    %896 = vector.broadcast %895 : vector<8x1xf32> to vector<8x32xf32>
    %897 = arith.subf %887, %896 : vector<8x32xf32>
    %898 = arith.mulf %897, %897 : vector<8x32xf32>
    %cst_506 = arith.constant dense<0.000000e+00> : vector<8xf32>
    %899 = vector.multi_reduction <add>, %898, %cst_506 [1] : vector<8x32xf32> to vector<8xf32>
    %900 = vector.shape_cast %899 : vector<8xf32> to vector<8x1xf32>
    %cst_507 = arith.constant 3.100000e+01 : f32
    %901 = vector.broadcast %cst_507 : f32 to vector<8x1xf32>
    %902 = arith.divf %900, %901 : vector<8x1xf32>
    %903 = vector.broadcast %895 : vector<8x1xf32> to vector<8x32xf32>
    %904 = arith.subf %887, %903 : vector<8x32xf32>
    %905 = vector.broadcast %889 : vector<1x32xf32> to vector<8x32xf32>
    %906 = arith.mulf %905, %904 : vector<8x32xf32>
    %907 = math.sqrt %902 : vector<8x1xf32>
    %cst_508 = arith.constant 9.99999997E-7 : f32
    %908 = vector.broadcast %cst_508 : f32 to vector<8x1xf32>
    %909 = arith.addf %907, %908 : vector<8x1xf32>
    %910 = vector.broadcast %909 : vector<8x1xf32> to vector<8x32xf32>
    %911 = arith.divf %906, %910 : vector<8x32xf32>
    %912 = vector.broadcast %891 : vector<1x32xf32> to vector<8x32xf32>
    %913 = arith.addf %911, %912 : vector<8x32xf32>
    %c0_509 = arith.constant 0 : index
    %c0_510 = arith.constant 0 : index
    %c0_511 = arith.constant 0 : index
    %c0_512 = arith.constant 0 : index
    %914 = vector.load %arg20[%c0_509, %c0_510, %c0_511, %c0_512] : memref<2x4x32x24xf32, #tpu.memory_space<vmem>>, vector<1x4x32x24xf32>
    %915 = vector.shape_cast %914 : vector<1x4x32x24xf32> to vector<4x32x24xf32>
    %c0_513 = arith.constant 0 : index
    %c0_514 = arith.constant 0 : index
    %c0_515 = arith.constant 0 : index
    %c0_516 = arith.constant 0 : index
    %916 = vector.load %arg21[%c0_513, %c0_514, %c0_515, %c0_516] : memref<2x4x1x24xf32, #tpu.memory_space<vmem>>, vector<1x4x1x24xf32>
    %917 = vector.shape_cast %916 : vector<1x4x1x24xf32> to vector<4x1x24xf32>
    %918 = vector.shape_cast %913 : vector<8x32xf32> to vector<1x8x32xf32>
    %919 = vector.shape_cast %918 : vector<1x8x32xf32> to vector<1x8x32xf32>
    %920 = vector.broadcast %919 : vector<1x8x32xf32> to vector<4x8x32xf32>
    %cst_517 = arith.constant dense<0.000000e+00> : vector<4x8x24xf32>
    %921 = tpu.matmul %920, %915, %cst_517 {dimension_numbers = #tpu.dot_dimension_numbers<[2], [1], [1], [2], [0, 0, 0, 1, 1, 2], [0], [0]>} : vector<4x8x32xf32>, vector<4x32x24xf32>, vector<4x8x24xf32> -> vector<4x8x24xf32>
    %922 = vector.broadcast %917 : vector<4x1x24xf32> to vector<4x8x24xf32>
    %923 = arith.addf %921, %922 : vector<4x8x24xf32>
    %924 = vector.extract_strided_slice %923 {offsets = [0, 0, 0], sizes = [4, 8, 8], strides = [1, 1, 1]} : vector<4x8x24xf32> to vector<4x8x8xf32>
    %925 = vector.extract_strided_slice %923 {offsets = [0, 0, 8], sizes = [4, 8, 8], strides = [1, 1, 1]} : vector<4x8x24xf32> to vector<4x8x8xf32>
    %926 = vector.extract_strided_slice %923 {offsets = [0, 0, 16], sizes = [4, 8, 8], strides = [1, 1, 1]} : vector<4x8x24xf32> to vector<4x8x8xf32>
    %cst_518 = arith.constant dense<0.000000e+00> : vector<4x8x8xf32>
    %927 = tpu.matmul %924, %925, %cst_518 {dimension_numbers = #tpu.dot_dimension_numbers<[2], [2], [1], [1], [0, 0, 0, 1, 1, 1], [0], [0]>} : vector<4x8x8xf32>, vector<4x8x8xf32>, vector<4x8x8xf32> -> vector<4x8x8xf32>
    %928 = vector.shape_cast %647 : vector<8x8xf32> to vector<1x8x8xf32>
    %929 = vector.broadcast %928 : vector<1x8x8xf32> to vector<4x8x8xf32>
    %930 = arith.addf %927, %929 : vector<4x8x8xf32>
    %cst_519 = arith.constant dense<0xFF800000> : vector<4x8xf32>
    %931 = vector.multi_reduction <maximumf>, %930, %cst_519 [2] : vector<4x8x8xf32> to vector<4x8xf32>
    %932 = vector.shape_cast %931 : vector<4x8xf32> to vector<4x8x1xf32>
    %933 = vector.broadcast %932 : vector<4x8x1xf32> to vector<4x8x8xf32>
    %934 = arith.subf %930, %933 : vector<4x8x8xf32>
    %935 = math.exp %934 : vector<4x8x8xf32>
    %cst_520 = arith.constant dense<0.000000e+00> : vector<4x8xf32>
    %936 = vector.multi_reduction <add>, %935, %cst_520 [2] : vector<4x8x8xf32> to vector<4x8xf32>
    %937 = vector.shape_cast %936 : vector<4x8xf32> to vector<4x8x1xf32>
    %938 = tpu.reciprocal %937 {approx = true} : vector<4x8x1xf32> -> vector<4x8x1xf32>
    %939 = vector.broadcast %938 : vector<4x8x1xf32> to vector<4x8x8xf32>
    %940 = arith.mulf %935, %939 : vector<4x8x8xf32>
    %cst_521 = arith.constant dense<0.000000e+00> : vector<4x8x8xf32>
    %941 = tpu.matmul %940, %926, %cst_521 {dimension_numbers = #tpu.dot_dimension_numbers<[2], [1], [1], [2], [0, 0, 0, 1, 1, 2], [0], [0]>} : vector<4x8x8xf32>, vector<4x8x8xf32>, vector<4x8x8xf32> -> vector<4x8x8xf32>
    %c0_522 = arith.constant 0 : index
    %c0_523 = arith.constant 0 : index
    %c0_524 = arith.constant 0 : index
    %c0_525 = arith.constant 0 : index
    %942 = vector.load %arg22[%c0_522, %c0_523, %c0_524, %c0_525] : memref<2x4x8x32xf32, #tpu.memory_space<vmem>>, vector<1x4x8x32xf32>
    %943 = vector.shape_cast %942 : vector<1x4x8x32xf32> to vector<4x8x32xf32>
    %c0_526 = arith.constant 0 : index
    %c0_527 = arith.constant 0 : index
    %c0_528 = arith.constant 0 : index
    %944 = vector.load %arg23[%c0_526, %c0_527, %c0_528] : memref<2x1x32xf32, #tpu.memory_space<vmem>>, vector<1x1x32xf32>
    %945 = vector.shape_cast %944 : vector<1x1x32xf32> to vector<1x32xf32>
    %cst_529 = arith.constant dense<0.000000e+00> : vector<4x8x32xf32>
    %946 = tpu.matmul %941, %943, %cst_529 {dimension_numbers = #tpu.dot_dimension_numbers<[2], [1], [1], [2], [0, 0, 0, 1, 1, 2], [0], [0]>} : vector<4x8x8xf32>, vector<4x8x32xf32>, vector<4x8x32xf32> -> vector<4x8x32xf32>
    %cst_530 = arith.constant dense<0.000000e+00> : vector<8x32xf32>
    %947 = vector.multi_reduction <add>, %946, %cst_530 [0] : vector<4x8x32xf32> to vector<8x32xf32>
    %948 = vector.broadcast %945 : vector<1x32xf32> to vector<8x32xf32>
    %949 = arith.addf %947, %948 : vector<8x32xf32>
    %950 = arith.addf %887, %949 : vector<8x32xf32>
    %c0_531 = arith.constant 0 : index
    %c0_532 = arith.constant 0 : index
    %c0_533 = arith.constant 0 : index
    %951 = vector.load %arg24[%c0_531, %c0_532, %c0_533] : memref<2x1x32xf32, #tpu.memory_space<vmem>>, vector<1x1x32xf32>
    %952 = vector.shape_cast %951 : vector<1x1x32xf32> to vector<1x32xf32>
    %c0_534 = arith.constant 0 : index
    %c0_535 = arith.constant 0 : index
    %c0_536 = arith.constant 0 : index
    %953 = vector.load %arg25[%c0_534, %c0_535, %c0_536] : memref<2x1x32xf32, #tpu.memory_space<vmem>>, vector<1x1x32xf32>
    %954 = vector.shape_cast %953 : vector<1x1x32xf32> to vector<1x32xf32>
    %cst_537 = arith.constant dense<0.000000e+00> : vector<8xf32>
    %955 = vector.multi_reduction <add>, %950, %cst_537 [1] : vector<8x32xf32> to vector<8xf32>
    %956 = vector.shape_cast %955 : vector<8xf32> to vector<8x1xf32>
    %cst_538 = arith.constant 3.200000e+01 : f32
    %957 = vector.broadcast %cst_538 : f32 to vector<8x1xf32>
    %958 = arith.divf %956, %957 : vector<8x1xf32>
    %959 = vector.broadcast %958 : vector<8x1xf32> to vector<8x32xf32>
    %960 = arith.subf %950, %959 : vector<8x32xf32>
    %961 = arith.mulf %960, %960 : vector<8x32xf32>
    %cst_539 = arith.constant dense<0.000000e+00> : vector<8xf32>
    %962 = vector.multi_reduction <add>, %961, %cst_539 [1] : vector<8x32xf32> to vector<8xf32>
    %963 = vector.shape_cast %962 : vector<8xf32> to vector<8x1xf32>
    %cst_540 = arith.constant 3.100000e+01 : f32
    %964 = vector.broadcast %cst_540 : f32 to vector<8x1xf32>
    %965 = arith.divf %963, %964 : vector<8x1xf32>
    %966 = vector.broadcast %958 : vector<8x1xf32> to vector<8x32xf32>
    %967 = arith.subf %950, %966 : vector<8x32xf32>
    %968 = vector.broadcast %952 : vector<1x32xf32> to vector<8x32xf32>
    %969 = arith.mulf %968, %967 : vector<8x32xf32>
    %970 = math.sqrt %965 : vector<8x1xf32>
    %cst_541 = arith.constant 9.99999997E-7 : f32
    %971 = vector.broadcast %cst_541 : f32 to vector<8x1xf32>
    %972 = arith.addf %970, %971 : vector<8x1xf32>
    %973 = vector.broadcast %972 : vector<8x1xf32> to vector<8x32xf32>
    %974 = arith.divf %969, %973 : vector<8x32xf32>
    %975 = vector.broadcast %954 : vector<1x32xf32> to vector<8x32xf32>
    %976 = arith.addf %974, %975 : vector<8x32xf32>
    %c0_542 = arith.constant 0 : index
    %c0_543 = arith.constant 0 : index
    %c0_544 = arith.constant 0 : index
    %c0_545 = arith.constant 0 : index
    %977 = vector.load %arg26[%c0_542, %c0_543, %c0_544, %c0_545] : memref<2x4x32x8xf32, #tpu.memory_space<vmem>>, vector<1x4x32x8xf32>
    %978 = vector.shape_cast %977 : vector<1x4x32x8xf32> to vector<4x32x8xf32>
    %c0_546 = arith.constant 0 : index
    %c0_547 = arith.constant 0 : index
    %c0_548 = arith.constant 0 : index
    %c0_549 = arith.constant 0 : index
    %979 = vector.load %arg27[%c0_546, %c0_547, %c0_548, %c0_549] : memref<2x4x1x8xf32, #tpu.memory_space<vmem>>, vector<1x4x1x8xf32>
    %980 = vector.shape_cast %979 : vector<1x4x1x8xf32> to vector<4x1x8xf32>
    %981 = vector.shape_cast %976 : vector<8x32xf32> to vector<1x8x32xf32>
    %982 = vector.shape_cast %981 : vector<1x8x32xf32> to vector<1x8x32xf32>
    %983 = vector.broadcast %982 : vector<1x8x32xf32> to vector<4x8x32xf32>
    %cst_550 = arith.constant dense<0.000000e+00> : vector<4x8x8xf32>
    %984 = tpu.matmul %983, %978, %cst_550 {dimension_numbers = #tpu.dot_dimension_numbers<[2], [1], [1], [2], [0, 0, 0, 1, 1, 2], [0], [0]>} : vector<4x8x32xf32>, vector<4x32x8xf32>, vector<4x8x8xf32> -> vector<4x8x8xf32>
    %985 = vector.broadcast %980 : vector<4x1x8xf32> to vector<4x8x8xf32>
    %986 = arith.addf %984, %985 : vector<4x8x8xf32>
    %c0_551 = arith.constant 0 : index
    %c0_552 = arith.constant 0 : index
    %c0_553 = arith.constant 0 : index
    %c0_554 = arith.constant 0 : index
    %987 = vector.load %arg28[%c0_551, %c0_552, %c0_553, %c0_554] : memref<2x4x32x16xf32, #tpu.memory_space<vmem>>, vector<1x4x32x16xf32>
    %988 = vector.shape_cast %987 : vector<1x4x32x16xf32> to vector<4x32x16xf32>
    %c0_555 = arith.constant 0 : index
    %c0_556 = arith.constant 0 : index
    %c0_557 = arith.constant 0 : index
    %c0_558 = arith.constant 0 : index
    %989 = vector.load %arg29[%c0_555, %c0_556, %c0_557, %c0_558] : memref<2x4x1x16xf32, #tpu.memory_space<vmem>>, vector<1x4x1x16xf32>
    %990 = vector.shape_cast %989 : vector<1x4x1x16xf32> to vector<4x1x16xf32>
    %991 = vector.shape_cast %885 : vector<8x32xf32> to vector<1x8x32xf32>
    %992 = vector.shape_cast %991 : vector<1x8x32xf32> to vector<1x8x32xf32>
    %993 = vector.broadcast %992 : vector<1x8x32xf32> to vector<4x8x32xf32>
    %cst_559 = arith.constant dense<0.000000e+00> : vector<4x8x16xf32>
    %994 = tpu.matmul %993, %988, %cst_559 {dimension_numbers = #tpu.dot_dimension_numbers<[2], [1], [1], [2], [0, 0, 0, 1, 1, 2], [0], [0]>} : vector<4x8x32xf32>, vector<4x32x16xf32>, vector<4x8x16xf32> -> vector<4x8x16xf32>
    %995 = vector.broadcast %990 : vector<4x1x16xf32> to vector<4x8x16xf32>
    %996 = arith.addf %994, %995 : vector<4x8x16xf32>
    %997 = vector.extract_strided_slice %996 {offsets = [0, 0, 0], sizes = [4, 8, 8], strides = [1, 1, 1]} : vector<4x8x16xf32> to vector<4x8x8xf32>
    %998 = vector.extract_strided_slice %996 {offsets = [0, 0, 8], sizes = [4, 8, 8], strides = [1, 1, 1]} : vector<4x8x16xf32> to vector<4x8x8xf32>
    %cst_560 = arith.constant dense<0.000000e+00> : vector<4x8x8xf32>
    %999 = tpu.matmul %986, %997, %cst_560 {dimension_numbers = #tpu.dot_dimension_numbers<[2], [2], [1], [1], [0, 0, 0, 1, 1, 1], [0], [0]>} : vector<4x8x8xf32>, vector<4x8x8xf32>, vector<4x8x8xf32> -> vector<4x8x8xf32>
    %1000 = vector.shape_cast %640 : vector<1x8xf32> to vector<1x1x8xf32>
    %1001 = vector.broadcast %1000 : vector<1x1x8xf32> to vector<4x8x8xf32>
    %1002 = arith.addf %999, %1001 : vector<4x8x8xf32>
    %cst_561 = arith.constant dense<0xFF800000> : vector<4x8xf32>
    %1003 = vector.multi_reduction <maximumf>, %1002, %cst_561 [2] : vector<4x8x8xf32> to vector<4x8xf32>
    %1004 = vector.shape_cast %1003 : vector<4x8xf32> to vector<4x8x1xf32>
    %1005 = vector.broadcast %1004 : vector<4x8x1xf32> to vector<4x8x8xf32>
    %1006 = arith.subf %1002, %1005 : vector<4x8x8xf32>
    %1007 = math.exp %1006 : vector<4x8x8xf32>
    %cst_562 = arith.constant dense<0.000000e+00> : vector<4x8xf32>
    %1008 = vector.multi_reduction <add>, %1007, %cst_562 [2] : vector<4x8x8xf32> to vector<4x8xf32>
    %1009 = vector.shape_cast %1008 : vector<4x8xf32> to vector<4x8x1xf32>
    %1010 = tpu.reciprocal %1009 {approx = true} : vector<4x8x1xf32> -> vector<4x8x1xf32>
    %1011 = vector.broadcast %1010 : vector<4x8x1xf32> to vector<4x8x8xf32>
    %1012 = arith.mulf %1007, %1011 : vector<4x8x8xf32>
    %cst_563 = arith.constant dense<0.000000e+00> : vector<4x8x8xf32>
    %1013 = tpu.matmul %1012, %998, %cst_563 {dimension_numbers = #tpu.dot_dimension_numbers<[2], [1], [1], [2], [0, 0, 0, 1, 1, 2], [0], [0]>} : vector<4x8x8xf32>, vector<4x8x8xf32>, vector<4x8x8xf32> -> vector<4x8x8xf32>
    %c0_564 = arith.constant 0 : index
    %c0_565 = arith.constant 0 : index
    %c0_566 = arith.constant 0 : index
    %c0_567 = arith.constant 0 : index
    %1014 = vector.load %arg30[%c0_564, %c0_565, %c0_566, %c0_567] : memref<2x4x8x32xf32, #tpu.memory_space<vmem>>, vector<1x4x8x32xf32>
    %1015 = vector.shape_cast %1014 : vector<1x4x8x32xf32> to vector<4x8x32xf32>
    %c0_568 = arith.constant 0 : index
    %c0_569 = arith.constant 0 : index
    %c0_570 = arith.constant 0 : index
    %1016 = vector.load %arg31[%c0_568, %c0_569, %c0_570] : memref<2x1x32xf32, #tpu.memory_space<vmem>>, vector<1x1x32xf32>
    %1017 = vector.shape_cast %1016 : vector<1x1x32xf32> to vector<1x32xf32>
    %cst_571 = arith.constant dense<0.000000e+00> : vector<4x8x32xf32>
    %1018 = tpu.matmul %1013, %1015, %cst_571 {dimension_numbers = #tpu.dot_dimension_numbers<[2], [1], [1], [2], [0, 0, 0, 1, 1, 2], [0], [0]>} : vector<4x8x8xf32>, vector<4x8x32xf32>, vector<4x8x32xf32> -> vector<4x8x32xf32>
    %cst_572 = arith.constant dense<0.000000e+00> : vector<8x32xf32>
    %1019 = vector.multi_reduction <add>, %1018, %cst_572 [0] : vector<4x8x32xf32> to vector<8x32xf32>
    %1020 = vector.broadcast %1017 : vector<1x32xf32> to vector<8x32xf32>
    %1021 = arith.addf %1019, %1020 : vector<8x32xf32>
    %1022 = arith.addf %950, %1021 : vector<8x32xf32>
    %c0_573 = arith.constant 0 : index
    %c0_574 = arith.constant 0 : index
    %c0_575 = arith.constant 0 : index
    %1023 = vector.load %arg32[%c0_573, %c0_574, %c0_575] : memref<2x1x32xf32, #tpu.memory_space<vmem>>, vector<1x1x32xf32>
    %1024 = vector.shape_cast %1023 : vector<1x1x32xf32> to vector<1x32xf32>
    %c0_576 = arith.constant 0 : index
    %c0_577 = arith.constant 0 : index
    %c0_578 = arith.constant 0 : index
    %1025 = vector.load %arg33[%c0_576, %c0_577, %c0_578] : memref<2x1x32xf32, #tpu.memory_space<vmem>>, vector<1x1x32xf32>
    %1026 = vector.shape_cast %1025 : vector<1x1x32xf32> to vector<1x32xf32>
    %cst_579 = arith.constant dense<0.000000e+00> : vector<8xf32>
    %1027 = vector.multi_reduction <add>, %1022, %cst_579 [1] : vector<8x32xf32> to vector<8xf32>
    %1028 = vector.shape_cast %1027 : vector<8xf32> to vector<8x1xf32>
    %cst_580 = arith.constant 3.200000e+01 : f32
    %1029 = vector.broadcast %cst_580 : f32 to vector<8x1xf32>
    %1030 = arith.divf %1028, %1029 : vector<8x1xf32>
    %1031 = vector.broadcast %1030 : vector<8x1xf32> to vector<8x32xf32>
    %1032 = arith.subf %1022, %1031 : vector<8x32xf32>
    %1033 = arith.mulf %1032, %1032 : vector<8x32xf32>
    %cst_581 = arith.constant dense<0.000000e+00> : vector<8xf32>
    %1034 = vector.multi_reduction <add>, %1033, %cst_581 [1] : vector<8x32xf32> to vector<8xf32>
    %1035 = vector.shape_cast %1034 : vector<8xf32> to vector<8x1xf32>
    %cst_582 = arith.constant 3.100000e+01 : f32
    %1036 = vector.broadcast %cst_582 : f32 to vector<8x1xf32>
    %1037 = arith.divf %1035, %1036 : vector<8x1xf32>
    %1038 = vector.broadcast %1030 : vector<8x1xf32> to vector<8x32xf32>
    %1039 = arith.subf %1022, %1038 : vector<8x32xf32>
    %1040 = vector.broadcast %1024 : vector<1x32xf32> to vector<8x32xf32>
    %1041 = arith.mulf %1040, %1039 : vector<8x32xf32>
    %1042 = math.sqrt %1037 : vector<8x1xf32>
    %cst_583 = arith.constant 9.99999997E-7 : f32
    %1043 = vector.broadcast %cst_583 : f32 to vector<8x1xf32>
    %1044 = arith.addf %1042, %1043 : vector<8x1xf32>
    %1045 = vector.broadcast %1044 : vector<8x1xf32> to vector<8x32xf32>
    %1046 = arith.divf %1041, %1045 : vector<8x32xf32>
    %1047 = vector.broadcast %1026 : vector<1x32xf32> to vector<8x32xf32>
    %1048 = arith.addf %1046, %1047 : vector<8x32xf32>
    %c0_584 = arith.constant 0 : index
    %c0_585 = arith.constant 0 : index
    %c0_586 = arith.constant 0 : index
    %1049 = vector.load %arg34[%c0_584, %c0_585, %c0_586] : memref<2x32x64xf32, #tpu.memory_space<vmem>>, vector<1x32x64xf32>
    %1050 = vector.shape_cast %1049 : vector<1x32x64xf32> to vector<32x64xf32>
    %c0_587 = arith.constant 0 : index
    %c0_588 = arith.constant 0 : index
    %c0_589 = arith.constant 0 : index
    %1051 = vector.load %arg35[%c0_587, %c0_588, %c0_589] : memref<2x1x64xf32, #tpu.memory_space<vmem>>, vector<1x1x64xf32>
    %1052 = vector.shape_cast %1051 : vector<1x1x64xf32> to vector<1x64xf32>
    %c0_590 = arith.constant 0 : index
    %c0_591 = arith.constant 0 : index
    %c0_592 = arith.constant 0 : index
    %1053 = vector.load %arg36[%c0_590, %c0_591, %c0_592] : memref<2x64x32xf32, #tpu.memory_space<vmem>>, vector<1x64x32xf32>
    %1054 = vector.shape_cast %1053 : vector<1x64x32xf32> to vector<64x32xf32>
    %c0_593 = arith.constant 0 : index
    %c0_594 = arith.constant 0 : index
    %c0_595 = arith.constant 0 : index
    %1055 = vector.load %arg37[%c0_593, %c0_594, %c0_595] : memref<2x1x32xf32, #tpu.memory_space<vmem>>, vector<1x1x32xf32>
    %1056 = vector.shape_cast %1055 : vector<1x1x32xf32> to vector<1x32xf32>
    %cst_596 = arith.constant dense<0.000000e+00> : vector<8x64xf32>
    %1057 = tpu.matmul %1048, %1050, %cst_596 {dimension_numbers = #tpu.dot_dimension_numbers<[1], [0], [0], [1], [0, 0, 1, 1], [], []>} : vector<8x32xf32>, vector<32x64xf32>, vector<8x64xf32> -> vector<8x64xf32>
    %1058 = vector.broadcast %1052 : vector<1x64xf32> to vector<8x64xf32>
    %1059 = arith.addf %1057, %1058 : vector<8x64xf32>
    %cst_597 = arith.constant 0.000000e+00 : f32
    %1060 = vector.broadcast %cst_597 : f32 to vector<8x64xf32>
    %1061 = arith.maximumf %1059, %1060 : vector<8x64xf32>
    %cst_598 = arith.constant dense<0.000000e+00> : vector<8x32xf32>
    %1062 = tpu.matmul %1061, %1054, %cst_598 {dimension_numbers = #tpu.dot_dimension_numbers<[1], [0], [0], [1], [0, 0, 1, 1], [], []>} : vector<8x64xf32>, vector<64x32xf32>, vector<8x32xf32> -> vector<8x32xf32>
    %1063 = vector.broadcast %1056 : vector<1x32xf32> to vector<8x32xf32>
    %1064 = arith.addf %1062, %1063 : vector<8x32xf32>
    %1065 = arith.addf %1022, %1064 : vector<8x32xf32>
    %c1_599 = arith.constant 1 : index
    %c0_600 = arith.constant 0 : index
    %c0_601 = arith.constant 0 : index
    %1066 = vector.load %arg18[%c1_599, %c0_600, %c0_601] : memref<2x1x32xf32, #tpu.memory_space<vmem>>, vector<1x1x32xf32>
    %1067 = vector.shape_cast %1066 : vector<1x1x32xf32> to vector<1x32xf32>
    %c1_602 = arith.constant 1 : index
    %c0_603 = arith.constant 0 : index
    %c0_604 = arith.constant 0 : index
    %1068 = vector.load %arg19[%c1_602, %c0_603, %c0_604] : memref<2x1x32xf32, #tpu.memory_space<vmem>>, vector<1x1x32xf32>
    %1069 = vector.shape_cast %1068 : vector<1x1x32xf32> to vector<1x32xf32>
    %cst_605 = arith.constant dense<0.000000e+00> : vector<8xf32>
    %1070 = vector.multi_reduction <add>, %1065, %cst_605 [1] : vector<8x32xf32> to vector<8xf32>
    %1071 = vector.shape_cast %1070 : vector<8xf32> to vector<8x1xf32>
    %cst_606 = arith.constant 3.200000e+01 : f32
    %1072 = vector.broadcast %cst_606 : f32 to vector<8x1xf32>
    %1073 = arith.divf %1071, %1072 : vector<8x1xf32>
    %1074 = vector.broadcast %1073 : vector<8x1xf32> to vector<8x32xf32>
    %1075 = arith.subf %1065, %1074 : vector<8x32xf32>
    %1076 = arith.mulf %1075, %1075 : vector<8x32xf32>
    %cst_607 = arith.constant dense<0.000000e+00> : vector<8xf32>
    %1077 = vector.multi_reduction <add>, %1076, %cst_607 [1] : vector<8x32xf32> to vector<8xf32>
    %1078 = vector.shape_cast %1077 : vector<8xf32> to vector<8x1xf32>
    %cst_608 = arith.constant 3.100000e+01 : f32
    %1079 = vector.broadcast %cst_608 : f32 to vector<8x1xf32>
    %1080 = arith.divf %1078, %1079 : vector<8x1xf32>
    %1081 = vector.broadcast %1073 : vector<8x1xf32> to vector<8x32xf32>
    %1082 = arith.subf %1065, %1081 : vector<8x32xf32>
    %1083 = vector.broadcast %1067 : vector<1x32xf32> to vector<8x32xf32>
    %1084 = arith.mulf %1083, %1082 : vector<8x32xf32>
    %1085 = math.sqrt %1080 : vector<8x1xf32>
    %cst_609 = arith.constant 9.99999997E-7 : f32
    %1086 = vector.broadcast %cst_609 : f32 to vector<8x1xf32>
    %1087 = arith.addf %1085, %1086 : vector<8x1xf32>
    %1088 = vector.broadcast %1087 : vector<8x1xf32> to vector<8x32xf32>
    %1089 = arith.divf %1084, %1088 : vector<8x32xf32>
    %1090 = vector.broadcast %1069 : vector<1x32xf32> to vector<8x32xf32>
    %1091 = arith.addf %1089, %1090 : vector<8x32xf32>
    %c1_610 = arith.constant 1 : index
    %c0_611 = arith.constant 0 : index
    %c0_612 = arith.constant 0 : index
    %c0_613 = arith.constant 0 : index
    %1092 = vector.load %arg20[%c1_610, %c0_611, %c0_612, %c0_613] : memref<2x4x32x24xf32, #tpu.memory_space<vmem>>, vector<1x4x32x24xf32>
    %1093 = vector.shape_cast %1092 : vector<1x4x32x24xf32> to vector<4x32x24xf32>
    %c1_614 = arith.constant 1 : index
    %c0_615 = arith.constant 0 : index
    %c0_616 = arith.constant 0 : index
    %c0_617 = arith.constant 0 : index
    %1094 = vector.load %arg21[%c1_614, %c0_615, %c0_616, %c0_617] : memref<2x4x1x24xf32, #tpu.memory_space<vmem>>, vector<1x4x1x24xf32>
    %1095 = vector.shape_cast %1094 : vector<1x4x1x24xf32> to vector<4x1x24xf32>
    %1096 = vector.shape_cast %1091 : vector<8x32xf32> to vector<1x8x32xf32>
    %1097 = vector.shape_cast %1096 : vector<1x8x32xf32> to vector<1x8x32xf32>
    %1098 = vector.broadcast %1097 : vector<1x8x32xf32> to vector<4x8x32xf32>
    %cst_618 = arith.constant dense<0.000000e+00> : vector<4x8x24xf32>
    %1099 = tpu.matmul %1098, %1093, %cst_618 {dimension_numbers = #tpu.dot_dimension_numbers<[2], [1], [1], [2], [0, 0, 0, 1, 1, 2], [0], [0]>} : vector<4x8x32xf32>, vector<4x32x24xf32>, vector<4x8x24xf32> -> vector<4x8x24xf32>
    %1100 = vector.broadcast %1095 : vector<4x1x24xf32> to vector<4x8x24xf32>
    %1101 = arith.addf %1099, %1100 : vector<4x8x24xf32>
    %1102 = vector.extract_strided_slice %1101 {offsets = [0, 0, 0], sizes = [4, 8, 8], strides = [1, 1, 1]} : vector<4x8x24xf32> to vector<4x8x8xf32>
    %1103 = vector.extract_strided_slice %1101 {offsets = [0, 0, 8], sizes = [4, 8, 8], strides = [1, 1, 1]} : vector<4x8x24xf32> to vector<4x8x8xf32>
    %1104 = vector.extract_strided_slice %1101 {offsets = [0, 0, 16], sizes = [4, 8, 8], strides = [1, 1, 1]} : vector<4x8x24xf32> to vector<4x8x8xf32>
    %cst_619 = arith.constant dense<0.000000e+00> : vector<4x8x8xf32>
    %1105 = tpu.matmul %1102, %1103, %cst_619 {dimension_numbers = #tpu.dot_dimension_numbers<[2], [2], [1], [1], [0, 0, 0, 1, 1, 1], [0], [0]>} : vector<4x8x8xf32>, vector<4x8x8xf32>, vector<4x8x8xf32> -> vector<4x8x8xf32>
    %1106 = vector.shape_cast %647 : vector<8x8xf32> to vector<1x8x8xf32>
    %1107 = vector.broadcast %1106 : vector<1x8x8xf32> to vector<4x8x8xf32>
    %1108 = arith.addf %1105, %1107 : vector<4x8x8xf32>
    %cst_620 = arith.constant dense<0xFF800000> : vector<4x8xf32>
    %1109 = vector.multi_reduction <maximumf>, %1108, %cst_620 [2] : vector<4x8x8xf32> to vector<4x8xf32>
    %1110 = vector.shape_cast %1109 : vector<4x8xf32> to vector<4x8x1xf32>
    %1111 = vector.broadcast %1110 : vector<4x8x1xf32> to vector<4x8x8xf32>
    %1112 = arith.subf %1108, %1111 : vector<4x8x8xf32>
    %1113 = math.exp %1112 : vector<4x8x8xf32>
    %cst_621 = arith.constant dense<0.000000e+00> : vector<4x8xf32>
    %1114 = vector.multi_reduction <add>, %1113, %cst_621 [2] : vector<4x8x8xf32> to vector<4x8xf32>
    %1115 = vector.shape_cast %1114 : vector<4x8xf32> to vector<4x8x1xf32>
    %1116 = tpu.reciprocal %1115 {approx = true} : vector<4x8x1xf32> -> vector<4x8x1xf32>
    %1117 = vector.broadcast %1116 : vector<4x8x1xf32> to vector<4x8x8xf32>
    %1118 = arith.mulf %1113, %1117 : vector<4x8x8xf32>
    %cst_622 = arith.constant dense<0.000000e+00> : vector<4x8x8xf32>
    %1119 = tpu.matmul %1118, %1104, %cst_622 {dimension_numbers = #tpu.dot_dimension_numbers<[2], [1], [1], [2], [0, 0, 0, 1, 1, 2], [0], [0]>} : vector<4x8x8xf32>, vector<4x8x8xf32>, vector<4x8x8xf32> -> vector<4x8x8xf32>
    %c1_623 = arith.constant 1 : index
    %c0_624 = arith.constant 0 : index
    %c0_625 = arith.constant 0 : index
    %c0_626 = arith.constant 0 : index
    %1120 = vector.load %arg22[%c1_623, %c0_624, %c0_625, %c0_626] : memref<2x4x8x32xf32, #tpu.memory_space<vmem>>, vector<1x4x8x32xf32>
    %1121 = vector.shape_cast %1120 : vector<1x4x8x32xf32> to vector<4x8x32xf32>
    %c1_627 = arith.constant 1 : index
    %c0_628 = arith.constant 0 : index
    %c0_629 = arith.constant 0 : index
    %1122 = vector.load %arg23[%c1_627, %c0_628, %c0_629] : memref<2x1x32xf32, #tpu.memory_space<vmem>>, vector<1x1x32xf32>
    %1123 = vector.shape_cast %1122 : vector<1x1x32xf32> to vector<1x32xf32>
    %cst_630 = arith.constant dense<0.000000e+00> : vector<4x8x32xf32>
    %1124 = tpu.matmul %1119, %1121, %cst_630 {dimension_numbers = #tpu.dot_dimension_numbers<[2], [1], [1], [2], [0, 0, 0, 1, 1, 2], [0], [0]>} : vector<4x8x8xf32>, vector<4x8x32xf32>, vector<4x8x32xf32> -> vector<4x8x32xf32>
    %cst_631 = arith.constant dense<0.000000e+00> : vector<8x32xf32>
    %1125 = vector.multi_reduction <add>, %1124, %cst_631 [0] : vector<4x8x32xf32> to vector<8x32xf32>
    %1126 = vector.broadcast %1123 : vector<1x32xf32> to vector<8x32xf32>
    %1127 = arith.addf %1125, %1126 : vector<8x32xf32>
    %1128 = arith.addf %1065, %1127 : vector<8x32xf32>
    %c1_632 = arith.constant 1 : index
    %c0_633 = arith.constant 0 : index
    %c0_634 = arith.constant 0 : index
    %1129 = vector.load %arg24[%c1_632, %c0_633, %c0_634] : memref<2x1x32xf32, #tpu.memory_space<vmem>>, vector<1x1x32xf32>
    %1130 = vector.shape_cast %1129 : vector<1x1x32xf32> to vector<1x32xf32>
    %c1_635 = arith.constant 1 : index
    %c0_636 = arith.constant 0 : index
    %c0_637 = arith.constant 0 : index
    %1131 = vector.load %arg25[%c1_635, %c0_636, %c0_637] : memref<2x1x32xf32, #tpu.memory_space<vmem>>, vector<1x1x32xf32>
    %1132 = vector.shape_cast %1131 : vector<1x1x32xf32> to vector<1x32xf32>
    %cst_638 = arith.constant dense<0.000000e+00> : vector<8xf32>
    %1133 = vector.multi_reduction <add>, %1128, %cst_638 [1] : vector<8x32xf32> to vector<8xf32>
    %1134 = vector.shape_cast %1133 : vector<8xf32> to vector<8x1xf32>
    %cst_639 = arith.constant 3.200000e+01 : f32
    %1135 = vector.broadcast %cst_639 : f32 to vector<8x1xf32>
    %1136 = arith.divf %1134, %1135 : vector<8x1xf32>
    %1137 = vector.broadcast %1136 : vector<8x1xf32> to vector<8x32xf32>
    %1138 = arith.subf %1128, %1137 : vector<8x32xf32>
    %1139 = arith.mulf %1138, %1138 : vector<8x32xf32>
    %cst_640 = arith.constant dense<0.000000e+00> : vector<8xf32>
    %1140 = vector.multi_reduction <add>, %1139, %cst_640 [1] : vector<8x32xf32> to vector<8xf32>
    %1141 = vector.shape_cast %1140 : vector<8xf32> to vector<8x1xf32>
    %cst_641 = arith.constant 3.100000e+01 : f32
    %1142 = vector.broadcast %cst_641 : f32 to vector<8x1xf32>
    %1143 = arith.divf %1141, %1142 : vector<8x1xf32>
    %1144 = vector.broadcast %1136 : vector<8x1xf32> to vector<8x32xf32>
    %1145 = arith.subf %1128, %1144 : vector<8x32xf32>
    %1146 = vector.broadcast %1130 : vector<1x32xf32> to vector<8x32xf32>
    %1147 = arith.mulf %1146, %1145 : vector<8x32xf32>
    %1148 = math.sqrt %1143 : vector<8x1xf32>
    %cst_642 = arith.constant 9.99999997E-7 : f32
    %1149 = vector.broadcast %cst_642 : f32 to vector<8x1xf32>
    %1150 = arith.addf %1148, %1149 : vector<8x1xf32>
    %1151 = vector.broadcast %1150 : vector<8x1xf32> to vector<8x32xf32>
    %1152 = arith.divf %1147, %1151 : vector<8x32xf32>
    %1153 = vector.broadcast %1132 : vector<1x32xf32> to vector<8x32xf32>
    %1154 = arith.addf %1152, %1153 : vector<8x32xf32>
    %c1_643 = arith.constant 1 : index
    %c0_644 = arith.constant 0 : index
    %c0_645 = arith.constant 0 : index
    %c0_646 = arith.constant 0 : index
    %1155 = vector.load %arg26[%c1_643, %c0_644, %c0_645, %c0_646] : memref<2x4x32x8xf32, #tpu.memory_space<vmem>>, vector<1x4x32x8xf32>
    %1156 = vector.shape_cast %1155 : vector<1x4x32x8xf32> to vector<4x32x8xf32>
    %c1_647 = arith.constant 1 : index
    %c0_648 = arith.constant 0 : index
    %c0_649 = arith.constant 0 : index
    %c0_650 = arith.constant 0 : index
    %1157 = vector.load %arg27[%c1_647, %c0_648, %c0_649, %c0_650] : memref<2x4x1x8xf32, #tpu.memory_space<vmem>>, vector<1x4x1x8xf32>
    %1158 = vector.shape_cast %1157 : vector<1x4x1x8xf32> to vector<4x1x8xf32>
    %1159 = vector.shape_cast %1154 : vector<8x32xf32> to vector<1x8x32xf32>
    %1160 = vector.shape_cast %1159 : vector<1x8x32xf32> to vector<1x8x32xf32>
    %1161 = vector.broadcast %1160 : vector<1x8x32xf32> to vector<4x8x32xf32>
    %cst_651 = arith.constant dense<0.000000e+00> : vector<4x8x8xf32>
    %1162 = tpu.matmul %1161, %1156, %cst_651 {dimension_numbers = #tpu.dot_dimension_numbers<[2], [1], [1], [2], [0, 0, 0, 1, 1, 2], [0], [0]>} : vector<4x8x32xf32>, vector<4x32x8xf32>, vector<4x8x8xf32> -> vector<4x8x8xf32>
    %1163 = vector.broadcast %1158 : vector<4x1x8xf32> to vector<4x8x8xf32>
    %1164 = arith.addf %1162, %1163 : vector<4x8x8xf32>
    %c1_652 = arith.constant 1 : index
    %c0_653 = arith.constant 0 : index
    %c0_654 = arith.constant 0 : index
    %c0_655 = arith.constant 0 : index
    %1165 = vector.load %arg28[%c1_652, %c0_653, %c0_654, %c0_655] : memref<2x4x32x16xf32, #tpu.memory_space<vmem>>, vector<1x4x32x16xf32>
    %1166 = vector.shape_cast %1165 : vector<1x4x32x16xf32> to vector<4x32x16xf32>
    %c1_656 = arith.constant 1 : index
    %c0_657 = arith.constant 0 : index
    %c0_658 = arith.constant 0 : index
    %c0_659 = arith.constant 0 : index
    %1167 = vector.load %arg29[%c1_656, %c0_657, %c0_658, %c0_659] : memref<2x4x1x16xf32, #tpu.memory_space<vmem>>, vector<1x4x1x16xf32>
    %1168 = vector.shape_cast %1167 : vector<1x4x1x16xf32> to vector<4x1x16xf32>
    %1169 = vector.shape_cast %885 : vector<8x32xf32> to vector<1x8x32xf32>
    %1170 = vector.shape_cast %1169 : vector<1x8x32xf32> to vector<1x8x32xf32>
    %1171 = vector.broadcast %1170 : vector<1x8x32xf32> to vector<4x8x32xf32>
    %cst_660 = arith.constant dense<0.000000e+00> : vector<4x8x16xf32>
    %1172 = tpu.matmul %1171, %1166, %cst_660 {dimension_numbers = #tpu.dot_dimension_numbers<[2], [1], [1], [2], [0, 0, 0, 1, 1, 2], [0], [0]>} : vector<4x8x32xf32>, vector<4x32x16xf32>, vector<4x8x16xf32> -> vector<4x8x16xf32>
    %1173 = vector.broadcast %1168 : vector<4x1x16xf32> to vector<4x8x16xf32>
    %1174 = arith.addf %1172, %1173 : vector<4x8x16xf32>
    %1175 = vector.extract_strided_slice %1174 {offsets = [0, 0, 0], sizes = [4, 8, 8], strides = [1, 1, 1]} : vector<4x8x16xf32> to vector<4x8x8xf32>
    %1176 = vector.extract_strided_slice %1174 {offsets = [0, 0, 8], sizes = [4, 8, 8], strides = [1, 1, 1]} : vector<4x8x16xf32> to vector<4x8x8xf32>
    %cst_661 = arith.constant dense<0.000000e+00> : vector<4x8x8xf32>
    %1177 = tpu.matmul %1164, %1175, %cst_661 {dimension_numbers = #tpu.dot_dimension_numbers<[2], [2], [1], [1], [0, 0, 0, 1, 1, 1], [0], [0]>} : vector<4x8x8xf32>, vector<4x8x8xf32>, vector<4x8x8xf32> -> vector<4x8x8xf32>
    %1178 = vector.shape_cast %640 : vector<1x8xf32> to vector<1x1x8xf32>
    %1179 = vector.broadcast %1178 : vector<1x1x8xf32> to vector<4x8x8xf32>
    %1180 = arith.addf %1177, %1179 : vector<4x8x8xf32>
    %cst_662 = arith.constant dense<0xFF800000> : vector<4x8xf32>
    %1181 = vector.multi_reduction <maximumf>, %1180, %cst_662 [2] : vector<4x8x8xf32> to vector<4x8xf32>
    %1182 = vector.shape_cast %1181 : vector<4x8xf32> to vector<4x8x1xf32>
    %1183 = vector.broadcast %1182 : vector<4x8x1xf32> to vector<4x8x8xf32>
    %1184 = arith.subf %1180, %1183 : vector<4x8x8xf32>
    %1185 = math.exp %1184 : vector<4x8x8xf32>
    %cst_663 = arith.constant dense<0.000000e+00> : vector<4x8xf32>
    %1186 = vector.multi_reduction <add>, %1185, %cst_663 [2] : vector<4x8x8xf32> to vector<4x8xf32>
    %1187 = vector.shape_cast %1186 : vector<4x8xf32> to vector<4x8x1xf32>
    %1188 = tpu.reciprocal %1187 {approx = true} : vector<4x8x1xf32> -> vector<4x8x1xf32>
    %1189 = vector.broadcast %1188 : vector<4x8x1xf32> to vector<4x8x8xf32>
    %1190 = arith.mulf %1185, %1189 : vector<4x8x8xf32>
    %cst_664 = arith.constant dense<0.000000e+00> : vector<4x8x8xf32>
    %1191 = tpu.matmul %1190, %1176, %cst_664 {dimension_numbers = #tpu.dot_dimension_numbers<[2], [1], [1], [2], [0, 0, 0, 1, 1, 2], [0], [0]>} : vector<4x8x8xf32>, vector<4x8x8xf32>, vector<4x8x8xf32> -> vector<4x8x8xf32>
    %c1_665 = arith.constant 1 : index
    %c0_666 = arith.constant 0 : index
    %c0_667 = arith.constant 0 : index
    %c0_668 = arith.constant 0 : index
    %1192 = vector.load %arg30[%c1_665, %c0_666, %c0_667, %c0_668] : memref<2x4x8x32xf32, #tpu.memory_space<vmem>>, vector<1x4x8x32xf32>
    %1193 = vector.shape_cast %1192 : vector<1x4x8x32xf32> to vector<4x8x32xf32>
    %c1_669 = arith.constant 1 : index
    %c0_670 = arith.constant 0 : index
    %c0_671 = arith.constant 0 : index
    %1194 = vector.load %arg31[%c1_669, %c0_670, %c0_671] : memref<2x1x32xf32, #tpu.memory_space<vmem>>, vector<1x1x32xf32>
    %1195 = vector.shape_cast %1194 : vector<1x1x32xf32> to vector<1x32xf32>
    %cst_672 = arith.constant dense<0.000000e+00> : vector<4x8x32xf32>
    %1196 = tpu.matmul %1191, %1193, %cst_672 {dimension_numbers = #tpu.dot_dimension_numbers<[2], [1], [1], [2], [0, 0, 0, 1, 1, 2], [0], [0]>} : vector<4x8x8xf32>, vector<4x8x32xf32>, vector<4x8x32xf32> -> vector<4x8x32xf32>
    %cst_673 = arith.constant dense<0.000000e+00> : vector<8x32xf32>
    %1197 = vector.multi_reduction <add>, %1196, %cst_673 [0] : vector<4x8x32xf32> to vector<8x32xf32>
    %1198 = vector.broadcast %1195 : vector<1x32xf32> to vector<8x32xf32>
    %1199 = arith.addf %1197, %1198 : vector<8x32xf32>
    %1200 = arith.addf %1128, %1199 : vector<8x32xf32>
    %c1_674 = arith.constant 1 : index
    %c0_675 = arith.constant 0 : index
    %c0_676 = arith.constant 0 : index
    %1201 = vector.load %arg32[%c1_674, %c0_675, %c0_676] : memref<2x1x32xf32, #tpu.memory_space<vmem>>, vector<1x1x32xf32>
    %1202 = vector.shape_cast %1201 : vector<1x1x32xf32> to vector<1x32xf32>
    %c1_677 = arith.constant 1 : index
    %c0_678 = arith.constant 0 : index
    %c0_679 = arith.constant 0 : index
    %1203 = vector.load %arg33[%c1_677, %c0_678, %c0_679] : memref<2x1x32xf32, #tpu.memory_space<vmem>>, vector<1x1x32xf32>
    %1204 = vector.shape_cast %1203 : vector<1x1x32xf32> to vector<1x32xf32>
    %cst_680 = arith.constant dense<0.000000e+00> : vector<8xf32>
    %1205 = vector.multi_reduction <add>, %1200, %cst_680 [1] : vector<8x32xf32> to vector<8xf32>
    %1206 = vector.shape_cast %1205 : vector<8xf32> to vector<8x1xf32>
    %cst_681 = arith.constant 3.200000e+01 : f32
    %1207 = vector.broadcast %cst_681 : f32 to vector<8x1xf32>
    %1208 = arith.divf %1206, %1207 : vector<8x1xf32>
    %1209 = vector.broadcast %1208 : vector<8x1xf32> to vector<8x32xf32>
    %1210 = arith.subf %1200, %1209 : vector<8x32xf32>
    %1211 = arith.mulf %1210, %1210 : vector<8x32xf32>
    %cst_682 = arith.constant dense<0.000000e+00> : vector<8xf32>
    %1212 = vector.multi_reduction <add>, %1211, %cst_682 [1] : vector<8x32xf32> to vector<8xf32>
    %1213 = vector.shape_cast %1212 : vector<8xf32> to vector<8x1xf32>
    %cst_683 = arith.constant 3.100000e+01 : f32
    %1214 = vector.broadcast %cst_683 : f32 to vector<8x1xf32>
    %1215 = arith.divf %1213, %1214 : vector<8x1xf32>
    %1216 = vector.broadcast %1208 : vector<8x1xf32> to vector<8x32xf32>
    %1217 = arith.subf %1200, %1216 : vector<8x32xf32>
    %1218 = vector.broadcast %1202 : vector<1x32xf32> to vector<8x32xf32>
    %1219 = arith.mulf %1218, %1217 : vector<8x32xf32>
    %1220 = math.sqrt %1215 : vector<8x1xf32>
    %cst_684 = arith.constant 9.99999997E-7 : f32
    %1221 = vector.broadcast %cst_684 : f32 to vector<8x1xf32>
    %1222 = arith.addf %1220, %1221 : vector<8x1xf32>
    %1223 = vector.broadcast %1222 : vector<8x1xf32> to vector<8x32xf32>
    %1224 = arith.divf %1219, %1223 : vector<8x32xf32>
    %1225 = vector.broadcast %1204 : vector<1x32xf32> to vector<8x32xf32>
    %1226 = arith.addf %1224, %1225 : vector<8x32xf32>
    %c1_685 = arith.constant 1 : index
    %c0_686 = arith.constant 0 : index
    %c0_687 = arith.constant 0 : index
    %1227 = vector.load %arg34[%c1_685, %c0_686, %c0_687] : memref<2x32x64xf32, #tpu.memory_space<vmem>>, vector<1x32x64xf32>
    %1228 = vector.shape_cast %1227 : vector<1x32x64xf32> to vector<32x64xf32>
    %c1_688 = arith.constant 1 : index
    %c0_689 = arith.constant 0 : index
    %c0_690 = arith.constant 0 : index
    %1229 = vector.load %arg35[%c1_688, %c0_689, %c0_690] : memref<2x1x64xf32, #tpu.memory_space<vmem>>, vector<1x1x64xf32>
    %1230 = vector.shape_cast %1229 : vector<1x1x64xf32> to vector<1x64xf32>
    %c1_691 = arith.constant 1 : index
    %c0_692 = arith.constant 0 : index
    %c0_693 = arith.constant 0 : index
    %1231 = vector.load %arg36[%c1_691, %c0_692, %c0_693] : memref<2x64x32xf32, #tpu.memory_space<vmem>>, vector<1x64x32xf32>
    %1232 = vector.shape_cast %1231 : vector<1x64x32xf32> to vector<64x32xf32>
    %c1_694 = arith.constant 1 : index
    %c0_695 = arith.constant 0 : index
    %c0_696 = arith.constant 0 : index
    %1233 = vector.load %arg37[%c1_694, %c0_695, %c0_696] : memref<2x1x32xf32, #tpu.memory_space<vmem>>, vector<1x1x32xf32>
    %1234 = vector.shape_cast %1233 : vector<1x1x32xf32> to vector<1x32xf32>
    %cst_697 = arith.constant dense<0.000000e+00> : vector<8x64xf32>
    %1235 = tpu.matmul %1226, %1228, %cst_697 {dimension_numbers = #tpu.dot_dimension_numbers<[1], [0], [0], [1], [0, 0, 1, 1], [], []>} : vector<8x32xf32>, vector<32x64xf32>, vector<8x64xf32> -> vector<8x64xf32>
    %1236 = vector.broadcast %1230 : vector<1x64xf32> to vector<8x64xf32>
    %1237 = arith.addf %1235, %1236 : vector<8x64xf32>
    %cst_698 = arith.constant 0.000000e+00 : f32
    %1238 = vector.broadcast %cst_698 : f32 to vector<8x64xf32>
    %1239 = arith.maximumf %1237, %1238 : vector<8x64xf32>
    %cst_699 = arith.constant dense<0.000000e+00> : vector<8x32xf32>
    %1240 = tpu.matmul %1239, %1232, %cst_699 {dimension_numbers = #tpu.dot_dimension_numbers<[1], [0], [0], [1], [0, 0, 1, 1], [], []>} : vector<8x64xf32>, vector<64x32xf32>, vector<8x32xf32> -> vector<8x32xf32>
    %1241 = vector.broadcast %1234 : vector<1x32xf32> to vector<8x32xf32>
    %1242 = arith.addf %1240, %1241 : vector<8x32xf32>
    %1243 = arith.addf %1200, %1242 : vector<8x32xf32>
    %c0_700 = arith.constant 0 : index
    %c0_701 = arith.constant 0 : index
    %1244 = vector.load %arg38[%c0_700, %c0_701] : memref<1x32xf32, #tpu.memory_space<vmem>>, vector<1x32xf32>
    %c0_702 = arith.constant 0 : index
    %c0_703 = arith.constant 0 : index
    %1245 = vector.load %arg39[%c0_702, %c0_703] : memref<1x32xf32, #tpu.memory_space<vmem>>, vector<1x32xf32>
    %cst_704 = arith.constant dense<0.000000e+00> : vector<8xf32>
    %1246 = vector.multi_reduction <add>, %1243, %cst_704 [1] : vector<8x32xf32> to vector<8xf32>
    %1247 = vector.shape_cast %1246 : vector<8xf32> to vector<8x1xf32>
    %cst_705 = arith.constant 3.200000e+01 : f32
    %1248 = vector.broadcast %cst_705 : f32 to vector<8x1xf32>
    %1249 = arith.divf %1247, %1248 : vector<8x1xf32>
    %1250 = vector.broadcast %1249 : vector<8x1xf32> to vector<8x32xf32>
    %1251 = arith.subf %1243, %1250 : vector<8x32xf32>
    %1252 = arith.mulf %1251, %1251 : vector<8x32xf32>
    %cst_706 = arith.constant dense<0.000000e+00> : vector<8xf32>
    %1253 = vector.multi_reduction <add>, %1252, %cst_706 [1] : vector<8x32xf32> to vector<8xf32>
    %1254 = vector.shape_cast %1253 : vector<8xf32> to vector<8x1xf32>
    %cst_707 = arith.constant 3.100000e+01 : f32
    %1255 = vector.broadcast %cst_707 : f32 to vector<8x1xf32>
    %1256 = arith.divf %1254, %1255 : vector<8x1xf32>
    %1257 = vector.broadcast %1249 : vector<8x1xf32> to vector<8x32xf32>
    %1258 = arith.subf %1243, %1257 : vector<8x32xf32>
    %1259 = vector.broadcast %1244 : vector<1x32xf32> to vector<8x32xf32>
    %1260 = arith.mulf %1259, %1258 : vector<8x32xf32>
    %1261 = math.sqrt %1256 : vector<8x1xf32>
    %cst_708 = arith.constant 9.99999997E-7 : f32
    %1262 = vector.broadcast %cst_708 : f32 to vector<8x1xf32>
    %1263 = arith.addf %1261, %1262 : vector<8x1xf32>
    %1264 = vector.broadcast %1263 : vector<8x1xf32> to vector<8x32xf32>
    %1265 = arith.divf %1260, %1264 : vector<8x32xf32>
    %1266 = vector.broadcast %1245 : vector<1x32xf32> to vector<8x32xf32>
    %1267 = arith.addf %1265, %1266 : vector<8x32xf32>
    %1268 = vector.shape_cast %633 : vector<8x32xf32> to vector<1x8x32xf32>
    %1269 = vector.shape_cast %1267 : vector<8x32xf32> to vector<1x8x32xf32>
    %1270 = tpu.concatenate %1268, %1269 in 0 : vector<1x8x32xf32>, vector<1x8x32xf32> -> vector<2x8x32xf32>
    %c0_709 = arith.constant 0 : index
    %c0_710 = arith.constant 0 : index
    %c0_711 = arith.constant 0 : index
    %1271 = vector.load %arg40[%c0_709, %c0_710, %c0_711] : memref<2x8x32xf32, #tpu.memory_space<vmem>>, vector<2x8x32xf32>
    tpu.vector_store %arg40[%c0_709, %c0_710, %c0_711], %1270 {strides = array<i32>} : memref<2x8x32xf32, #tpu.memory_space<vmem>>, vector<2x8x32xf32>,
    return
  }
}

</mosaic_0001>

<llo_original>
// kernel: tpu_custom_call.1
$region0: #{tpu_custom_call.1}
  #allocation0 [shape = 'u32[]', space=smem, size = 0x4, offset = 0x4, fixed_abs, tag = 'smem constant byte address 0x4 - core index']
  #allocation1 [shape = 'u32[72,128]{1,0:T(1,128)}', space=vmem, size = 0x9000, scoped, tag = 'internal scratch']
  %s0 = inlined_call_operand.smem [shape: u32[41], index: -1, kind: input, shape index: {}]
  %s1 = sld [smem:[%s0]]
  %s2 = scalar_lea.smem %s0, 1
  %s3 = sld [smem:[%s2]]
  %s4 = scalar_lea.smem %s0, 2
  %s5 = sld [smem:[%s4]]
  %s6 = scalar_lea.smem %s0, 3
  %s7 = sld [smem:[%s6]]
  %s8 = scalar_lea.smem %s0, 4
  %s9 = sld [smem:[%s8]]
  %s10 = scalar_lea.smem %s0, 5
  %s11 = sld [smem:[%s10]]
  %s12 = scalar_lea.smem %s0, 6
  %s13 = sld [smem:[%s12]]
  %s14 = scalar_lea.smem %s0, 7
  %s15 = sld [smem:[%s14]]
  %s16 = scalar_lea.smem %s0, 8
  %s17 = sld [smem:[%s16]]
  %s18 = scalar_lea.smem %s0, 9
  %s19 = sld [smem:[%s18]]
  %s20 = scalar_lea.smem %s0, 10
  %s21 = sld [smem:[%s20]]
  %s22 = scalar_lea.smem %s0, 11
  %s23 = sld [smem:[%s22]]
  %s24 = scalar_lea.smem %s0, 12
  %s25 = sld [smem:[%s24]]
  %s26 = scalar_lea.smem %s0, 13
  %s27 = sld [smem:[%s26]]
  %s28 = scalar_lea.smem %s0, 14
  %s29 = sld [smem:[%s28]]
  %s30 = scalar_lea.smem %s0, 15
  %s31 = sld [smem:[%s30]]
  %s32 = scalar_lea.smem %s0, 16
  %s33 = sld [smem:[%s32]]
  %s34 = scalar_lea.smem %s0, 17
  %s35 = sld [smem:[%s34]]
  %s36 = scalar_lea.smem %s0, 18
  %s37 = sld [smem:[%s36]]
  %s38 = scalar_lea.smem %s0, 19
  %s39 = sld [smem:[%s38]]
  %s40 = scalar_lea.smem %s0, 20
  %s41 = sld [smem:[%s40]]
  %s42 = scalar_lea.smem %s0, 21
  %s43 = sld [smem:[%s42]]
  %s44 = scalar_lea.smem %s0, 22
  %s45 = sld [smem:[%s44]]
  %s46 = scalar_lea.smem %s0, 23
  %s47 = sld [smem:[%s46]]
  %s48 = scalar_lea.smem %s0, 24
  %s49 = sld [smem:[%s48]]
  %s50 = scalar_lea.smem %s0, 25
  %s51 = sld [smem:[%s50]]
  %s52 = scalar_lea.smem %s0, 26
  %s53 = sld [smem:[%s52]]
  %s54 = scalar_lea.smem %s0, 27
  %s55 = sld [smem:[%s54]]
  %s56 = scalar_lea.smem %s0, 28
  %s57 = sld [smem:[%s56]]
  %s58 = scalar_lea.smem %s0, 29
  %s59 = sld [smem:[%s58]]
  %s60 = scalar_lea.smem %s0, 30
  %s61 = sld [smem:[%s60]]
  %s62 = scalar_lea.smem %s0, 31
  %s63 = sld [smem:[%s62]]
  %s64 = scalar_lea.smem %s0, 32
  %s65 = sld [smem:[%s64]]
  %s66 = scalar_lea.smem %s0, 33
  %s67 = sld [smem:[%s66]]
  %s68 = scalar_lea.smem %s0, 34
  %s69 = sld [smem:[%s68]]
  %s70 = scalar_lea.smem %s0, 35
  %s71 = sld [smem:[%s70]]
  %s72 = scalar_lea.smem %s0, 36
  %s73 = sld [smem:[%s72]]
  %s74 = scalar_lea.smem %s0, 37
  %s75 = sld [smem:[%s74]]
  %s76 = scalar_lea.smem %s0, 38
  %s77 = sld [smem:[%s76]]
  %s78 = scalar_lea.smem %s0, 39
  %s79 = sld [smem:[%s78]]
  %s80 = scalar_lea.smem %s0, 40
  %s81 = sld [smem:[%s80]]
  %s82 = sld [smem:[#allocation0]]
  $region170: #{tpu_custom_call.1} parent=0
    _
  %s84 = ssub.s32 1, %s82
  %s85 = scalar_select 0, %s84, %s82
  $region1: #{tpu_custom_call.1} parent=0
    #allocation2 [shape = 'u8[8192]{0}', space=vmem, size = 0x2000, scoped, tag = 'output window, operand 0, single buffered']
    #allocation3 [shape = 's32[1]{0}', space=sflag, size = 0x4, scoped, tag = 'scoped memory for tpu_custom_call.1']
    %86 = vsyncpa [#allocation3], 0
    // Predicated region
    $region2: #{tpu_custom_call.1} parent=1 // pred_check
      _
    $region3: #{tpu_custom_call.1} parent=1 // pred_check_branch
      %88 = sbr.rel (0) target = $region5
    $region4: #{tpu_custom_call.1} parent=1 // pred_region
      _
    $region5: #{tpu_custom_call.1} parent=1 // pred_fallthru
      _
    // Predicated region
    $region6: #{tpu_custom_call.1} parent=1 // pred_check
      _
    $region7: #{tpu_custom_call.1} parent=1 // pred_check_branch
      %90 = sbr.rel (0) target = $region9
    $region8: #{tpu_custom_call.1} parent=1 // pred_region
      _
    $region9: #{tpu_custom_call.1} parent=1 // pred_fallthru
      _
    // Predicated region
    $region10: #{tpu_custom_call.1} parent=1 // pred_check
      _
    $region11: #{tpu_custom_call.1} parent=1 // pred_check_branch
      %92 = sbr.rel (0) target = $region13
    $region12: #{tpu_custom_call.1} parent=1 // pred_region
      _
    $region13: #{tpu_custom_call.1} parent=1 // pred_fallthru
      _
    // Predicated region
    $region14: #{tpu_custom_call.1} parent=1 // pred_check
      _
    $region15: #{tpu_custom_call.1} parent=1 // pred_check_branch
      %94 = sbr.rel (0) target = $region17
    $region16: #{tpu_custom_call.1} parent=1 // pred_region
      _
    $region17: #{tpu_custom_call.1} parent=1 // pred_fallthru
      _
    // Predicated region
    $region18: #{tpu_custom_call.1} parent=1 // pred_check
      _
    $region19: #{tpu_custom_call.1} parent=1 // pred_check_branch
      %96 = sbr.rel (0) target = $region21
    $region20: #{tpu_custom_call.1} parent=1 // pred_region
      _
    $region21: #{tpu_custom_call.1} parent=1 // pred_fallthru
      _
    // Predicated region
    $region22: #{tpu_custom_call.1} parent=1 // pred_check
      _
    $region23: #{tpu_custom_call.1} parent=1 // pred_check_branch
      %98 = sbr.rel (0) target = $region25
    $region24: #{tpu_custom_call.1} parent=1 // pred_region
      _
    $region25: #{tpu_custom_call.1} parent=1 // pred_fallthru
      _
    // Predicated region
    $region26: #{tpu_custom_call.1} parent=1 // pred_check
      _
    $region27: #{tpu_custom_call.1} parent=1 // pred_check_branch
      %100 = sbr.rel (0) target = $region29
    $region28: #{tpu_custom_call.1} parent=1 // pred_region
      _
    $region29: #{tpu_custom_call.1} parent=1 // pred_fallthru
      _
    // Predicated region
    $region30: #{tpu_custom_call.1} parent=1 // pred_check
      _
    $region31: #{tpu_custom_call.1} parent=1 // pred_check_branch
      %102 = sbr.rel (0) target = $region33
    $region32: #{tpu_custom_call.1} parent=1 // pred_region
      _
    $region33: #{tpu_custom_call.1} parent=1 // pred_fallthru
      _
    // Predicated region
    $region34: #{tpu_custom_call.1} parent=1 // pred_check
      _
    $region35: #{tpu_custom_call.1} parent=1 // pred_check_branch
      %104 = sbr.rel (0) target = $region37
    $region36: #{tpu_custom_call.1} parent=1 // pred_region
      _
    $region37: #{tpu_custom_call.1} parent=1 // pred_fallthru
      _
    // Predicated region
    $region38: #{tpu_custom_call.1} parent=1 // pred_check
      _
    $region39: #{tpu_custom_call.1} parent=1 // pred_check_branch
      %106 = sbr.rel (0) target = $region41
    $region40: #{tpu_custom_call.1} parent=1 // pred_region
      _
    $region41: #{tpu_custom_call.1} parent=1 // pred_fallthru
      _
    // Predicated region
    $region42: #{tpu_custom_call.1} parent=1 // pred_check
      _
    $region43: #{tpu_custom_call.1} parent=1 // pred_check_branch
      %108 = sbr.rel (0) target = $region45
    $region44: #{tpu_custom_call.1} parent=1 // pred_region
      _
    $region45: #{tpu_custom_call.1} parent=1 // pred_fallthru
      _
    // Predicated region
    $region46: #{tpu_custom_call.1} parent=1 // pred_check
      _
    $region47: #{tpu_custom_call.1} parent=1 // pred_check_branch
      %110 = sbr.rel (0) target = $region49
    $region48: #{tpu_custom_call.1} parent=1 // pred_region
      _
    $region49: #{tpu_custom_call.1} parent=1 // pred_fallthru
      _
    // Predicated region
    $region50: #{tpu_custom_call.1} parent=1 // pred_check
      _
    $region51: #{tpu_custom_call.1} parent=1 // pred_check_branch
      %112 = sbr.rel (0) target = $region53
    $region52: #{tpu_custom_call.1} parent=1 // pred_region
      _
    $region53: #{tpu_custom_call.1} parent=1 // pred_fallthru
      _
    // Predicated region
    $region54: #{tpu_custom_call.1} parent=1 // pred_check
      _
    $region55: #{tpu_custom_call.1} parent=1 // pred_check_branch
      %114 = sbr.rel (0) target = $region57
    $region56: #{tpu_custom_call.1} parent=1 // pred_region
      _
    $region57: #{tpu_custom_call.1} parent=1 // pred_fallthru
      _
    // Predicated region
    $region58: #{tpu_custom_call.1} parent=1 // pred_check
      _
    $region59: #{tpu_custom_call.1} parent=1 // pred_check_branch
      %116 = sbr.rel (0) target = $region61
    $region60: #{tpu_custom_call.1} parent=1 // pred_region
      _
    $region61: #{tpu_custom_call.1} parent=1 // pred_fallthru
      _
    // Predicated region
    $region62: #{tpu_custom_call.1} parent=1 // pred_check
      _
    $region63: #{tpu_custom_call.1} parent=1 // pred_check_branch
      %118 = sbr.rel (0) target = $region65
    $region64: #{tpu_custom_call.1} parent=1 // pred_region
      _
    $region65: #{tpu_custom_call.1} parent=1 // pred_fallthru
      _
    // Predicated region
    $region66: #{tpu_custom_call.1} parent=1 // pred_check
      _
    $region67: #{tpu_custom_call.1} parent=1 // pred_check_branch
      %120 = sbr.rel (0) target = $region69
    $region68: #{tpu_custom_call.1} parent=1 // pred_region
      _
    $region69: #{tpu_custom_call.1} parent=1 // pred_fallthru
      _
    // Predicated region
    $region70: #{tpu_custom_call.1} parent=1 // pred_check
      _
    $region71: #{tpu_custom_call.1} parent=1 // pred_check_branch
      %122 = sbr.rel (0) target = $region73
    $region72: #{tpu_custom_call.1} parent=1 // pred_region
      _
    $region73: #{tpu_custom_call.1} parent=1 // pred_fallthru
      _
    // Predicated region
    $region74: #{tpu_custom_call.1} parent=1 // pred_check
      _
    $region75: #{tpu_custom_call.1} parent=1 // pred_check_branch
      %124 = sbr.rel (0) target = $region77
    $region76: #{tpu_custom_call.1} parent=1 // pred_region
      _
    $region77: #{tpu_custom_call.1} parent=1 // pred_fallthru
      _
    // Predicated region
    $region78: #{tpu_custom_call.1} parent=1 // pred_check
      _
    $region79: #{tpu_custom_call.1} parent=1 // pred_check_branch
      %126 = sbr.rel (0) target = $region81
    $region80: #{tpu_custom_call.1} parent=1 // pred_region
      _
    $region81: #{tpu_custom_call.1} parent=1 // pred_fallthru
      _
    // Predicated region
    $region82: #{tpu_custom_call.1} parent=1 // pred_check
      _
    $region83: #{tpu_custom_call.1} parent=1 // pred_check_branch
      %128 = sbr.rel (0) target = $region85
    $region84: #{tpu_custom_call.1} parent=1 // pred_region
      _
    $region85: #{tpu_custom_call.1} parent=1 // pred_fallthru
      _
    // Predicated region
    $region86: #{tpu_custom_call.1} parent=1 // pred_check
      _
    $region87: #{tpu_custom_call.1} parent=1 // pred_check_branch
      %130 = sbr.rel (0) target = $region89
    $region88: #{tpu_custom_call.1} parent=1 // pred_region
      _
    $region89: #{tpu_custom_call.1} parent=1 // pred_fallthru
      _
    // Predicated region
    $region90: #{tpu_custom_call.1} parent=1 // pred_check
      _
    $region91: #{tpu_custom_call.1} parent=1 // pred_check_branch
      %132 = sbr.rel (0) target = $region93
    $region92: #{tpu_custom_call.1} parent=1 // pred_region
      _
    $region93: #{tpu_custom_call.1} parent=1 // pred_fallthru
      _
    // Predicated region
    $region94: #{tpu_custom_call.1} parent=1 // pred_check
      _
    $region95: #{tpu_custom_call.1} parent=1 // pred_check_branch
      %134 = sbr.rel (0) target = $region97
    $region96: #{tpu_custom_call.1} parent=1 // pred_region
      _
    $region97: #{tpu_custom_call.1} parent=1 // pred_fallthru
      _
    // Predicated region
    $region98: #{tpu_custom_call.1} parent=1 // pred_check
      _
    $region99: #{tpu_custom_call.1} parent=1 // pred_check_branch
      %136 = sbr.rel (0) target = $region101
    $region100: #{tpu_custom_call.1} parent=1 // pred_region
      _
    $region101: #{tpu_custom_call.1} parent=1 // pred_fallthru
      _
    // Predicated region
    $region102: #{tpu_custom_call.1} parent=1 // pred_check
      _
    $region103: #{tpu_custom_call.1} parent=1 // pred_check_branch
      %138 = sbr.rel (0) target = $region105
    $region104: #{tpu_custom_call.1} parent=1 // pred_region
      _
    $region105: #{tpu_custom_call.1} parent=1 // pred_fallthru
      _
    // Predicated region
    $region106: #{tpu_custom_call.1} parent=1 // pred_check
      _
    $region107: #{tpu_custom_call.1} parent=1 // pred_check_branch
      %140 = sbr.rel (0) target = $region109
    $region108: #{tpu_custom_call.1} parent=1 // pred_region
      _
    $region109: #{tpu_custom_call.1} parent=1 // pred_fallthru
      _
    // Predicated region
    $region110: #{tpu_custom_call.1} parent=1 // pred_check
      _
    $region111: #{tpu_custom_call.1} parent=1 // pred_check_branch
      %142 = sbr.rel (0) target = $region113
    $region112: #{tpu_custom_call.1} parent=1 // pred_region
      _
    $region113: #{tpu_custom_call.1} parent=1 // pred_fallthru
      _
    // Predicated region
    $region114: #{tpu_custom_call.1} parent=1 // pred_check
      _
    $region115: #{tpu_custom_call.1} parent=1 // pred_check_branch
      %144 = sbr.rel (0) target = $region117
    $region116: #{tpu_custom_call.1} parent=1 // pred_region
      _
    $region117: #{tpu_custom_call.1} parent=1 // pred_fallthru
      _
    // Predicated region
    $region118: #{tpu_custom_call.1} parent=1 // pred_check
      _
    $region119: #{tpu_custom_call.1} parent=1 // pred_check_branch
      %146 = sbr.rel (0) target = $region121
    $region120: #{tpu_custom_call.1} parent=1 // pred_region
      _
    $region121: #{tpu_custom_call.1} parent=1 // pred_fallthru
      _
    // Predicated region
    $region122: #{tpu_custom_call.1} parent=1 // pred_check
      _
    $region123: #{tpu_custom_call.1} parent=1 // pred_check_branch
      %148 = sbr.rel (0) target = $region125
    $region124: #{tpu_custom_call.1} parent=1 // pred_region
      _
    $region125: #{tpu_custom_call.1} parent=1 // pred_fallthru
      _
    // Predicated region
    $region126: #{tpu_custom_call.1} parent=1 // pred_check
      _
    $region127: #{tpu_custom_call.1} parent=1 // pred_check_branch
      %150 = sbr.rel (0) target = $region129
    $region128: #{tpu_custom_call.1} parent=1 // pred_region
      _
    $region129: #{tpu_custom_call.1} parent=1 // pred_fallthru
      _
    // Predicated region
    $region130: #{tpu_custom_call.1} parent=1 // pred_check
      _
    $region131: #{tpu_custom_call.1} parent=1 // pred_check_branch
      %152 = sbr.rel (0) target = $region133
    $region132: #{tpu_custom_call.1} parent=1 // pred_region
      _
    $region133: #{tpu_custom_call.1} parent=1 // pred_fallthru
      _
    // Predicated region
    $region134: #{tpu_custom_call.1} parent=1 // pred_check
      _
    $region135: #{tpu_custom_call.1} parent=1 // pred_check_branch
      %154 = sbr.rel (0) target = $region137
    $region136: #{tpu_custom_call.1} parent=1 // pred_region
      _
    $region137: #{tpu_custom_call.1} parent=1 // pred_fallthru
      _
    // Predicated region
    $region138: #{tpu_custom_call.1} parent=1 // pred_check
      _
    $region139: #{tpu_custom_call.1} parent=1 // pred_check_branch
      %156 = sbr.rel (0) target = $region141
    $region140: #{tpu_custom_call.1} parent=1 // pred_region
      _
    $region141: #{tpu_custom_call.1} parent=1 // pred_fallthru
      _
    // Predicated region
    $region142: #{tpu_custom_call.1} parent=1 // pred_check
      _
    $region143: #{tpu_custom_call.1} parent=1 // pred_check_branch
      %158 = sbr.rel (0) target = $region145
    $region144: #{tpu_custom_call.1} parent=1 // pred_region
      _
    $region145: #{tpu_custom_call.1} parent=1 // pred_fallthru
      _
    // Predicated region
    $region146: #{tpu_custom_call.1} parent=1 // pred_check
      _
    $region147: #{tpu_custom_call.1} parent=1 // pred_check_branch
      %160 = sbr.rel (0) target = $region149
    $region148: #{tpu_custom_call.1} parent=1 // pred_region
      _
    $region149: #{tpu_custom_call.1} parent=1 // pred_fallthru
      _
    // Predicated region
    $region150: #{tpu_custom_call.1} parent=1 // pred_check
      _
    $region151: #{tpu_custom_call.1} parent=1 // pred_check_branch
      %162 = sbr.rel (0) target = $region153
    $region152: #{tpu_custom_call.1} parent=1 // pred_region
      _
    $region153: #{tpu_custom_call.1} parent=1 // pred_fallthru
      _
    // Predicated region
    $region154: #{tpu_custom_call.1} parent=1 // pred_check
      _
    $region155: #{tpu_custom_call.1} parent=1 // pred_check_branch
      %164 = sbr.rel (0) target = $region157
    $region156: #{tpu_custom_call.1} parent=1 // pred_region
      _
    $region157: #{tpu_custom_call.1} parent=1 // pred_fallthru
      _
    // Predicated region
    $region158: #{tpu_custom_call.1} parent=1 // pred_check
      _
    $region159: #{tpu_custom_call.1} parent=1 // pred_check_branch
      %166 = sbr.rel (0) target = $region161
    $region160: #{tpu_custom_call.1} parent=1 // pred_region
      _
    $region161: #{tpu_custom_call.1} parent=1 // pred_fallthru
      _
    %v167 = vld [vmem:[%s5] sm:$0x1]
    %vm168 = vcmp.lt.f32.partialorder %v167, 0.5
    %v169 = vsel %vm168, -1e+09, 0.0
    %v170 = vld [vmem:[%s7] sm:$0xff]
    %vm171 = vcmp.lt.f32.partialorder %v170, 0.5
    %v172 = vsel %vm171, -1e+09, 0.0
    %v173 = vld [vmem:[%s1] sm:$0xff]
    %v174 = vld [vmem:[%s9] sm:$0x1]
    %v175 = vld [vmem:[%s11] sm:$0x1]
    %vm176 = vcmask 261120
    %v177 = vsel %vm176, %v173, 0.0
    %178 = vadd.xlane.f32.xlu0 %v177
    %v179 = vpop.xlane.xlu0 %178
    %v180 = vrcp.pop 32.0
    %v181 = vmul.f32 32.0, %v180
    %v182 = vsub.f32 1.0, %v181
    %v183 = vmul.f32 %v180, %v182
    %v184 = vadd.f32 %v180, %v183
    %vm185 = vweird.f32 %v180
    %v186 = vsel %vm185, %v180, %v184
    %v187 = vmul.f32 %v179, %v186
    %v188 = vsub.f32 %v173, %v187
    %v189 = vmul.f32 %v188, %v188
    %v190 = vsel %vm176, %v189, 0.0
    %191 = vadd.xlane.f32.xlu0 %v190
    %v192 = vpop.xlane.xlu0 %191
    %v193 = vrcp.pop 31.0
    %v194 = vmul.f32 31.0, %v193
    %v195 = vsub.f32 1.0, %v194
    %v196 = vmul.f32 %v193, %v195
    %v197 = vadd.f32 %v193, %v196
    %vm198 = vweird.f32 %v193
    %v199 = vsel %vm198, %v193, %v197
    %v200 = vmul.f32 %v192, %v199
    %v202 = vperm.slane %v174, 0
    %v204 = vmul.f32 %v202, %v188
    %v205 = vrsqrt.pop %v200
    %v206 = vmul.f32 %v205, %v200
    %v207 = vmul.f32 %v206, %v205
    %v208 = vmul.f32 0.5, %v207
    %v209 = vsub.f32 1.5, %v208
    %v210 = vmul.f32 %v205, %v209
    %v211 = vmul.f32 %v200, %v210
    %vm212 = vcmp.eq.f32.partialorder %v200, inf
    %v213 = vsel %vm212, %v200, %v211
    %vm214 = vcmp.eq.f32.partialorder %v200, 0.0
    %v215 = vand.u32 %v200, 2147483648
    %v216 = vsel %vm214, %v215, %v213
    %v217 = vadd.f32 %v216, 1e-06
    %v218 = vrcp.pop %v217
    %v219 = vmul.f32 %v217, %v218
    %v220 = vsub.f32 1.0, %v219
    %v221 = vmul.f32 %v218, %v220
    %v222 = vadd.f32 %v218, %v221
    %vm223 = vweird.f32 %v217
    %vm224 = vweird.f32 %v218
    %vm225 = vmor %vm223, %vm224
    %v226 = vsel %vm225, %v218, %v222
    %v227 = vand.u32 2147483647, %v217
    %vm228 = vcmp.eq.f32.partialorder %v227, 8.507059e+37
    %v229 = vand.u32 %v217, 2147483648
    %v230 = vor.u32 1.1754944e-38, %v229
    %v231 = vsel %vm228, %v230, %v226
    %v232 = vmul.f32 %v204, %v231
    %v234 = vperm.slane %v175, 0
    %v236 = vadd.f32 %v232, %v234
    %v237 = vld [vmem:[%s13] sm:$0xff]
    %v238 = vld [vmem:[%s13 + $0x8] sm:$0xff]
    %v239 = vld [vmem:[%s13 + $0x10] sm:$0xff]
    %v240 = vld [vmem:[%s13 + $0x18] sm:$0xff]
    %v241 = vld [vmem:[%s13 + $0x20] sm:$0xff]
    %v242 = vld [vmem:[%s13 + $0x28] sm:$0xff]
    %v243 = vld [vmem:[%s13 + $0x30] sm:$0xff]
    %v244 = vld [vmem:[%s13 + $0x38] sm:$0xff]
    %v245 = vld [vmem:[%s13 + $0x40] sm:$0xff]
    %v246 = vld [vmem:[%s13 + $0x48] sm:$0xff]
    %v247 = vld [vmem:[%s13 + $0x50] sm:$0xff]
    %v248 = vld [vmem:[%s13 + $0x58] sm:$0xff]
    %v249 = vld [vmem:[%s13 + $0x60] sm:$0xff]
    %v250 = vld [vmem:[%s13 + $0x68] sm:$0xff]
    %v251 = vld [vmem:[%s13 + $0x70] sm:$0xff]
    %v252 = vld [vmem:[%s13 + $0x78] sm:$0xff]
    %v253 = vld [vmem:[%s15] sm:$0x1]
    %v254 = vld [vmem:[%s15 + $0x1] sm:$0x1]
    %v255 = vld [vmem:[%s15 + $0x2] sm:$0x1]
    %v256 = vld [vmem:[%s15 + $0x3] sm:$0x1]
    %v261 = vperm.slane %v253, 0
    %v262 = vperm.slane %v254, 0
    %v263 = vperm.slane %v255, 0
    %v264 = vperm.slane %v256, 0
    %v270 = vsel %vm176, %v236, 0
    %272 = vmatpush.msra.mxu0 0.0
    %273 = vmatpush.msra.mxu0 0.0
    %274 = vmatpush.msra.mxu0 0.0
    %275 = vmatpush.msra.mxu0 0.0
    %276 = vmatpush.msra.mxu0 0.0
    %277 = vmatpush.msra.mxu0 0.0
    %278 = vmatpush.msra.mxu0 0.0
    %279 = vmatpush.msra.mxu0 0.0
    %280 = vmatpush.msra.mxu0 0.0
    %281 = vmatpush.msra.mxu0 0.0
    %282 = vmatpush.msra.mxu0 0.0
    %283 = vmatpush.msra.mxu0 0.0
    %284 = vmatpush.msra.mxu0 %v240
    %285 = vmatpush.msra.mxu0 %v239
    %286 = vmatpush.msra.mxu0 %v238
    %287 = vmatpush.msra.mxu0 %v237
    %288 = vmatmul.f32.gmra.mxu0 %v270
    %v289 = vpop.f32.mrf.mxu0
    %v290 = vadd.f32 %v261, %v289
    %291 = vdwg.mxu0
    %292 = vmatpush.msra.mxu0 0.0
    %293 = vmatpush.msra.mxu0 0.0
    %294 = vmatpush.msra.mxu0 0.0
    %295 = vmatpush.msra.mxu0 0.0
    %296 = vmatpush.msra.mxu0 0.0
    %297 = vmatpush.msra.mxu0 0.0
    %298 = vmatpush.msra.mxu0 0.0
    %299 = vmatpush.msra.mxu0 0.0
    %300 = vmatpush.msra.mxu0 0.0
    %301 = vmatpush.msra.mxu0 0.0
    %302 = vmatpush.msra.mxu0 0.0
    %303 = vmatpush.msra.mxu0 0.0
    %304 = vmatpush.msra.mxu0 %v244
    %305 = vmatpush.msra.mxu0 %v243
    %306 = vmatpush.msra.mxu0 %v242
    %307 = vmatpush.msra.mxu0 %v241
    %308 = vmatmul.f32.gmra.mxu0 %v270
    %v309 = vpop.f32.mrf.mxu0
    %v310 = vadd.f32 %v262, %v309
    %311 = vdwg.mxu0
    %312 = vmatpush.msra.mxu0 0.0
    %313 = vmatpush.msra.mxu0 0.0
    %314 = vmatpush.msra.mxu0 0.0
    %315 = vmatpush.msra.mxu0 0.0
    %316 = vmatpush.msra.mxu0 0.0
    %317 = vmatpush.msra.mxu0 0.0
    %318 = vmatpush.msra.mxu0 0.0
    %319 = vmatpush.msra.mxu0 0.0
    %320 = vmatpush.msra.mxu0 0.0
    %321 = vmatpush.msra.mxu0 0.0
    %322 = vmatpush.msra.mxu0 0.0
    %323 = vmatpush.msra.mxu0 0.0
    %324 = vmatpush.msra.mxu0 %v248
    %325 = vmatpush.msra.mxu0 %v247
    %326 = vmatpush.msra.mxu0 %v246
    %327 = vmatpush.msra.mxu0 %v245
    %328 = vmatmul.f32.gmra.mxu0 %v270
    %v329 = vpop.f32.mrf.mxu0
    %v330 = vadd.f32 %v263, %v329
    %331 = vdwg.mxu0
    %332 = vmatpush.msra.mxu0 0.0
    %333 = vmatpush.msra.mxu0 0.0
    %334 = vmatpush.msra.mxu0 0.0
    %335 = vmatpush.msra.mxu0 0.0
    %336 = vmatpush.msra.mxu0 0.0
    %337 = vmatpush.msra.mxu0 0.0
    %338 = vmatpush.msra.mxu0 0.0
    %339 = vmatpush.msra.mxu0 0.0
    %340 = vmatpush.msra.mxu0 0.0
    %341 = vmatpush.msra.mxu0 0.0
    %342 = vmatpush.msra.mxu0 0.0
    %343 = vmatpush.msra.mxu0 0.0
    %344 = vmatpush.msra.mxu0 %v252
    %345 = vmatpush.msra.mxu0 %v251
    %346 = vmatpush.msra.mxu0 %v250
    %347 = vmatpush.msra.mxu0 %v249
    %348 = vmatmul.f32.gmra.mxu0 %v270
    %v349 = vpop.f32.mrf.mxu0
    %v350 = vadd.f32 %v264, %v349
    %351 = vdwg.mxu0
    %v353 = vperm.slane %v169, 0
    %356 = vrot.lane.b32.xlu0 %v290, 120
    %v357 = vpop.permute.xlu0 %356
    %vm358 = vcmask 64512
    %v359 = vsel %vm358, %v290, 0
    %v361 = vsel %vm358, %v357, 0
    %363 = vmatpush.xpose.msra.mxu0 0.0
    %364 = vmatpush.xpose.msra.mxu0 0.0
    %365 = vmatpush.xpose.msra.mxu0 0.0
    %366 = vmatpush.xpose.msra.mxu0 0.0
    %367 = vmatpush.xpose.msra.mxu0 0.0
    %368 = vmatpush.xpose.msra.mxu0 0.0
    %369 = vmatpush.xpose.msra.mxu0 0.0
    %370 = vmatpush.xpose.msra.mxu0 0.0
    %371 = vmatpush.xpose.msra.mxu0 0.0
    %372 = vmatpush.xpose.msra.mxu0 0.0
    %373 = vmatpush.xpose.msra.mxu0 0.0
    %374 = vmatpush.xpose.msra.mxu0 0.0
    %375 = vmatpush.xpose.msra.mxu0 0.0
    %376 = vmatpush.xpose.msra.mxu0 0.0
    %377 = vmatpush.xpose.msra.mxu0 0.0
    %378 = vmatpush.xpose.msra.mxu0 %v361
    %379 = vmatmul.f32.gmra.mxu0 %v359
    %v380 = vpop.f32.mrf.mxu0
    %v381 = vadd.f32 %v353, %v380
    %382 = vdwg.mxu0
    %384 = vrot.lane.b32.xlu0 %v310, 120
    %v385 = vpop.permute.xlu0 %384
    %v386 = vsel %vm358, %v310, 0
    %v388 = vsel %vm358, %v385, 0
    %390 = vmatpush.xpose.msra.mxu0 0.0
    %391 = vmatpush.xpose.msra.mxu0 0.0
    %392 = vmatpush.xpose.msra.mxu0 0.0
    %393 = vmatpush.xpose.msra.mxu0 0.0
    %394 = vmatpush.xpose.msra.mxu0 0.0
    %395 = vmatpush.xpose.msra.mxu0 0.0
    %396 = vmatpush.xpose.msra.mxu0 0.0
    %397 = vmatpush.xpose.msra.mxu0 0.0
    %398 = vmatpush.xpose.msra.mxu0 0.0
    %399 = vmatpush.xpose.msra.mxu0 0.0
    %400 = vmatpush.xpose.msra.mxu0 0.0
    %401 = vmatpush.xpose.msra.mxu0 0.0
    %402 = vmatpush.xpose.msra.mxu0 0.0
    %403 = vmatpush.xpose.msra.mxu0 0.0
    %404 = vmatpush.xpose.msra.mxu0 0.0
    %405 = vmatpush.xpose.msra.mxu0 %v388
    %406 = vmatmul.f32.gmra.mxu0 %v386
    %v407 = vpop.f32.mrf.mxu0
    %v408 = vadd.f32 %v353, %v407
    %409 = vdwg.mxu0
    %411 = vrot.lane.b32.xlu0 %v330, 120
    %v412 = vpop.permute.xlu0 %411
    %v413 = vsel %vm358, %v330, 0
    %v415 = vsel %vm358, %v412, 0
    %417 = vmatpush.xpose.msra.mxu0 0.0
    %418 = vmatpush.xpose.msra.mxu0 0.0
    %419 = vmatpush.xpose.msra.mxu0 0.0
    %420 = vmatpush.xpose.msra.mxu0 0.0
    %421 = vmatpush.xpose.msra.mxu0 0.0
    %422 = vmatpush.xpose.msra.mxu0 0.0
    %423 = vmatpush.xpose.msra.mxu0 0.0
    %424 = vmatpush.xpose.msra.mxu0 0.0
    %425 = vmatpush.xpose.msra.mxu0 0.0
    %426 = vmatpush.xpose.msra.mxu0 0.0
    %427 = vmatpush.xpose.msra.mxu0 0.0
    %428 = vmatpush.xpose.msra.mxu0 0.0
    %429 = vmatpush.xpose.msra.mxu0 0.0
    %430 = vmatpush.xpose.msra.mxu0 0.0
    %431 = vmatpush.xpose.msra.mxu0 0.0
    %432 = vmatpush.xpose.msra.mxu0 %v415
    %433 = vmatmul.f32.gmra.mxu0 %v413
    %v434 = vpop.f32.mrf.mxu0
    %v435 = vadd.f32 %v353, %v434
    %436 = vdwg.mxu0
    %438 = vrot.lane.b32.xlu0 %v350, 120
    %v439 = vpop.permute.xlu0 %438
    %v440 = vsel %vm358, %v350, 0
    %v442 = vsel %vm358, %v439, 0
    %444 = vmatpush.xpose.msra.mxu0 0.0
    %445 = vmatpush.xpose.msra.mxu0 0.0
    %446 = vmatpush.xpose.msra.mxu0 0.0
    %447 = vmatpush.xpose.msra.mxu0 0.0
    %448 = vmatpush.xpose.msra.mxu0 0.0
    %449 = vmatpush.xpose.msra.mxu0 0.0
    %450 = vmatpush.xpose.msra.mxu0 0.0
    %451 = vmatpush.xpose.msra.mxu0 0.0
    %452 = vmatpush.xpose.msra.mxu0 0.0
    %453 = vmatpush.xpose.msra.mxu0 0.0
    %454 = vmatpush.xpose.msra.mxu0 0.0
    %455 = vmatpush.xpose.msra.mxu0 0.0
    %456 = vmatpush.xpose.msra.mxu0 0.0
    %457 = vmatpush.xpose.msra.mxu0 0.0
    %458 = vmatpush.xpose.msra.mxu0 0.0
    %459 = vmatpush.xpose.msra.mxu0 %v442
    %460 = vmatmul.f32.gmra.mxu0 %v440
    %v461 = vpop.f32.mrf.mxu0
    %v462 = vadd.f32 %v353, %v461
    %463 = vdwg.mxu0
    %v464 = vsel %vm358, %v381, -inf
    %465 = vmax.xlane.f32.xlu0 %v464
    %v466 = vpop.xlane.xlu0 %465
    %v467 = vsel %vm358, %v408, -inf
    %468 = vmax.xlane.f32.xlu0 %v467
    %v469 = vpop.xlane.xlu0 %468
    %v470 = vsel %vm358, %v435, -inf
    %471 = vmax.xlane.f32.xlu0 %v470
    %v472 = vpop.xlane.xlu0 %471
    %v473 = vsel %vm358, %v462, -inf
    %474 = vmax.xlane.f32.xlu0 %v473
    %v475 = vpop.xlane.xlu0 %474
    %v476 = vsub.f32 %v381, %v466
    %v477 = vsub.f32 %v408, %v469
    %v478 = vsub.f32 %v435, %v472
    %v479 = vsub.f32 %v462, %v475
    %v480 = vmul.f32 %v476, 1.442695
    %v481 = vpow.pop %v480
    %v482 = vmul.f32 %v477, 1.442695
    %v483 = vpow.pop %v482
    %v484 = vmul.f32 %v478, 1.442695
    %v485 = vpow.pop %v484
    %v486 = vmul.f32 %v479, 1.442695
    %v487 = vpow.pop %v486
    %v488 = vsel %vm358, %v481, 0.0
    %489 = vadd.xlane.f32.xlu0 %v488
    %v490 = vpop.xlane.xlu0 %489
    %v491 = vsel %vm358, %v483, 0.0
    %492 = vadd.xlane.f32.xlu0 %v491
    %v493 = vpop.xlane.xlu0 %492
    %v494 = vsel %vm358, %v485, 0.0
    %495 = vadd.xlane.f32.xlu0 %v494
    %v496 = vpop.xlane.xlu0 %495
    %v497 = vsel %vm358, %v487, 0.0
    %498 = vadd.xlane.f32.xlu0 %v497
    %v499 = vpop.xlane.xlu0 %498
    %v500 = vrcp.pop %v490
    %v501 = vrcp.pop %v493
    %v502 = vrcp.pop %v496
    %v503 = vrcp.pop %v499
    %v504 = vmul.f32 %v481, %v500
    %v505 = vmul.f32 %v483, %v501
    %v506 = vmul.f32 %v485, %v502
    %v507 = vmul.f32 %v487, %v503
    %508 = vrot.lane.b32.xlu0 %v290, 112
    %v509 = vpop.permute.xlu0 %508
    %v512 = vsel %vm358, %v504, 0
    %514 = vmatpush.msra.mxu0 0.0
    %515 = vmatpush.msra.mxu0 0.0
    %516 = vmatpush.msra.mxu0 0.0
    %517 = vmatpush.msra.mxu0 0.0
    %518 = vmatpush.msra.mxu0 0.0
    %519 = vmatpush.msra.mxu0 0.0
    %520 = vmatpush.msra.mxu0 0.0
    %521 = vmatpush.msra.mxu0 0.0
    %522 = vmatpush.msra.mxu0 0.0
    %523 = vmatpush.msra.mxu0 0.0
    %524 = vmatpush.msra.mxu0 0.0
    %525 = vmatpush.msra.mxu0 0.0
    %526 = vmatpush.msra.mxu0 0.0
    %527 = vmatpush.msra.mxu0 0.0
    %528 = vmatpush.msra.mxu0 0.0
    %529 = vmatpush.msra.mxu0 %v509
    %530 = vmatmul.f32.gmra.mxu0 %v512
    %v531 = vpop.f32.mrf.mxu0
    %v532 = vadd.f32 0.0, %v531
    %533 = vdwg.mxu0
    %534 = vrot.lane.b32.xlu0 %v310, 112
    %v535 = vpop.permute.xlu0 %534
    %v538 = vsel %vm358, %v505, 0
    %540 = vmatpush.msra.mxu0 0.0
    %541 = vmatpush.msra.mxu0 0.0
    %542 = vmatpush.msra.mxu0 0.0
    %543 = vmatpush.msra.mxu0 0.0
    %544 = vmatpush.msra.mxu0 0.0
    %545 = vmatpush.msra.mxu0 0.0
    %546 = vmatpush.msra.mxu0 0.0
    %547 = vmatpush.msra.mxu0 0.0
    %548 = vmatpush.msra.mxu0 0.0
    %549 = vmatpush.msra.mxu0 0.0
    %550 = vmatpush.msra.mxu0 0.0
    %551 = vmatpush.msra.mxu0 0.0
    %552 = vmatpush.msra.mxu0 0.0
    %553 = vmatpush.msra.mxu0 0.0
    %554 = vmatpush.msra.mxu0 0.0
    %555 = vmatpush.msra.mxu0 %v535
    %556 = vmatmul.f32.gmra.mxu0 %v538
    %v557 = vpop.f32.mrf.mxu0
    %v558 = vadd.f32 0.0, %v557
    %559 = vdwg.mxu0
    %560 = vrot.lane.b32.xlu0 %v330, 112
    %v561 = vpop.permute.xlu0 %560
    %v564 = vsel %vm358, %v506, 0
    %566 = vmatpush.msra.mxu0 0.0
    %567 = vmatpush.msra.mxu0 0.0
    %568 = vmatpush.msra.mxu0 0.0
    %569 = vmatpush.msra.mxu0 0.0
    %570 = vmatpush.msra.mxu0 0.0
    %571 = vmatpush.msra.mxu0 0.0
    %572 = vmatpush.msra.mxu0 0.0
    %573 = vmatpush.msra.mxu0 0.0
    %574 = vmatpush.msra.mxu0 0.0
    %575 = vmatpush.msra.mxu0 0.0
    %576 = vmatpush.msra.mxu0 0.0
    %577 = vmatpush.msra.mxu0 0.0
    %578 = vmatpush.msra.mxu0 0.0
    %579 = vmatpush.msra.mxu0 0.0
    %580 = vmatpush.msra.mxu0 0.0
    %581 = vmatpush.msra.mxu0 %v561
    %582 = vmatmul.f32.gmra.mxu0 %v564
    %v583 = vpop.f32.mrf.mxu0
    %v584 = vadd.f32 0.0, %v583
    %585 = vdwg.mxu0
    %586 = vrot.lane.b32.xlu0 %v350, 112
    %v587 = vpop.permute.xlu0 %586
    %v590 = vsel %vm358, %v507, 0
    %592 = vmatpush.msra.mxu0 0.0
    %593 = vmatpush.msra.mxu0 0.0
    %594 = vmatpush.msra.mxu0 0.0
    %595 = vmatpush.msra.mxu0 0.0
    %596 = vmatpush.msra.mxu0 0.0
    %597 = vmatpush.msra.mxu0 0.0
    %598 = vmatpush.msra.mxu0 0.0
    %599 = vmatpush.msra.mxu0 0.0
    %600 = vmatpush.msra.mxu0 0.0
    %601 = vmatpush.msra.mxu0 0.0
    %602 = vmatpush.msra.mxu0 0.0
    %603 = vmatpush.msra.mxu0 0.0
    %604 = vmatpush.msra.mxu0 0.0
    %605 = vmatpush.msra.mxu0 0.0
    %606 = vmatpush.msra.mxu0 0.0
    %607 = vmatpush.msra.mxu0 %v587
    %608 = vmatmul.f32.gmra.mxu0 %v590
    %v609 = vpop.f32.mrf.mxu0
    %v610 = vadd.f32 0.0, %v609
    %611 = vdwg.mxu0
    %v612 = vld [vmem:[%s17] sm:$0xff]
    %v613 = vld [vmem:[%s17 + $0x8] sm:$0xff]
    %v614 = vld [vmem:[%s17 + $0x10] sm:$0xff]
    %v615 = vld [vmem:[%s17 + $0x18] sm:$0xff]
    %v616 = vld [vmem:[%s19] sm:$0x1]
    %v618 = vsel %vm358, %v532, 0
    %620 = vmatpush.msra.mxu0 0.0
    %621 = vmatpush.msra.mxu0 0.0
    %622 = vmatpush.msra.mxu0 0.0
    %623 = vmatpush.msra.mxu0 0.0
    %624 = vmatpush.msra.mxu0 0.0
    %625 = vmatpush.msra.mxu0 0.0
    %626 = vmatpush.msra.mxu0 0.0
    %627 = vmatpush.msra.mxu0 0.0
    %628 = vmatpush.msra.mxu0 0.0
    %629 = vmatpush.msra.mxu0 0.0
    %630 = vmatpush.msra.mxu0 0.0
    %631 = vmatpush.msra.mxu0 0.0
    %632 = vmatpush.msra.mxu0 0.0
    %633 = vmatpush.msra.mxu0 0.0
    %634 = vmatpush.msra.mxu0 0.0
    %635 = vmatpush.msra.mxu0 %v612
    %636 = vmatmul.f32.gmra.mxu0 %v618
    %v637 = vpop.f32.mrf.mxu0
    %v638 = vadd.f32 0.0, %v637
    %639 = vdwg.mxu0
    %v641 = vsel %vm358, %v558, 0
    %643 = vmatpush.msra.mxu0 0.0
    %644 = vmatpush.msra.mxu0 0.0
    %645 = vmatpush.msra.mxu0 0.0
    %646 = vmatpush.msra.mxu0 0.0
    %647 = vmatpush.msra.mxu0 0.0
    %648 = vmatpush.msra.mxu0 0.0
    %649 = vmatpush.msra.mxu0 0.0
    %650 = vmatpush.msra.mxu0 0.0
    %651 = vmatpush.msra.mxu0 0.0
    %652 = vmatpush.msra.mxu0 0.0
    %653 = vmatpush.msra.mxu0 0.0
    %654 = vmatpush.msra.mxu0 0.0
    %655 = vmatpush.msra.mxu0 0.0
    %656 = vmatpush.msra.mxu0 0.0
    %657 = vmatpush.msra.mxu0 0.0
    %658 = vmatpush.msra.mxu0 %v613
    %659 = vmatmul.f32.gmra.mxu0 %v641
    %v660 = vpop.f32.mrf.mxu0
    %v661 = vadd.f32 0.0, %v660
    %662 = vdwg.mxu0
    %v664 = vsel %vm358, %v584, 0
    %666 = vmatpush.msra.mxu0 0.0
    %667 = vmatpush.msra.mxu0 0.0
    %668 = vmatpush.msra.mxu0 0.0
    %669 = vmatpush.msra.mxu0 0.0
    %670 = vmatpush.msra.mxu0 0.0
    %671 = vmatpush.msra.mxu0 0.0
    %672 = vmatpush.msra.mxu0 0.0
    %673 = vmatpush.msra.mxu0 0.0
    %674 = vmatpush.msra.mxu0 0.0
    %675 = vmatpush.msra.mxu0 0.0
    %676 = vmatpush.msra.mxu0 0.0
    %677 = vmatpush.msra.mxu0 0.0
    %678 = vmatpush.msra.mxu0 0.0
    %679 = vmatpush.msra.mxu0 0.0
    %680 = vmatpush.msra.mxu0 0.0
    %681 = vmatpush.msra.mxu0 %v614
    %682 = vmatmul.f32.gmra.mxu0 %v664
    %v683 = vpop.f32.mrf.mxu0
    %v684 = vadd.f32 0.0, %v683
    %685 = vdwg.mxu0
    %v687 = vsel %vm358, %v610, 0
    %689 = vmatpush.msra.mxu0 0.0
    %690 = vmatpush.msra.mxu0 0.0
    %691 = vmatpush.msra.mxu0 0.0
    %692 = vmatpush.msra.mxu0 0.0
    %693 = vmatpush.msra.mxu0 0.0
    %694 = vmatpush.msra.mxu0 0.0
    %695 = vmatpush.msra.mxu0 0.0
    %696 = vmatpush.msra.mxu0 0.0
    %697 = vmatpush.msra.mxu0 0.0
    %698 = vmatpush.msra.mxu0 0.0
    %699 = vmatpush.msra.mxu0 0.0
    %700 = vmatpush.msra.mxu0 0.0
    %701 = vmatpush.msra.mxu0 0.0
    %702 = vmatpush.msra.mxu0 0.0
    %703 = vmatpush.msra.mxu0 0.0
    %704 = vmatpush.msra.mxu0 %v615
    %705 = vmatmul.f32.gmra.mxu0 %v687
    %v706 = vpop.f32.mrf.mxu0
    %v707 = vadd.f32 0.0, %v706
    %708 = vdwg.mxu0
    %v709 = vsel %vm176, %v638, 0.0
    %v710 = vsel %vm176, %v661, 0.0
    %v711 = vadd.f32 %v709, %v710
    %v712 = vsel %vm176, %v684, 0.0
    %v713 = vadd.f32 %v711, %v712
    %v714 = vsel %vm176, %v707, 0.0
    %v715 = vadd.f32 %v713, %v714
    %v717 = vperm.slane %v616, 0
    %v719 = vadd.f32 %v715, %v717
    %v720 = vadd.f32 %v173, %v719
    %v721 = vld [vmem:[%s21] sm:$0x1]
    %v722 = vld [vmem:[%s23] sm:$0x1]
    %v723 = vsel %vm176, %v720, 0.0
    %724 = vadd.xlane.f32.xlu0 %v723
    %v725 = vpop.xlane.xlu0 %724
    %v726 = vmul.f32 %v725, %v186
    %v727 = vsub.f32 %v720, %v726
    %v728 = vmul.f32 %v727, %v727
    %v729 = vsel %vm176, %v728, 0.0
    %730 = vadd.xlane.f32.xlu0 %v729
    %v731 = vpop.xlane.xlu0 %730
    %v732 = vmul.f32 %v731, %v199
    %v734 = vperm.slane %v721, 0
    %v736 = vmul.f32 %v734, %v727
    %v737 = vrsqrt.pop %v732
    %v738 = vmul.f32 %v737, %v732
    %v739 = vmul.f32 %v738, %v737
    %v740 = vmul.f32 0.5, %v739
    %v741 = vsub.f32 1.5, %v740
    %v742 = vmul.f32 %v737, %v741
    %v743 = vmul.f32 %v732, %v742
    %vm744 = vcmp.eq.f32.partialorder %v732, inf
    %v745 = vsel %vm744, %v732, %v743
    %vm746 = vcmp.eq.f32.partialorder %v732, 0.0
    %v747 = vand.u32 %v732, 2147483648
    %v748 = vsel %vm746, %v747, %v745
    %v749 = vadd.f32 %v748, 1e-06
    %v750 = vrcp.pop %v749
    %v751 = vmul.f32 %v749, %v750
    %v752 = vsub.f32 1.0, %v751
    %v753 = vmul.f32 %v750, %v752
    %v754 = vadd.f32 %v750, %v753
    %vm755 = vweird.f32 %v749
    %vm756 = vweird.f32 %v750
    %vm757 = vmor %vm755, %vm756
    %v758 = vsel %vm757, %v750, %v754
    %v759 = vand.u32 2147483647, %v749
    %vm760 = vcmp.eq.f32.partialorder %v759, 8.507059e+37
    %v761 = vand.u32 %v749, 2147483648
    %v762 = vor.u32 1.1754944e-38, %v761
    %v763 = vsel %vm760, %v762, %v758
    %v764 = vmul.f32 %v736, %v763
    %v766 = vperm.slane %v722, 0
    %v768 = vadd.f32 %v764, %v766
    %v769 = vld [vmem:[%s25] sm:$0xff]
    %v770 = vld [vmem:[%s25 + $0x8] sm:$0xff]
    %v771 = vld [vmem:[%s25 + $0x10] sm:$0xff]
    %v772 = vld [vmem:[%s25 + $0x18] sm:$0xff]
    %v773 = vld [vmem:[%s27] sm:$0x1]
    %v774 = vld [vmem:[%s29] sm:$0xff]
    %v775 = vld [vmem:[%s29 + $0x8] sm:$0xff]
    %v776 = vld [vmem:[%s29 + $0x10] sm:$0xff]
    %v777 = vld [vmem:[%s29 + $0x18] sm:$0xff]
    %v778 = vld [vmem:[%s29 + $0x20] sm:$0xff]
    %v779 = vld [vmem:[%s29 + $0x28] sm:$0xff]
    %v780 = vld [vmem:[%s29 + $0x30] sm:$0xff]
    %v781 = vld [vmem:[%s29 + $0x38] sm:$0xff]
    %v782 = vld [vmem:[%s31] sm:$0x1]
    %v784 = vperm.slane %v773, 0
    %v787 = vsel %vm176, %v768, 0
    %789 = vmatpush.msra.mxu0 0.0
    %790 = vmatpush.msra.mxu0 0.0
    %791 = vmatpush.msra.mxu0 0.0
    %792 = vmatpush.msra.mxu0 0.0
    %793 = vmatpush.msra.mxu0 0.0
    %794 = vmatpush.msra.mxu0 0.0
    %795 = vmatpush.msra.mxu0 0.0
    %796 = vmatpush.msra.mxu0 0.0
    %797 = vmatpush.msra.mxu0 0.0
    %798 = vmatpush.msra.mxu0 0.0
    %799 = vmatpush.msra.mxu0 0.0
    %800 = vmatpush.msra.mxu0 0.0
    %801 = vmatpush.msra.mxu0 %v772
    %802 = vmatpush.msra.mxu0 %v771
    %803 = vmatpush.msra.mxu0 %v770
    %804 = vmatpush.msra.mxu0 %v769
    %805 = vmatmul.f32.gmra.mxu0 %v787
    %v806 = vpop.f32.mrf.mxu0
    %v807 = vadd.f32 %v784, %v806
    %808 = vdwg.mxu0
    %v809 = vmax.f32 %v807, 0.0
    %v811 = vperm.slane %v782, 0
    %vm813 = vcmask 523264
    %v815 = vsel %vm813, %v809, 0
    %817 = vmatpush.msra.mxu0 0.0
    %818 = vmatpush.msra.mxu0 0.0
    %819 = vmatpush.msra.mxu0 0.0
    %820 = vmatpush.msra.mxu0 0.0
    %821 = vmatpush.msra.mxu0 0.0
    %822 = vmatpush.msra.mxu0 0.0
    %823 = vmatpush.msra.mxu0 0.0
    %824 = vmatpush.msra.mxu0 0.0
    %825 = vmatpush.msra.mxu0 %v781
    %826 = vmatpush.msra.mxu0 %v780
    %827 = vmatpush.msra.mxu0 %v779
    %828 = vmatpush.msra.mxu0 %v778
    %829 = vmatpush.msra.mxu0 %v777
    %830 = vmatpush.msra.mxu0 %v776
    %831 = vmatpush.msra.mxu0 %v775
    %832 = vmatpush.msra.mxu0 %v774
    %833 = vmatmul.f32.gmra.mxu0 %v815
    %v834 = vpop.f32.mrf.mxu0
    %v835 = vadd.f32 %v811, %v834
    %836 = vdwg.mxu0
    %v837 = vadd.f32 %v720, %v835
    %s838 = scalar_lea.vmem %s9, 1
    %v839 = vld [vmem:[%s838] sm:$0x1]
    %s840 = scalar_lea.vmem %s11, 1
    %v841 = vld [vmem:[%s840] sm:$0x1]
    %v842 = vsel %vm176, %v837, 0.0
    %843 = vadd.xlane.f32.xlu0 %v842
    %v844 = vpop.xlane.xlu0 %843
    %v845 = vmul.f32 %v844, %v186
    %v846 = vsub.f32 %v837, %v845
    %v847 = vmul.f32 %v846, %v846
    %v848 = vsel %vm176, %v847, 0.0
    %849 = vadd.xlane.f32.xlu0 %v848
    %v850 = vpop.xlane.xlu0 %849
    %v851 = vmul.f32 %v850, %v199
    %v853 = vperm.slane %v839, 0
    %v855 = vmul.f32 %v853, %v846
    %v856 = vrsqrt.pop %v851
    %v857 = vmul.f32 %v856, %v851
    %v858 = vmul.f32 %v857, %v856
    %v859 = vmul.f32 0.5, %v858
    %v860 = vsub.f32 1.5, %v859
    %v861 = vmul.f32 %v856, %v860
    %v862 = vmul.f32 %v851, %v861
    %vm863 = vcmp.eq.f32.partialorder %v851, inf
    %v864 = vsel %vm863, %v851, %v862
    %vm865 = vcmp.eq.f32.partialorder %v851, 0.0
    %v866 = vand.u32 %v851, 2147483648
    %v867 = vsel %vm865, %v866, %v864
    %v868 = vadd.f32 %v867, 1e-06
    %v869 = vrcp.pop %v868
    %v870 = vmul.f32 %v868, %v869
    %v871 = vsub.f32 1.0, %v870
    %v872 = vmul.f32 %v869, %v871
    %v873 = vadd.f32 %v869, %v872
    %vm874 = vweird.f32 %v868
    %vm875 = vweird.f32 %v869
    %vm876 = vmor %vm874, %vm875
    %v877 = vsel %vm876, %v869, %v873
    %v878 = vand.u32 2147483647, %v868
    %vm879 = vcmp.eq.f32.partialorder %v878, 8.507059e+37
    %v880 = vand.u32 %v868, 2147483648
    %v881 = vor.u32 1.1754944e-38, %v880
    %v882 = vsel %vm879, %v881, %v877
    %v883 = vmul.f32 %v855, %v882
    %v885 = vperm.slane %v841, 0
    %v887 = vadd.f32 %v883, %v885
    %s888 = scalar_lea.vmem %s13, 128
    %v889 = vld [vmem:[%s888] sm:$0xff]
    %v890 = vld [vmem:[%s888 + $0x8] sm:$0xff]
    %v891 = vld [vmem:[%s888 + $0x10] sm:$0xff]
    %v892 = vld [vmem:[%s888 + $0x18] sm:$0xff]
    %v893 = vld [vmem:[%s888 + $0x20] sm:$0xff]
    %v894 = vld [vmem:[%s888 + $0x28] sm:$0xff]
    %v895 = vld [vmem:[%s888 + $0x30] sm:$0xff]
    %v896 = vld [vmem:[%s888 + $0x38] sm:$0xff]
    %v897 = vld [vmem:[%s888 + $0x40] sm:$0xff]
    %v898 = vld [vmem:[%s888 + $0x48] sm:$0xff]
    %v899 = vld [vmem:[%s888 + $0x50] sm:$0xff]
    %v900 = vld [vmem:[%s888 + $0x58] sm:$0xff]
    %v901 = vld [vmem:[%s888 + $0x60] sm:$0xff]
    %v902 = vld [vmem:[%s888 + $0x68] sm:$0xff]
    %v903 = vld [vmem:[%s888 + $0x70] sm:$0xff]
    %v904 = vld [vmem:[%s888 + $0x78] sm:$0xff]
    %s905 = scalar_lea.vmem %s15, 4
    %v906 = vld [vmem:[%s905] sm:$0x1]
    %v907 = vld [vmem:[%s905 + $0x1] sm:$0x1]
    %v908 = vld [vmem:[%s905 + $0x2] sm:$0x1]
    %v909 = vld [vmem:[%s905 + $0x3] sm:$0x1]
    %v914 = vperm.slane %v906, 0
    %v915 = vperm.slane %v907, 0
    %v916 = vperm.slane %v908, 0
    %v917 = vperm.slane %v909, 0
    %v923 = vsel %vm176, %v887, 0
    %925 = vmatpush.msra.mxu0 0.0
    %926 = vmatpush.msra.mxu0 0.0
    %927 = vmatpush.msra.mxu0 0.0
    %928 = vmatpush.msra.mxu0 0.0
    %929 = vmatpush.msra.mxu0 0.0
    %930 = vmatpush.msra.mxu0 0.0
    %931 = vmatpush.msra.mxu0 0.0
    %932 = vmatpush.msra.mxu0 0.0
    %933 = vmatpush.msra.mxu0 0.0
    %934 = vmatpush.msra.mxu0 0.0
    %935 = vmatpush.msra.mxu0 0.0
    %936 = vmatpush.msra.mxu0 0.0
    %937 = vmatpush.msra.mxu0 %v892
    %938 = vmatpush.msra.mxu0 %v891
    %939 = vmatpush.msra.mxu0 %v890
    %940 = vmatpush.msra.mxu0 %v889
    %941 = vmatmul.f32.gmra.mxu0 %v923
    %v942 = vpop.f32.mrf.mxu0
    %v943 = vadd.f32 %v914, %v942
    %944 = vdwg.mxu0
    %945 = vmatpush.msra.mxu0 0.0
    %946 = vmatpush.msra.mxu0 0.0
    %947 = vmatpush.msra.mxu0 0.0
    %948 = vmatpush.msra.mxu0 0.0
    %949 = vmatpush.msra.mxu0 0.0
    %950 = vmatpush.msra.mxu0 0.0
    %951 = vmatpush.msra.mxu0 0.0
    %952 = vmatpush.msra.mxu0 0.0
    %953 = vmatpush.msra.mxu0 0.0
    %954 = vmatpush.msra.mxu0 0.0
    %955 = vmatpush.msra.mxu0 0.0
    %956 = vmatpush.msra.mxu0 0.0
    %957 = vmatpush.msra.mxu0 %v896
    %958 = vmatpush.msra.mxu0 %v895
    %959 = vmatpush.msra.mxu0 %v894
    %960 = vmatpush.msra.mxu0 %v893
    %961 = vmatmul.f32.gmra.mxu0 %v923
    %v962 = vpop.f32.mrf.mxu0
    %v963 = vadd.f32 %v915, %v962
    %964 = vdwg.mxu0
    %965 = vmatpush.msra.mxu0 0.0
    %966 = vmatpush.msra.mxu0 0.0
    %967 = vmatpush.msra.mxu0 0.0
    %968 = vmatpush.msra.mxu0 0.0
    %969 = vmatpush.msra.mxu0 0.0
    %970 = vmatpush.msra.mxu0 0.0
    %971 = vmatpush.msra.mxu0 0.0
    %972 = vmatpush.msra.mxu0 0.0
    %973 = vmatpush.msra.mxu0 0.0
    %974 = vmatpush.msra.mxu0 0.0
    %975 = vmatpush.msra.mxu0 0.0
    %976 = vmatpush.msra.mxu0 0.0
    %977 = vmatpush.msra.mxu0 %v900
    %978 = vmatpush.msra.mxu0 %v899
    %979 = vmatpush.msra.mxu0 %v898
    %980 = vmatpush.msra.mxu0 %v897
    %981 = vmatmul.f32.gmra.mxu0 %v923
    %v982 = vpop.f32.mrf.mxu0
    %v983 = vadd.f32 %v916, %v982
    %984 = vdwg.mxu0
    %985 = vmatpush.msra.mxu0 0.0
    %986 = vmatpush.msra.mxu0 0.0
    %987 = vmatpush.msra.mxu0 0.0
    %988 = vmatpush.msra.mxu0 0.0
    %989 = vmatpush.msra.mxu0 0.0
    %990 = vmatpush.msra.mxu0 0.0
    %991 = vmatpush.msra.mxu0 0.0
    %992 = vmatpush.msra.mxu0 0.0
    %993 = vmatpush.msra.mxu0 0.0
    %994 = vmatpush.msra.mxu0 0.0
    %995 = vmatpush.msra.mxu0 0.0
    %996 = vmatpush.msra.mxu0 0.0
    %997 = vmatpush.msra.mxu0 %v904
    %998 = vmatpush.msra.mxu0 %v903
    %999 = vmatpush.msra.mxu0 %v902
    %1000 = vmatpush.msra.mxu0 %v901
    %1001 = vmatmul.f32.gmra.mxu0 %v923
    %v1002 = vpop.f32.mrf.mxu0
    %v1003 = vadd.f32 %v917, %v1002
    %1004 = vdwg.mxu0
    %1006 = vrot.lane.b32.xlu0 %v943, 120
    %v1007 = vpop.permute.xlu0 %1006
    %v1008 = vsel %vm358, %v943, 0
    %v1010 = vsel %vm358, %v1007, 0
    %1012 = vmatpush.xpose.msra.mxu0 0.0
    %1013 = vmatpush.xpose.msra.mxu0 0.0
    %1014 = vmatpush.xpose.msra.mxu0 0.0
    %1015 = vmatpush.xpose.msra.mxu0 0.0
    %1016 = vmatpush.xpose.msra.mxu0 0.0
    %1017 = vmatpush.xpose.msra.mxu0 0.0
    %1018 = vmatpush.xpose.msra.mxu0 0.0
    %1019 = vmatpush.xpose.msra.mxu0 0.0
    %1020 = vmatpush.xpose.msra.mxu0 0.0
    %1021 = vmatpush.xpose.msra.mxu0 0.0
    %1022 = vmatpush.xpose.msra.mxu0 0.0
    %1023 = vmatpush.xpose.msra.mxu0 0.0
    %1024 = vmatpush.xpose.msra.mxu0 0.0
    %1025 = vmatpush.xpose.msra.mxu0 0.0
    %1026 = vmatpush.xpose.msra.mxu0 0.0
    %1027 = vmatpush.xpose.msra.mxu0 %v1010
    %1028 = vmatmul.f32.gmra.mxu0 %v1008
    %v1029 = vpop.f32.mrf.mxu0
    %v1030 = vadd.f32 %v353, %v1029
    %1031 = vdwg.mxu0
    %1033 = vrot.lane.b32.xlu0 %v963, 120
    %v1034 = vpop.permute.xlu0 %1033
    %v1035 = vsel %vm358, %v963, 0
    %v1037 = vsel %vm358, %v1034, 0
    %1039 = vmatpush.xpose.msra.mxu0 0.0
    %1040 = vmatpush.xpose.msra.mxu0 0.0
    %1041 = vmatpush.xpose.msra.mxu0 0.0
    %1042 = vmatpush.xpose.msra.mxu0 0.0
    %1043 = vmatpush.xpose.msra.mxu0 0.0
    %1044 = vmatpush.xpose.msra.mxu0 0.0
    %1045 = vmatpush.xpose.msra.mxu0 0.0
    %1046 = vmatpush.xpose.msra.mxu0 0.0
    %1047 = vmatpush.xpose.msra.mxu0 0.0
    %1048 = vmatpush.xpose.msra.mxu0 0.0
    %1049 = vmatpush.xpose.msra.mxu0 0.0
    %1050 = vmatpush.xpose.msra.mxu0 0.0
    %1051 = vmatpush.xpose.msra.mxu0 0.0
    %1052 = vmatpush.xpose.msra.mxu0 0.0
    %1053 = vmatpush.xpose.msra.mxu0 0.0
    %1054 = vmatpush.xpose.msra.mxu0 %v1037
    %1055 = vmatmul.f32.gmra.mxu0 %v1035
    %v1056 = vpop.f32.mrf.mxu0
    %v1057 = vadd.f32 %v353, %v1056
    %1058 = vdwg.mxu0
    %1060 = vrot.lane.b32.xlu0 %v983, 120
    %v1061 = vpop.permute.xlu0 %1060
    %v1062 = vsel %vm358, %v983, 0
    %v1064 = vsel %vm358, %v1061, 0
    %1066 = vmatpush.xpose.msra.mxu0 0.0
    %1067 = vmatpush.xpose.msra.mxu0 0.0
    %1068 = vmatpush.xpose.msra.mxu0 0.0
    %1069 = vmatpush.xpose.msra.mxu0 0.0
    %1070 = vmatpush.xpose.msra.mxu0 0.0
    %1071 = vmatpush.xpose.msra.mxu0 0.0
    %1072 = vmatpush.xpose.msra.mxu0 0.0
    %1073 = vmatpush.xpose.msra.mxu0 0.0
    %1074 = vmatpush.xpose.msra.mxu0 0.0
    %1075 = vmatpush.xpose.msra.mxu0 0.0
    %1076 = vmatpush.xpose.msra.mxu0 0.0
    %1077 = vmatpush.xpose.msra.mxu0 0.0
    %1078 = vmatpush.xpose.msra.mxu0 0.0
    %1079 = vmatpush.xpose.msra.mxu0 0.0
    %1080 = vmatpush.xpose.msra.mxu0 0.0
    %1081 = vmatpush.xpose.msra.mxu0 %v1064
    %1082 = vmatmul.f32.gmra.mxu0 %v1062
    %v1083 = vpop.f32.mrf.mxu0
    %v1084 = vadd.f32 %v353, %v1083
    %1085 = vdwg.mxu0
    %1087 = vrot.lane.b32.xlu0 %v1003, 120
    %v1088 = vpop.permute.xlu0 %1087
    %v1089 = vsel %vm358, %v1003, 0
    %v1091 = vsel %vm358, %v1088, 0
    %1093 = vmatpush.xpose.msra.mxu0 0.0
    %1094 = vmatpush.xpose.msra.mxu0 0.0
    %1095 = vmatpush.xpose.msra.mxu0 0.0
    %1096 = vmatpush.xpose.msra.mxu0 0.0
    %1097 = vmatpush.xpose.msra.mxu0 0.0
    %1098 = vmatpush.xpose.msra.mxu0 0.0
    %1099 = vmatpush.xpose.msra.mxu0 0.0
    %1100 = vmatpush.xpose.msra.mxu0 0.0
    %1101 = vmatpush.xpose.msra.mxu0 0.0
    %1102 = vmatpush.xpose.msra.mxu0 0.0
    %1103 = vmatpush.xpose.msra.mxu0 0.0
    %1104 = vmatpush.xpose.msra.mxu0 0.0
    %1105 = vmatpush.xpose.msra.mxu0 0.0
    %1106 = vmatpush.xpose.msra.mxu0 0.0
    %1107 = vmatpush.xpose.msra.mxu0 0.0
    %1108 = vmatpush.xpose.msra.mxu0 %v1091
    %1109 = vmatmul.f32.gmra.mxu0 %v1089
    %v1110 = vpop.f32.mrf.mxu0
    %v1111 = vadd.f32 %v353, %v1110
    %1112 = vdwg.mxu0
    %v1113 = vsel %vm358, %v1030, -inf
    %1114 = vmax.xlane.f32.xlu0 %v1113
    %v1115 = vpop.xlane.xlu0 %1114
    %v1116 = vsel %vm358, %v1057, -inf
    %1117 = vmax.xlane.f32.xlu0 %v1116
    %v1118 = vpop.xlane.xlu0 %1117
    %v1119 = vsel %vm358, %v1084, -inf
    %1120 = vmax.xlane.f32.xlu0 %v1119
    %v1121 = vpop.xlane.xlu0 %1120
    %v1122 = vsel %vm358, %v1111, -inf
    %1123 = vmax.xlane.f32.xlu0 %v1122
    %v1124 = vpop.xlane.xlu0 %1123
    %v1125 = vsub.f32 %v1030, %v1115
    %v1126 = vsub.f32 %v1057, %v1118
    %v1127 = vsub.f32 %v1084, %v1121
    %v1128 = vsub.f32 %v1111, %v1124
    %v1129 = vmul.f32 %v1125, 1.442695
    %v1130 = vpow.pop %v1129
    %v1131 = vmul.f32 %v1126, 1.442695
    %v1132 = vpow.pop %v1131
    %v1133 = vmul.f32 %v1127, 1.442695
    %v1134 = vpow.pop %v1133
    %v1135 = vmul.f32 %v1128, 1.442695
    %v1136 = vpow.pop %v1135
    %v1137 = vsel %vm358, %v1130, 0.0
    %1138 = vadd.xlane.f32.xlu0 %v1137
    %v1139 = vpop.xlane.xlu0 %1138
    %v1140 = vsel %vm358, %v1132, 0.0
    %1141 = vadd.xlane.f32.xlu0 %v1140
    %v1142 = vpop.xlane.xlu0 %1141
    %v1143 = vsel %vm358, %v1134, 0.0
    %1144 = vadd.xlane.f32.xlu0 %v1143
    %v1145 = vpop.xlane.xlu0 %1144
    %v1146 = vsel %vm358, %v1136, 0.0
    %1147 = vadd.xlane.f32.xlu0 %v1146
    %v1148 = vpop.xlane.xlu0 %1147
    %v1149 = vrcp.pop %v1139
    %v1150 = vrcp.pop %v1142
    %v1151 = vrcp.pop %v1145
    %v1152 = vrcp.pop %v1148
    %v1153 = vmul.f32 %v1130, %v1149
    %v1154 = vmul.f32 %v1132, %v1150
    %v1155 = vmul.f32 %v1134, %v1151
    %v1156 = vmul.f32 %v1136, %v1152
    %1157 = vrot.lane.b32.xlu0 %v943, 112
    %v1158 = vpop.permute.xlu0 %1157
    %v1161 = vsel %vm358, %v1153, 0
    %1163 = vmatpush.msra.mxu0 0.0
    %1164 = vmatpush.msra.mxu0 0.0
    %1165 = vmatpush.msra.mxu0 0.0
    %1166 = vmatpush.msra.mxu0 0.0
    %1167 = vmatpush.msra.mxu0 0.0
    %1168 = vmatpush.msra.mxu0 0.0
    %1169 = vmatpush.msra.mxu0 0.0
    %1170 = vmatpush.msra.mxu0 0.0
    %1171 = vmatpush.msra.mxu0 0.0
    %1172 = vmatpush.msra.mxu0 0.0
    %1173 = vmatpush.msra.mxu0 0.0
    %1174 = vmatpush.msra.mxu0 0.0
    %1175 = vmatpush.msra.mxu0 0.0
    %1176 = vmatpush.msra.mxu0 0.0
    %1177 = vmatpush.msra.mxu0 0.0
    %1178 = vmatpush.msra.mxu0 %v1158
    %1179 = vmatmul.f32.gmra.mxu0 %v1161
    %v1180 = vpop.f32.mrf.mxu0
    %v1181 = vadd.f32 0.0, %v1180
    %1182 = vdwg.mxu0
    %1183 = vrot.lane.b32.xlu0 %v963, 112
    %v1184 = vpop.permute.xlu0 %1183
    %v1187 = vsel %vm358, %v1154, 0
    %1189 = vmatpush.msra.mxu0 0.0
    %1190 = vmatpush.msra.mxu0 0.0
    %1191 = vmatpush.msra.mxu0 0.0
    %1192 = vmatpush.msra.mxu0 0.0
    %1193 = vmatpush.msra.mxu0 0.0
    %1194 = vmatpush.msra.mxu0 0.0
    %1195 = vmatpush.msra.mxu0 0.0
    %1196 = vmatpush.msra.mxu0 0.0
    %1197 = vmatpush.msra.mxu0 0.0
    %1198 = vmatpush.msra.mxu0 0.0
    %1199 = vmatpush.msra.mxu0 0.0
    %1200 = vmatpush.msra.mxu0 0.0
    %1201 = vmatpush.msra.mxu0 0.0
    %1202 = vmatpush.msra.mxu0 0.0
    %1203 = vmatpush.msra.mxu0 0.0
    %1204 = vmatpush.msra.mxu0 %v1184
    %1205 = vmatmul.f32.gmra.mxu0 %v1187
    %v1206 = vpop.f32.mrf.mxu0
    %v1207 = vadd.f32 0.0, %v1206
    %1208 = vdwg.mxu0
    %1209 = vrot.lane.b32.xlu0 %v983, 112
    %v1210 = vpop.permute.xlu0 %1209
    %v1213 = vsel %vm358, %v1155, 0
    %1215 = vmatpush.msra.mxu0 0.0
    %1216 = vmatpush.msra.mxu0 0.0
    %1217 = vmatpush.msra.mxu0 0.0
    %1218 = vmatpush.msra.mxu0 0.0
    %1219 = vmatpush.msra.mxu0 0.0
    %1220 = vmatpush.msra.mxu0 0.0
    %1221 = vmatpush.msra.mxu0 0.0
    %1222 = vmatpush.msra.mxu0 0.0
    %1223 = vmatpush.msra.mxu0 0.0
    %1224 = vmatpush.msra.mxu0 0.0
    %1225 = vmatpush.msra.mxu0 0.0
    %1226 = vmatpush.msra.mxu0 0.0
    %1227 = vmatpush.msra.mxu0 0.0
    %1228 = vmatpush.msra.mxu0 0.0
    %1229 = vmatpush.msra.mxu0 0.0
    %1230 = vmatpush.msra.mxu0 %v1210
    %1231 = vmatmul.f32.gmra.mxu0 %v1213
    %v1232 = vpop.f32.mrf.mxu0
    %v1233 = vadd.f32 0.0, %v1232
    %1234 = vdwg.mxu0
    %1235 = vrot.lane.b32.xlu0 %v1003, 112
    %v1236 = vpop.permute.xlu0 %1235
    %v1239 = vsel %vm358, %v1156, 0
    %1241 = vmatpush.msra.mxu0 0.0
    %1242 = vmatpush.msra.mxu0 0.0
    %1243 = vmatpush.msra.mxu0 0.0
    %1244 = vmatpush.msra.mxu0 0.0
    %1245 = vmatpush.msra.mxu0 0.0
    %1246 = vmatpush.msra.mxu0 0.0
    %1247 = vmatpush.msra.mxu0 0.0
    %1248 = vmatpush.msra.mxu0 0.0
    %1249 = vmatpush.msra.mxu0 0.0
    %1250 = vmatpush.msra.mxu0 0.0
    %1251 = vmatpush.msra.mxu0 0.0
    %1252 = vmatpush.msra.mxu0 0.0
    %1253 = vmatpush.msra.mxu0 0.0
    %1254 = vmatpush.msra.mxu0 0.0
    %1255 = vmatpush.msra.mxu0 0.0
    %1256 = vmatpush.msra.mxu0 %v1236
    %1257 = vmatmul.f32.gmra.mxu0 %v1239
    %v1258 = vpop.f32.mrf.mxu0
    %v1259 = vadd.f32 0.0, %v1258
    %1260 = vdwg.mxu0
    %s1261 = scalar_lea.vmem %s17, 32
    %v1262 = vld [vmem:[%s1261] sm:$0xff]
    %v1263 = vld [vmem:[%s1261 + $0x8] sm:$0xff]
    %v1264 = vld [vmem:[%s1261 + $0x10] sm:$0xff]
    %v1265 = vld [vmem:[%s1261 + $0x18] sm:$0xff]
    %s1266 = scalar_lea.vmem %s19, 1
    %v1267 = vld [vmem:[%s1266] sm:$0x1]
    %v1269 = vsel %vm358, %v1181, 0
    %1271 = vmatpush.msra.mxu0 0.0
    %1272 = vmatpush.msra.mxu0 0.0
    %1273 = vmatpush.msra.mxu0 0.0
    %1274 = vmatpush.msra.mxu0 0.0
    %1275 = vmatpush.msra.mxu0 0.0
    %1276 = vmatpush.msra.mxu0 0.0
    %1277 = vmatpush.msra.mxu0 0.0
    %1278 = vmatpush.msra.mxu0 0.0
    %1279 = vmatpush.msra.mxu0 0.0
    %1280 = vmatpush.msra.mxu0 0.0
    %1281 = vmatpush.msra.mxu0 0.0
    %1282 = vmatpush.msra.mxu0 0.0
    %1283 = vmatpush.msra.mxu0 0.0
    %1284 = vmatpush.msra.mxu0 0.0
    %1285 = vmatpush.msra.mxu0 0.0
    %1286 = vmatpush.msra.mxu0 %v1262
    %1287 = vmatmul.f32.gmra.mxu0 %v1269
    %v1288 = vpop.f32.mrf.mxu0
    %v1289 = vadd.f32 0.0, %v1288
    %1290 = vdwg.mxu0
    %v1292 = vsel %vm358, %v1207, 0
    %1294 = vmatpush.msra.mxu0 0.0
    %1295 = vmatpush.msra.mxu0 0.0
    %1296 = vmatpush.msra.mxu0 0.0
    %1297 = vmatpush.msra.mxu0 0.0
    %1298 = vmatpush.msra.mxu0 0.0
    %1299 = vmatpush.msra.mxu0 0.0
    %1300 = vmatpush.msra.mxu0 0.0
    %1301 = vmatpush.msra.mxu0 0.0
    %1302 = vmatpush.msra.mxu0 0.0
    %1303 = vmatpush.msra.mxu0 0.0
    %1304 = vmatpush.msra.mxu0 0.0
    %1305 = vmatpush.msra.mxu0 0.0
    %1306 = vmatpush.msra.mxu0 0.0
    %1307 = vmatpush.msra.mxu0 0.0
    %1308 = vmatpush.msra.mxu0 0.0
    %1309 = vmatpush.msra.mxu0 %v1263
    %1310 = vmatmul.f32.gmra.mxu0 %v1292
    %v1311 = vpop.f32.mrf.mxu0
    %v1312 = vadd.f32 0.0, %v1311
    %1313 = vdwg.mxu0
    %v1315 = vsel %vm358, %v1233, 0
    %1317 = vmatpush.msra.mxu0 0.0
    %1318 = vmatpush.msra.mxu0 0.0
    %1319 = vmatpush.msra.mxu0 0.0
    %1320 = vmatpush.msra.mxu0 0.0
    %1321 = vmatpush.msra.mxu0 0.0
    %1322 = vmatpush.msra.mxu0 0.0
    %1323 = vmatpush.msra.mxu0 0.0
    %1324 = vmatpush.msra.mxu0 0.0
    %1325 = vmatpush.msra.mxu0 0.0
    %1326 = vmatpush.msra.mxu0 0.0
    %1327 = vmatpush.msra.mxu0 0.0
    %1328 = vmatpush.msra.mxu0 0.0
    %1329 = vmatpush.msra.mxu0 0.0
    %1330 = vmatpush.msra.mxu0 0.0
    %1331 = vmatpush.msra.mxu0 0.0
    %1332 = vmatpush.msra.mxu0 %v1264
    %1333 = vmatmul.f32.gmra.mxu0 %v1315
    %v1334 = vpop.f32.mrf.mxu0
    %v1335 = vadd.f32 0.0, %v1334
    %1336 = vdwg.mxu0
    %v1338 = vsel %vm358, %v1259, 0
    %1340 = vmatpush.msra.mxu0 0.0
    %1341 = vmatpush.msra.mxu0 0.0
    %1342 = vmatpush.msra.mxu0 0.0
    %1343 = vmatpush.msra.mxu0 0.0
    %1344 = vmatpush.msra.mxu0 0.0
    %1345 = vmatpush.msra.mxu0 0.0
    %1346 = vmatpush.msra.mxu0 0.0
    %1347 = vmatpush.msra.mxu0 0.0
    %1348 = vmatpush.msra.mxu0 0.0
    %1349 = vmatpush.msra.mxu0 0.0
    %1350 = vmatpush.msra.mxu0 0.0
    %1351 = vmatpush.msra.mxu0 0.0
    %1352 = vmatpush.msra.mxu0 0.0
    %1353 = vmatpush.msra.mxu0 0.0
    %1354 = vmatpush.msra.mxu0 0.0
    %1355 = vmatpush.msra.mxu0 %v1265
    %1356 = vmatmul.f32.gmra.mxu0 %v1338
    %v1357 = vpop.f32.mrf.mxu0
    %v1358 = vadd.f32 0.0, %v1357
    %1359 = vdwg.mxu0
    %v1360 = vsel %vm176, %v1289, 0.0
    %v1361 = vsel %vm176, %v1312, 0.0
    %v1362 = vadd.f32 %v1360, %v1361
    %v1363 = vsel %vm176, %v1335, 0.0
    %v1364 = vadd.f32 %v1362, %v1363
    %v1365 = vsel %vm176, %v1358, 0.0
    %v1366 = vadd.f32 %v1364, %v1365
    %v1368 = vperm.slane %v1267, 0
    %v1370 = vadd.f32 %v1366, %v1368
    %v1371 = vadd.f32 %v837, %v1370
    %s1372 = scalar_lea.vmem %s21, 1
    %v1373 = vld [vmem:[%s1372] sm:$0x1]
    %s1374 = scalar_lea.vmem %s23, 1
    %v1375 = vld [vmem:[%s1374] sm:$0x1]
    %v1376 = vsel %vm176, %v1371, 0.0
    %1377 = vadd.xlane.f32.xlu0 %v1376
    %v1378 = vpop.xlane.xlu0 %1377
    %v1379 = vmul.f32 %v1378, %v186
    %v1380 = vsub.f32 %v1371, %v1379
    %v1381 = vmul.f32 %v1380, %v1380
    %v1382 = vsel %vm176, %v1381, 0.0
    %1383 = vadd.xlane.f32.xlu0 %v1382
    %v1384 = vpop.xlane.xlu0 %1383
    %v1385 = vmul.f32 %v1384, %v199
    %v1387 = vperm.slane %v1373, 0
    %v1389 = vmul.f32 %v1387, %v1380
    %v1390 = vrsqrt.pop %v1385
    %v1391 = vmul.f32 %v1390, %v1385
    %v1392 = vmul.f32 %v1391, %v1390
    %v1393 = vmul.f32 0.5, %v1392
    %v1394 = vsub.f32 1.5, %v1393
    %v1395 = vmul.f32 %v1390, %v1394
    %v1396 = vmul.f32 %v1385, %v1395
    %vm1397 = vcmp.eq.f32.partialorder %v1385, inf
    %v1398 = vsel %vm1397, %v1385, %v1396
    %vm1399 = vcmp.eq.f32.partialorder %v1385, 0.0
    %v1400 = vand.u32 %v1385, 2147483648
    %v1401 = vsel %vm1399, %v1400, %v1398
    %v1402 = vadd.f32 %v1401, 1e-06
    %v1403 = vrcp.pop %v1402
    %v1404 = vmul.f32 %v1402, %v1403
    %v1405 = vsub.f32 1.0, %v1404
    %v1406 = vmul.f32 %v1403, %v1405
    %v1407 = vadd.f32 %v1403, %v1406
    %vm1408 = vweird.f32 %v1402
    %vm1409 = vweird.f32 %v1403
    %vm1410 = vmor %vm1408, %vm1409
    %v1411 = vsel %vm1410, %v1403, %v1407
    %v1412 = vand.u32 2147483647, %v1402
    %vm1413 = vcmp.eq.f32.partialorder %v1412, 8.507059e+37
    %v1414 = vand.u32 %v1402, 2147483648
    %v1415 = vor.u32 1.1754944e-38, %v1414
    %v1416 = vsel %vm1413, %v1415, %v1411
    %v1417 = vmul.f32 %v1389, %v1416
    %v1419 = vperm.slane %v1375, 0
    %v1421 = vadd.f32 %v1417, %v1419
    %s1422 = scalar_lea.vmem %s25, 32
    %v1423 = vld [vmem:[%s1422] sm:$0xff]
    %v1424 = vld [vmem:[%s1422 + $0x8] sm:$0xff]
    %v1425 = vld [vmem:[%s1422 + $0x10] sm:$0xff]
    %v1426 = vld [vmem:[%s1422 + $0x18] sm:$0xff]
    %s1427 = scalar_lea.vmem %s27, 1
    %v1428 = vld [vmem:[%s1427] sm:$0x1]
    %s1429 = scalar_lea.vmem %s29, 64
    %v1430 = vld [vmem:[%s1429] sm:$0xff]
    %v1431 = vld [vmem:[%s1429 + $0x8] sm:$0xff]
    %v1432 = vld [vmem:[%s1429 + $0x10] sm:$0xff]
    %v1433 = vld [vmem:[%s1429 + $0x18] sm:$0xff]
    %v1434 = vld [vmem:[%s1429 + $0x20] sm:$0xff]
    %v1435 = vld [vmem:[%s1429 + $0x28] sm:$0xff]
    %v1436 = vld [vmem:[%s1429 + $0x30] sm:$0xff]
    %v1437 = vld [vmem:[%s1429 + $0x38] sm:$0xff]
    %s1438 = scalar_lea.vmem %s31, 1
    %v1439 = vld [vmem:[%s1438] sm:$0x1]
    %v1441 = vperm.slane %v1428, 0
    %v1444 = vsel %vm176, %v1421, 0
    %1446 = vmatpush.msra.mxu0 0.0
    %1447 = vmatpush.msra.mxu0 0.0
    %1448 = vmatpush.msra.mxu0 0.0
    %1449 = vmatpush.msra.mxu0 0.0
    %1450 = vmatpush.msra.mxu0 0.0
    %1451 = vmatpush.msra.mxu0 0.0
    %1452 = vmatpush.msra.mxu0 0.0
    %1453 = vmatpush.msra.mxu0 0.0
    %1454 = vmatpush.msra.mxu0 0.0
    %1455 = vmatpush.msra.mxu0 0.0
    %1456 = vmatpush.msra.mxu0 0.0
    %1457 = vmatpush.msra.mxu0 0.0
    %1458 = vmatpush.msra.mxu0 %v1426
    %1459 = vmatpush.msra.mxu0 %v1425
    %1460 = vmatpush.msra.mxu0 %v1424
    %1461 = vmatpush.msra.mxu0 %v1423
    %1462 = vmatmul.f32.gmra.mxu0 %v1444
    %v1463 = vpop.f32.mrf.mxu0
    %v1464 = vadd.f32 %v1441, %v1463
    %1465 = vdwg.mxu0
    %v1466 = vmax.f32 %v1464, 0.0
    %v1468 = vperm.slane %v1439, 0
    %v1471 = vsel %vm813, %v1466, 0
    %1473 = vmatpush.msra.mxu0 0.0
    %1474 = vmatpush.msra.mxu0 0.0
    %1475 = vmatpush.msra.mxu0 0.0
    %1476 = vmatpush.msra.mxu0 0.0
    %1477 = vmatpush.msra.mxu0 0.0
    %1478 = vmatpush.msra.mxu0 0.0
    %1479 = vmatpush.msra.mxu0 0.0
    %1480 = vmatpush.msra.mxu0 0.0
    %1481 = vmatpush.msra.mxu0 %v1437
    %1482 = vmatpush.msra.mxu0 %v1436
    %1483 = vmatpush.msra.mxu0 %v1435
    %1484 = vmatpush.msra.mxu0 %v1434
    %1485 = vmatpush.msra.mxu0 %v1433
    %1486 = vmatpush.msra.mxu0 %v1432
    %1487 = vmatpush.msra.mxu0 %v1431
    %1488 = vmatpush.msra.mxu0 %v1430
    %1489 = vmatmul.f32.gmra.mxu0 %v1471
    %v1490 = vpop.f32.mrf.mxu0
    %v1491 = vadd.f32 %v1468, %v1490
    %1492 = vdwg.mxu0
    %v1493 = vadd.f32 %v1371, %v1491
    %v1494 = vld [vmem:[%s33] sm:$0x1]
    %v1495 = vld [vmem:[%s35] sm:$0x1]
    %v1496 = vsel %vm176, %v1493, 0.0
    %1497 = vadd.xlane.f32.xlu0 %v1496
    %v1498 = vpop.xlane.xlu0 %1497
    %v1499 = vmul.f32 %v1498, %v186
    %v1500 = vsub.f32 %v1493, %v1499
    %v1501 = vmul.f32 %v1500, %v1500
    %v1502 = vsel %vm176, %v1501, 0.0
    %1503 = vadd.xlane.f32.xlu0 %v1502
    %v1504 = vpop.xlane.xlu0 %1503
    %v1505 = vmul.f32 %v1504, %v199
    %v1507 = vperm.slane %v1494, 0
    %v1509 = vmul.f32 %v1507, %v1500
    %v1510 = vrsqrt.pop %v1505
    %v1511 = vmul.f32 %v1510, %v1505
    %v1512 = vmul.f32 %v1511, %v1510
    %v1513 = vmul.f32 0.5, %v1512
    %v1514 = vsub.f32 1.5, %v1513
    %v1515 = vmul.f32 %v1510, %v1514
    %v1516 = vmul.f32 %v1505, %v1515
    %vm1517 = vcmp.eq.f32.partialorder %v1505, inf
    %v1518 = vsel %vm1517, %v1505, %v1516
    %vm1519 = vcmp.eq.f32.partialorder %v1505, 0.0
    %v1520 = vand.u32 %v1505, 2147483648
    %v1521 = vsel %vm1519, %v1520, %v1518
    %v1522 = vadd.f32 %v1521, 1e-06
    %v1523 = vrcp.pop %v1522
    %v1524 = vmul.f32 %v1522, %v1523
    %v1525 = vsub.f32 1.0, %v1524
    %v1526 = vmul.f32 %v1523, %v1525
    %v1527 = vadd.f32 %v1523, %v1526
    %vm1528 = vweird.f32 %v1522
    %vm1529 = vweird.f32 %v1523
    %vm1530 = vmor %vm1528, %vm1529
    %v1531 = vsel %vm1530, %v1523, %v1527
    %v1532 = vand.u32 2147483647, %v1522
    %vm1533 = vcmp.eq.f32.partialorder %v1532, 8.507059e+37
    %v1534 = vand.u32 %v1522, 2147483648
    %v1535 = vor.u32 1.1754944e-38, %v1534
    %v1536 = vsel %vm1533, %v1535, %v1531
    %v1537 = vmul.f32 %v1509, %v1536
    %v1539 = vperm.slane %v1495, 0
    %v1541 = vadd.f32 %v1537, %v1539
    %v1542 = vld [vmem:[%s3] sm:$0xff]
    %v1543 = vld [vmem:[%s37] sm:$0x1]
    %v1544 = vld [vmem:[%s39] sm:$0x1]
    %v1545 = vsel %vm176, %v1542, 0.0
    %1546 = vadd.xlane.f32.xlu0 %v1545
    %v1547 = vpop.xlane.xlu0 %1546
    %v1548 = vmul.f32 %v1547, %v186
    %v1549 = vsub.f32 %v1542, %v1548
    %v1550 = vmul.f32 %v1549, %v1549
    %v1551 = vsel %vm176, %v1550, 0.0
    %1552 = vadd.xlane.f32.xlu0 %v1551
    %v1553 = vpop.xlane.xlu0 %1552
    %v1554 = vmul.f32 %v1553, %v199
    %v1556 = vperm.slane %v1543, 0
    %v1558 = vmul.f32 %v1556, %v1549
    %v1559 = vrsqrt.pop %v1554
    %v1560 = vmul.f32 %v1559, %v1554
    %v1561 = vmul.f32 %v1560, %v1559
    %v1562 = vmul.f32 0.5, %v1561
    %v1563 = vsub.f32 1.5, %v1562
    %v1564 = vmul.f32 %v1559, %v1563
    %v1565 = vmul.f32 %v1554, %v1564
    %vm1566 = vcmp.eq.f32.partialorder %v1554, inf
    %v1567 = vsel %vm1566, %v1554, %v1565
    %vm1568 = vcmp.eq.f32.partialorder %v1554, 0.0
    %v1569 = vand.u32 %v1554, 2147483648
    %v1570 = vsel %vm1568, %v1569, %v1567
    %v1571 = vadd.f32 %v1570, 1e-06
    %v1572 = vrcp.pop %v1571
    %v1573 = vmul.f32 %v1571, %v1572
    %v1574 = vsub.f32 1.0, %v1573
    %v1575 = vmul.f32 %v1572, %v1574
    %v1576 = vadd.f32 %v1572, %v1575
    %vm1577 = vweird.f32 %v1571
    %vm1578 = vweird.f32 %v1572
    %vm1579 = vmor %vm1577, %vm1578
    %v1580 = vsel %vm1579, %v1572, %v1576
    %v1581 = vand.u32 2147483647, %v1571
    %vm1582 = vcmp.eq.f32.partialorder %v1581, 8.507059e+37
    %v1583 = vand.u32 %v1571, 2147483648
    %v1584 = vor.u32 1.1754944e-38, %v1583
    %v1585 = vsel %vm1582, %v1584, %v1580
    %v1586 = vmul.f32 %v1558, %v1585
    %v1588 = vperm.slane %v1544, 0
    %v1590 = vadd.f32 %v1586, %v1588
    %v1591 = vld [vmem:[%s41] sm:$0xff]
    %v1592 = vld [vmem:[%s41 + $0x8] sm:$0xff]
    %v1593 = vld [vmem:[%s41 + $0x10] sm:$0xff]
    %v1594 = vld [vmem:[%s41 + $0x18] sm:$0xff]
    %v1595 = vld [vmem:[%s41 + $0x20] sm:$0xff]
    %v1596 = vld [vmem:[%s41 + $0x28] sm:$0xff]
    %v1597 = vld [vmem:[%s41 + $0x30] sm:$0xff]
    %v1598 = vld [vmem:[%s41 + $0x38] sm:$0xff]
    %v1599 = vld [vmem:[%s41 + $0x40] sm:$0xff]
    %v1600 = vld [vmem:[%s41 + $0x48] sm:$0xff]
    %v1601 = vld [vmem:[%s41 + $0x50] sm:$0xff]
    %v1602 = vld [vmem:[%s41 + $0x58] sm:$0xff]
    %v1603 = vld [vmem:[%s41 + $0x60] sm:$0xff]
    %v1604 = vld [vmem:[%s41 + $0x68] sm:$0xff]
    %v1605 = vld [vmem:[%s41 + $0x70] sm:$0xff]
    %v1606 = vld [vmem:[%s41 + $0x78] sm:$0xff]
    %v1607 = vld [vmem:[%s43] sm:$0x1]
    %v1608 = vld [vmem:[%s43 + $0x1] sm:$0x1]
    %v1609 = vld [vmem:[%s43 + $0x2] sm:$0x1]
    %v1610 = vld [vmem:[%s43 + $0x3] sm:$0x1]
    %v1615 = vperm.slane %v1607, 0
    %v1616 = vperm.slane %v1608, 0
    %v1617 = vperm.slane %v1609, 0
    %v1618 = vperm.slane %v1610, 0
    %v1624 = vsel %vm176, %v1590, 0
    %1626 = vmatpush.msra.mxu0 0.0
    %1627 = vmatpush.msra.mxu0 0.0
    %1628 = vmatpush.msra.mxu0 0.0
    %1629 = vmatpush.msra.mxu0 0.0
    %1630 = vmatpush.msra.mxu0 0.0
    %1631 = vmatpush.msra.mxu0 0.0
    %1632 = vmatpush.msra.mxu0 0.0
    %1633 = vmatpush.msra.mxu0 0.0
    %1634 = vmatpush.msra.mxu0 0.0
    %1635 = vmatpush.msra.mxu0 0.0
    %1636 = vmatpush.msra.mxu0 0.0
    %1637 = vmatpush.msra.mxu0 0.0
    %1638 = vmatpush.msra.mxu0 %v1594
    %1639 = vmatpush.msra.mxu0 %v1593
    %1640 = vmatpush.msra.mxu0 %v1592
    %1641 = vmatpush.msra.mxu0 %v1591
    %1642 = vmatmul.f32.gmra.mxu0 %v1624
    %v1643 = vpop.f32.mrf.mxu0
    %v1644 = vadd.f32 %v1615, %v1643
    %1645 = vdwg.mxu0
    %1646 = vmatpush.msra.mxu0 0.0
    %1647 = vmatpush.msra.mxu0 0.0
    %1648 = vmatpush.msra.mxu0 0.0
    %1649 = vmatpush.msra.mxu0 0.0
    %1650 = vmatpush.msra.mxu0 0.0
    %1651 = vmatpush.msra.mxu0 0.0
    %1652 = vmatpush.msra.mxu0 0.0
    %1653 = vmatpush.msra.mxu0 0.0
    %1654 = vmatpush.msra.mxu0 0.0
    %1655 = vmatpush.msra.mxu0 0.0
    %1656 = vmatpush.msra.mxu0 0.0
    %1657 = vmatpush.msra.mxu0 0.0
    %1658 = vmatpush.msra.mxu0 %v1598
    %1659 = vmatpush.msra.mxu0 %v1597
    %1660 = vmatpush.msra.mxu0 %v1596
    %1661 = vmatpush.msra.mxu0 %v1595
    %1662 = vmatmul.f32.gmra.mxu0 %v1624
    %v1663 = vpop.f32.mrf.mxu0
    %v1664 = vadd.f32 %v1616, %v1663
    %1665 = vdwg.mxu0
    %1666 = vmatpush.msra.mxu0 0.0
    %1667 = vmatpush.msra.mxu0 0.0
    %1668 = vmatpush.msra.mxu0 0.0
    %1669 = vmatpush.msra.mxu0 0.0
    %1670 = vmatpush.msra.mxu0 0.0
    %1671 = vmatpush.msra.mxu0 0.0
    %1672 = vmatpush.msra.mxu0 0.0
    %1673 = vmatpush.msra.mxu0 0.0
    %1674 = vmatpush.msra.mxu0 0.0
    %1675 = vmatpush.msra.mxu0 0.0
    %1676 = vmatpush.msra.mxu0 0.0
    %1677 = vmatpush.msra.mxu0 0.0
    %1678 = vmatpush.msra.mxu0 %v1602
    %1679 = vmatpush.msra.mxu0 %v1601
    %1680 = vmatpush.msra.mxu0 %v1600
    %1681 = vmatpush.msra.mxu0 %v1599
    %1682 = vmatmul.f32.gmra.mxu0 %v1624
    %v1683 = vpop.f32.mrf.mxu0
    %v1684 = vadd.f32 %v1617, %v1683
    %1685 = vdwg.mxu0
    %1686 = vmatpush.msra.mxu0 0.0
    %1687 = vmatpush.msra.mxu0 0.0
    %1688 = vmatpush.msra.mxu0 0.0
    %1689 = vmatpush.msra.mxu0 0.0
    %1690 = vmatpush.msra.mxu0 0.0
    %1691 = vmatpush.msra.mxu0 0.0
    %1692 = vmatpush.msra.mxu0 0.0
    %1693 = vmatpush.msra.mxu0 0.0
    %1694 = vmatpush.msra.mxu0 0.0
    %1695 = vmatpush.msra.mxu0 0.0
    %1696 = vmatpush.msra.mxu0 0.0
    %1697 = vmatpush.msra.mxu0 0.0
    %1698 = vmatpush.msra.mxu0 %v1606
    %1699 = vmatpush.msra.mxu0 %v1605
    %1700 = vmatpush.msra.mxu0 %v1604
    %1701 = vmatpush.msra.mxu0 %v1603
    %1702 = vmatmul.f32.gmra.mxu0 %v1624
    %v1703 = vpop.f32.mrf.mxu0
    %v1704 = vadd.f32 %v1618, %v1703
    %1705 = vdwg.mxu0
    %1707 = vrot.lane.b32.xlu0 %v1644, 120
    %v1708 = vpop.permute.xlu0 %1707
    %v1709 = vsel %vm358, %v1644, 0
    %v1711 = vsel %vm358, %v1708, 0
    %1713 = vmatpush.xpose.msra.mxu0 0.0
    %1714 = vmatpush.xpose.msra.mxu0 0.0
    %1715 = vmatpush.xpose.msra.mxu0 0.0
    %1716 = vmatpush.xpose.msra.mxu0 0.0
    %1717 = vmatpush.xpose.msra.mxu0 0.0
    %1718 = vmatpush.xpose.msra.mxu0 0.0
    %1719 = vmatpush.xpose.msra.mxu0 0.0
    %1720 = vmatpush.xpose.msra.mxu0 0.0
    %1721 = vmatpush.xpose.msra.mxu0 0.0
    %1722 = vmatpush.xpose.msra.mxu0 0.0
    %1723 = vmatpush.xpose.msra.mxu0 0.0
    %1724 = vmatpush.xpose.msra.mxu0 0.0
    %1725 = vmatpush.xpose.msra.mxu0 0.0
    %1726 = vmatpush.xpose.msra.mxu0 0.0
    %1727 = vmatpush.xpose.msra.mxu0 0.0
    %1728 = vmatpush.xpose.msra.mxu0 %v1711
    %1729 = vmatmul.f32.gmra.mxu0 %v1709
    %v1730 = vpop.f32.mrf.mxu0
    %v1731 = vadd.f32 %v172, %v1730
    %1732 = vdwg.mxu0
    %1734 = vrot.lane.b32.xlu0 %v1664, 120
    %v1735 = vpop.permute.xlu0 %1734
    %v1736 = vsel %vm358, %v1664, 0
    %v1738 = vsel %vm358, %v1735, 0
    %1740 = vmatpush.xpose.msra.mxu0 0.0
    %1741 = vmatpush.xpose.msra.mxu0 0.0
    %1742 = vmatpush.xpose.msra.mxu0 0.0
    %1743 = vmatpush.xpose.msra.mxu0 0.0
    %1744 = vmatpush.xpose.msra.mxu0 0.0
    %1745 = vmatpush.xpose.msra.mxu0 0.0
    %1746 = vmatpush.xpose.msra.mxu0 0.0
    %1747 = vmatpush.xpose.msra.mxu0 0.0
    %1748 = vmatpush.xpose.msra.mxu0 0.0
    %1749 = vmatpush.xpose.msra.mxu0 0.0
    %1750 = vmatpush.xpose.msra.mxu0 0.0
    %1751 = vmatpush.xpose.msra.mxu0 0.0
    %1752 = vmatpush.xpose.msra.mxu0 0.0
    %1753 = vmatpush.xpose.msra.mxu0 0.0
    %1754 = vmatpush.xpose.msra.mxu0 0.0
    %1755 = vmatpush.xpose.msra.mxu0 %v1738
    %1756 = vmatmul.f32.gmra.mxu0 %v1736
    %v1757 = vpop.f32.mrf.mxu0
    %v1758 = vadd.f32 %v172, %v1757
    %1759 = vdwg.mxu0
    %1761 = vrot.lane.b32.xlu0 %v1684, 120
    %v1762 = vpop.permute.xlu0 %1761
    %v1763 = vsel %vm358, %v1684, 0
    %v1765 = vsel %vm358, %v1762, 0
    %1767 = vmatpush.xpose.msra.mxu0 0.0
    %1768 = vmatpush.xpose.msra.mxu0 0.0
    %1769 = vmatpush.xpose.msra.mxu0 0.0
    %1770 = vmatpush.xpose.msra.mxu0 0.0
    %1771 = vmatpush.xpose.msra.mxu0 0.0
    %1772 = vmatpush.xpose.msra.mxu0 0.0
    %1773 = vmatpush.xpose.msra.mxu0 0.0
    %1774 = vmatpush.xpose.msra.mxu0 0.0
    %1775 = vmatpush.xpose.msra.mxu0 0.0
    %1776 = vmatpush.xpose.msra.mxu0 0.0
    %1777 = vmatpush.xpose.msra.mxu0 0.0
    %1778 = vmatpush.xpose.msra.mxu0 0.0
    %1779 = vmatpush.xpose.msra.mxu0 0.0
    %1780 = vmatpush.xpose.msra.mxu0 0.0
    %1781 = vmatpush.xpose.msra.mxu0 0.0
    %1782 = vmatpush.xpose.msra.mxu0 %v1765
    %1783 = vmatmul.f32.gmra.mxu0 %v1763
    %v1784 = vpop.f32.mrf.mxu0
    %v1785 = vadd.f32 %v172, %v1784
    %1786 = vdwg.mxu0
    %1788 = vrot.lane.b32.xlu0 %v1704, 120
    %v1789 = vpop.permute.xlu0 %1788
    %v1790 = vsel %vm358, %v1704, 0
    %v1792 = vsel %vm358, %v1789, 0
    %1794 = vmatpush.xpose.msra.mxu0 0.0
    %1795 = vmatpush.xpose.msra.mxu0 0.0
    %1796 = vmatpush.xpose.msra.mxu0 0.0
    %1797 = vmatpush.xpose.msra.mxu0 0.0
    %1798 = vmatpush.xpose.msra.mxu0 0.0
    %1799 = vmatpush.xpose.msra.mxu0 0.0
    %1800 = vmatpush.xpose.msra.mxu0 0.0
    %1801 = vmatpush.xpose.msra.mxu0 0.0
    %1802 = vmatpush.xpose.msra.mxu0 0.0
    %1803 = vmatpush.xpose.msra.mxu0 0.0
    %1804 = vmatpush.xpose.msra.mxu0 0.0
    %1805 = vmatpush.xpose.msra.mxu0 0.0
    %1806 = vmatpush.xpose.msra.mxu0 0.0
    %1807 = vmatpush.xpose.msra.mxu0 0.0
    %1808 = vmatpush.xpose.msra.mxu0 0.0
    %1809 = vmatpush.xpose.msra.mxu0 %v1792
    %1810 = vmatmul.f32.gmra.mxu0 %v1790
    %v1811 = vpop.f32.mrf.mxu0
    %v1812 = vadd.f32 %v172, %v1811
    %1813 = vdwg.mxu0
    %v1814 = vsel %vm358, %v1731, -inf
    %1815 = vmax.xlane.f32.xlu0 %v1814
    %v1816 = vpop.xlane.xlu0 %1815
    %v1817 = vsel %vm358, %v1758, -inf
    %1818 = vmax.xlane.f32.xlu0 %v1817
    %v1819 = vpop.xlane.xlu0 %1818
    %v1820 = vsel %vm358, %v1785, -inf
    %1821 = vmax.xlane.f32.xlu0 %v1820
    %v1822 = vpop.xlane.xlu0 %1821
    %v1823 = vsel %vm358, %v1812, -inf
    %1824 = vmax.xlane.f32.xlu0 %v1823
    %v1825 = vpop.xlane.xlu0 %1824
    %v1826 = vsub.f32 %v1731, %v1816
    %v1827 = vsub.f32 %v1758, %v1819
    %v1828 = vsub.f32 %v1785, %v1822
    %v1829 = vsub.f32 %v1812, %v1825
    %v1830 = vmul.f32 %v1826, 1.442695
    %v1831 = vpow.pop %v1830
    %v1832 = vmul.f32 %v1827, 1.442695
    %v1833 = vpow.pop %v1832
    %v1834 = vmul.f32 %v1828, 1.442695
    %v1835 = vpow.pop %v1834
    %v1836 = vmul.f32 %v1829, 1.442695
    %v1837 = vpow.pop %v1836
    %v1838 = vsel %vm358, %v1831, 0.0
    %1839 = vadd.xlane.f32.xlu0 %v1838
    %v1840 = vpop.xlane.xlu0 %1839
    %v1841 = vsel %vm358, %v1833, 0.0
    %1842 = vadd.xlane.f32.xlu0 %v1841
    %v1843 = vpop.xlane.xlu0 %1842
    %v1844 = vsel %vm358, %v1835, 0.0
    %1845 = vadd.xlane.f32.xlu0 %v1844
    %v1846 = vpop.xlane.xlu0 %1845
    %v1847 = vsel %vm358, %v1837, 0.0
    %1848 = vadd.xlane.f32.xlu0 %v1847
    %v1849 = vpop.xlane.xlu0 %1848
    %v1850 = vrcp.pop %v1840
    %v1851 = vrcp.pop %v1843
    %v1852 = vrcp.pop %v1846
    %v1853 = vrcp.pop %v1849
    %v1854 = vmul.f32 %v1831, %v1850
    %v1855 = vmul.f32 %v1833, %v1851
    %v1856 = vmul.f32 %v1835, %v1852
    %v1857 = vmul.f32 %v1837, %v1853
    %1858 = vrot.lane.b32.xlu0 %v1644, 112
    %v1859 = vpop.permute.xlu0 %1858
    %v1862 = vsel %vm358, %v1854, 0
    %1864 = vmatpush.msra.mxu0 0.0
    %1865 = vmatpush.msra.mxu0 0.0
    %1866 = vmatpush.msra.mxu0 0.0
    %1867 = vmatpush.msra.mxu0 0.0
    %1868 = vmatpush.msra.mxu0 0.0
    %1869 = vmatpush.msra.mxu0 0.0
    %1870 = vmatpush.msra.mxu0 0.0
    %1871 = vmatpush.msra.mxu0 0.0
    %1872 = vmatpush.msra.mxu0 0.0
    %1873 = vmatpush.msra.mxu0 0.0
    %1874 = vmatpush.msra.mxu0 0.0
    %1875 = vmatpush.msra.mxu0 0.0
    %1876 = vmatpush.msra.mxu0 0.0
    %1877 = vmatpush.msra.mxu0 0.0
    %1878 = vmatpush.msra.mxu0 0.0
    %1879 = vmatpush.msra.mxu0 %v1859
    %1880 = vmatmul.f32.gmra.mxu0 %v1862
    %v1881 = vpop.f32.mrf.mxu0
    %v1882 = vadd.f32 0.0, %v1881
    %1883 = vdwg.mxu0
    %1884 = vrot.lane.b32.xlu0 %v1664, 112
    %v1885 = vpop.permute.xlu0 %1884
    %v1888 = vsel %vm358, %v1855, 0
    %1890 = vmatpush.msra.mxu0 0.0
    %1891 = vmatpush.msra.mxu0 0.0
    %1892 = vmatpush.msra.mxu0 0.0
    %1893 = vmatpush.msra.mxu0 0.0
    %1894 = vmatpush.msra.mxu0 0.0
    %1895 = vmatpush.msra.mxu0 0.0
    %1896 = vmatpush.msra.mxu0 0.0
    %1897 = vmatpush.msra.mxu0 0.0
    %1898 = vmatpush.msra.mxu0 0.0
    %1899 = vmatpush.msra.mxu0 0.0
    %1900 = vmatpush.msra.mxu0 0.0
    %1901 = vmatpush.msra.mxu0 0.0
    %1902 = vmatpush.msra.mxu0 0.0
    %1903 = vmatpush.msra.mxu0 0.0
    %1904 = vmatpush.msra.mxu0 0.0
    %1905 = vmatpush.msra.mxu0 %v1885
    %1906 = vmatmul.f32.gmra.mxu0 %v1888
    %v1907 = vpop.f32.mrf.mxu0
    %v1908 = vadd.f32 0.0, %v1907
    %1909 = vdwg.mxu0
    %1910 = vrot.lane.b32.xlu0 %v1684, 112
    %v1911 = vpop.permute.xlu0 %1910
    %v1914 = vsel %vm358, %v1856, 0
    %1916 = vmatpush.msra.mxu0 0.0
    %1917 = vmatpush.msra.mxu0 0.0
    %1918 = vmatpush.msra.mxu0 0.0
    %1919 = vmatpush.msra.mxu0 0.0
    %1920 = vmatpush.msra.mxu0 0.0
    %1921 = vmatpush.msra.mxu0 0.0
    %1922 = vmatpush.msra.mxu0 0.0
    %1923 = vmatpush.msra.mxu0 0.0
    %1924 = vmatpush.msra.mxu0 0.0
    %1925 = vmatpush.msra.mxu0 0.0
    %1926 = vmatpush.msra.mxu0 0.0
    %1927 = vmatpush.msra.mxu0 0.0
    %1928 = vmatpush.msra.mxu0 0.0
    %1929 = vmatpush.msra.mxu0 0.0
    %1930 = vmatpush.msra.mxu0 0.0
    %1931 = vmatpush.msra.mxu0 %v1911
    %1932 = vmatmul.f32.gmra.mxu0 %v1914
    %v1933 = vpop.f32.mrf.mxu0
    %v1934 = vadd.f32 0.0, %v1933
    %1935 = vdwg.mxu0
    %1936 = vrot.lane.b32.xlu0 %v1704, 112
    %v1937 = vpop.permute.xlu0 %1936
    %v1940 = vsel %vm358, %v1857, 0
    %1942 = vmatpush.msra.mxu0 0.0
    %1943 = vmatpush.msra.mxu0 0.0
    %1944 = vmatpush.msra.mxu0 0.0
    %1945 = vmatpush.msra.mxu0 0.0
    %1946 = vmatpush.msra.mxu0 0.0
    %1947 = vmatpush.msra.mxu0 0.0
    %1948 = vmatpush.msra.mxu0 0.0
    %1949 = vmatpush.msra.mxu0 0.0
    %1950 = vmatpush.msra.mxu0 0.0
    %1951 = vmatpush.msra.mxu0 0.0
    %1952 = vmatpush.msra.mxu0 0.0
    %1953 = vmatpush.msra.mxu0 0.0
    %1954 = vmatpush.msra.mxu0 0.0
    %1955 = vmatpush.msra.mxu0 0.0
    %1956 = vmatpush.msra.mxu0 0.0
    %1957 = vmatpush.msra.mxu0 %v1937
    %1958 = vmatmul.f32.gmra.mxu0 %v1940
    %v1959 = vpop.f32.mrf.mxu0
    %v1960 = vadd.f32 0.0, %v1959
    %1961 = vdwg.mxu0
    %v1962 = vld [vmem:[%s45] sm:$0xff]
    %v1963 = vld [vmem:[%s45 + $0x8] sm:$0xff]
    %v1964 = vld [vmem:[%s45 + $0x10] sm:$0xff]
    %v1965 = vld [vmem:[%s45 + $0x18] sm:$0xff]
    %v1966 = vld [vmem:[%s47] sm:$0x1]
    %v1968 = vsel %vm358, %v1882, 0
    %1970 = vmatpush.msra.mxu0 0.0
    %1971 = vmatpush.msra.mxu0 0.0
    %1972 = vmatpush.msra.mxu0 0.0
    %1973 = vmatpush.msra.mxu0 0.0
    %1974 = vmatpush.msra.mxu0 0.0
    %1975 = vmatpush.msra.mxu0 0.0
    %1976 = vmatpush.msra.mxu0 0.0
    %1977 = vmatpush.msra.mxu0 0.0
    %1978 = vmatpush.msra.mxu0 0.0
    %1979 = vmatpush.msra.mxu0 0.0
    %1980 = vmatpush.msra.mxu0 0.0
    %1981 = vmatpush.msra.mxu0 0.0
    %1982 = vmatpush.msra.mxu0 0.0
    %1983 = vmatpush.msra.mxu0 0.0
    %1984 = vmatpush.msra.mxu0 0.0
    %1985 = vmatpush.msra.mxu0 %v1962
    %1986 = vmatmul.f32.gmra.mxu0 %v1968
    %v1987 = vpop.f32.mrf.mxu0
    %v1988 = vadd.f32 0.0, %v1987
    %1989 = vdwg.mxu0
    %v1991 = vsel %vm358, %v1908, 0
    %1993 = vmatpush.msra.mxu0 0.0
    %1994 = vmatpush.msra.mxu0 0.0
    %1995 = vmatpush.msra.mxu0 0.0
    %1996 = vmatpush.msra.mxu0 0.0
    %1997 = vmatpush.msra.mxu0 0.0
    %1998 = vmatpush.msra.mxu0 0.0
    %1999 = vmatpush.msra.mxu0 0.0
    %2000 = vmatpush.msra.mxu0 0.0
    %2001 = vmatpush.msra.mxu0 0.0
    %2002 = vmatpush.msra.mxu0 0.0
    %2003 = vmatpush.msra.mxu0 0.0
    %2004 = vmatpush.msra.mxu0 0.0
    %2005 = vmatpush.msra.mxu0 0.0
    %2006 = vmatpush.msra.mxu0 0.0
    %2007 = vmatpush.msra.mxu0 0.0
    %2008 = vmatpush.msra.mxu0 %v1963
    %2009 = vmatmul.f32.gmra.mxu0 %v1991
    %v2010 = vpop.f32.mrf.mxu0
    %v2011 = vadd.f32 0.0, %v2010
    %2012 = vdwg.mxu0
    %v2014 = vsel %vm358, %v1934, 0
    %2016 = vmatpush.msra.mxu0 0.0
    %2017 = vmatpush.msra.mxu0 0.0
    %2018 = vmatpush.msra.mxu0 0.0
    %2019 = vmatpush.msra.mxu0 0.0
    %2020 = vmatpush.msra.mxu0 0.0
    %2021 = vmatpush.msra.mxu0 0.0
    %2022 = vmatpush.msra.mxu0 0.0
    %2023 = vmatpush.msra.mxu0 0.0
    %2024 = vmatpush.msra.mxu0 0.0
    %2025 = vmatpush.msra.mxu0 0.0
    %2026 = vmatpush.msra.mxu0 0.0
    %2027 = vmatpush.msra.mxu0 0.0
    %2028 = vmatpush.msra.mxu0 0.0
    %2029 = vmatpush.msra.mxu0 0.0
    %2030 = vmatpush.msra.mxu0 0.0
    %2031 = vmatpush.msra.mxu0 %v1964
    %2032 = vmatmul.f32.gmra.mxu0 %v2014
    %v2033 = vpop.f32.mrf.mxu0
    %v2034 = vadd.f32 0.0, %v2033
    %2035 = vdwg.mxu0
    %v2037 = vsel %vm358, %v1960, 0
    %2039 = vmatpush.msra.mxu0 0.0
    %2040 = vmatpush.msra.mxu0 0.0
    %2041 = vmatpush.msra.mxu0 0.0
    %2042 = vmatpush.msra.mxu0 0.0
    %2043 = vmatpush.msra.mxu0 0.0
    %2044 = vmatpush.msra.mxu0 0.0
    %2045 = vmatpush.msra.mxu0 0.0
    %2046 = vmatpush.msra.mxu0 0.0
    %2047 = vmatpush.msra.mxu0 0.0
    %2048 = vmatpush.msra.mxu0 0.0
    %2049 = vmatpush.msra.mxu0 0.0
    %2050 = vmatpush.msra.mxu0 0.0
    %2051 = vmatpush.msra.mxu0 0.0
    %2052 = vmatpush.msra.mxu0 0.0
    %2053 = vmatpush.msra.mxu0 0.0
    %2054 = vmatpush.msra.mxu0 %v1965
    %2055 = vmatmul.f32.gmra.mxu0 %v2037
    %v2056 = vpop.f32.mrf.mxu0
    %v2057 = vadd.f32 0.0, %v2056
    %2058 = vdwg.mxu0
    %v2059 = vsel %vm176, %v1988, 0.0
    %v2060 = vsel %vm176, %v2011, 0.0
    %v2061 = vadd.f32 %v2059, %v2060
    %v2062 = vsel %vm176, %v2034, 0.0
    %v2063 = vadd.f32 %v2061, %v2062
    %v2064 = vsel %vm176, %v2057, 0.0
    %v2065 = vadd.f32 %v2063, %v2064
    %v2067 = vperm.slane %v1966, 0
    %v2069 = vadd.f32 %v2065, %v2067
    %v2070 = vadd.f32 %v1542, %v2069
    %v2071 = vld [vmem:[%s49] sm:$0x1]
    %v2072 = vld [vmem:[%s51] sm:$0x1]
    %v2073 = vsel %vm176, %v2070, 0.0
    %2074 = vadd.xlane.f32.xlu0 %v2073
    %v2075 = vpop.xlane.xlu0 %2074
    %v2076 = vmul.f32 %v2075, %v186
    %v2077 = vsub.f32 %v2070, %v2076
    %v2078 = vmul.f32 %v2077, %v2077
    %v2079 = vsel %vm176, %v2078, 0.0
    %2080 = vadd.xlane.f32.xlu0 %v2079
    %v2081 = vpop.xlane.xlu0 %2080
    %v2082 = vmul.f32 %v2081, %v199
    %v2084 = vperm.slane %v2071, 0
    %v2086 = vmul.f32 %v2084, %v2077
    %v2087 = vrsqrt.pop %v2082
    %v2088 = vmul.f32 %v2087, %v2082
    %v2089 = vmul.f32 %v2088, %v2087
    %v2090 = vmul.f32 0.5, %v2089
    %v2091 = vsub.f32 1.5, %v2090
    %v2092 = vmul.f32 %v2087, %v2091
    %v2093 = vmul.f32 %v2082, %v2092
    %vm2094 = vcmp.eq.f32.partialorder %v2082, inf
    %v2095 = vsel %vm2094, %v2082, %v2093
    %vm2096 = vcmp.eq.f32.partialorder %v2082, 0.0
    %v2097 = vand.u32 %v2082, 2147483648
    %v2098 = vsel %vm2096, %v2097, %v2095
    %v2099 = vadd.f32 %v2098, 1e-06
    %v2100 = vrcp.pop %v2099
    %v2101 = vmul.f32 %v2099, %v2100
    %v2102 = vsub.f32 1.0, %v2101
    %v2103 = vmul.f32 %v2100, %v2102
    %v2104 = vadd.f32 %v2100, %v2103
    %vm2105 = vweird.f32 %v2099
    %vm2106 = vweird.f32 %v2100
    %vm2107 = vmor %vm2105, %vm2106
    %v2108 = vsel %vm2107, %v2100, %v2104
    %v2109 = vand.u32 2147483647, %v2099
    %vm2110 = vcmp.eq.f32.partialorder %v2109, 8.507059e+37
    %v2111 = vand.u32 %v2099, 2147483648
    %v2112 = vor.u32 1.1754944e-38, %v2111
    %v2113 = vsel %vm2110, %v2112, %v2108
    %v2114 = vmul.f32 %v2086, %v2113
    %v2116 = vperm.slane %v2072, 0
    %v2118 = vadd.f32 %v2114, %v2116
    %v2119 = vld [vmem:[%s53] sm:$0xff]
    %v2120 = vld [vmem:[%s53 + $0x8] sm:$0xff]
    %v2121 = vld [vmem:[%s53 + $0x10] sm:$0xff]
    %v2122 = vld [vmem:[%s53 + $0x18] sm:$0xff]
    %v2123 = vld [vmem:[%s53 + $0x20] sm:$0xff]
    %v2124 = vld [vmem:[%s53 + $0x28] sm:$0xff]
    %v2125 = vld [vmem:[%s53 + $0x30] sm:$0xff]
    %v2126 = vld [vmem:[%s53 + $0x38] sm:$0xff]
    %v2127 = vld [vmem:[%s53 + $0x40] sm:$0xff]
    %v2128 = vld [vmem:[%s53 + $0x48] sm:$0xff]
    %v2129 = vld [vmem:[%s53 + $0x50] sm:$0xff]
    %v2130 = vld [vmem:[%s53 + $0x58] sm:$0xff]
    %v2131 = vld [vmem:[%s53 + $0x60] sm:$0xff]
    %v2132 = vld [vmem:[%s53 + $0x68] sm:$0xff]
    %v2133 = vld [vmem:[%s53 + $0x70] sm:$0xff]
    %v2134 = vld [vmem:[%s53 + $0x78] sm:$0xff]
    %v2135 = vld [vmem:[%s55] sm:$0x1]
    %v2136 = vld [vmem:[%s55 + $0x1] sm:$0x1]
    %v2137 = vld [vmem:[%s55 + $0x2] sm:$0x1]
    %v2138 = vld [vmem:[%s55 + $0x3] sm:$0x1]
    %v2143 = vperm.slane %v2135, 0
    %v2144 = vperm.slane %v2136, 0
    %v2145 = vperm.slane %v2137, 0
    %v2146 = vperm.slane %v2138, 0
    %v2152 = vsel %vm176, %v2118, 0
    %2154 = vmatpush.msra.mxu0 0.0
    %2155 = vmatpush.msra.mxu0 0.0
    %2156 = vmatpush.msra.mxu0 0.0
    %2157 = vmatpush.msra.mxu0 0.0
    %2158 = vmatpush.msra.mxu0 0.0
    %2159 = vmatpush.msra.mxu0 0.0
    %2160 = vmatpush.msra.mxu0 0.0
    %2161 = vmatpush.msra.mxu0 0.0
    %2162 = vmatpush.msra.mxu0 0.0
    %2163 = vmatpush.msra.mxu0 0.0
    %2164 = vmatpush.msra.mxu0 0.0
    %2165 = vmatpush.msra.mxu0 0.0
    %2166 = vmatpush.msra.mxu0 %v2122
    %2167 = vmatpush.msra.mxu0 %v2121
    %2168 = vmatpush.msra.mxu0 %v2120
    %2169 = vmatpush.msra.mxu0 %v2119
    %2170 = vmatmul.f32.gmra.mxu0 %v2152
    %v2171 = vpop.f32.mrf.mxu0
    %v2172 = vadd.f32 %v2143, %v2171
    %2173 = vdwg.mxu0
    %2174 = vmatpush.msra.mxu0 0.0
    %2175 = vmatpush.msra.mxu0 0.0
    %2176 = vmatpush.msra.mxu0 0.0
    %2177 = vmatpush.msra.mxu0 0.0
    %2178 = vmatpush.msra.mxu0 0.0
    %2179 = vmatpush.msra.mxu0 0.0
    %2180 = vmatpush.msra.mxu0 0.0
    %2181 = vmatpush.msra.mxu0 0.0
    %2182 = vmatpush.msra.mxu0 0.0
    %2183 = vmatpush.msra.mxu0 0.0
    %2184 = vmatpush.msra.mxu0 0.0
    %2185 = vmatpush.msra.mxu0 0.0
    %2186 = vmatpush.msra.mxu0 %v2126
    %2187 = vmatpush.msra.mxu0 %v2125
    %2188 = vmatpush.msra.mxu0 %v2124
    %2189 = vmatpush.msra.mxu0 %v2123
    %2190 = vmatmul.f32.gmra.mxu0 %v2152
    %v2191 = vpop.f32.mrf.mxu0
    %v2192 = vadd.f32 %v2144, %v2191
    %2193 = vdwg.mxu0
    %2194 = vmatpush.msra.mxu0 0.0
    %2195 = vmatpush.msra.mxu0 0.0
    %2196 = vmatpush.msra.mxu0 0.0
    %2197 = vmatpush.msra.mxu0 0.0
    %2198 = vmatpush.msra.mxu0 0.0
    %2199 = vmatpush.msra.mxu0 0.0
    %2200 = vmatpush.msra.mxu0 0.0
    %2201 = vmatpush.msra.mxu0 0.0
    %2202 = vmatpush.msra.mxu0 0.0
    %2203 = vmatpush.msra.mxu0 0.0
    %2204 = vmatpush.msra.mxu0 0.0
    %2205 = vmatpush.msra.mxu0 0.0
    %2206 = vmatpush.msra.mxu0 %v2130
    %2207 = vmatpush.msra.mxu0 %v2129
    %2208 = vmatpush.msra.mxu0 %v2128
    %2209 = vmatpush.msra.mxu0 %v2127
    %2210 = vmatmul.f32.gmra.mxu0 %v2152
    %v2211 = vpop.f32.mrf.mxu0
    %v2212 = vadd.f32 %v2145, %v2211
    %2213 = vdwg.mxu0
    %2214 = vmatpush.msra.mxu0 0.0
    %2215 = vmatpush.msra.mxu0 0.0
    %2216 = vmatpush.msra.mxu0 0.0
    %2217 = vmatpush.msra.mxu0 0.0
    %2218 = vmatpush.msra.mxu0 0.0
    %2219 = vmatpush.msra.mxu0 0.0
    %2220 = vmatpush.msra.mxu0 0.0
    %2221 = vmatpush.msra.mxu0 0.0
    %2222 = vmatpush.msra.mxu0 0.0
    %2223 = vmatpush.msra.mxu0 0.0
    %2224 = vmatpush.msra.mxu0 0.0
    %2225 = vmatpush.msra.mxu0 0.0
    %2226 = vmatpush.msra.mxu0 %v2134
    %2227 = vmatpush.msra.mxu0 %v2133
    %2228 = vmatpush.msra.mxu0 %v2132
    %2229 = vmatpush.msra.mxu0 %v2131
    %2230 = vmatmul.f32.gmra.mxu0 %v2152
    %v2231 = vpop.f32.mrf.mxu0
    %v2232 = vadd.f32 %v2146, %v2231
    %2233 = vdwg.mxu0
    %v2234 = vld [vmem:[%s57] sm:$0xff]
    %v2235 = vld [vmem:[%s57 + $0x8] sm:$0xff]
    %v2236 = vld [vmem:[%s57 + $0x10] sm:$0xff]
    %v2237 = vld [vmem:[%s57 + $0x18] sm:$0xff]
    %v2238 = vld [vmem:[%s57 + $0x20] sm:$0xff]
    %v2239 = vld [vmem:[%s57 + $0x28] sm:$0xff]
    %v2240 = vld [vmem:[%s57 + $0x30] sm:$0xff]
    %v2241 = vld [vmem:[%s57 + $0x38] sm:$0xff]
    %v2242 = vld [vmem:[%s57 + $0x40] sm:$0xff]
    %v2243 = vld [vmem:[%s57 + $0x48] sm:$0xff]
    %v2244 = vld [vmem:[%s57 + $0x50] sm:$0xff]
    %v2245 = vld [vmem:[%s57 + $0x58] sm:$0xff]
    %v2246 = vld [vmem:[%s57 + $0x60] sm:$0xff]
    %v2247 = vld [vmem:[%s57 + $0x68] sm:$0xff]
    %v2248 = vld [vmem:[%s57 + $0x70] sm:$0xff]
    %v2249 = vld [vmem:[%s57 + $0x78] sm:$0xff]
    %v2250 = vld [vmem:[%s59] sm:$0x1]
    %v2251 = vld [vmem:[%s59 + $0x1] sm:$0x1]
    %v2252 = vld [vmem:[%s59 + $0x2] sm:$0x1]
    %v2253 = vld [vmem:[%s59 + $0x3] sm:$0x1]
    %v2258 = vperm.slane %v2250, 0
    %v2259 = vperm.slane %v2251, 0
    %v2260 = vperm.slane %v2252, 0
    %v2261 = vperm.slane %v2253, 0
    %v2267 = vsel %vm176, %v1541, 0
    %2269 = vmatpush.msra.mxu0 0.0
    %2270 = vmatpush.msra.mxu0 0.0
    %2271 = vmatpush.msra.mxu0 0.0
    %2272 = vmatpush.msra.mxu0 0.0
    %2273 = vmatpush.msra.mxu0 0.0
    %2274 = vmatpush.msra.mxu0 0.0
    %2275 = vmatpush.msra.mxu0 0.0
    %2276 = vmatpush.msra.mxu0 0.0
    %2277 = vmatpush.msra.mxu0 0.0
    %2278 = vmatpush.msra.mxu0 0.0
    %2279 = vmatpush.msra.mxu0 0.0
    %2280 = vmatpush.msra.mxu0 0.0
    %2281 = vmatpush.msra.mxu0 %v2237
    %2282 = vmatpush.msra.mxu0 %v2236
    %2283 = vmatpush.msra.mxu0 %v2235
    %2284 = vmatpush.msra.mxu0 %v2234
    %2285 = vmatmul.f32.gmra.mxu0 %v2267
    %v2286 = vpop.f32.mrf.mxu0
    %v2287 = vadd.f32 %v2258, %v2286
    %2288 = vdwg.mxu0
    %2289 = vmatpush.msra.mxu0 0.0
    %2290 = vmatpush.msra.mxu0 0.0
    %2291 = vmatpush.msra.mxu0 0.0
    %2292 = vmatpush.msra.mxu0 0.0
    %2293 = vmatpush.msra.mxu0 0.0
    %2294 = vmatpush.msra.mxu0 0.0
    %2295 = vmatpush.msra.mxu0 0.0
    %2296 = vmatpush.msra.mxu0 0.0
    %2297 = vmatpush.msra.mxu0 0.0
    %2298 = vmatpush.msra.mxu0 0.0
    %2299 = vmatpush.msra.mxu0 0.0
    %2300 = vmatpush.msra.mxu0 0.0
    %2301 = vmatpush.msra.mxu0 %v2241
    %2302 = vmatpush.msra.mxu0 %v2240
    %2303 = vmatpush.msra.mxu0 %v2239
    %2304 = vmatpush.msra.mxu0 %v2238
    %2305 = vmatmul.f32.gmra.mxu0 %v2267
    %v2306 = vpop.f32.mrf.mxu0
    %v2307 = vadd.f32 %v2259, %v2306
    %2308 = vdwg.mxu0
    %2309 = vmatpush.msra.mxu0 0.0
    %2310 = vmatpush.msra.mxu0 0.0
    %2311 = vmatpush.msra.mxu0 0.0
    %2312 = vmatpush.msra.mxu0 0.0
    %2313 = vmatpush.msra.mxu0 0.0
    %2314 = vmatpush.msra.mxu0 0.0
    %2315 = vmatpush.msra.mxu0 0.0
    %2316 = vmatpush.msra.mxu0 0.0
    %2317 = vmatpush.msra.mxu0 0.0
    %2318 = vmatpush.msra.mxu0 0.0
    %2319 = vmatpush.msra.mxu0 0.0
    %2320 = vmatpush.msra.mxu0 0.0
    %2321 = vmatpush.msra.mxu0 %v2245
    %2322 = vmatpush.msra.mxu0 %v2244
    %2323 = vmatpush.msra.mxu0 %v2243
    %2324 = vmatpush.msra.mxu0 %v2242
    %2325 = vmatmul.f32.gmra.mxu0 %v2267
    %v2326 = vpop.f32.mrf.mxu0
    %v2327 = vadd.f32 %v2260, %v2326
    %2328 = vdwg.mxu0
    %2329 = vmatpush.msra.mxu0 0.0
    %2330 = vmatpush.msra.mxu0 0.0
    %2331 = vmatpush.msra.mxu0 0.0
    %2332 = vmatpush.msra.mxu0 0.0
    %2333 = vmatpush.msra.mxu0 0.0
    %2334 = vmatpush.msra.mxu0 0.0
    %2335 = vmatpush.msra.mxu0 0.0
    %2336 = vmatpush.msra.mxu0 0.0
    %2337 = vmatpush.msra.mxu0 0.0
    %2338 = vmatpush.msra.mxu0 0.0
    %2339 = vmatpush.msra.mxu0 0.0
    %2340 = vmatpush.msra.mxu0 0.0
    %2341 = vmatpush.msra.mxu0 %v2249
    %2342 = vmatpush.msra.mxu0 %v2248
    %2343 = vmatpush.msra.mxu0 %v2247
    %2344 = vmatpush.msra.mxu0 %v2246
    %2345 = vmatmul.f32.gmra.mxu0 %v2267
    %v2346 = vpop.f32.mrf.mxu0
    %v2347 = vadd.f32 %v2261, %v2346
    %2348 = vdwg.mxu0
    %v2350 = vsel %vm358, %v2172, 0
    %v2353 = vsel %vm358, %v2287, 0
    %2355 = vmatpush.xpose.msra.mxu0 0.0
    %2356 = vmatpush.xpose.msra.mxu0 0.0
    %2357 = vmatpush.xpose.msra.mxu0 0.0
    %2358 = vmatpush.xpose.msra.mxu0 0.0
    %2359 = vmatpush.xpose.msra.mxu0 0.0
    %2360 = vmatpush.xpose.msra.mxu0 0.0
    %2361 = vmatpush.xpose.msra.mxu0 0.0
    %2362 = vmatpush.xpose.msra.mxu0 0.0
    %2363 = vmatpush.xpose.msra.mxu0 0.0
    %2364 = vmatpush.xpose.msra.mxu0 0.0
    %2365 = vmatpush.xpose.msra.mxu0 0.0
    %2366 = vmatpush.xpose.msra.mxu0 0.0
    %2367 = vmatpush.xpose.msra.mxu0 0.0
    %2368 = vmatpush.xpose.msra.mxu0 0.0
    %2369 = vmatpush.xpose.msra.mxu0 0.0
    %2370 = vmatpush.xpose.msra.mxu0 %v2353
    %2371 = vmatmul.f32.gmra.mxu0 %v2350
    %v2372 = vpop.f32.mrf.mxu0
    %v2373 = vadd.f32 %v353, %v2372
    %2374 = vdwg.mxu0
    %v2376 = vsel %vm358, %v2192, 0
    %v2379 = vsel %vm358, %v2307, 0
    %2381 = vmatpush.xpose.msra.mxu0 0.0
    %2382 = vmatpush.xpose.msra.mxu0 0.0
    %2383 = vmatpush.xpose.msra.mxu0 0.0
    %2384 = vmatpush.xpose.msra.mxu0 0.0
    %2385 = vmatpush.xpose.msra.mxu0 0.0
    %2386 = vmatpush.xpose.msra.mxu0 0.0
    %2387 = vmatpush.xpose.msra.mxu0 0.0
    %2388 = vmatpush.xpose.msra.mxu0 0.0
    %2389 = vmatpush.xpose.msra.mxu0 0.0
    %2390 = vmatpush.xpose.msra.mxu0 0.0
    %2391 = vmatpush.xpose.msra.mxu0 0.0
    %2392 = vmatpush.xpose.msra.mxu0 0.0
    %2393 = vmatpush.xpose.msra.mxu0 0.0
    %2394 = vmatpush.xpose.msra.mxu0 0.0
    %2395 = vmatpush.xpose.msra.mxu0 0.0
    %2396 = vmatpush.xpose.msra.mxu0 %v2379
    %2397 = vmatmul.f32.gmra.mxu0 %v2376
    %v2398 = vpop.f32.mrf.mxu0
    %v2399 = vadd.f32 %v353, %v2398
    %2400 = vdwg.mxu0
    %v2402 = vsel %vm358, %v2212, 0
    %v2405 = vsel %vm358, %v2327, 0
    %2407 = vmatpush.xpose.msra.mxu0 0.0
    %2408 = vmatpush.xpose.msra.mxu0 0.0
    %2409 = vmatpush.xpose.msra.mxu0 0.0
    %2410 = vmatpush.xpose.msra.mxu0 0.0
    %2411 = vmatpush.xpose.msra.mxu0 0.0
    %2412 = vmatpush.xpose.msra.mxu0 0.0
    %2413 = vmatpush.xpose.msra.mxu0 0.0
    %2414 = vmatpush.xpose.msra.mxu0 0.0
    %2415 = vmatpush.xpose.msra.mxu0 0.0
    %2416 = vmatpush.xpose.msra.mxu0 0.0
    %2417 = vmatpush.xpose.msra.mxu0 0.0
    %2418 = vmatpush.xpose.msra.mxu0 0.0
    %2419 = vmatpush.xpose.msra.mxu0 0.0
    %2420 = vmatpush.xpose.msra.mxu0 0.0
    %2421 = vmatpush.xpose.msra.mxu0 0.0
    %2422 = vmatpush.xpose.msra.mxu0 %v2405
    %2423 = vmatmul.f32.gmra.mxu0 %v2402
    %v2424 = vpop.f32.mrf.mxu0
    %v2425 = vadd.f32 %v353, %v2424
    %2426 = vdwg.mxu0
    %v2428 = vsel %vm358, %v2232, 0
    %v2431 = vsel %vm358, %v2347, 0
    %2433 = vmatpush.xpose.msra.mxu0 0.0
    %2434 = vmatpush.xpose.msra.mxu0 0.0
    %2435 = vmatpush.xpose.msra.mxu0 0.0
    %2436 = vmatpush.xpose.msra.mxu0 0.0
    %2437 = vmatpush.xpose.msra.mxu0 0.0
    %2438 = vmatpush.xpose.msra.mxu0 0.0
    %2439 = vmatpush.xpose.msra.mxu0 0.0
    %2440 = vmatpush.xpose.msra.mxu0 0.0
    %2441 = vmatpush.xpose.msra.mxu0 0.0
    %2442 = vmatpush.xpose.msra.mxu0 0.0
    %2443 = vmatpush.xpose.msra.mxu0 0.0
    %2444 = vmatpush.xpose.msra.mxu0 0.0
    %2445 = vmatpush.xpose.msra.mxu0 0.0
    %2446 = vmatpush.xpose.msra.mxu0 0.0
    %2447 = vmatpush.xpose.msra.mxu0 0.0
    %2448 = vmatpush.xpose.msra.mxu0 %v2431
    %2449 = vmatmul.f32.gmra.mxu0 %v2428
    %v2450 = vpop.f32.mrf.mxu0
    %v2451 = vadd.f32 %v353, %v2450
    %2452 = vdwg.mxu0
    %v2453 = vsel %vm358, %v2373, -inf
    %2454 = vmax.xlane.f32.xlu0 %v2453
    %v2455 = vpop.xlane.xlu0 %2454
    %v2456 = vsel %vm358, %v2399, -inf
    %2457 = vmax.xlane.f32.xlu0 %v2456
    %v2458 = vpop.xlane.xlu0 %2457
    %v2459 = vsel %vm358, %v2425, -inf
    %2460 = vmax.xlane.f32.xlu0 %v2459
    %v2461 = vpop.xlane.xlu0 %2460
    %v2462 = vsel %vm358, %v2451, -inf
    %2463 = vmax.xlane.f32.xlu0 %v2462
    %v2464 = vpop.xlane.xlu0 %2463
    %v2465 = vsub.f32 %v2373, %v2455
    %v2466 = vsub.f32 %v2399, %v2458
    %v2467 = vsub.f32 %v2425, %v2461
    %v2468 = vsub.f32 %v2451, %v2464
    %v2469 = vmul.f32 %v2465, 1.442695
    %v2470 = vpow.pop %v2469
    %v2471 = vmul.f32 %v2466, 1.442695
    %v2472 = vpow.pop %v2471
    %v2473 = vmul.f32 %v2467, 1.442695
    %v2474 = vpow.pop %v2473
    %v2475 = vmul.f32 %v2468, 1.442695
    %v2476 = vpow.pop %v2475
    %v2477 = vsel %vm358, %v2470, 0.0
    %2478 = vadd.xlane.f32.xlu0 %v2477
    %v2479 = vpop.xlane.xlu0 %2478
    %v2480 = vsel %vm358, %v2472, 0.0
    %2481 = vadd.xlane.f32.xlu0 %v2480
    %v2482 = vpop.xlane.xlu0 %2481
    %v2483 = vsel %vm358, %v2474, 0.0
    %2484 = vadd.xlane.f32.xlu0 %v2483
    %v2485 = vpop.xlane.xlu0 %2484
    %v2486 = vsel %vm358, %v2476, 0.0
    %2487 = vadd.xlane.f32.xlu0 %v2486
    %v2488 = vpop.xlane.xlu0 %2487
    %v2489 = vrcp.pop %v2479
    %v2490 = vrcp.pop %v2482
    %v2491 = vrcp.pop %v2485
    %v2492 = vrcp.pop %v2488
    %v2493 = vmul.f32 %v2470, %v2489
    %v2494 = vmul.f32 %v2472, %v2490
    %v2495 = vmul.f32 %v2474, %v2491
    %v2496 = vmul.f32 %v2476, %v2492
    %2497 = vrot.lane.b32.xlu0 %v2287, 120
    %v2498 = vpop.permute.xlu0 %2497
    %v2501 = vsel %vm358, %v2493, 0
    %2503 = vmatpush.msra.mxu0 0.0
    %2504 = vmatpush.msra.mxu0 0.0
    %2505 = vmatpush.msra.mxu0 0.0
    %2506 = vmatpush.msra.mxu0 0.0
    %2507 = vmatpush.msra.mxu0 0.0
    %2508 = vmatpush.msra.mxu0 0.0
    %2509 = vmatpush.msra.mxu0 0.0
    %2510 = vmatpush.msra.mxu0 0.0
    %2511 = vmatpush.msra.mxu0 0.0
    %2512 = vmatpush.msra.mxu0 0.0
    %2513 = vmatpush.msra.mxu0 0.0
    %2514 = vmatpush.msra.mxu0 0.0
    %2515 = vmatpush.msra.mxu0 0.0
    %2516 = vmatpush.msra.mxu0 0.0
    %2517 = vmatpush.msra.mxu0 0.0
    %2518 = vmatpush.msra.mxu0 %v2498
    %2519 = vmatmul.f32.gmra.mxu0 %v2501
    %v2520 = vpop.f32.mrf.mxu0
    %v2521 = vadd.f32 0.0, %v2520
    %2522 = vdwg.mxu0
    %2523 = vrot.lane.b32.xlu0 %v2307, 120
    %v2524 = vpop.permute.xlu0 %2523
    %v2527 = vsel %vm358, %v2494, 0
    %2529 = vmatpush.msra.mxu0 0.0
    %2530 = vmatpush.msra.mxu0 0.0
    %2531 = vmatpush.msra.mxu0 0.0
    %2532 = vmatpush.msra.mxu0 0.0
    %2533 = vmatpush.msra.mxu0 0.0
    %2534 = vmatpush.msra.mxu0 0.0
    %2535 = vmatpush.msra.mxu0 0.0
    %2536 = vmatpush.msra.mxu0 0.0
    %2537 = vmatpush.msra.mxu0 0.0
    %2538 = vmatpush.msra.mxu0 0.0
    %2539 = vmatpush.msra.mxu0 0.0
    %2540 = vmatpush.msra.mxu0 0.0
    %2541 = vmatpush.msra.mxu0 0.0
    %2542 = vmatpush.msra.mxu0 0.0
    %2543 = vmatpush.msra.mxu0 0.0
    %2544 = vmatpush.msra.mxu0 %v2524
    %2545 = vmatmul.f32.gmra.mxu0 %v2527
    %v2546 = vpop.f32.mrf.mxu0
    %v2547 = vadd.f32 0.0, %v2546
    %2548 = vdwg.mxu0
    %2549 = vrot.lane.b32.xlu0 %v2327, 120
    %v2550 = vpop.permute.xlu0 %2549
    %v2553 = vsel %vm358, %v2495, 0
    %2555 = vmatpush.msra.mxu0 0.0
    %2556 = vmatpush.msra.mxu0 0.0
    %2557 = vmatpush.msra.mxu0 0.0
    %2558 = vmatpush.msra.mxu0 0.0
    %2559 = vmatpush.msra.mxu0 0.0
    %2560 = vmatpush.msra.mxu0 0.0
    %2561 = vmatpush.msra.mxu0 0.0
    %2562 = vmatpush.msra.mxu0 0.0
    %2563 = vmatpush.msra.mxu0 0.0
    %2564 = vmatpush.msra.mxu0 0.0
    %2565 = vmatpush.msra.mxu0 0.0
    %2566 = vmatpush.msra.mxu0 0.0
    %2567 = vmatpush.msra.mxu0 0.0
    %2568 = vmatpush.msra.mxu0 0.0
    %2569 = vmatpush.msra.mxu0 0.0
    %2570 = vmatpush.msra.mxu0 %v2550
    %2571 = vmatmul.f32.gmra.mxu0 %v2553
    %v2572 = vpop.f32.mrf.mxu0
    %v2573 = vadd.f32 0.0, %v2572
    %2574 = vdwg.mxu0
    %2575 = vrot.lane.b32.xlu0 %v2347, 120
    %v2576 = vpop.permute.xlu0 %2575
    %v2579 = vsel %vm358, %v2496, 0
    %2581 = vmatpush.msra.mxu0 0.0
    %2582 = vmatpush.msra.mxu0 0.0
    %2583 = vmatpush.msra.mxu0 0.0
    %2584 = vmatpush.msra.mxu0 0.0
    %2585 = vmatpush.msra.mxu0 0.0
    %2586 = vmatpush.msra.mxu0 0.0
    %2587 = vmatpush.msra.mxu0 0.0
    %2588 = vmatpush.msra.mxu0 0.0
    %2589 = vmatpush.msra.mxu0 0.0
    %2590 = vmatpush.msra.mxu0 0.0
    %2591 = vmatpush.msra.mxu0 0.0
    %2592 = vmatpush.msra.mxu0 0.0
    %2593 = vmatpush.msra.mxu0 0.0
    %2594 = vmatpush.msra.mxu0 0.0
    %2595 = vmatpush.msra.mxu0 0.0
    %2596 = vmatpush.msra.mxu0 %v2576
    %2597 = vmatmul.f32.gmra.mxu0 %v2579
    %v2598 = vpop.f32.mrf.mxu0
    %v2599 = vadd.f32 0.0, %v2598
    %2600 = vdwg.mxu0
    %v2601 = vld [vmem:[%s61] sm:$0xff]
    %v2602 = vld [vmem:[%s61 + $0x8] sm:$0xff]
    %v2603 = vld [vmem:[%s61 + $0x10] sm:$0xff]
    %v2604 = vld [vmem:[%s61 + $0x18] sm:$0xff]
    %v2605 = vld [vmem:[%s63] sm:$0x1]
    %v2607 = vsel %vm358, %v2521, 0
    %2609 = vmatpush.msra.mxu0 0.0
    %2610 = vmatpush.msra.mxu0 0.0
    %2611 = vmatpush.msra.mxu0 0.0
    %2612 = vmatpush.msra.mxu0 0.0
    %2613 = vmatpush.msra.mxu0 0.0
    %2614 = vmatpush.msra.mxu0 0.0
    %2615 = vmatpush.msra.mxu0 0.0
    %2616 = vmatpush.msra.mxu0 0.0
    %2617 = vmatpush.msra.mxu0 0.0
    %2618 = vmatpush.msra.mxu0 0.0
    %2619 = vmatpush.msra.mxu0 0.0
    %2620 = vmatpush.msra.mxu0 0.0
    %2621 = vmatpush.msra.mxu0 0.0
    %2622 = vmatpush.msra.mxu0 0.0
    %2623 = vmatpush.msra.mxu0 0.0
    %2624 = vmatpush.msra.mxu0 %v2601
    %2625 = vmatmul.f32.gmra.mxu0 %v2607
    %v2626 = vpop.f32.mrf.mxu0
    %v2627 = vadd.f32 0.0, %v2626
    %2628 = vdwg.mxu0
    %v2630 = vsel %vm358, %v2547, 0
    %2632 = vmatpush.msra.mxu0 0.0
    %2633 = vmatpush.msra.mxu0 0.0
    %2634 = vmatpush.msra.mxu0 0.0
    %2635 = vmatpush.msra.mxu0 0.0
    %2636 = vmatpush.msra.mxu0 0.0
    %2637 = vmatpush.msra.mxu0 0.0
    %2638 = vmatpush.msra.mxu0 0.0
    %2639 = vmatpush.msra.mxu0 0.0
    %2640 = vmatpush.msra.mxu0 0.0
    %2641 = vmatpush.msra.mxu0 0.0
    %2642 = vmatpush.msra.mxu0 0.0
    %2643 = vmatpush.msra.mxu0 0.0
    %2644 = vmatpush.msra.mxu0 0.0
    %2645 = vmatpush.msra.mxu0 0.0
    %2646 = vmatpush.msra.mxu0 0.0
    %2647 = vmatpush.msra.mxu0 %v2602
    %2648 = vmatmul.f32.gmra.mxu0 %v2630
    %v2649 = vpop.f32.mrf.mxu0
    %v2650 = vadd.f32 0.0, %v2649
    %2651 = vdwg.mxu0
    %v2653 = vsel %vm358, %v2573, 0
    %2655 = vmatpush.msra.mxu0 0.0
    %2656 = vmatpush.msra.mxu0 0.0
    %2657 = vmatpush.msra.mxu0 0.0
    %2658 = vmatpush.msra.mxu0 0.0
    %2659 = vmatpush.msra.mxu0 0.0
    %2660 = vmatpush.msra.mxu0 0.0
    %2661 = vmatpush.msra.mxu0 0.0
    %2662 = vmatpush.msra.mxu0 0.0
    %2663 = vmatpush.msra.mxu0 0.0
    %2664 = vmatpush.msra.mxu0 0.0
    %2665 = vmatpush.msra.mxu0 0.0
    %2666 = vmatpush.msra.mxu0 0.0
    %2667 = vmatpush.msra.mxu0 0.0
    %2668 = vmatpush.msra.mxu0 0.0
    %2669 = vmatpush.msra.mxu0 0.0
    %2670 = vmatpush.msra.mxu0 %v2603
    %2671 = vmatmul.f32.gmra.mxu0 %v2653
    %v2672 = vpop.f32.mrf.mxu0
    %v2673 = vadd.f32 0.0, %v2672
    %2674 = vdwg.mxu0
    %v2676 = vsel %vm358, %v2599, 0
    %2678 = vmatpush.msra.mxu0 0.0
    %2679 = vmatpush.msra.mxu0 0.0
    %2680 = vmatpush.msra.mxu0 0.0
    %2681 = vmatpush.msra.mxu0 0.0
    %2682 = vmatpush.msra.mxu0 0.0
    %2683 = vmatpush.msra.mxu0 0.0
    %2684 = vmatpush.msra.mxu0 0.0
    %2685 = vmatpush.msra.mxu0 0.0
    %2686 = vmatpush.msra.mxu0 0.0
    %2687 = vmatpush.msra.mxu0 0.0
    %2688 = vmatpush.msra.mxu0 0.0
    %2689 = vmatpush.msra.mxu0 0.0
    %2690 = vmatpush.msra.mxu0 0.0
    %2691 = vmatpush.msra.mxu0 0.0
    %2692 = vmatpush.msra.mxu0 0.0
    %2693 = vmatpush.msra.mxu0 %v2604
    %2694 = vmatmul.f32.gmra.mxu0 %v2676
    %v2695 = vpop.f32.mrf.mxu0
    %v2696 = vadd.f32 0.0, %v2695
    %2697 = vdwg.mxu0
    %v2698 = vsel %vm176, %v2627, 0.0
    %v2699 = vsel %vm176, %v2650, 0.0
    %v2700 = vadd.f32 %v2698, %v2699
    %v2701 = vsel %vm176, %v2673, 0.0
    %v2702 = vadd.f32 %v2700, %v2701
    %v2703 = vsel %vm176, %v2696, 0.0
    %v2704 = vadd.f32 %v2702, %v2703
    %v2706 = vperm.slane %v2605, 0
    %v2708 = vadd.f32 %v2704, %v2706
    %v2709 = vadd.f32 %v2070, %v2708
    %v2710 = vld [vmem:[%s65] sm:$0x1]
    %v2711 = vld [vmem:[%s67] sm:$0x1]
    %v2712 = vsel %vm176, %v2709, 0.0
    %2713 = vadd.xlane.f32.xlu0 %v2712
    %v2714 = vpop.xlane.xlu0 %2713
    %v2715 = vmul.f32 %v2714, %v186
    %v2716 = vsub.f32 %v2709, %v2715
    %v2717 = vmul.f32 %v2716, %v2716
    %v2718 = vsel %vm176, %v2717, 0.0
    %2719 = vadd.xlane.f32.xlu0 %v2718
    %v2720 = vpop.xlane.xlu0 %2719
    %v2721 = vmul.f32 %v2720, %v199
    %v2723 = vperm.slane %v2710, 0
    %v2725 = vmul.f32 %v2723, %v2716
    %v2726 = vrsqrt.pop %v2721
    %v2727 = vmul.f32 %v2726, %v2721
    %v2728 = vmul.f32 %v2727, %v2726
    %v2729 = vmul.f32 0.5, %v2728
    %v2730 = vsub.f32 1.5, %v2729
    %v2731 = vmul.f32 %v2726, %v2730
    %v2732 = vmul.f32 %v2721, %v2731
    %vm2733 = vcmp.eq.f32.partialorder %v2721, inf
    %v2734 = vsel %vm2733, %v2721, %v2732
    %vm2735 = vcmp.eq.f32.partialorder %v2721, 0.0
    %v2736 = vand.u32 %v2721, 2147483648
    %v2737 = vsel %vm2735, %v2736, %v2734
    %v2738 = vadd.f32 %v2737, 1e-06
    %v2739 = vrcp.pop %v2738
    %v2740 = vmul.f32 %v2738, %v2739
    %v2741 = vsub.f32 1.0, %v2740
    %v2742 = vmul.f32 %v2739, %v2741
    %v2743 = vadd.f32 %v2739, %v2742
    %vm2744 = vweird.f32 %v2738
    %vm2745 = vweird.f32 %v2739
    %vm2746 = vmor %vm2744, %vm2745
    %v2747 = vsel %vm2746, %v2739, %v2743
    %v2748 = vand.u32 2147483647, %v2738
    %vm2749 = vcmp.eq.f32.partialorder %v2748, 8.507059e+37
    %v2750 = vand.u32 %v2738, 2147483648
    %v2751 = vor.u32 1.1754944e-38, %v2750
    %v2752 = vsel %vm2749, %v2751, %v2747
    %v2753 = vmul.f32 %v2725, %v2752
    %v2755 = vperm.slane %v2711, 0
    %v2757 = vadd.f32 %v2753, %v2755
    %v2758 = vld [vmem:[%s69] sm:$0xff]
    %v2759 = vld [vmem:[%s69 + $0x8] sm:$0xff]
    %v2760 = vld [vmem:[%s69 + $0x10] sm:$0xff]
    %v2761 = vld [vmem:[%s69 + $0x18] sm:$0xff]
    %v2762 = vld [vmem:[%s71] sm:$0x1]
    %v2763 = vld [vmem:[%s73] sm:$0xff]
    %v2764 = vld [vmem:[%s73 + $0x8] sm:$0xff]
    %v2765 = vld [vmem:[%s73 + $0x10] sm:$0xff]
    %v2766 = vld [vmem:[%s73 + $0x18] sm:$0xff]
    %v2767 = vld [vmem:[%s73 + $0x20] sm:$0xff]
    %v2768 = vld [vmem:[%s73 + $0x28] sm:$0xff]
    %v2769 = vld [vmem:[%s73 + $0x30] sm:$0xff]
    %v2770 = vld [vmem:[%s73 + $0x38] sm:$0xff]
    %v2771 = vld [vmem:[%s75] sm:$0x1]
    %v2773 = vperm.slane %v2762, 0
    %v2776 = vsel %vm176, %v2757, 0
    %2778 = vmatpush.msra.mxu0 0.0
    %2779 = vmatpush.msra.mxu0 0.0
    %2780 = vmatpush.msra.mxu0 0.0
    %2781 = vmatpush.msra.mxu0 0.0
    %2782 = vmatpush.msra.mxu0 0.0
    %2783 = vmatpush.msra.mxu0 0.0
    %2784 = vmatpush.msra.mxu0 0.0
    %2785 = vmatpush.msra.mxu0 0.0
    %2786 = vmatpush.msra.mxu0 0.0
    %2787 = vmatpush.msra.mxu0 0.0
    %2788 = vmatpush.msra.mxu0 0.0
    %2789 = vmatpush.msra.mxu0 0.0
    %2790 = vmatpush.msra.mxu0 %v2761
    %2791 = vmatpush.msra.mxu0 %v2760
    %2792 = vmatpush.msra.mxu0 %v2759
    %2793 = vmatpush.msra.mxu0 %v2758
    %2794 = vmatmul.f32.gmra.mxu0 %v2776
    %v2795 = vpop.f32.mrf.mxu0
    %v2796 = vadd.f32 %v2773, %v2795
    %2797 = vdwg.mxu0
    %v2798 = vmax.f32 %v2796, 0.0
    %v2800 = vperm.slane %v2771, 0
    %v2803 = vsel %vm813, %v2798, 0
    %2805 = vmatpush.msra.mxu0 0.0
    %2806 = vmatpush.msra.mxu0 0.0
    %2807 = vmatpush.msra.mxu0 0.0
    %2808 = vmatpush.msra.mxu0 0.0
    %2809 = vmatpush.msra.mxu0 0.0
    %2810 = vmatpush.msra.mxu0 0.0
    %2811 = vmatpush.msra.mxu0 0.0
    %2812 = vmatpush.msra.mxu0 0.0
    %2813 = vmatpush.msra.mxu0 %v2770
    %2814 = vmatpush.msra.mxu0 %v2769
    %2815 = vmatpush.msra.mxu0 %v2768
    %2816 = vmatpush.msra.mxu0 %v2767
    %2817 = vmatpush.msra.mxu0 %v2766
    %2818 = vmatpush.msra.mxu0 %v2765
    %2819 = vmatpush.msra.mxu0 %v2764
    %2820 = vmatpush.msra.mxu0 %v2763
    %2821 = vmatmul.f32.gmra.mxu0 %v2803
    %v2822 = vpop.f32.mrf.mxu0
    %v2823 = vadd.f32 %v2800, %v2822
    %2824 = vdwg.mxu0
    %v2825 = vadd.f32 %v2709, %v2823
    %s2826 = scalar_lea.vmem %s37, 1
    %v2827 = vld [vmem:[%s2826] sm:$0x1]
    %s2828 = scalar_lea.vmem %s39, 1
    %v2829 = vld [vmem:[%s2828] sm:$0x1]
    %v2830 = vsel %vm176, %v2825, 0.0
    %2831 = vadd.xlane.f32.xlu0 %v2830
    %v2832 = vpop.xlane.xlu0 %2831
    %v2833 = vmul.f32 %v2832, %v186
    %v2834 = vsub.f32 %v2825, %v2833
    %v2835 = vmul.f32 %v2834, %v2834
    %v2836 = vsel %vm176, %v2835, 0.0
    %2837 = vadd.xlane.f32.xlu0 %v2836
    %v2838 = vpop.xlane.xlu0 %2837
    %v2839 = vmul.f32 %v2838, %v199
    %v2841 = vperm.slane %v2827, 0
    %v2843 = vmul.f32 %v2841, %v2834
    %v2844 = vrsqrt.pop %v2839
    %v2845 = vmul.f32 %v2844, %v2839
    %v2846 = vmul.f32 %v2845, %v2844
    %v2847 = vmul.f32 0.5, %v2846
    %v2848 = vsub.f32 1.5, %v2847
    %v2849 = vmul.f32 %v2844, %v2848
    %v2850 = vmul.f32 %v2839, %v2849
    %vm2851 = vcmp.eq.f32.partialorder %v2839, inf
    %v2852 = vsel %vm2851, %v2839, %v2850
    %vm2853 = vcmp.eq.f32.partialorder %v2839, 0.0
    %v2854 = vand.u32 %v2839, 2147483648
    %v2855 = vsel %vm2853, %v2854, %v2852
    %v2856 = vadd.f32 %v2855, 1e-06
    %v2857 = vrcp.pop %v2856
    %v2858 = vmul.f32 %v2856, %v2857
    %v2859 = vsub.f32 1.0, %v2858
    %v2860 = vmul.f32 %v2857, %v2859
    %v2861 = vadd.f32 %v2857, %v2860
    %vm2862 = vweird.f32 %v2856
    %vm2863 = vweird.f32 %v2857
    %vm2864 = vmor %vm2862, %vm2863
    %v2865 = vsel %vm2864, %v2857, %v2861
    %v2866 = vand.u32 2147483647, %v2856
    %vm2867 = vcmp.eq.f32.partialorder %v2866, 8.507059e+37
    %v2868 = vand.u32 %v2856, 2147483648
    %v2869 = vor.u32 1.1754944e-38, %v2868
    %v2870 = vsel %vm2867, %v2869, %v2865
    %v2871 = vmul.f32 %v2843, %v2870
    %v2873 = vperm.slane %v2829, 0
    %v2875 = vadd.f32 %v2871, %v2873
    %s2876 = scalar_lea.vmem %s41, 128
    %v2877 = vld [vmem:[%s2876] sm:$0xff]
    %v2878 = vld [vmem:[%s2876 + $0x8] sm:$0xff]
    %v2879 = vld [vmem:[%s2876 + $0x10] sm:$0xff]
    %v2880 = vld [vmem:[%s2876 + $0x18] sm:$0xff]
    %v2881 = vld [vmem:[%s2876 + $0x20] sm:$0xff]
    %v2882 = vld [vmem:[%s2876 + $0x28] sm:$0xff]
    %v2883 = vld [vmem:[%s2876 + $0x30] sm:$0xff]
    %v2884 = vld [vmem:[%s2876 + $0x38] sm:$0xff]
    %v2885 = vld [vmem:[%s2876 + $0x40] sm:$0xff]
    %v2886 = vld [vmem:[%s2876 + $0x48] sm:$0xff]
    %v2887 = vld [vmem:[%s2876 + $0x50] sm:$0xff]
    %v2888 = vld [vmem:[%s2876 + $0x58] sm:$0xff]
    %v2889 = vld [vmem:[%s2876 + $0x60] sm:$0xff]
    %v2890 = vld [vmem:[%s2876 + $0x68] sm:$0xff]
    %v2891 = vld [vmem:[%s2876 + $0x70] sm:$0xff]
    %v2892 = vld [vmem:[%s2876 + $0x78] sm:$0xff]
    %s2893 = scalar_lea.vmem %s43, 4
    %v2894 = vld [vmem:[%s2893] sm:$0x1]
    %v2895 = vld [vmem:[%s2893 + $0x1] sm:$0x1]
    %v2896 = vld [vmem:[%s2893 + $0x2] sm:$0x1]
    %v2897 = vld [vmem:[%s2893 + $0x3] sm:$0x1]
    %v2902 = vperm.slane %v2894, 0
    %v2903 = vperm.slane %v2895, 0
    %v2904 = vperm.slane %v2896, 0
    %v2905 = vperm.slane %v2897, 0
    %v2911 = vsel %vm176, %v2875, 0
    %2913 = vmatpush.msra.mxu0 0.0
    %2914 = vmatpush.msra.mxu0 0.0
    %2915 = vmatpush.msra.mxu0 0.0
    %2916 = vmatpush.msra.mxu0 0.0
    %2917 = vmatpush.msra.mxu0 0.0
    %2918 = vmatpush.msra.mxu0 0.0
    %2919 = vmatpush.msra.mxu0 0.0
    %2920 = vmatpush.msra.mxu0 0.0
    %2921 = vmatpush.msra.mxu0 0.0
    %2922 = vmatpush.msra.mxu0 0.0
    %2923 = vmatpush.msra.mxu0 0.0
    %2924 = vmatpush.msra.mxu0 0.0
    %2925 = vmatpush.msra.mxu0 %v2880
    %2926 = vmatpush.msra.mxu0 %v2879
    %2927 = vmatpush.msra.mxu0 %v2878
    %2928 = vmatpush.msra.mxu0 %v2877
    %2929 = vmatmul.f32.gmra.mxu0 %v2911
    %v2930 = vpop.f32.mrf.mxu0
    %v2931 = vadd.f32 %v2902, %v2930
    %2932 = vdwg.mxu0
    %2933 = vmatpush.msra.mxu0 0.0
    %2934 = vmatpush.msra.mxu0 0.0
    %2935 = vmatpush.msra.mxu0 0.0
    %2936 = vmatpush.msra.mxu0 0.0
    %2937 = vmatpush.msra.mxu0 0.0
    %2938 = vmatpush.msra.mxu0 0.0
    %2939 = vmatpush.msra.mxu0 0.0
    %2940 = vmatpush.msra.mxu0 0.0
    %2941 = vmatpush.msra.mxu0 0.0
    %2942 = vmatpush.msra.mxu0 0.0
    %2943 = vmatpush.msra.mxu0 0.0
    %2944 = vmatpush.msra.mxu0 0.0
    %2945 = vmatpush.msra.mxu0 %v2884
    %2946 = vmatpush.msra.mxu0 %v2883
    %2947 = vmatpush.msra.mxu0 %v2882
    %2948 = vmatpush.msra.mxu0 %v2881
    %2949 = vmatmul.f32.gmra.mxu0 %v2911
    %v2950 = vpop.f32.mrf.mxu0
    %v2951 = vadd.f32 %v2903, %v2950
    %2952 = vdwg.mxu0
    %2953 = vmatpush.msra.mxu0 0.0
    %2954 = vmatpush.msra.mxu0 0.0
    %2955 = vmatpush.msra.mxu0 0.0
    %2956 = vmatpush.msra.mxu0 0.0
    %2957 = vmatpush.msra.mxu0 0.0
    %2958 = vmatpush.msra.mxu0 0.0
    %2959 = vmatpush.msra.mxu0 0.0
    %2960 = vmatpush.msra.mxu0 0.0
    %2961 = vmatpush.msra.mxu0 0.0
    %2962 = vmatpush.msra.mxu0 0.0
    %2963 = vmatpush.msra.mxu0 0.0
    %2964 = vmatpush.msra.mxu0 0.0
    %2965 = vmatpush.msra.mxu0 %v2888
    %2966 = vmatpush.msra.mxu0 %v2887
    %2967 = vmatpush.msra.mxu0 %v2886
    %2968 = vmatpush.msra.mxu0 %v2885
    %2969 = vmatmul.f32.gmra.mxu0 %v2911
    %v2970 = vpop.f32.mrf.mxu0
    %v2971 = vadd.f32 %v2904, %v2970
    %2972 = vdwg.mxu0
    %2973 = vmatpush.msra.mxu0 0.0
    %2974 = vmatpush.msra.mxu0 0.0
    %2975 = vmatpush.msra.mxu0 0.0
    %2976 = vmatpush.msra.mxu0 0.0
    %2977 = vmatpush.msra.mxu0 0.0
    %2978 = vmatpush.msra.mxu0 0.0
    %2979 = vmatpush.msra.mxu0 0.0
    %2980 = vmatpush.msra.mxu0 0.0
    %2981 = vmatpush.msra.mxu0 0.0
    %2982 = vmatpush.msra.mxu0 0.0
    %2983 = vmatpush.msra.mxu0 0.0
    %2984 = vmatpush.msra.mxu0 0.0
    %2985 = vmatpush.msra.mxu0 %v2892
    %2986 = vmatpush.msra.mxu0 %v2891
    %2987 = vmatpush.msra.mxu0 %v2890
    %2988 = vmatpush.msra.mxu0 %v2889
    %2989 = vmatmul.f32.gmra.mxu0 %v2911
    %v2990 = vpop.f32.mrf.mxu0
    %v2991 = vadd.f32 %v2905, %v2990
    %2992 = vdwg.mxu0
    %2994 = vrot.lane.b32.xlu0 %v2931, 120
    %v2995 = vpop.permute.xlu0 %2994
    %v2996 = vsel %vm358, %v2931, 0
    %v2998 = vsel %vm358, %v2995, 0
    %3000 = vmatpush.xpose.msra.mxu0 0.0
    %3001 = vmatpush.xpose.msra.mxu0 0.0
    %3002 = vmatpush.xpose.msra.mxu0 0.0
    %3003 = vmatpush.xpose.msra.mxu0 0.0
    %3004 = vmatpush.xpose.msra.mxu0 0.0
    %3005 = vmatpush.xpose.msra.mxu0 0.0
    %3006 = vmatpush.xpose.msra.mxu0 0.0
    %3007 = vmatpush.xpose.msra.mxu0 0.0
    %3008 = vmatpush.xpose.msra.mxu0 0.0
    %3009 = vmatpush.xpose.msra.mxu0 0.0
    %3010 = vmatpush.xpose.msra.mxu0 0.0
    %3011 = vmatpush.xpose.msra.mxu0 0.0
    %3012 = vmatpush.xpose.msra.mxu0 0.0
    %3013 = vmatpush.xpose.msra.mxu0 0.0
    %3014 = vmatpush.xpose.msra.mxu0 0.0
    %3015 = vmatpush.xpose.msra.mxu0 %v2998
    %3016 = vmatmul.f32.gmra.mxu0 %v2996
    %v3017 = vpop.f32.mrf.mxu0
    %v3018 = vadd.f32 %v172, %v3017
    %3019 = vdwg.mxu0
    %3021 = vrot.lane.b32.xlu0 %v2951, 120
    %v3022 = vpop.permute.xlu0 %3021
    %v3023 = vsel %vm358, %v2951, 0
    %v3025 = vsel %vm358, %v3022, 0
    %3027 = vmatpush.xpose.msra.mxu0 0.0
    %3028 = vmatpush.xpose.msra.mxu0 0.0
    %3029 = vmatpush.xpose.msra.mxu0 0.0
    %3030 = vmatpush.xpose.msra.mxu0 0.0
    %3031 = vmatpush.xpose.msra.mxu0 0.0
    %3032 = vmatpush.xpose.msra.mxu0 0.0
    %3033 = vmatpush.xpose.msra.mxu0 0.0
    %3034 = vmatpush.xpose.msra.mxu0 0.0
    %3035 = vmatpush.xpose.msra.mxu0 0.0
    %3036 = vmatpush.xpose.msra.mxu0 0.0
    %3037 = vmatpush.xpose.msra.mxu0 0.0
    %3038 = vmatpush.xpose.msra.mxu0 0.0
    %3039 = vmatpush.xpose.msra.mxu0 0.0
    %3040 = vmatpush.xpose.msra.mxu0 0.0
    %3041 = vmatpush.xpose.msra.mxu0 0.0
    %3042 = vmatpush.xpose.msra.mxu0 %v3025
    %3043 = vmatmul.f32.gmra.mxu0 %v3023
    %v3044 = vpop.f32.mrf.mxu0
    %v3045 = vadd.f32 %v172, %v3044
    %3046 = vdwg.mxu0
    %3048 = vrot.lane.b32.xlu0 %v2971, 120
    %v3049 = vpop.permute.xlu0 %3048
    %v3050 = vsel %vm358, %v2971, 0
    %v3052 = vsel %vm358, %v3049, 0
    %3054 = vmatpush.xpose.msra.mxu0 0.0
    %3055 = vmatpush.xpose.msra.mxu0 0.0
    %3056 = vmatpush.xpose.msra.mxu0 0.0
    %3057 = vmatpush.xpose.msra.mxu0 0.0
    %3058 = vmatpush.xpose.msra.mxu0 0.0
    %3059 = vmatpush.xpose.msra.mxu0 0.0
    %3060 = vmatpush.xpose.msra.mxu0 0.0
    %3061 = vmatpush.xpose.msra.mxu0 0.0
    %3062 = vmatpush.xpose.msra.mxu0 0.0
    %3063 = vmatpush.xpose.msra.mxu0 0.0
    %3064 = vmatpush.xpose.msra.mxu0 0.0
    %3065 = vmatpush.xpose.msra.mxu0 0.0
    %3066 = vmatpush.xpose.msra.mxu0 0.0
    %3067 = vmatpush.xpose.msra.mxu0 0.0
    %3068 = vmatpush.xpose.msra.mxu0 0.0
    %3069 = vmatpush.xpose.msra.mxu0 %v3052
    %3070 = vmatmul.f32.gmra.mxu0 %v3050
    %v3071 = vpop.f32.mrf.mxu0
    %v3072 = vadd.f32 %v172, %v3071
    %3073 = vdwg.mxu0
    %3075 = vrot.lane.b32.xlu0 %v2991, 120
    %v3076 = vpop.permute.xlu0 %3075
    %v3077 = vsel %vm358, %v2991, 0
    %v3079 = vsel %vm358, %v3076, 0
    %3081 = vmatpush.xpose.msra.mxu0 0.0
    %3082 = vmatpush.xpose.msra.mxu0 0.0
    %3083 = vmatpush.xpose.msra.mxu0 0.0
    %3084 = vmatpush.xpose.msra.mxu0 0.0
    %3085 = vmatpush.xpose.msra.mxu0 0.0
    %3086 = vmatpush.xpose.msra.mxu0 0.0
    %3087 = vmatpush.xpose.msra.mxu0 0.0
    %3088 = vmatpush.xpose.msra.mxu0 0.0
    %3089 = vmatpush.xpose.msra.mxu0 0.0
    %3090 = vmatpush.xpose.msra.mxu0 0.0
    %3091 = vmatpush.xpose.msra.mxu0 0.0
    %3092 = vmatpush.xpose.msra.mxu0 0.0
    %3093 = vmatpush.xpose.msra.mxu0 0.0
    %3094 = vmatpush.xpose.msra.mxu0 0.0
    %3095 = vmatpush.xpose.msra.mxu0 0.0
    %3096 = vmatpush.xpose.msra.mxu0 %v3079
    %3097 = vmatmul.f32.gmra.mxu0 %v3077
    %v3098 = vpop.f32.mrf.mxu0
    %v3099 = vadd.f32 %v172, %v3098
    %3100 = vdwg.mxu0
    %v3101 = vsel %vm358, %v3018, -inf
    %3102 = vmax.xlane.f32.xlu0 %v3101
    %v3103 = vpop.xlane.xlu0 %3102
    %v3104 = vsel %vm358, %v3045, -inf
    %3105 = vmax.xlane.f32.xlu0 %v3104
    %v3106 = vpop.xlane.xlu0 %3105
    %v3107 = vsel %vm358, %v3072, -inf
    %3108 = vmax.xlane.f32.xlu0 %v3107
    %v3109 = vpop.xlane.xlu0 %3108
    %v3110 = vsel %vm358, %v3099, -inf
    %3111 = vmax.xlane.f32.xlu0 %v3110
    %v3112 = vpop.xlane.xlu0 %3111
    %v3113 = vsub.f32 %v3018, %v3103
    %v3114 = vsub.f32 %v3045, %v3106
    %v3115 = vsub.f32 %v3072, %v3109
    %v3116 = vsub.f32 %v3099, %v3112
    %v3117 = vmul.f32 %v3113, 1.442695
    %v3118 = vpow.pop %v3117
    %v3119 = vmul.f32 %v3114, 1.442695
    %v3120 = vpow.pop %v3119
    %v3121 = vmul.f32 %v3115, 1.442695
    %v3122 = vpow.pop %v3121
    %v3123 = vmul.f32 %v3116, 1.442695
    %v3124 = vpow.pop %v3123
    %v3125 = vsel %vm358, %v3118, 0.0
    %3126 = vadd.xlane.f32.xlu0 %v3125
    %v3127 = vpop.xlane.xlu0 %3126
    %v3128 = vsel %vm358, %v3120, 0.0
    %3129 = vadd.xlane.f32.xlu0 %v3128
    %v3130 = vpop.xlane.xlu0 %3129
    %v3131 = vsel %vm358, %v3122, 0.0
    %3132 = vadd.xlane.f32.xlu0 %v3131
    %v3133 = vpop.xlane.xlu0 %3132
    %v3134 = vsel %vm358, %v3124, 0.0
    %3135 = vadd.xlane.f32.xlu0 %v3134
    %v3136 = vpop.xlane.xlu0 %3135
    %v3137 = vrcp.pop %v3127
    %v3138 = vrcp.pop %v3130
    %v3139 = vrcp.pop %v3133
    %v3140 = vrcp.pop %v3136
    %v3141 = vmul.f32 %v3118, %v3137
    %v3142 = vmul.f32 %v3120, %v3138
    %v3143 = vmul.f32 %v3122, %v3139
    %v3144 = vmul.f32 %v3124, %v3140
    %3145 = vrot.lane.b32.xlu0 %v2931, 112
    %v3146 = vpop.permute.xlu0 %3145
    %v3149 = vsel %vm358, %v3141, 0
    %3151 = vmatpush.msra.mxu0 0.0
    %3152 = vmatpush.msra.mxu0 0.0
    %3153 = vmatpush.msra.mxu0 0.0
    %3154 = vmatpush.msra.mxu0 0.0
    %3155 = vmatpush.msra.mxu0 0.0
    %3156 = vmatpush.msra.mxu0 0.0
    %3157 = vmatpush.msra.mxu0 0.0
    %3158 = vmatpush.msra.mxu0 0.0
    %3159 = vmatpush.msra.mxu0 0.0
    %3160 = vmatpush.msra.mxu0 0.0
    %3161 = vmatpush.msra.mxu0 0.0
    %3162 = vmatpush.msra.mxu0 0.0
    %3163 = vmatpush.msra.mxu0 0.0
    %3164 = vmatpush.msra.mxu0 0.0
    %3165 = vmatpush.msra.mxu0 0.0
    %3166 = vmatpush.msra.mxu0 %v3146
    %3167 = vmatmul.f32.gmra.mxu0 %v3149
    %v3168 = vpop.f32.mrf.mxu0
    %v3169 = vadd.f32 0.0, %v3168
    %3170 = vdwg.mxu0
    %3171 = vrot.lane.b32.xlu0 %v2951, 112
    %v3172 = vpop.permute.xlu0 %3171
    %v3175 = vsel %vm358, %v3142, 0
    %3177 = vmatpush.msra.mxu0 0.0
    %3178 = vmatpush.msra.mxu0 0.0
    %3179 = vmatpush.msra.mxu0 0.0
    %3180 = vmatpush.msra.mxu0 0.0
    %3181 = vmatpush.msra.mxu0 0.0
    %3182 = vmatpush.msra.mxu0 0.0
    %3183 = vmatpush.msra.mxu0 0.0
    %3184 = vmatpush.msra.mxu0 0.0
    %3185 = vmatpush.msra.mxu0 0.0
    %3186 = vmatpush.msra.mxu0 0.0
    %3187 = vmatpush.msra.mxu0 0.0
    %3188 = vmatpush.msra.mxu0 0.0
    %3189 = vmatpush.msra.mxu0 0.0
    %3190 = vmatpush.msra.mxu0 0.0
    %3191 = vmatpush.msra.mxu0 0.0
    %3192 = vmatpush.msra.mxu0 %v3172
    %3193 = vmatmul.f32.gmra.mxu0 %v3175
    %v3194 = vpop.f32.mrf.mxu0
    %v3195 = vadd.f32 0.0, %v3194
    %3196 = vdwg.mxu0
    %3197 = vrot.lane.b32.xlu0 %v2971, 112
    %v3198 = vpop.permute.xlu0 %3197
    %v3201 = vsel %vm358, %v3143, 0
    %3203 = vmatpush.msra.mxu0 0.0
    %3204 = vmatpush.msra.mxu0 0.0
    %3205 = vmatpush.msra.mxu0 0.0
    %3206 = vmatpush.msra.mxu0 0.0
    %3207 = vmatpush.msra.mxu0 0.0
    %3208 = vmatpush.msra.mxu0 0.0
    %3209 = vmatpush.msra.mxu0 0.0
    %3210 = vmatpush.msra.mxu0 0.0
    %3211 = vmatpush.msra.mxu0 0.0
    %3212 = vmatpush.msra.mxu0 0.0
    %3213 = vmatpush.msra.mxu0 0.0
    %3214 = vmatpush.msra.mxu0 0.0
    %3215 = vmatpush.msra.mxu0 0.0
    %3216 = vmatpush.msra.mxu0 0.0
    %3217 = vmatpush.msra.mxu0 0.0
    %3218 = vmatpush.msra.mxu0 %v3198
    %3219 = vmatmul.f32.gmra.mxu0 %v3201
    %v3220 = vpop.f32.mrf.mxu0
    %v3221 = vadd.f32 0.0, %v3220
    %3222 = vdwg.mxu0
    %3223 = vrot.lane.b32.xlu0 %v2991, 112
    %v3224 = vpop.permute.xlu0 %3223
    %v3227 = vsel %vm358, %v3144, 0
    %3229 = vmatpush.msra.mxu0 0.0
    %3230 = vmatpush.msra.mxu0 0.0
    %3231 = vmatpush.msra.mxu0 0.0
    %3232 = vmatpush.msra.mxu0 0.0
    %3233 = vmatpush.msra.mxu0 0.0
    %3234 = vmatpush.msra.mxu0 0.0
    %3235 = vmatpush.msra.mxu0 0.0
    %3236 = vmatpush.msra.mxu0 0.0
    %3237 = vmatpush.msra.mxu0 0.0
    %3238 = vmatpush.msra.mxu0 0.0
    %3239 = vmatpush.msra.mxu0 0.0
    %3240 = vmatpush.msra.mxu0 0.0
    %3241 = vmatpush.msra.mxu0 0.0
    %3242 = vmatpush.msra.mxu0 0.0
    %3243 = vmatpush.msra.mxu0 0.0
    %3244 = vmatpush.msra.mxu0 %v3224
    %3245 = vmatmul.f32.gmra.mxu0 %v3227
    %v3246 = vpop.f32.mrf.mxu0
    %v3247 = vadd.f32 0.0, %v3246
    %3248 = vdwg.mxu0
    %s3249 = scalar_lea.vmem %s45, 32
    %v3250 = vld [vmem:[%s3249] sm:$0xff]
    %v3251 = vld [vmem:[%s3249 + $0x8] sm:$0xff]
    %v3252 = vld [vmem:[%s3249 + $0x10] sm:$0xff]
    %v3253 = vld [vmem:[%s3249 + $0x18] sm:$0xff]
    %s3254 = scalar_lea.vmem %s47, 1
    %v3255 = vld [vmem:[%s3254] sm:$0x1]
    %v3257 = vsel %vm358, %v3169, 0
    %3259 = vmatpush.msra.mxu0 0.0
    %3260 = vmatpush.msra.mxu0 0.0
    %3261 = vmatpush.msra.mxu0 0.0
    %3262 = vmatpush.msra.mxu0 0.0
    %3263 = vmatpush.msra.mxu0 0.0
    %3264 = vmatpush.msra.mxu0 0.0
    %3265 = vmatpush.msra.mxu0 0.0
    %3266 = vmatpush.msra.mxu0 0.0
    %3267 = vmatpush.msra.mxu0 0.0
    %3268 = vmatpush.msra.mxu0 0.0
    %3269 = vmatpush.msra.mxu0 0.0
    %3270 = vmatpush.msra.mxu0 0.0
    %3271 = vmatpush.msra.mxu0 0.0
    %3272 = vmatpush.msra.mxu0 0.0
    %3273 = vmatpush.msra.mxu0 0.0
    %3274 = vmatpush.msra.mxu0 %v3250
    %3275 = vmatmul.f32.gmra.mxu0 %v3257
    %v3276 = vpop.f32.mrf.mxu0
    %v3277 = vadd.f32 0.0, %v3276
    %3278 = vdwg.mxu0
    %v3280 = vsel %vm358, %v3195, 0
    %3282 = vmatpush.msra.mxu0 0.0
    %3283 = vmatpush.msra.mxu0 0.0
    %3284 = vmatpush.msra.mxu0 0.0
    %3285 = vmatpush.msra.mxu0 0.0
    %3286 = vmatpush.msra.mxu0 0.0
    %3287 = vmatpush.msra.mxu0 0.0
    %3288 = vmatpush.msra.mxu0 0.0
    %3289 = vmatpush.msra.mxu0 0.0
    %3290 = vmatpush.msra.mxu0 0.0
    %3291 = vmatpush.msra.mxu0 0.0
    %3292 = vmatpush.msra.mxu0 0.0
    %3293 = vmatpush.msra.mxu0 0.0
    %3294 = vmatpush.msra.mxu0 0.0
    %3295 = vmatpush.msra.mxu0 0.0
    %3296 = vmatpush.msra.mxu0 0.0
    %3297 = vmatpush.msra.mxu0 %v3251
    %3298 = vmatmul.f32.gmra.mxu0 %v3280
    %v3299 = vpop.f32.mrf.mxu0
    %v3300 = vadd.f32 0.0, %v3299
    %3301 = vdwg.mxu0
    %v3303 = vsel %vm358, %v3221, 0
    %3305 = vmatpush.msra.mxu0 0.0
    %3306 = vmatpush.msra.mxu0 0.0
    %3307 = vmatpush.msra.mxu0 0.0
    %3308 = vmatpush.msra.mxu0 0.0
    %3309 = vmatpush.msra.mxu0 0.0
    %3310 = vmatpush.msra.mxu0 0.0
    %3311 = vmatpush.msra.mxu0 0.0
    %3312 = vmatpush.msra.mxu0 0.0
    %3313 = vmatpush.msra.mxu0 0.0
    %3314 = vmatpush.msra.mxu0 0.0
    %3315 = vmatpush.msra.mxu0 0.0
    %3316 = vmatpush.msra.mxu0 0.0
    %3317 = vmatpush.msra.mxu0 0.0
    %3318 = vmatpush.msra.mxu0 0.0
    %3319 = vmatpush.msra.mxu0 0.0
    %3320 = vmatpush.msra.mxu0 %v3252
    %3321 = vmatmul.f32.gmra.mxu0 %v3303
    %v3322 = vpop.f32.mrf.mxu0
    %v3323 = vadd.f32 0.0, %v3322
    %3324 = vdwg.mxu0
    %v3326 = vsel %vm358, %v3247, 0
    %3328 = vmatpush.msra.mxu0 0.0
    %3329 = vmatpush.msra.mxu0 0.0
    %3330 = vmatpush.msra.mxu0 0.0
    %3331 = vmatpush.msra.mxu0 0.0
    %3332 = vmatpush.msra.mxu0 0.0
    %3333 = vmatpush.msra.mxu0 0.0
    %3334 = vmatpush.msra.mxu0 0.0
    %3335 = vmatpush.msra.mxu0 0.0
    %3336 = vmatpush.msra.mxu0 0.0
    %3337 = vmatpush.msra.mxu0 0.0
    %3338 = vmatpush.msra.mxu0 0.0
    %3339 = vmatpush.msra.mxu0 0.0
    %3340 = vmatpush.msra.mxu0 0.0
    %3341 = vmatpush.msra.mxu0 0.0
    %3342 = vmatpush.msra.mxu0 0.0
    %3343 = vmatpush.msra.mxu0 %v3253
    %3344 = vmatmul.f32.gmra.mxu0 %v3326
    %v3345 = vpop.f32.mrf.mxu0
    %v3346 = vadd.f32 0.0, %v3345
    %3347 = vdwg.mxu0
    %v3348 = vsel %vm176, %v3277, 0.0
    %v3349 = vsel %vm176, %v3300, 0.0
    %v3350 = vadd.f32 %v3348, %v3349
    %v3351 = vsel %vm176, %v3323, 0.0
    %v3352 = vadd.f32 %v3350, %v3351
    %v3353 = vsel %vm176, %v3346, 0.0
    %v3354 = vadd.f32 %v3352, %v3353
    %v3356 = vperm.slane %v3255, 0
    %v3358 = vadd.f32 %v3354, %v3356
    %v3359 = vadd.f32 %v2825, %v3358
    %s3360 = scalar_lea.vmem %s49, 1
    %v3361 = vld [vmem:[%s3360] sm:$0x1]
    %s3362 = scalar_lea.vmem %s51, 1
    %v3363 = vld [vmem:[%s3362] sm:$0x1]
    %v3364 = vsel %vm176, %v3359, 0.0
    %3365 = vadd.xlane.f32.xlu0 %v3364
    %v3366 = vpop.xlane.xlu0 %3365
    %v3367 = vmul.f32 %v3366, %v186
    %v3368 = vsub.f32 %v3359, %v3367
    %v3369 = vmul.f32 %v3368, %v3368
    %v3370 = vsel %vm176, %v3369, 0.0
    %3371 = vadd.xlane.f32.xlu0 %v3370
    %v3372 = vpop.xlane.xlu0 %3371
    %v3373 = vmul.f32 %v3372, %v199
    %v3375 = vperm.slane %v3361, 0
    %v3377 = vmul.f32 %v3375, %v3368
    %v3378 = vrsqrt.pop %v3373
    %v3379 = vmul.f32 %v3378, %v3373
    %v3380 = vmul.f32 %v3379, %v3378
    %v3381 = vmul.f32 0.5, %v3380
    %v3382 = vsub.f32 1.5, %v3381
    %v3383 = vmul.f32 %v3378, %v3382
    %v3384 = vmul.f32 %v3373, %v3383
    %vm3385 = vcmp.eq.f32.partialorder %v3373, inf
    %v3386 = vsel %vm3385, %v3373, %v3384
    %vm3387 = vcmp.eq.f32.partialorder %v3373, 0.0
    %v3388 = vand.u32 %v3373, 2147483648
    %v3389 = vsel %vm3387, %v3388, %v3386
    %v3390 = vadd.f32 %v3389, 1e-06
    %v3391 = vrcp.pop %v3390
    %v3392 = vmul.f32 %v3390, %v3391
    %v3393 = vsub.f32 1.0, %v3392
    %v3394 = vmul.f32 %v3391, %v3393
    %v3395 = vadd.f32 %v3391, %v3394
    %vm3396 = vweird.f32 %v3390
    %vm3397 = vweird.f32 %v3391
    %vm3398 = vmor %vm3396, %vm3397
    %v3399 = vsel %vm3398, %v3391, %v3395
    %v3400 = vand.u32 2147483647, %v3390
    %vm3401 = vcmp.eq.f32.partialorder %v3400, 8.507059e+37
    %v3402 = vand.u32 %v3390, 2147483648
    %v3403 = vor.u32 1.1754944e-38, %v3402
    %v3404 = vsel %vm3401, %v3403, %v3399
    %v3405 = vmul.f32 %v3377, %v3404
    %v3407 = vperm.slane %v3363, 0
    %v3409 = vadd.f32 %v3405, %v3407
    %s3410 = scalar_lea.vmem %s53, 128
    %v3411 = vld [vmem:[%s3410] sm:$0xff]
    %v3412 = vld [vmem:[%s3410 + $0x8] sm:$0xff]
    %v3413 = vld [vmem:[%s3410 + $0x10] sm:$0xff]
    %v3414 = vld [vmem:[%s3410 + $0x18] sm:$0xff]
    %v3415 = vld [vmem:[%s3410 + $0x20] sm:$0xff]
    %v3416 = vld [vmem:[%s3410 + $0x28] sm:$0xff]
    %v3417 = vld [vmem:[%s3410 + $0x30] sm:$0xff]
    %v3418 = vld [vmem:[%s3410 + $0x38] sm:$0xff]
    %v3419 = vld [vmem:[%s3410 + $0x40] sm:$0xff]
    %v3420 = vld [vmem:[%s3410 + $0x48] sm:$0xff]
    %v3421 = vld [vmem:[%s3410 + $0x50] sm:$0xff]
    %v3422 = vld [vmem:[%s3410 + $0x58] sm:$0xff]
    %v3423 = vld [vmem:[%s3410 + $0x60] sm:$0xff]
    %v3424 = vld [vmem:[%s3410 + $0x68] sm:$0xff]
    %v3425 = vld [vmem:[%s3410 + $0x70] sm:$0xff]
    %v3426 = vld [vmem:[%s3410 + $0x78] sm:$0xff]
    %s3427 = scalar_lea.vmem %s55, 4
    %v3428 = vld [vmem:[%s3427] sm:$0x1]
    %v3429 = vld [vmem:[%s3427 + $0x1] sm:$0x1]
    %v3430 = vld [vmem:[%s3427 + $0x2] sm:$0x1]
    %v3431 = vld [vmem:[%s3427 + $0x3] sm:$0x1]
    %v3436 = vperm.slane %v3428, 0
    %v3437 = vperm.slane %v3429, 0
    %v3438 = vperm.slane %v3430, 0
    %v3439 = vperm.slane %v3431, 0
    %v3445 = vsel %vm176, %v3409, 0
    %3447 = vmatpush.msra.mxu0 0.0
    %3448 = vmatpush.msra.mxu0 0.0
    %3449 = vmatpush.msra.mxu0 0.0
    %3450 = vmatpush.msra.mxu0 0.0
    %3451 = vmatpush.msra.mxu0 0.0
    %3452 = vmatpush.msra.mxu0 0.0
    %3453 = vmatpush.msra.mxu0 0.0
    %3454 = vmatpush.msra.mxu0 0.0
    %3455 = vmatpush.msra.mxu0 0.0
    %3456 = vmatpush.msra.mxu0 0.0
    %3457 = vmatpush.msra.mxu0 0.0
    %3458 = vmatpush.msra.mxu0 0.0
    %3459 = vmatpush.msra.mxu0 %v3414
    %3460 = vmatpush.msra.mxu0 %v3413
    %3461 = vmatpush.msra.mxu0 %v3412
    %3462 = vmatpush.msra.mxu0 %v3411
    %3463 = vmatmul.f32.gmra.mxu0 %v3445
    %v3464 = vpop.f32.mrf.mxu0
    %v3465 = vadd.f32 %v3436, %v3464
    %3466 = vdwg.mxu0
    %3467 = vmatpush.msra.mxu0 0.0
    %3468 = vmatpush.msra.mxu0 0.0
    %3469 = vmatpush.msra.mxu0 0.0
    %3470 = vmatpush.msra.mxu0 0.0
    %3471 = vmatpush.msra.mxu0 0.0
    %3472 = vmatpush.msra.mxu0 0.0
    %3473 = vmatpush.msra.mxu0 0.0
    %3474 = vmatpush.msra.mxu0 0.0
    %3475 = vmatpush.msra.mxu0 0.0
    %3476 = vmatpush.msra.mxu0 0.0
    %3477 = vmatpush.msra.mxu0 0.0
    %3478 = vmatpush.msra.mxu0 0.0
    %3479 = vmatpush.msra.mxu0 %v3418
    %3480 = vmatpush.msra.mxu0 %v3417
    %3481 = vmatpush.msra.mxu0 %v3416
    %3482 = vmatpush.msra.mxu0 %v3415
    %3483 = vmatmul.f32.gmra.mxu0 %v3445
    %v3484 = vpop.f32.mrf.mxu0
    %v3485 = vadd.f32 %v3437, %v3484
    %3486 = vdwg.mxu0
    %3487 = vmatpush.msra.mxu0 0.0
    %3488 = vmatpush.msra.mxu0 0.0
    %3489 = vmatpush.msra.mxu0 0.0
    %3490 = vmatpush.msra.mxu0 0.0
    %3491 = vmatpush.msra.mxu0 0.0
    %3492 = vmatpush.msra.mxu0 0.0
    %3493 = vmatpush.msra.mxu0 0.0
    %3494 = vmatpush.msra.mxu0 0.0
    %3495 = vmatpush.msra.mxu0 0.0
    %3496 = vmatpush.msra.mxu0 0.0
    %3497 = vmatpush.msra.mxu0 0.0
    %3498 = vmatpush.msra.mxu0 0.0
    %3499 = vmatpush.msra.mxu0 %v3422
    %3500 = vmatpush.msra.mxu0 %v3421
    %3501 = vmatpush.msra.mxu0 %v3420
    %3502 = vmatpush.msra.mxu0 %v3419
    %3503 = vmatmul.f32.gmra.mxu0 %v3445
    %v3504 = vpop.f32.mrf.mxu0
    %v3505 = vadd.f32 %v3438, %v3504
    %3506 = vdwg.mxu0
    %3507 = vmatpush.msra.mxu0 0.0
    %3508 = vmatpush.msra.mxu0 0.0
    %3509 = vmatpush.msra.mxu0 0.0
    %3510 = vmatpush.msra.mxu0 0.0
    %3511 = vmatpush.msra.mxu0 0.0
    %3512 = vmatpush.msra.mxu0 0.0
    %3513 = vmatpush.msra.mxu0 0.0
    %3514 = vmatpush.msra.mxu0 0.0
    %3515 = vmatpush.msra.mxu0 0.0
    %3516 = vmatpush.msra.mxu0 0.0
    %3517 = vmatpush.msra.mxu0 0.0
    %3518 = vmatpush.msra.mxu0 0.0
    %3519 = vmatpush.msra.mxu0 %v3426
    %3520 = vmatpush.msra.mxu0 %v3425
    %3521 = vmatpush.msra.mxu0 %v3424
    %3522 = vmatpush.msra.mxu0 %v3423
    %3523 = vmatmul.f32.gmra.mxu0 %v3445
    %v3524 = vpop.f32.mrf.mxu0
    %v3525 = vadd.f32 %v3439, %v3524
    %3526 = vdwg.mxu0
    %s3527 = scalar_lea.vmem %s57, 128
    %v3528 = vld [vmem:[%s3527] sm:$0xff]
    %v3529 = vld [vmem:[%s3527 + $0x8] sm:$0xff]
    %v3530 = vld [vmem:[%s3527 + $0x10] sm:$0xff]
    %v3531 = vld [vmem:[%s3527 + $0x18] sm:$0xff]
    %v3532 = vld [vmem:[%s3527 + $0x20] sm:$0xff]
    %v3533 = vld [vmem:[%s3527 + $0x28] sm:$0xff]
    %v3534 = vld [vmem:[%s3527 + $0x30] sm:$0xff]
    %v3535 = vld [vmem:[%s3527 + $0x38] sm:$0xff]
    %v3536 = vld [vmem:[%s3527 + $0x40] sm:$0xff]
    %v3537 = vld [vmem:[%s3527 + $0x48] sm:$0xff]
    %v3538 = vld [vmem:[%s3527 + $0x50] sm:$0xff]
    %v3539 = vld [vmem:[%s3527 + $0x58] sm:$0xff]
    %v3540 = vld [vmem:[%s3527 + $0x60] sm:$0xff]
    %v3541 = vld [vmem:[%s3527 + $0x68] sm:$0xff]
    %v3542 = vld [vmem:[%s3527 + $0x70] sm:$0xff]
    %v3543 = vld [vmem:[%s3527 + $0x78] sm:$0xff]
    %s3544 = scalar_lea.vmem %s59, 4
    %v3545 = vld [vmem:[%s3544] sm:$0x1]
    %v3546 = vld [vmem:[%s3544 + $0x1] sm:$0x1]
    %v3547 = vld [vmem:[%s3544 + $0x2] sm:$0x1]
    %v3548 = vld [vmem:[%s3544 + $0x3] sm:$0x1]
    %v3553 = vperm.slane %v3545, 0
    %v3554 = vperm.slane %v3546, 0
    %v3555 = vperm.slane %v3547, 0
    %v3556 = vperm.slane %v3548, 0
    %3561 = vmatpush.msra.mxu0 0.0
    %3562 = vmatpush.msra.mxu0 0.0
    %3563 = vmatpush.msra.mxu0 0.0
    %3564 = vmatpush.msra.mxu0 0.0
    %3565 = vmatpush.msra.mxu0 0.0
    %3566 = vmatpush.msra.mxu0 0.0
    %3567 = vmatpush.msra.mxu0 0.0
    %3568 = vmatpush.msra.mxu0 0.0
    %3569 = vmatpush.msra.mxu0 0.0
    %3570 = vmatpush.msra.mxu0 0.0
    %3571 = vmatpush.msra.mxu0 0.0
    %3572 = vmatpush.msra.mxu0 0.0
    %3573 = vmatpush.msra.mxu0 %v3531
    %3574 = vmatpush.msra.mxu0 %v3530
    %3575 = vmatpush.msra.mxu0 %v3529
    %3576 = vmatpush.msra.mxu0 %v3528
    %3577 = vmatmul.f32.gmra.mxu0 %v2267
    %v3578 = vpop.f32.mrf.mxu0
    %v3579 = vadd.f32 %v3553, %v3578
    %3580 = vdwg.mxu0
    %3581 = vmatpush.msra.mxu0 0.0
    %3582 = vmatpush.msra.mxu0 0.0
    %3583 = vmatpush.msra.mxu0 0.0
    %3584 = vmatpush.msra.mxu0 0.0
    %3585 = vmatpush.msra.mxu0 0.0
    %3586 = vmatpush.msra.mxu0 0.0
    %3587 = vmatpush.msra.mxu0 0.0
    %3588 = vmatpush.msra.mxu0 0.0
    %3589 = vmatpush.msra.mxu0 0.0
    %3590 = vmatpush.msra.mxu0 0.0
    %3591 = vmatpush.msra.mxu0 0.0
    %3592 = vmatpush.msra.mxu0 0.0
    %3593 = vmatpush.msra.mxu0 %v3535
    %3594 = vmatpush.msra.mxu0 %v3534
    %3595 = vmatpush.msra.mxu0 %v3533
    %3596 = vmatpush.msra.mxu0 %v3532
    %3597 = vmatmul.f32.gmra.mxu0 %v2267
    %v3598 = vpop.f32.mrf.mxu0
    %v3599 = vadd.f32 %v3554, %v3598
    %3600 = vdwg.mxu0
    %3601 = vmatpush.msra.mxu0 0.0
    %3602 = vmatpush.msra.mxu0 0.0
    %3603 = vmatpush.msra.mxu0 0.0
    %3604 = vmatpush.msra.mxu0 0.0
    %3605 = vmatpush.msra.mxu0 0.0
    %3606 = vmatpush.msra.mxu0 0.0
    %3607 = vmatpush.msra.mxu0 0.0
    %3608 = vmatpush.msra.mxu0 0.0
    %3609 = vmatpush.msra.mxu0 0.0
    %3610 = vmatpush.msra.mxu0 0.0
    %3611 = vmatpush.msra.mxu0 0.0
    %3612 = vmatpush.msra.mxu0 0.0
    %3613 = vmatpush.msra.mxu0 %v3539
    %3614 = vmatpush.msra.mxu0 %v3538
    %3615 = vmatpush.msra.mxu0 %v3537
    %3616 = vmatpush.msra.mxu0 %v3536
    %3617 = vmatmul.f32.gmra.mxu0 %v2267
    %v3618 = vpop.f32.mrf.mxu0
    %v3619 = vadd.f32 %v3555, %v3618
    %3620 = vdwg.mxu0
    %3621 = vmatpush.msra.mxu0 0.0
    %3622 = vmatpush.msra.mxu0 0.0
    %3623 = vmatpush.msra.mxu0 0.0
    %3624 = vmatpush.msra.mxu0 0.0
    %3625 = vmatpush.msra.mxu0 0.0
    %3626 = vmatpush.msra.mxu0 0.0
    %3627 = vmatpush.msra.mxu0 0.0
    %3628 = vmatpush.msra.mxu0 0.0
    %3629 = vmatpush.msra.mxu0 0.0
    %3630 = vmatpush.msra.mxu0 0.0
    %3631 = vmatpush.msra.mxu0 0.0
    %3632 = vmatpush.msra.mxu0 0.0
    %3633 = vmatpush.msra.mxu0 %v3543
    %3634 = vmatpush.msra.mxu0 %v3542
    %3635 = vmatpush.msra.mxu0 %v3541
    %3636 = vmatpush.msra.mxu0 %v3540
    %3637 = vmatmul.f32.gmra.mxu0 %v2267
    %v3638 = vpop.f32.mrf.mxu0
    %v3639 = vadd.f32 %v3556, %v3638
    %3640 = vdwg.mxu0
    %v3642 = vsel %vm358, %v3465, 0
    %v3645 = vsel %vm358, %v3579, 0
    %3647 = vmatpush.xpose.msra.mxu0 0.0
    %3648 = vmatpush.xpose.msra.mxu0 0.0
    %3649 = vmatpush.xpose.msra.mxu0 0.0
    %3650 = vmatpush.xpose.msra.mxu0 0.0
    %3651 = vmatpush.xpose.msra.mxu0 0.0
    %3652 = vmatpush.xpose.msra.mxu0 0.0
    %3653 = vmatpush.xpose.msra.mxu0 0.0
    %3654 = vmatpush.xpose.msra.mxu0 0.0
    %3655 = vmatpush.xpose.msra.mxu0 0.0
    %3656 = vmatpush.xpose.msra.mxu0 0.0
    %3657 = vmatpush.xpose.msra.mxu0 0.0
    %3658 = vmatpush.xpose.msra.mxu0 0.0
    %3659 = vmatpush.xpose.msra.mxu0 0.0
    %3660 = vmatpush.xpose.msra.mxu0 0.0
    %3661 = vmatpush.xpose.msra.mxu0 0.0
    %3662 = vmatpush.xpose.msra.mxu0 %v3645
    %3663 = vmatmul.f32.gmra.mxu0 %v3642
    %v3664 = vpop.f32.mrf.mxu0
    %v3665 = vadd.f32 %v353, %v3664
    %3666 = vdwg.mxu0
    %v3668 = vsel %vm358, %v3485, 0
    %v3671 = vsel %vm358, %v3599, 0
    %3673 = vmatpush.xpose.msra.mxu0 0.0
    %3674 = vmatpush.xpose.msra.mxu0 0.0
    %3675 = vmatpush.xpose.msra.mxu0 0.0
    %3676 = vmatpush.xpose.msra.mxu0 0.0
    %3677 = vmatpush.xpose.msra.mxu0 0.0
    %3678 = vmatpush.xpose.msra.mxu0 0.0
    %3679 = vmatpush.xpose.msra.mxu0 0.0
    %3680 = vmatpush.xpose.msra.mxu0 0.0
    %3681 = vmatpush.xpose.msra.mxu0 0.0
    %3682 = vmatpush.xpose.msra.mxu0 0.0
    %3683 = vmatpush.xpose.msra.mxu0 0.0
    %3684 = vmatpush.xpose.msra.mxu0 0.0
    %3685 = vmatpush.xpose.msra.mxu0 0.0
    %3686 = vmatpush.xpose.msra.mxu0 0.0
    %3687 = vmatpush.xpose.msra.mxu0 0.0
    %3688 = vmatpush.xpose.msra.mxu0 %v3671
    %3689 = vmatmul.f32.gmra.mxu0 %v3668
    %v3690 = vpop.f32.mrf.mxu0
    %v3691 = vadd.f32 %v353, %v3690
    %3692 = vdwg.mxu0
    %v3694 = vsel %vm358, %v3505, 0
    %v3697 = vsel %vm358, %v3619, 0
    %3699 = vmatpush.xpose.msra.mxu0 0.0
    %3700 = vmatpush.xpose.msra.mxu0 0.0
    %3701 = vmatpush.xpose.msra.mxu0 0.0
    %3702 = vmatpush.xpose.msra.mxu0 0.0
    %3703 = vmatpush.xpose.msra.mxu0 0.0
    %3704 = vmatpush.xpose.msra.mxu0 0.0
    %3705 = vmatpush.xpose.msra.mxu0 0.0
    %3706 = vmatpush.xpose.msra.mxu0 0.0
    %3707 = vmatpush.xpose.msra.mxu0 0.0
    %3708 = vmatpush.xpose.msra.mxu0 0.0
    %3709 = vmatpush.xpose.msra.mxu0 0.0
    %3710 = vmatpush.xpose.msra.mxu0 0.0
    %3711 = vmatpush.xpose.msra.mxu0 0.0
    %3712 = vmatpush.xpose.msra.mxu0 0.0
    %3713 = vmatpush.xpose.msra.mxu0 0.0
    %3714 = vmatpush.xpose.msra.mxu0 %v3697
    %3715 = vmatmul.f32.gmra.mxu0 %v3694
    %v3716 = vpop.f32.mrf.mxu0
    %v3717 = vadd.f32 %v353, %v3716
    %3718 = vdwg.mxu0
    %v3720 = vsel %vm358, %v3525, 0
    %v3723 = vsel %vm358, %v3639, 0
    %3725 = vmatpush.xpose.msra.mxu0 0.0
    %3726 = vmatpush.xpose.msra.mxu0 0.0
    %3727 = vmatpush.xpose.msra.mxu0 0.0
    %3728 = vmatpush.xpose.msra.mxu0 0.0
    %3729 = vmatpush.xpose.msra.mxu0 0.0
    %3730 = vmatpush.xpose.msra.mxu0 0.0
    %3731 = vmatpush.xpose.msra.mxu0 0.0
    %3732 = vmatpush.xpose.msra.mxu0 0.0
    %3733 = vmatpush.xpose.msra.mxu0 0.0
    %3734 = vmatpush.xpose.msra.mxu0 0.0
    %3735 = vmatpush.xpose.msra.mxu0 0.0
    %3736 = vmatpush.xpose.msra.mxu0 0.0
    %3737 = vmatpush.xpose.msra.mxu0 0.0
    %3738 = vmatpush.xpose.msra.mxu0 0.0
    %3739 = vmatpush.xpose.msra.mxu0 0.0
    %3740 = vmatpush.xpose.msra.mxu0 %v3723
    %3741 = vmatmul.f32.gmra.mxu0 %v3720
    %v3742 = vpop.f32.mrf.mxu0
    %v3743 = vadd.f32 %v353, %v3742
    %3744 = vdwg.mxu0
    %v3745 = vsel %vm358, %v3665, -inf
    %3746 = vmax.xlane.f32.xlu0 %v3745
    %v3747 = vpop.xlane.xlu0 %3746
    %v3748 = vsel %vm358, %v3691, -inf
    %3749 = vmax.xlane.f32.xlu0 %v3748
    %v3750 = vpop.xlane.xlu0 %3749
    %v3751 = vsel %vm358, %v3717, -inf
    %3752 = vmax.xlane.f32.xlu0 %v3751
    %v3753 = vpop.xlane.xlu0 %3752
    %v3754 = vsel %vm358, %v3743, -inf
    %3755 = vmax.xlane.f32.xlu0 %v3754
    %v3756 = vpop.xlane.xlu0 %3755
    %v3757 = vsub.f32 %v3665, %v3747
    %v3758 = vsub.f32 %v3691, %v3750
    %v3759 = vsub.f32 %v3717, %v3753
    %v3760 = vsub.f32 %v3743, %v3756
    %v3761 = vmul.f32 %v3757, 1.442695
    %v3762 = vpow.pop %v3761
    %v3763 = vmul.f32 %v3758, 1.442695
    %v3764 = vpow.pop %v3763
    %v3765 = vmul.f32 %v3759, 1.442695
    %v3766 = vpow.pop %v3765
    %v3767 = vmul.f32 %v3760, 1.442695
    %v3768 = vpow.pop %v3767
    %v3769 = vsel %vm358, %v3762, 0.0
    %3770 = vadd.xlane.f32.xlu0 %v3769
    %v3771 = vpop.xlane.xlu0 %3770
    %v3772 = vsel %vm358, %v3764, 0.0
    %3773 = vadd.xlane.f32.xlu0 %v3772
    %v3774 = vpop.xlane.xlu0 %3773
    %v3775 = vsel %vm358, %v3766, 0.0
    %3776 = vadd.xlane.f32.xlu0 %v3775
    %v3777 = vpop.xlane.xlu0 %3776
    %v3778 = vsel %vm358, %v3768, 0.0
    %3779 = vadd.xlane.f32.xlu0 %v3778
    %v3780 = vpop.xlane.xlu0 %3779
    %v3781 = vrcp.pop %v3771
    %v3782 = vrcp.pop %v3774
    %v3783 = vrcp.pop %v3777
    %v3784 = vrcp.pop %v3780
    %v3785 = vmul.f32 %v3762, %v3781
    %v3786 = vmul.f32 %v3764, %v3782
    %v3787 = vmul.f32 %v3766, %v3783
    %v3788 = vmul.f32 %v3768, %v3784
    %3789 = vrot.lane.b32.xlu0 %v3579, 120
    %v3790 = vpop.permute.xlu0 %3789
    %v3793 = vsel %vm358, %v3785, 0
    %3795 = vmatpush.msra.mxu0 0.0
    %3796 = vmatpush.msra.mxu0 0.0
    %3797 = vmatpush.msra.mxu0 0.0
    %3798 = vmatpush.msra.mxu0 0.0
    %3799 = vmatpush.msra.mxu0 0.0
    %3800 = vmatpush.msra.mxu0 0.0
    %3801 = vmatpush.msra.mxu0 0.0
    %3802 = vmatpush.msra.mxu0 0.0
    %3803 = vmatpush.msra.mxu0 0.0
    %3804 = vmatpush.msra.mxu0 0.0
    %3805 = vmatpush.msra.mxu0 0.0
    %3806 = vmatpush.msra.mxu0 0.0
    %3807 = vmatpush.msra.mxu0 0.0
    %3808 = vmatpush.msra.mxu0 0.0
    %3809 = vmatpush.msra.mxu0 0.0
    %3810 = vmatpush.msra.mxu0 %v3790
    %3811 = vmatmul.f32.gmra.mxu0 %v3793
    %v3812 = vpop.f32.mrf.mxu0
    %v3813 = vadd.f32 0.0, %v3812
    %3814 = vdwg.mxu0
    %3815 = vrot.lane.b32.xlu0 %v3599, 120
    %v3816 = vpop.permute.xlu0 %3815
    %v3819 = vsel %vm358, %v3786, 0
    %3821 = vmatpush.msra.mxu0 0.0
    %3822 = vmatpush.msra.mxu0 0.0
    %3823 = vmatpush.msra.mxu0 0.0
    %3824 = vmatpush.msra.mxu0 0.0
    %3825 = vmatpush.msra.mxu0 0.0
    %3826 = vmatpush.msra.mxu0 0.0
    %3827 = vmatpush.msra.mxu0 0.0
    %3828 = vmatpush.msra.mxu0 0.0
    %3829 = vmatpush.msra.mxu0 0.0
    %3830 = vmatpush.msra.mxu0 0.0
    %3831 = vmatpush.msra.mxu0 0.0
    %3832 = vmatpush.msra.mxu0 0.0
    %3833 = vmatpush.msra.mxu0 0.0
    %3834 = vmatpush.msra.mxu0 0.0
    %3835 = vmatpush.msra.mxu0 0.0
    %3836 = vmatpush.msra.mxu0 %v3816
    %3837 = vmatmul.f32.gmra.mxu0 %v3819
    %v3838 = vpop.f32.mrf.mxu0
    %v3839 = vadd.f32 0.0, %v3838
    %3840 = vdwg.mxu0
    %3841 = vrot.lane.b32.xlu0 %v3619, 120
    %v3842 = vpop.permute.xlu0 %3841
    %v3845 = vsel %vm358, %v3787, 0
    %3847 = vmatpush.msra.mxu0 0.0
    %3848 = vmatpush.msra.mxu0 0.0
    %3849 = vmatpush.msra.mxu0 0.0
    %3850 = vmatpush.msra.mxu0 0.0
    %3851 = vmatpush.msra.mxu0 0.0
    %3852 = vmatpush.msra.mxu0 0.0
    %3853 = vmatpush.msra.mxu0 0.0
    %3854 = vmatpush.msra.mxu0 0.0
    %3855 = vmatpush.msra.mxu0 0.0
    %3856 = vmatpush.msra.mxu0 0.0
    %3857 = vmatpush.msra.mxu0 0.0
    %3858 = vmatpush.msra.mxu0 0.0
    %3859 = vmatpush.msra.mxu0 0.0
    %3860 = vmatpush.msra.mxu0 0.0
    %3861 = vmatpush.msra.mxu0 0.0
    %3862 = vmatpush.msra.mxu0 %v3842
    %3863 = vmatmul.f32.gmra.mxu0 %v3845
    %v3864 = vpop.f32.mrf.mxu0
    %v3865 = vadd.f32 0.0, %v3864
    %3866 = vdwg.mxu0
    %3867 = vrot.lane.b32.xlu0 %v3639, 120
    %v3868 = vpop.permute.xlu0 %3867
    %v3871 = vsel %vm358, %v3788, 0
    %3873 = vmatpush.msra.mxu0 0.0
    %3874 = vmatpush.msra.mxu0 0.0
    %3875 = vmatpush.msra.mxu0 0.0
    %3876 = vmatpush.msra.mxu0 0.0
    %3877 = vmatpush.msra.mxu0 0.0
    %3878 = vmatpush.msra.mxu0 0.0
    %3879 = vmatpush.msra.mxu0 0.0
    %3880 = vmatpush.msra.mxu0 0.0
    %3881 = vmatpush.msra.mxu0 0.0
    %3882 = vmatpush.msra.mxu0 0.0
    %3883 = vmatpush.msra.mxu0 0.0
    %3884 = vmatpush.msra.mxu0 0.0
    %3885 = vmatpush.msra.mxu0 0.0
    %3886 = vmatpush.msra.mxu0 0.0
    %3887 = vmatpush.msra.mxu0 0.0
    %3888 = vmatpush.msra.mxu0 %v3868
    %3889 = vmatmul.f32.gmra.mxu0 %v3871
    %v3890 = vpop.f32.mrf.mxu0
    %v3891 = vadd.f32 0.0, %v3890
    %3892 = vdwg.mxu0
    %s3893 = scalar_lea.vmem %s61, 32
    %v3894 = vld [vmem:[%s3893] sm:$0xff]
    %v3895 = vld [vmem:[%s3893 + $0x8] sm:$0xff]
    %v3896 = vld [vmem:[%s3893 + $0x10] sm:$0xff]
    %v3897 = vld [vmem:[%s3893 + $0x18] sm:$0xff]
    %s3898 = scalar_lea.vmem %s63, 1
    %v3899 = vld [vmem:[%s3898] sm:$0x1]
    %v3901 = vsel %vm358, %v3813, 0
    %3903 = vmatpush.msra.mxu0 0.0
    %3904 = vmatpush.msra.mxu0 0.0
    %3905 = vmatpush.msra.mxu0 0.0
    %3906 = vmatpush.msra.mxu0 0.0
    %3907 = vmatpush.msra.mxu0 0.0
    %3908 = vmatpush.msra.mxu0 0.0
    %3909 = vmatpush.msra.mxu0 0.0
    %3910 = vmatpush.msra.mxu0 0.0
    %3911 = vmatpush.msra.mxu0 0.0
    %3912 = vmatpush.msra.mxu0 0.0
    %3913 = vmatpush.msra.mxu0 0.0
    %3914 = vmatpush.msra.mxu0 0.0
    %3915 = vmatpush.msra.mxu0 0.0
    %3916 = vmatpush.msra.mxu0 0.0
    %3917 = vmatpush.msra.mxu0 0.0
    %3918 = vmatpush.msra.mxu0 %v3894
    %3919 = vmatmul.f32.gmra.mxu0 %v3901
    %v3920 = vpop.f32.mrf.mxu0
    %v3921 = vadd.f32 0.0, %v3920
    %3922 = vdwg.mxu0
    %v3924 = vsel %vm358, %v3839, 0
    %3926 = vmatpush.msra.mxu0 0.0
    %3927 = vmatpush.msra.mxu0 0.0
    %3928 = vmatpush.msra.mxu0 0.0
    %3929 = vmatpush.msra.mxu0 0.0
    %3930 = vmatpush.msra.mxu0 0.0
    %3931 = vmatpush.msra.mxu0 0.0
    %3932 = vmatpush.msra.mxu0 0.0
    %3933 = vmatpush.msra.mxu0 0.0
    %3934 = vmatpush.msra.mxu0 0.0
    %3935 = vmatpush.msra.mxu0 0.0
    %3936 = vmatpush.msra.mxu0 0.0
    %3937 = vmatpush.msra.mxu0 0.0
    %3938 = vmatpush.msra.mxu0 0.0
    %3939 = vmatpush.msra.mxu0 0.0
    %3940 = vmatpush.msra.mxu0 0.0
    %3941 = vmatpush.msra.mxu0 %v3895
    %3942 = vmatmul.f32.gmra.mxu0 %v3924
    %v3943 = vpop.f32.mrf.mxu0
    %v3944 = vadd.f32 0.0, %v3943
    %3945 = vdwg.mxu0
    %v3947 = vsel %vm358, %v3865, 0
    %3949 = vmatpush.msra.mxu0 0.0
    %3950 = vmatpush.msra.mxu0 0.0
    %3951 = vmatpush.msra.mxu0 0.0
    %3952 = vmatpush.msra.mxu0 0.0
    %3953 = vmatpush.msra.mxu0 0.0
    %3954 = vmatpush.msra.mxu0 0.0
    %3955 = vmatpush.msra.mxu0 0.0
    %3956 = vmatpush.msra.mxu0 0.0
    %3957 = vmatpush.msra.mxu0 0.0
    %3958 = vmatpush.msra.mxu0 0.0
    %3959 = vmatpush.msra.mxu0 0.0
    %3960 = vmatpush.msra.mxu0 0.0
    %3961 = vmatpush.msra.mxu0 0.0
    %3962 = vmatpush.msra.mxu0 0.0
    %3963 = vmatpush.msra.mxu0 0.0
    %3964 = vmatpush.msra.mxu0 %v3896
    %3965 = vmatmul.f32.gmra.mxu0 %v3947
    %v3966 = vpop.f32.mrf.mxu0
    %v3967 = vadd.f32 0.0, %v3966
    %3968 = vdwg.mxu0
    %v3970 = vsel %vm358, %v3891, 0
    %3972 = vmatpush.msra.mxu0 0.0
    %3973 = vmatpush.msra.mxu0 0.0
    %3974 = vmatpush.msra.mxu0 0.0
    %3975 = vmatpush.msra.mxu0 0.0
    %3976 = vmatpush.msra.mxu0 0.0
    %3977 = vmatpush.msra.mxu0 0.0
    %3978 = vmatpush.msra.mxu0 0.0
    %3979 = vmatpush.msra.mxu0 0.0
    %3980 = vmatpush.msra.mxu0 0.0
    %3981 = vmatpush.msra.mxu0 0.0
    %3982 = vmatpush.msra.mxu0 0.0
    %3983 = vmatpush.msra.mxu0 0.0
    %3984 = vmatpush.msra.mxu0 0.0
    %3985 = vmatpush.msra.mxu0 0.0
    %3986 = vmatpush.msra.mxu0 0.0
    %3987 = vmatpush.msra.mxu0 %v3897
    %3988 = vmatmul.f32.gmra.mxu0 %v3970
    %v3989 = vpop.f32.mrf.mxu0
    %v3990 = vadd.f32 0.0, %v3989
    %3991 = vdwg.mxu0
    %v3992 = vsel %vm176, %v3921, 0.0
    %v3993 = vsel %vm176, %v3944, 0.0
    %v3994 = vadd.f32 %v3992, %v3993
    %v3995 = vsel %vm176, %v3967, 0.0
    %v3996 = vadd.f32 %v3994, %v3995
    %v3997 = vsel %vm176, %v3990, 0.0
    %v3998 = vadd.f32 %v3996, %v3997
    %v4000 = vperm.slane %v3899, 0
    %v4002 = vadd.f32 %v3998, %v4000
    %v4003 = vadd.f32 %v3359, %v4002
    %s4004 = scalar_lea.vmem %s65, 1
    %v4005 = vld [vmem:[%s4004] sm:$0x1]
    %s4006 = scalar_lea.vmem %s67, 1
    %v4007 = vld [vmem:[%s4006] sm:$0x1]
    %v4008 = vsel %vm176, %v4003, 0.0
    %4009 = vadd.xlane.f32.xlu0 %v4008
    %v4010 = vpop.xlane.xlu0 %4009
    %v4011 = vmul.f32 %v4010, %v186
    %v4012 = vsub.f32 %v4003, %v4011
    %v4013 = vmul.f32 %v4012, %v4012
    %v4014 = vsel %vm176, %v4013, 0.0
    %4015 = vadd.xlane.f32.xlu0 %v4014
    %v4016 = vpop.xlane.xlu0 %4015
    %v4017 = vmul.f32 %v4016, %v199
    %v4019 = vperm.slane %v4005, 0
    %v4021 = vmul.f32 %v4019, %v4012
    %v4022 = vrsqrt.pop %v4017
    %v4023 = vmul.f32 %v4022, %v4017
    %v4024 = vmul.f32 %v4023, %v4022
    %v4025 = vmul.f32 0.5, %v4024
    %v4026 = vsub.f32 1.5, %v4025
    %v4027 = vmul.f32 %v4022, %v4026
    %v4028 = vmul.f32 %v4017, %v4027
    %vm4029 = vcmp.eq.f32.partialorder %v4017, inf
    %v4030 = vsel %vm4029, %v4017, %v4028
    %vm4031 = vcmp.eq.f32.partialorder %v4017, 0.0
    %v4032 = vand.u32 %v4017, 2147483648
    %v4033 = vsel %vm4031, %v4032, %v4030
    %v4034 = vadd.f32 %v4033, 1e-06
    %v4035 = vrcp.pop %v4034
    %v4036 = vmul.f32 %v4034, %v4035
    %v4037 = vsub.f32 1.0, %v4036
    %v4038 = vmul.f32 %v4035, %v4037
    %v4039 = vadd.f32 %v4035, %v4038
    %vm4040 = vweird.f32 %v4034
    %vm4041 = vweird.f32 %v4035
    %vm4042 = vmor %vm4040, %vm4041
    %v4043 = vsel %vm4042, %v4035, %v4039
    %v4044 = vand.u32 2147483647, %v4034
    %vm4045 = vcmp.eq.f32.partialorder %v4044, 8.507059e+37
    %v4046 = vand.u32 %v4034, 2147483648
    %v4047 = vor.u32 1.1754944e-38, %v4046
    %v4048 = vsel %vm4045, %v4047, %v4043
    %v4049 = vmul.f32 %v4021, %v4048
    %v4051 = vperm.slane %v4007, 0
    %v4053 = vadd.f32 %v4049, %v4051
    %s4054 = scalar_lea.vmem %s69, 32
    %v4055 = vld [vmem:[%s4054] sm:$0xff]
    %v4056 = vld [vmem:[%s4054 + $0x8] sm:$0xff]
    %v4057 = vld [vmem:[%s4054 + $0x10] sm:$0xff]
    %v4058 = vld [vmem:[%s4054 + $0x18] sm:$0xff]
    %s4059 = scalar_lea.vmem %s71, 1
    %v4060 = vld [vmem:[%s4059] sm:$0x1]
    %s4061 = scalar_lea.vmem %s73, 64
    %v4062 = vld [vmem:[%s4061] sm:$0xff]
    %v4063 = vld [vmem:[%s4061 + $0x8] sm:$0xff]
    %v4064 = vld [vmem:[%s4061 + $0x10] sm:$0xff]
    %v4065 = vld [vmem:[%s4061 + $0x18] sm:$0xff]
    %v4066 = vld [vmem:[%s4061 + $0x20] sm:$0xff]
    %v4067 = vld [vmem:[%s4061 + $0x28] sm:$0xff]
    %v4068 = vld [vmem:[%s4061 + $0x30] sm:$0xff]
    %v4069 = vld [vmem:[%s4061 + $0x38] sm:$0xff]
    %s4070 = scalar_lea.vmem %s75, 1
    %v4071 = vld [vmem:[%s4070] sm:$0x1]
    %v4073 = vperm.slane %v4060, 0
    %v4076 = vsel %vm176, %v4053, 0
    %4078 = vmatpush.msra.mxu0 0.0
    %4079 = vmatpush.msra.mxu0 0.0
    %4080 = vmatpush.msra.mxu0 0.0
    %4081 = vmatpush.msra.mxu0 0.0
    %4082 = vmatpush.msra.mxu0 0.0
    %4083 = vmatpush.msra.mxu0 0.0
    %4084 = vmatpush.msra.mxu0 0.0
    %4085 = vmatpush.msra.mxu0 0.0
    %4086 = vmatpush.msra.mxu0 0.0
    %4087 = vmatpush.msra.mxu0 0.0
    %4088 = vmatpush.msra.mxu0 0.0
    %4089 = vmatpush.msra.mxu0 0.0
    %4090 = vmatpush.msra.mxu0 %v4058
    %4091 = vmatpush.msra.mxu0 %v4057
    %4092 = vmatpush.msra.mxu0 %v4056
    %4093 = vmatpush.msra.mxu0 %v4055
    %4094 = vmatmul.f32.gmra.mxu0 %v4076
    %v4095 = vpop.f32.mrf.mxu0
    %v4096 = vadd.f32 %v4073, %v4095
    %4097 = vdwg.mxu0
    %v4098 = vmax.f32 %v4096, 0.0
    %v4100 = vperm.slane %v4071, 0
    %v4103 = vsel %vm813, %v4098, 0
    %4105 = vmatpush.msra.mxu0 0.0
    %4106 = vmatpush.msra.mxu0 0.0
    %4107 = vmatpush.msra.mxu0 0.0
    %4108 = vmatpush.msra.mxu0 0.0
    %4109 = vmatpush.msra.mxu0 0.0
    %4110 = vmatpush.msra.mxu0 0.0
    %4111 = vmatpush.msra.mxu0 0.0
    %4112 = vmatpush.msra.mxu0 0.0
    %4113 = vmatpush.msra.mxu0 %v4069
    %4114 = vmatpush.msra.mxu0 %v4068
    %4115 = vmatpush.msra.mxu0 %v4067
    %4116 = vmatpush.msra.mxu0 %v4066
    %4117 = vmatpush.msra.mxu0 %v4065
    %4118 = vmatpush.msra.mxu0 %v4064
    %4119 = vmatpush.msra.mxu0 %v4063
    %4120 = vmatpush.msra.mxu0 %v4062
    %4121 = vmatmul.f32.gmra.mxu0 %v4103
    %v4122 = vpop.f32.mrf.mxu0
    %v4123 = vadd.f32 %v4100, %v4122
    %4124 = vdwg.mxu0
    %v4125 = vadd.f32 %v4003, %v4123
    %v4126 = vld [vmem:[%s77] sm:$0x1]
    %v4127 = vld [vmem:[%s79] sm:$0x1]
    %v4128 = vsel %vm176, %v4125, 0.0
    %4129 = vadd.xlane.f32.xlu0 %v4128
    %v4130 = vpop.xlane.xlu0 %4129
    %v4131 = vmul.f32 %v4130, %v186
    %v4132 = vsub.f32 %v4125, %v4131
    %v4133 = vmul.f32 %v4132, %v4132
    %v4134 = vsel %vm176, %v4133, 0.0
    %4135 = vadd.xlane.f32.xlu0 %v4134
    %v4136 = vpop.xlane.xlu0 %4135
    %v4137 = vmul.f32 %v4136, %v199
    %v4139 = vperm.slane %v4126, 0
    %v4141 = vmul.f32 %v4139, %v4132
    %v4142 = vrsqrt.pop %v4137
    %v4143 = vmul.f32 %v4142, %v4137
    %v4144 = vmul.f32 %v4143, %v4142
    %v4145 = vmul.f32 0.5, %v4144
    %v4146 = vsub.f32 1.5, %v4145
    %v4147 = vmul.f32 %v4142, %v4146
    %v4148 = vmul.f32 %v4137, %v4147
    %vm4149 = vcmp.eq.f32.partialorder %v4137, inf
    %v4150 = vsel %vm4149, %v4137, %v4148
    %vm4151 = vcmp.eq.f32.partialorder %v4137, 0.0
    %v4152 = vand.u32 %v4137, 2147483648
    %v4153 = vsel %vm4151, %v4152, %v4150
    %v4154 = vadd.f32 %v4153, 1e-06
    %v4155 = vrcp.pop %v4154
    %v4156 = vmul.f32 %v4154, %v4155
    %v4157 = vsub.f32 1.0, %v4156
    %v4158 = vmul.f32 %v4155, %v4157
    %v4159 = vadd.f32 %v4155, %v4158
    %vm4160 = vweird.f32 %v4154
    %vm4161 = vweird.f32 %v4155
    %vm4162 = vmor %vm4160, %vm4161
    %v4163 = vsel %vm4162, %v4155, %v4159
    %v4164 = vand.u32 2147483647, %v4154
    %vm4165 = vcmp.eq.f32.partialorder %v4164, 8.507059e+37
    %v4166 = vand.u32 %v4154, 2147483648
    %v4167 = vor.u32 1.1754944e-38, %v4166
    %v4168 = vsel %vm4165, %v4167, %v4163
    %v4169 = vmul.f32 %v4141, %v4168
    %v4171 = vperm.slane %v4127, 0
    %v4173 = vadd.f32 %v4169, %v4171
    %s4174 = scalar_lea.vmem %s5, 1
    %v4175 = vld [vmem:[%s4174] sm:$0x1]
    %vm4176 = vcmp.lt.f32.partialorder %v4175, 0.5
    %v4177 = vsel %vm4176, -1e+09, 0.0
    %s4178 = scalar_lea.vmem %s7, 8
    %v4179 = vld [vmem:[%s4178] sm:$0xff]
    %vm4180 = vcmp.lt.f32.partialorder %v4179, 0.5
    %v4181 = vsel %vm4180, -1e+09, 0.0
    %s4182 = scalar_lea.vmem %s1, 8
    %v4183 = vld [vmem:[%s4182] sm:$0xff]
    %v4184 = vsel %vm176, %v4183, 0.0
    %4185 = vadd.xlane.f32.xlu0 %v4184
    %v4186 = vpop.xlane.xlu0 %4185
    %v4187 = vmul.f32 %v4186, %v186
    %v4188 = vsub.f32 %v4183, %v4187
    %v4189 = vmul.f32 %v4188, %v4188
    %v4190 = vsel %vm176, %v4189, 0.0
    %4191 = vadd.xlane.f32.xlu0 %v4190
    %v4192 = vpop.xlane.xlu0 %4191
    %v4193 = vmul.f32 %v4192, %v199
    %v4194 = vmul.f32 %v202, %v4188
    %v4195 = vrsqrt.pop %v4193
    %v4196 = vmul.f32 %v4195, %v4193
    %v4197 = vmul.f32 %v4196, %v4195
    %v4198 = vmul.f32 0.5, %v4197
    %v4199 = vsub.f32 1.5, %v4198
    %v4200 = vmul.f32 %v4195, %v4199
    %v4201 = vmul.f32 %v4193, %v4200
    %vm4202 = vcmp.eq.f32.partialorder %v4193, inf
    %v4203 = vsel %vm4202, %v4193, %v4201
    %vm4204 = vcmp.eq.f32.partialorder %v4193, 0.0
    %v4205 = vand.u32 %v4193, 2147483648
    %v4206 = vsel %vm4204, %v4205, %v4203
    %v4207 = vadd.f32 %v4206, 1e-06
    %v4208 = vrcp.pop %v4207
    %v4209 = vmul.f32 %v4207, %v4208
    %v4210 = vsub.f32 1.0, %v4209
    %v4211 = vmul.f32 %v4208, %v4210
    %v4212 = vadd.f32 %v4208, %v4211
    %vm4213 = vweird.f32 %v4207
    %vm4214 = vweird.f32 %v4208
    %vm4215 = vmor %vm4213, %vm4214
    %v4216 = vsel %vm4215, %v4208, %v4212
    %v4217 = vand.u32 2147483647, %v4207
    %vm4218 = vcmp.eq.f32.partialorder %v4217, 8.507059e+37
    %v4219 = vand.u32 %v4207, 2147483648
    %v4220 = vor.u32 1.1754944e-38, %v4219
    %v4221 = vsel %vm4218, %v4220, %v4216
    %v4222 = vmul.f32 %v4194, %v4221
    %v4223 = vadd.f32 %v4222, %v234
    %v4225 = vsel %vm176, %v4223, 0
    %4227 = vmatpush.msra.mxu0 0.0
    %4228 = vmatpush.msra.mxu0 0.0
    %4229 = vmatpush.msra.mxu0 0.0
    %4230 = vmatpush.msra.mxu0 0.0
    %4231 = vmatpush.msra.mxu0 0.0
    %4232 = vmatpush.msra.mxu0 0.0
    %4233 = vmatpush.msra.mxu0 0.0
    %4234 = vmatpush.msra.mxu0 0.0
    %4235 = vmatpush.msra.mxu0 0.0
    %4236 = vmatpush.msra.mxu0 0.0
    %4237 = vmatpush.msra.mxu0 0.0
    %4238 = vmatpush.msra.mxu0 0.0
    %4239 = vmatpush.msra.mxu0 %v240
    %4240 = vmatpush.msra.mxu0 %v239
    %4241 = vmatpush.msra.mxu0 %v238
    %4242 = vmatpush.msra.mxu0 %v237
    %4243 = vmatmul.f32.gmra.mxu0 %v4225
    %v4244 = vpop.f32.mrf.mxu0
    %v4245 = vadd.f32 %v261, %v4244
    %4246 = vdwg.mxu0
    %4247 = vmatpush.msra.mxu0 0.0
    %4248 = vmatpush.msra.mxu0 0.0
    %4249 = vmatpush.msra.mxu0 0.0
    %4250 = vmatpush.msra.mxu0 0.0
    %4251 = vmatpush.msra.mxu0 0.0
    %4252 = vmatpush.msra.mxu0 0.0
    %4253 = vmatpush.msra.mxu0 0.0
    %4254 = vmatpush.msra.mxu0 0.0
    %4255 = vmatpush.msra.mxu0 0.0
    %4256 = vmatpush.msra.mxu0 0.0
    %4257 = vmatpush.msra.mxu0 0.0
    %4258 = vmatpush.msra.mxu0 0.0
    %4259 = vmatpush.msra.mxu0 %v244
    %4260 = vmatpush.msra.mxu0 %v243
    %4261 = vmatpush.msra.mxu0 %v242
    %4262 = vmatpush.msra.mxu0 %v241
    %4263 = vmatmul.f32.gmra.mxu0 %v4225
    %v4264 = vpop.f32.mrf.mxu0
    %v4265 = vadd.f32 %v262, %v4264
    %4266 = vdwg.mxu0
    %4267 = vmatpush.msra.mxu0 0.0
    %4268 = vmatpush.msra.mxu0 0.0
    %4269 = vmatpush.msra.mxu0 0.0
    %4270 = vmatpush.msra.mxu0 0.0
    %4271 = vmatpush.msra.mxu0 0.0
    %4272 = vmatpush.msra.mxu0 0.0
    %4273 = vmatpush.msra.mxu0 0.0
    %4274 = vmatpush.msra.mxu0 0.0
    %4275 = vmatpush.msra.mxu0 0.0
    %4276 = vmatpush.msra.mxu0 0.0
    %4277 = vmatpush.msra.mxu0 0.0
    %4278 = vmatpush.msra.mxu0 0.0
    %4279 = vmatpush.msra.mxu0 %v248
    %4280 = vmatpush.msra.mxu0 %v247
    %4281 = vmatpush.msra.mxu0 %v246
    %4282 = vmatpush.msra.mxu0 %v245
    %4283 = vmatmul.f32.gmra.mxu0 %v4225
    %v4284 = vpop.f32.mrf.mxu0
    %v4285 = vadd.f32 %v263, %v4284
    %4286 = vdwg.mxu0
    %4287 = vmatpush.msra.mxu0 0.0
    %4288 = vmatpush.msra.mxu0 0.0
    %4289 = vmatpush.msra.mxu0 0.0
    %4290 = vmatpush.msra.mxu0 0.0
    %4291 = vmatpush.msra.mxu0 0.0
    %4292 = vmatpush.msra.mxu0 0.0
    %4293 = vmatpush.msra.mxu0 0.0
    %4294 = vmatpush.msra.mxu0 0.0
    %4295 = vmatpush.msra.mxu0 0.0
    %4296 = vmatpush.msra.mxu0 0.0
    %4297 = vmatpush.msra.mxu0 0.0
    %4298 = vmatpush.msra.mxu0 0.0
    %4299 = vmatpush.msra.mxu0 %v252
    %4300 = vmatpush.msra.mxu0 %v251
    %4301 = vmatpush.msra.mxu0 %v250
    %4302 = vmatpush.msra.mxu0 %v249
    %4303 = vmatmul.f32.gmra.mxu0 %v4225
    %v4304 = vpop.f32.mrf.mxu0
    %v4305 = vadd.f32 %v264, %v4304
    %4306 = vdwg.mxu0
    %v4308 = vperm.slane %v4177, 0
    %4311 = vrot.lane.b32.xlu0 %v4245, 120
    %v4312 = vpop.permute.xlu0 %4311
    %v4313 = vsel %vm358, %v4245, 0
    %v4315 = vsel %vm358, %v4312, 0
    %4317 = vmatpush.xpose.msra.mxu0 0.0
    %4318 = vmatpush.xpose.msra.mxu0 0.0
    %4319 = vmatpush.xpose.msra.mxu0 0.0
    %4320 = vmatpush.xpose.msra.mxu0 0.0
    %4321 = vmatpush.xpose.msra.mxu0 0.0
    %4322 = vmatpush.xpose.msra.mxu0 0.0
    %4323 = vmatpush.xpose.msra.mxu0 0.0
    %4324 = vmatpush.xpose.msra.mxu0 0.0
    %4325 = vmatpush.xpose.msra.mxu0 0.0
    %4326 = vmatpush.xpose.msra.mxu0 0.0
    %4327 = vmatpush.xpose.msra.mxu0 0.0
    %4328 = vmatpush.xpose.msra.mxu0 0.0
    %4329 = vmatpush.xpose.msra.mxu0 0.0
    %4330 = vmatpush.xpose.msra.mxu0 0.0
    %4331 = vmatpush.xpose.msra.mxu0 0.0
    %4332 = vmatpush.xpose.msra.mxu0 %v4315
    %4333 = vmatmul.f32.gmra.mxu0 %v4313
    %v4334 = vpop.f32.mrf.mxu0
    %v4335 = vadd.f32 %v4308, %v4334
    %4336 = vdwg.mxu0
    %4338 = vrot.lane.b32.xlu0 %v4265, 120
    %v4339 = vpop.permute.xlu0 %4338
    %v4340 = vsel %vm358, %v4265, 0
    %v4342 = vsel %vm358, %v4339, 0
    %4344 = vmatpush.xpose.msra.mxu0 0.0
    %4345 = vmatpush.xpose.msra.mxu0 0.0
    %4346 = vmatpush.xpose.msra.mxu0 0.0
    %4347 = vmatpush.xpose.msra.mxu0 0.0
    %4348 = vmatpush.xpose.msra.mxu0 0.0
    %4349 = vmatpush.xpose.msra.mxu0 0.0
    %4350 = vmatpush.xpose.msra.mxu0 0.0
    %4351 = vmatpush.xpose.msra.mxu0 0.0
    %4352 = vmatpush.xpose.msra.mxu0 0.0
    %4353 = vmatpush.xpose.msra.mxu0 0.0
    %4354 = vmatpush.xpose.msra.mxu0 0.0
    %4355 = vmatpush.xpose.msra.mxu0 0.0
    %4356 = vmatpush.xpose.msra.mxu0 0.0
    %4357 = vmatpush.xpose.msra.mxu0 0.0
    %4358 = vmatpush.xpose.msra.mxu0 0.0
    %4359 = vmatpush.xpose.msra.mxu0 %v4342
    %4360 = vmatmul.f32.gmra.mxu0 %v4340
    %v4361 = vpop.f32.mrf.mxu0
    %v4362 = vadd.f32 %v4308, %v4361
    %4363 = vdwg.mxu0
    %4365 = vrot.lane.b32.xlu0 %v4285, 120
    %v4366 = vpop.permute.xlu0 %4365
    %v4367 = vsel %vm358, %v4285, 0
    %v4369 = vsel %vm358, %v4366, 0
    %4371 = vmatpush.xpose.msra.mxu0 0.0
    %4372 = vmatpush.xpose.msra.mxu0 0.0
    %4373 = vmatpush.xpose.msra.mxu0 0.0
    %4374 = vmatpush.xpose.msra.mxu0 0.0
    %4375 = vmatpush.xpose.msra.mxu0 0.0
    %4376 = vmatpush.xpose.msra.mxu0 0.0
    %4377 = vmatpush.xpose.msra.mxu0 0.0
    %4378 = vmatpush.xpose.msra.mxu0 0.0
    %4379 = vmatpush.xpose.msra.mxu0 0.0
    %4380 = vmatpush.xpose.msra.mxu0 0.0
    %4381 = vmatpush.xpose.msra.mxu0 0.0
    %4382 = vmatpush.xpose.msra.mxu0 0.0
    %4383 = vmatpush.xpose.msra.mxu0 0.0
    %4384 = vmatpush.xpose.msra.mxu0 0.0
    %4385 = vmatpush.xpose.msra.mxu0 0.0
    %4386 = vmatpush.xpose.msra.mxu0 %v4369
    %4387 = vmatmul.f32.gmra.mxu0 %v4367
    %v4388 = vpop.f32.mrf.mxu0
    %v4389 = vadd.f32 %v4308, %v4388
    %4390 = vdwg.mxu0
    %4392 = vrot.lane.b32.xlu0 %v4305, 120
    %v4393 = vpop.permute.xlu0 %4392
    %v4394 = vsel %vm358, %v4305, 0
    %v4396 = vsel %vm358, %v4393, 0
    %4398 = vmatpush.xpose.msra.mxu0 0.0
    %4399 = vmatpush.xpose.msra.mxu0 0.0
    %4400 = vmatpush.xpose.msra.mxu0 0.0
    %4401 = vmatpush.xpose.msra.mxu0 0.0
    %4402 = vmatpush.xpose.msra.mxu0 0.0
    %4403 = vmatpush.xpose.msra.mxu0 0.0
    %4404 = vmatpush.xpose.msra.mxu0 0.0
    %4405 = vmatpush.xpose.msra.mxu0 0.0
    %4406 = vmatpush.xpose.msra.mxu0 0.0
    %4407 = vmatpush.xpose.msra.mxu0 0.0
    %4408 = vmatpush.xpose.msra.mxu0 0.0
    %4409 = vmatpush.xpose.msra.mxu0 0.0
    %4410 = vmatpush.xpose.msra.mxu0 0.0
    %4411 = vmatpush.xpose.msra.mxu0 0.0
    %4412 = vmatpush.xpose.msra.mxu0 0.0
    %4413 = vmatpush.xpose.msra.mxu0 %v4396
    %4414 = vmatmul.f32.gmra.mxu0 %v4394
    %v4415 = vpop.f32.mrf.mxu0
    %v4416 = vadd.f32 %v4308, %v4415
    %4417 = vdwg.mxu0
    %v4418 = vsel %vm358, %v4335, -inf
    %4419 = vmax.xlane.f32.xlu0 %v4418
    %v4420 = vpop.xlane.xlu0 %4419
    %v4421 = vsel %vm358, %v4362, -inf
    %4422 = vmax.xlane.f32.xlu0 %v4421
    %v4423 = vpop.xlane.xlu0 %4422
    %v4424 = vsel %vm358, %v4389, -inf
    %4425 = vmax.xlane.f32.xlu0 %v4424
    %v4426 = vpop.xlane.xlu0 %4425
    %v4427 = vsel %vm358, %v4416, -inf
    %4428 = vmax.xlane.f32.xlu0 %v4427
    %v4429 = vpop.xlane.xlu0 %4428
    %v4430 = vsub.f32 %v4335, %v4420
    %v4431 = vsub.f32 %v4362, %v4423
    %v4432 = vsub.f32 %v4389, %v4426
    %v4433 = vsub.f32 %v4416, %v4429
    %v4434 = vmul.f32 %v4430, 1.442695
    %v4435 = vpow.pop %v4434
    %v4436 = vmul.f32 %v4431, 1.442695
    %v4437 = vpow.pop %v4436
    %v4438 = vmul.f32 %v4432, 1.442695
    %v4439 = vpow.pop %v4438
    %v4440 = vmul.f32 %v4433, 1.442695
    %v4441 = vpow.pop %v4440
    %v4442 = vsel %vm358, %v4435, 0.0
    %4443 = vadd.xlane.f32.xlu0 %v4442
    %v4444 = vpop.xlane.xlu0 %4443
    %v4445 = vsel %vm358, %v4437, 0.0
    %4446 = vadd.xlane.f32.xlu0 %v4445
    %v4447 = vpop.xlane.xlu0 %4446
    %v4448 = vsel %vm358, %v4439, 0.0
    %4449 = vadd.xlane.f32.xlu0 %v4448
    %v4450 = vpop.xlane.xlu0 %4449
    %v4451 = vsel %vm358, %v4441, 0.0
    %4452 = vadd.xlane.f32.xlu0 %v4451
    %v4453 = vpop.xlane.xlu0 %4452
    %v4454 = vrcp.pop %v4444
    %v4455 = vrcp.pop %v4447
    %v4456 = vrcp.pop %v4450
    %v4457 = vrcp.pop %v4453
    %v4458 = vmul.f32 %v4435, %v4454
    %v4459 = vmul.f32 %v4437, %v4455
    %v4460 = vmul.f32 %v4439, %v4456
    %v4461 = vmul.f32 %v4441, %v4457
    %4462 = vrot.lane.b32.xlu0 %v4245, 112
    %v4463 = vpop.permute.xlu0 %4462
    %v4466 = vsel %vm358, %v4458, 0
    %4468 = vmatpush.msra.mxu0 0.0
    %4469 = vmatpush.msra.mxu0 0.0
    %4470 = vmatpush.msra.mxu0 0.0
    %4471 = vmatpush.msra.mxu0 0.0
    %4472 = vmatpush.msra.mxu0 0.0
    %4473 = vmatpush.msra.mxu0 0.0
    %4474 = vmatpush.msra.mxu0 0.0
    %4475 = vmatpush.msra.mxu0 0.0
    %4476 = vmatpush.msra.mxu0 0.0
    %4477 = vmatpush.msra.mxu0 0.0
    %4478 = vmatpush.msra.mxu0 0.0
    %4479 = vmatpush.msra.mxu0 0.0
    %4480 = vmatpush.msra.mxu0 0.0
    %4481 = vmatpush.msra.mxu0 0.0
    %4482 = vmatpush.msra.mxu0 0.0
    %4483 = vmatpush.msra.mxu0 %v4463
    %4484 = vmatmul.f32.gmra.mxu0 %v4466
    %v4485 = vpop.f32.mrf.mxu0
    %v4486 = vadd.f32 0.0, %v4485
    %4487 = vdwg.mxu0
    %4488 = vrot.lane.b32.xlu0 %v4265, 112
    %v4489 = vpop.permute.xlu0 %4488
    %v4492 = vsel %vm358, %v4459, 0
    %4494 = vmatpush.msra.mxu0 0.0
    %4495 = vmatpush.msra.mxu0 0.0
    %4496 = vmatpush.msra.mxu0 0.0
    %4497 = vmatpush.msra.mxu0 0.0
    %4498 = vmatpush.msra.mxu0 0.0
    %4499 = vmatpush.msra.mxu0 0.0
    %4500 = vmatpush.msra.mxu0 0.0
    %4501 = vmatpush.msra.mxu0 0.0
    %4502 = vmatpush.msra.mxu0 0.0
    %4503 = vmatpush.msra.mxu0 0.0
    %4504 = vmatpush.msra.mxu0 0.0
    %4505 = vmatpush.msra.mxu0 0.0
    %4506 = vmatpush.msra.mxu0 0.0
    %4507 = vmatpush.msra.mxu0 0.0
    %4508 = vmatpush.msra.mxu0 0.0
    %4509 = vmatpush.msra.mxu0 %v4489
    %4510 = vmatmul.f32.gmra.mxu0 %v4492
    %v4511 = vpop.f32.mrf.mxu0
    %v4512 = vadd.f32 0.0, %v4511
    %4513 = vdwg.mxu0
    %4514 = vrot.lane.b32.xlu0 %v4285, 112
    %v4515 = vpop.permute.xlu0 %4514
    %v4518 = vsel %vm358, %v4460, 0
    %4520 = vmatpush.msra.mxu0 0.0
    %4521 = vmatpush.msra.mxu0 0.0
    %4522 = vmatpush.msra.mxu0 0.0
    %4523 = vmatpush.msra.mxu0 0.0
    %4524 = vmatpush.msra.mxu0 0.0
    %4525 = vmatpush.msra.mxu0 0.0
    %4526 = vmatpush.msra.mxu0 0.0
    %4527 = vmatpush.msra.mxu0 0.0
    %4528 = vmatpush.msra.mxu0 0.0
    %4529 = vmatpush.msra.mxu0 0.0
    %4530 = vmatpush.msra.mxu0 0.0
    %4531 = vmatpush.msra.mxu0 0.0
    %4532 = vmatpush.msra.mxu0 0.0
    %4533 = vmatpush.msra.mxu0 0.0
    %4534 = vmatpush.msra.mxu0 0.0
    %4535 = vmatpush.msra.mxu0 %v4515
    %4536 = vmatmul.f32.gmra.mxu0 %v4518
    %v4537 = vpop.f32.mrf.mxu0
    %v4538 = vadd.f32 0.0, %v4537
    %4539 = vdwg.mxu0
    %4540 = vrot.lane.b32.xlu0 %v4305, 112
    %v4541 = vpop.permute.xlu0 %4540
    %v4544 = vsel %vm358, %v4461, 0
    %4546 = vmatpush.msra.mxu0 0.0
    %4547 = vmatpush.msra.mxu0 0.0
    %4548 = vmatpush.msra.mxu0 0.0
    %4549 = vmatpush.msra.mxu0 0.0
    %4550 = vmatpush.msra.mxu0 0.0
    %4551 = vmatpush.msra.mxu0 0.0
    %4552 = vmatpush.msra.mxu0 0.0
    %4553 = vmatpush.msra.mxu0 0.0
    %4554 = vmatpush.msra.mxu0 0.0
    %4555 = vmatpush.msra.mxu0 0.0
    %4556 = vmatpush.msra.mxu0 0.0
    %4557 = vmatpush.msra.mxu0 0.0
    %4558 = vmatpush.msra.mxu0 0.0
    %4559 = vmatpush.msra.mxu0 0.0
    %4560 = vmatpush.msra.mxu0 0.0
    %4561 = vmatpush.msra.mxu0 %v4541
    %4562 = vmatmul.f32.gmra.mxu0 %v4544
    %v4563 = vpop.f32.mrf.mxu0
    %v4564 = vadd.f32 0.0, %v4563
    %4565 = vdwg.mxu0
    %v4567 = vsel %vm358, %v4486, 0
    %4569 = vmatpush.msra.mxu0 0.0
    %4570 = vmatpush.msra.mxu0 0.0
    %4571 = vmatpush.msra.mxu0 0.0
    %4572 = vmatpush.msra.mxu0 0.0
    %4573 = vmatpush.msra.mxu0 0.0
    %4574 = vmatpush.msra.mxu0 0.0
    %4575 = vmatpush.msra.mxu0 0.0
    %4576 = vmatpush.msra.mxu0 0.0
    %4577 = vmatpush.msra.mxu0 0.0
    %4578 = vmatpush.msra.mxu0 0.0
    %4579 = vmatpush.msra.mxu0 0.0
    %4580 = vmatpush.msra.mxu0 0.0
    %4581 = vmatpush.msra.mxu0 0.0
    %4582 = vmatpush.msra.mxu0 0.0
    %4583 = vmatpush.msra.mxu0 0.0
    %4584 = vmatpush.msra.mxu0 %v612
    %4585 = vmatmul.f32.gmra.mxu0 %v4567
    %v4586 = vpop.f32.mrf.mxu0
    %v4587 = vadd.f32 0.0, %v4586
    %4588 = vdwg.mxu0
    %v4590 = vsel %vm358, %v4512, 0
    %4592 = vmatpush.msra.mxu0 0.0
    %4593 = vmatpush.msra.mxu0 0.0
    %4594 = vmatpush.msra.mxu0 0.0
    %4595 = vmatpush.msra.mxu0 0.0
    %4596 = vmatpush.msra.mxu0 0.0
    %4597 = vmatpush.msra.mxu0 0.0
    %4598 = vmatpush.msra.mxu0 0.0
    %4599 = vmatpush.msra.mxu0 0.0
    %4600 = vmatpush.msra.mxu0 0.0
    %4601 = vmatpush.msra.mxu0 0.0
    %4602 = vmatpush.msra.mxu0 0.0
    %4603 = vmatpush.msra.mxu0 0.0
    %4604 = vmatpush.msra.mxu0 0.0
    %4605 = vmatpush.msra.mxu0 0.0
    %4606 = vmatpush.msra.mxu0 0.0
    %4607 = vmatpush.msra.mxu0 %v613
    %4608 = vmatmul.f32.gmra.mxu0 %v4590
    %v4609 = vpop.f32.mrf.mxu0
    %v4610 = vadd.f32 0.0, %v4609
    %4611 = vdwg.mxu0
    %v4613 = vsel %vm358, %v4538, 0
    %4615 = vmatpush.msra.mxu0 0.0
    %4616 = vmatpush.msra.mxu0 0.0
    %4617 = vmatpush.msra.mxu0 0.0
    %4618 = vmatpush.msra.mxu0 0.0
    %4619 = vmatpush.msra.mxu0 0.0
    %4620 = vmatpush.msra.mxu0 0.0
    %4621 = vmatpush.msra.mxu0 0.0
    %4622 = vmatpush.msra.mxu0 0.0
    %4623 = vmatpush.msra.mxu0 0.0
    %4624 = vmatpush.msra.mxu0 0.0
    %4625 = vmatpush.msra.mxu0 0.0
    %4626 = vmatpush.msra.mxu0 0.0
    %4627 = vmatpush.msra.mxu0 0.0
    %4628 = vmatpush.msra.mxu0 0.0
    %4629 = vmatpush.msra.mxu0 0.0
    %4630 = vmatpush.msra.mxu0 %v614
    %4631 = vmatmul.f32.gmra.mxu0 %v4613
    %v4632 = vpop.f32.mrf.mxu0
    %v4633 = vadd.f32 0.0, %v4632
    %4634 = vdwg.mxu0
    %v4636 = vsel %vm358, %v4564, 0
    %4638 = vmatpush.msra.mxu0 0.0
    %4639 = vmatpush.msra.mxu0 0.0
    %4640 = vmatpush.msra.mxu0 0.0
    %4641 = vmatpush.msra.mxu0 0.0
    %4642 = vmatpush.msra.mxu0 0.0
    %4643 = vmatpush.msra.mxu0 0.0
    %4644 = vmatpush.msra.mxu0 0.0
    %4645 = vmatpush.msra.mxu0 0.0
    %4646 = vmatpush.msra.mxu0 0.0
    %4647 = vmatpush.msra.mxu0 0.0
    %4648 = vmatpush.msra.mxu0 0.0
    %4649 = vmatpush.msra.mxu0 0.0
    %4650 = vmatpush.msra.mxu0 0.0
    %4651 = vmatpush.msra.mxu0 0.0
    %4652 = vmatpush.msra.mxu0 0.0
    %4653 = vmatpush.msra.mxu0 %v615
    %4654 = vmatmul.f32.gmra.mxu0 %v4636
    %v4655 = vpop.f32.mrf.mxu0
    %v4656 = vadd.f32 0.0, %v4655
    %4657 = vdwg.mxu0
    %v4658 = vsel %vm176, %v4587, 0.0
    %v4659 = vsel %vm176, %v4610, 0.0
    %v4660 = vadd.f32 %v4658, %v4659
    %v4661 = vsel %vm176, %v4633, 0.0
    %v4662 = vadd.f32 %v4660, %v4661
    %v4663 = vsel %vm176, %v4656, 0.0
    %v4664 = vadd.f32 %v4662, %v4663
    %v4665 = vadd.f32 %v4664, %v717
    %v4666 = vadd.f32 %v4183, %v4665
    %v4667 = vsel %vm176, %v4666, 0.0
    %4668 = vadd.xlane.f32.xlu0 %v4667
    %v4669 = vpop.xlane.xlu0 %4668
    %v4670 = vmul.f32 %v4669, %v186
    %v4671 = vsub.f32 %v4666, %v4670
    %v4672 = vmul.f32 %v4671, %v4671
    %v4673 = vsel %vm176, %v4672, 0.0
    %4674 = vadd.xlane.f32.xlu0 %v4673
    %v4675 = vpop.xlane.xlu0 %4674
    %v4676 = vmul.f32 %v4675, %v199
    %v4677 = vmul.f32 %v734, %v4671
    %v4678 = vrsqrt.pop %v4676
    %v4679 = vmul.f32 %v4678, %v4676
    %v4680 = vmul.f32 %v4679, %v4678
    %v4681 = vmul.f32 0.5, %v4680
    %v4682 = vsub.f32 1.5, %v4681
    %v4683 = vmul.f32 %v4678, %v4682
    %v4684 = vmul.f32 %v4676, %v4683
    %vm4685 = vcmp.eq.f32.partialorder %v4676, inf
    %v4686 = vsel %vm4685, %v4676, %v4684
    %vm4687 = vcmp.eq.f32.partialorder %v4676, 0.0
    %v4688 = vand.u32 %v4676, 2147483648
    %v4689 = vsel %vm4687, %v4688, %v4686
    %v4690 = vadd.f32 %v4689, 1e-06
    %v4691 = vrcp.pop %v4690
    %v4692 = vmul.f32 %v4690, %v4691
    %v4693 = vsub.f32 1.0, %v4692
    %v4694 = vmul.f32 %v4691, %v4693
    %v4695 = vadd.f32 %v4691, %v4694
    %vm4696 = vweird.f32 %v4690
    %vm4697 = vweird.f32 %v4691
    %vm4698 = vmor %vm4696, %vm4697
    %v4699 = vsel %vm4698, %v4691, %v4695
    %v4700 = vand.u32 2147483647, %v4690
    %vm4701 = vcmp.eq.f32.partialorder %v4700, 8.507059e+37
    %v4702 = vand.u32 %v4690, 2147483648
    %v4703 = vor.u32 1.1754944e-38, %v4702
    %v4704 = vsel %vm4701, %v4703, %v4699
    %v4705 = vmul.f32 %v4677, %v4704
    %v4706 = vadd.f32 %v4705, %v766
    %v4708 = vsel %vm176, %v4706, 0
    %4710 = vmatpush.msra.mxu0 0.0
    %4711 = vmatpush.msra.mxu0 0.0
    %4712 = vmatpush.msra.mxu0 0.0
    %4713 = vmatpush.msra.mxu0 0.0
    %4714 = vmatpush.msra.mxu0 0.0
    %4715 = vmatpush.msra.mxu0 0.0
    %4716 = vmatpush.msra.mxu0 0.0
    %4717 = vmatpush.msra.mxu0 0.0
    %4718 = vmatpush.msra.mxu0 0.0
    %4719 = vmatpush.msra.mxu0 0.0
    %4720 = vmatpush.msra.mxu0 0.0
    %4721 = vmatpush.msra.mxu0 0.0
    %4722 = vmatpush.msra.mxu0 %v772
    %4723 = vmatpush.msra.mxu0 %v771
    %4724 = vmatpush.msra.mxu0 %v770
    %4725 = vmatpush.msra.mxu0 %v769
    %4726 = vmatmul.f32.gmra.mxu0 %v4708
    %v4727 = vpop.f32.mrf.mxu0
    %v4728 = vadd.f32 %v784, %v4727
    %4729 = vdwg.mxu0
    %v4730 = vmax.f32 %v4728, 0.0
    %v4732 = vsel %vm813, %v4730, 0
    %4734 = vmatpush.msra.mxu0 0.0
    %4735 = vmatpush.msra.mxu0 0.0
    %4736 = vmatpush.msra.mxu0 0.0
    %4737 = vmatpush.msra.mxu0 0.0
    %4738 = vmatpush.msra.mxu0 0.0
    %4739 = vmatpush.msra.mxu0 0.0
    %4740 = vmatpush.msra.mxu0 0.0
    %4741 = vmatpush.msra.mxu0 0.0
    %4742 = vmatpush.msra.mxu0 %v781
    %4743 = vmatpush.msra.mxu0 %v780
    %4744 = vmatpush.msra.mxu0 %v779
    %4745 = vmatpush.msra.mxu0 %v778
    %4746 = vmatpush.msra.mxu0 %v777
    %4747 = vmatpush.msra.mxu0 %v776
    %4748 = vmatpush.msra.mxu0 %v775
    %4749 = vmatpush.msra.mxu0 %v774
    %4750 = vmatmul.f32.gmra.mxu0 %v4732
    %v4751 = vpop.f32.mrf.mxu0
    %v4752 = vadd.f32 %v811, %v4751
    %4753 = vdwg.mxu0
    %v4754 = vadd.f32 %v4666, %v4752
    %v4755 = vsel %vm176, %v4754, 0.0
    %4756 = vadd.xlane.f32.xlu0 %v4755
    %v4757 = vpop.xlane.xlu0 %4756
    %v4758 = vmul.f32 %v4757, %v186
    %v4759 = vsub.f32 %v4754, %v4758
    %v4760 = vmul.f32 %v4759, %v4759
    %v4761 = vsel %vm176, %v4760, 0.0
    %4762 = vadd.xlane.f32.xlu0 %v4761
    %v4763 = vpop.xlane.xlu0 %4762
    %v4764 = vmul.f32 %v4763, %v199
    %v4765 = vmul.f32 %v853, %v4759
    %v4766 = vrsqrt.pop %v4764
    %v4767 = vmul.f32 %v4766, %v4764
    %v4768 = vmul.f32 %v4767, %v4766
    %v4769 = vmul.f32 0.5, %v4768
    %v4770 = vsub.f32 1.5, %v4769
    %v4771 = vmul.f32 %v4766, %v4770
    %v4772 = vmul.f32 %v4764, %v4771
    %vm4773 = vcmp.eq.f32.partialorder %v4764, inf
    %v4774 = vsel %vm4773, %v4764, %v4772
    %vm4775 = vcmp.eq.f32.partialorder %v4764, 0.0
    %v4776 = vand.u32 %v4764, 2147483648
    %v4777 = vsel %vm4775, %v4776, %v4774
    %v4778 = vadd.f32 %v4777, 1e-06
    %v4779 = vrcp.pop %v4778
    %v4780 = vmul.f32 %v4778, %v4779
    %v4781 = vsub.f32 1.0, %v4780
    %v4782 = vmul.f32 %v4779, %v4781
    %v4783 = vadd.f32 %v4779, %v4782
    %vm4784 = vweird.f32 %v4778
    %vm4785 = vweird.f32 %v4779
    %vm4786 = vmor %vm4784, %vm4785
    %v4787 = vsel %vm4786, %v4779, %v4783
    %v4788 = vand.u32 2147483647, %v4778
    %vm4789 = vcmp.eq.f32.partialorder %v4788, 8.507059e+37
    %v4790 = vand.u32 %v4778, 2147483648
    %v4791 = vor.u32 1.1754944e-38, %v4790
    %v4792 = vsel %vm4789, %v4791, %v4787
    %v4793 = vmul.f32 %v4765, %v4792
    %v4794 = vadd.f32 %v4793, %v885
    %v4796 = vsel %vm176, %v4794, 0
    %4798 = vmatpush.msra.mxu0 0.0
    %4799 = vmatpush.msra.mxu0 0.0
    %4800 = vmatpush.msra.mxu0 0.0
    %4801 = vmatpush.msra.mxu0 0.0
    %4802 = vmatpush.msra.mxu0 0.0
    %4803 = vmatpush.msra.mxu0 0.0
    %4804 = vmatpush.msra.mxu0 0.0
    %4805 = vmatpush.msra.mxu0 0.0
    %4806 = vmatpush.msra.mxu0 0.0
    %4807 = vmatpush.msra.mxu0 0.0
    %4808 = vmatpush.msra.mxu0 0.0
    %4809 = vmatpush.msra.mxu0 0.0
    %4810 = vmatpush.msra.mxu0 %v892
    %4811 = vmatpush.msra.mxu0 %v891
    %4812 = vmatpush.msra.mxu0 %v890
    %4813 = vmatpush.msra.mxu0 %v889
    %4814 = vmatmul.f32.gmra.mxu0 %v4796
    %v4815 = vpop.f32.mrf.mxu0
    %v4816 = vadd.f32 %v914, %v4815
    %4817 = vdwg.mxu0
    %4818 = vmatpush.msra.mxu0 0.0
    %4819 = vmatpush.msra.mxu0 0.0
    %4820 = vmatpush.msra.mxu0 0.0
    %4821 = vmatpush.msra.mxu0 0.0
    %4822 = vmatpush.msra.mxu0 0.0
    %4823 = vmatpush.msra.mxu0 0.0
    %4824 = vmatpush.msra.mxu0 0.0
    %4825 = vmatpush.msra.mxu0 0.0
    %4826 = vmatpush.msra.mxu0 0.0
    %4827 = vmatpush.msra.mxu0 0.0
    %4828 = vmatpush.msra.mxu0 0.0
    %4829 = vmatpush.msra.mxu0 0.0
    %4830 = vmatpush.msra.mxu0 %v896
    %4831 = vmatpush.msra.mxu0 %v895
    %4832 = vmatpush.msra.mxu0 %v894
    %4833 = vmatpush.msra.mxu0 %v893
    %4834 = vmatmul.f32.gmra.mxu0 %v4796
    %v4835 = vpop.f32.mrf.mxu0
    %v4836 = vadd.f32 %v915, %v4835
    %4837 = vdwg.mxu0
    %4838 = vmatpush.msra.mxu0 0.0
    %4839 = vmatpush.msra.mxu0 0.0
    %4840 = vmatpush.msra.mxu0 0.0
    %4841 = vmatpush.msra.mxu0 0.0
    %4842 = vmatpush.msra.mxu0 0.0
    %4843 = vmatpush.msra.mxu0 0.0
    %4844 = vmatpush.msra.mxu0 0.0
    %4845 = vmatpush.msra.mxu0 0.0
    %4846 = vmatpush.msra.mxu0 0.0
    %4847 = vmatpush.msra.mxu0 0.0
    %4848 = vmatpush.msra.mxu0 0.0
    %4849 = vmatpush.msra.mxu0 0.0
    %4850 = vmatpush.msra.mxu0 %v900
    %4851 = vmatpush.msra.mxu0 %v899
    %4852 = vmatpush.msra.mxu0 %v898
    %4853 = vmatpush.msra.mxu0 %v897
    %4854 = vmatmul.f32.gmra.mxu0 %v4796
    %v4855 = vpop.f32.mrf.mxu0
    %v4856 = vadd.f32 %v916, %v4855
    %4857 = vdwg.mxu0
    %4858 = vmatpush.msra.mxu0 0.0
    %4859 = vmatpush.msra.mxu0 0.0
    %4860 = vmatpush.msra.mxu0 0.0
    %4861 = vmatpush.msra.mxu0 0.0
    %4862 = vmatpush.msra.mxu0 0.0
    %4863 = vmatpush.msra.mxu0 0.0
    %4864 = vmatpush.msra.mxu0 0.0
    %4865 = vmatpush.msra.mxu0 0.0
    %4866 = vmatpush.msra.mxu0 0.0
    %4867 = vmatpush.msra.mxu0 0.0
    %4868 = vmatpush.msra.mxu0 0.0
    %4869 = vmatpush.msra.mxu0 0.0
    %4870 = vmatpush.msra.mxu0 %v904
    %4871 = vmatpush.msra.mxu0 %v903
    %4872 = vmatpush.msra.mxu0 %v902
    %4873 = vmatpush.msra.mxu0 %v901
    %4874 = vmatmul.f32.gmra.mxu0 %v4796
    %v4875 = vpop.f32.mrf.mxu0
    %v4876 = vadd.f32 %v917, %v4875
    %4877 = vdwg.mxu0
    %4879 = vrot.lane.b32.xlu0 %v4816, 120
    %v4880 = vpop.permute.xlu0 %4879
    %v4881 = vsel %vm358, %v4816, 0
    %v4883 = vsel %vm358, %v4880, 0
    %4885 = vmatpush.xpose.msra.mxu0 0.0
    %4886 = vmatpush.xpose.msra.mxu0 0.0
    %4887 = vmatpush.xpose.msra.mxu0 0.0
    %4888 = vmatpush.xpose.msra.mxu0 0.0
    %4889 = vmatpush.xpose.msra.mxu0 0.0
    %4890 = vmatpush.xpose.msra.mxu0 0.0
    %4891 = vmatpush.xpose.msra.mxu0 0.0
    %4892 = vmatpush.xpose.msra.mxu0 0.0
    %4893 = vmatpush.xpose.msra.mxu0 0.0
    %4894 = vmatpush.xpose.msra.mxu0 0.0
    %4895 = vmatpush.xpose.msra.mxu0 0.0
    %4896 = vmatpush.xpose.msra.mxu0 0.0
    %4897 = vmatpush.xpose.msra.mxu0 0.0
    %4898 = vmatpush.xpose.msra.mxu0 0.0
    %4899 = vmatpush.xpose.msra.mxu0 0.0
    %4900 = vmatpush.xpose.msra.mxu0 %v4883
    %4901 = vmatmul.f32.gmra.mxu0 %v4881
    %v4902 = vpop.f32.mrf.mxu0
    %v4903 = vadd.f32 %v4308, %v4902
    %4904 = vdwg.mxu0
    %4906 = vrot.lane.b32.xlu0 %v4836, 120
    %v4907 = vpop.permute.xlu0 %4906
    %v4908 = vsel %vm358, %v4836, 0
    %v4910 = vsel %vm358, %v4907, 0
    %4912 = vmatpush.xpose.msra.mxu0 0.0
    %4913 = vmatpush.xpose.msra.mxu0 0.0
    %4914 = vmatpush.xpose.msra.mxu0 0.0
    %4915 = vmatpush.xpose.msra.mxu0 0.0
    %4916 = vmatpush.xpose.msra.mxu0 0.0
    %4917 = vmatpush.xpose.msra.mxu0 0.0
    %4918 = vmatpush.xpose.msra.mxu0 0.0
    %4919 = vmatpush.xpose.msra.mxu0 0.0
    %4920 = vmatpush.xpose.msra.mxu0 0.0
    %4921 = vmatpush.xpose.msra.mxu0 0.0
    %4922 = vmatpush.xpose.msra.mxu0 0.0
    %4923 = vmatpush.xpose.msra.mxu0 0.0
    %4924 = vmatpush.xpose.msra.mxu0 0.0
    %4925 = vmatpush.xpose.msra.mxu0 0.0
    %4926 = vmatpush.xpose.msra.mxu0 0.0
    %4927 = vmatpush.xpose.msra.mxu0 %v4910
    %4928 = vmatmul.f32.gmra.mxu0 %v4908
    %v4929 = vpop.f32.mrf.mxu0
    %v4930 = vadd.f32 %v4308, %v4929
    %4931 = vdwg.mxu0
    %4933 = vrot.lane.b32.xlu0 %v4856, 120
    %v4934 = vpop.permute.xlu0 %4933
    %v4935 = vsel %vm358, %v4856, 0
    %v4937 = vsel %vm358, %v4934, 0
    %4939 = vmatpush.xpose.msra.mxu0 0.0
    %4940 = vmatpush.xpose.msra.mxu0 0.0
    %4941 = vmatpush.xpose.msra.mxu0 0.0
    %4942 = vmatpush.xpose.msra.mxu0 0.0
    %4943 = vmatpush.xpose.msra.mxu0 0.0
    %4944 = vmatpush.xpose.msra.mxu0 0.0
    %4945 = vmatpush.xpose.msra.mxu0 0.0
    %4946 = vmatpush.xpose.msra.mxu0 0.0
    %4947 = vmatpush.xpose.msra.mxu0 0.0
    %4948 = vmatpush.xpose.msra.mxu0 0.0
    %4949 = vmatpush.xpose.msra.mxu0 0.0
    %4950 = vmatpush.xpose.msra.mxu0 0.0
    %4951 = vmatpush.xpose.msra.mxu0 0.0
    %4952 = vmatpush.xpose.msra.mxu0 0.0
    %4953 = vmatpush.xpose.msra.mxu0 0.0
    %4954 = vmatpush.xpose.msra.mxu0 %v4937
    %4955 = vmatmul.f32.gmra.mxu0 %v4935
    %v4956 = vpop.f32.mrf.mxu0
    %v4957 = vadd.f32 %v4308, %v4956
    %4958 = vdwg.mxu0
    %4960 = vrot.lane.b32.xlu0 %v4876, 120
    %v4961 = vpop.permute.xlu0 %4960
    %v4962 = vsel %vm358, %v4876, 0
    %v4964 = vsel %vm358, %v4961, 0
    %4966 = vmatpush.xpose.msra.mxu0 0.0
    %4967 = vmatpush.xpose.msra.mxu0 0.0
    %4968 = vmatpush.xpose.msra.mxu0 0.0
    %4969 = vmatpush.xpose.msra.mxu0 0.0
    %4970 = vmatpush.xpose.msra.mxu0 0.0
    %4971 = vmatpush.xpose.msra.mxu0 0.0
    %4972 = vmatpush.xpose.msra.mxu0 0.0
    %4973 = vmatpush.xpose.msra.mxu0 0.0
    %4974 = vmatpush.xpose.msra.mxu0 0.0
    %4975 = vmatpush.xpose.msra.mxu0 0.0
    %4976 = vmatpush.xpose.msra.mxu0 0.0
    %4977 = vmatpush.xpose.msra.mxu0 0.0
    %4978 = vmatpush.xpose.msra.mxu0 0.0
    %4979 = vmatpush.xpose.msra.mxu0 0.0
    %4980 = vmatpush.xpose.msra.mxu0 0.0
    %4981 = vmatpush.xpose.msra.mxu0 %v4964
    %4982 = vmatmul.f32.gmra.mxu0 %v4962
    %v4983 = vpop.f32.mrf.mxu0
    %v4984 = vadd.f32 %v4308, %v4983
    %4985 = vdwg.mxu0
    %v4986 = vsel %vm358, %v4903, -inf
    %4987 = vmax.xlane.f32.xlu0 %v4986
    %v4988 = vpop.xlane.xlu0 %4987
    %v4989 = vsel %vm358, %v4930, -inf
    %4990 = vmax.xlane.f32.xlu0 %v4989
    %v4991 = vpop.xlane.xlu0 %4990
    %v4992 = vsel %vm358, %v4957, -inf
    %4993 = vmax.xlane.f32.xlu0 %v4992
    %v4994 = vpop.xlane.xlu0 %4993
    %v4995 = vsel %vm358, %v4984, -inf
    %4996 = vmax.xlane.f32.xlu0 %v4995
    %v4997 = vpop.xlane.xlu0 %4996
    %v4998 = vsub.f32 %v4903, %v4988
    %v4999 = vsub.f32 %v4930, %v4991
    %v5000 = vsub.f32 %v4957, %v4994
    %v5001 = vsub.f32 %v4984, %v4997
    %v5002 = vmul.f32 %v4998, 1.442695
    %v5003 = vpow.pop %v5002
    %v5004 = vmul.f32 %v4999, 1.442695
    %v5005 = vpow.pop %v5004
    %v5006 = vmul.f32 %v5000, 1.442695
    %v5007 = vpow.pop %v5006
    %v5008 = vmul.f32 %v5001, 1.442695
    %v5009 = vpow.pop %v5008
    %v5010 = vsel %vm358, %v5003, 0.0
    %5011 = vadd.xlane.f32.xlu0 %v5010
    %v5012 = vpop.xlane.xlu0 %5011
    %v5013 = vsel %vm358, %v5005, 0.0
    %5014 = vadd.xlane.f32.xlu0 %v5013
    %v5015 = vpop.xlane.xlu0 %5014
    %v5016 = vsel %vm358, %v5007, 0.0
    %5017 = vadd.xlane.f32.xlu0 %v5016
    %v5018 = vpop.xlane.xlu0 %5017
    %v5019 = vsel %vm358, %v5009, 0.0
    %5020 = vadd.xlane.f32.xlu0 %v5019
    %v5021 = vpop.xlane.xlu0 %5020
    %v5022 = vrcp.pop %v5012
    %v5023 = vrcp.pop %v5015
    %v5024 = vrcp.pop %v5018
    %v5025 = vrcp.pop %v5021
    %v5026 = vmul.f32 %v5003, %v5022
    %v5027 = vmul.f32 %v5005, %v5023
    %v5028 = vmul.f32 %v5007, %v5024
    %v5029 = vmul.f32 %v5009, %v5025
    %5030 = vrot.lane.b32.xlu0 %v4816, 112
    %v5031 = vpop.permute.xlu0 %5030
    %v5034 = vsel %vm358, %v5026, 0
    %5036 = vmatpush.msra.mxu0 0.0
    %5037 = vmatpush.msra.mxu0 0.0
    %5038 = vmatpush.msra.mxu0 0.0
    %5039 = vmatpush.msra.mxu0 0.0
    %5040 = vmatpush.msra.mxu0 0.0
    %5041 = vmatpush.msra.mxu0 0.0
    %5042 = vmatpush.msra.mxu0 0.0
    %5043 = vmatpush.msra.mxu0 0.0
    %5044 = vmatpush.msra.mxu0 0.0
    %5045 = vmatpush.msra.mxu0 0.0
    %5046 = vmatpush.msra.mxu0 0.0
    %5047 = vmatpush.msra.mxu0 0.0
    %5048 = vmatpush.msra.mxu0 0.0
    %5049 = vmatpush.msra.mxu0 0.0
    %5050 = vmatpush.msra.mxu0 0.0
    %5051 = vmatpush.msra.mxu0 %v5031
    %5052 = vmatmul.f32.gmra.mxu0 %v5034
    %v5053 = vpop.f32.mrf.mxu0
    %v5054 = vadd.f32 0.0, %v5053
    %5055 = vdwg.mxu0
    %5056 = vrot.lane.b32.xlu0 %v4836, 112
    %v5057 = vpop.permute.xlu0 %5056
    %v5060 = vsel %vm358, %v5027, 0
    %5062 = vmatpush.msra.mxu0 0.0
    %5063 = vmatpush.msra.mxu0 0.0
    %5064 = vmatpush.msra.mxu0 0.0
    %5065 = vmatpush.msra.mxu0 0.0
    %5066 = vmatpush.msra.mxu0 0.0
    %5067 = vmatpush.msra.mxu0 0.0
    %5068 = vmatpush.msra.mxu0 0.0
    %5069 = vmatpush.msra.mxu0 0.0
    %5070 = vmatpush.msra.mxu0 0.0
    %5071 = vmatpush.msra.mxu0 0.0
    %5072 = vmatpush.msra.mxu0 0.0
    %5073 = vmatpush.msra.mxu0 0.0
    %5074 = vmatpush.msra.mxu0 0.0
    %5075 = vmatpush.msra.mxu0 0.0
    %5076 = vmatpush.msra.mxu0 0.0
    %5077 = vmatpush.msra.mxu0 %v5057
    %5078 = vmatmul.f32.gmra.mxu0 %v5060
    %v5079 = vpop.f32.mrf.mxu0
    %v5080 = vadd.f32 0.0, %v5079
    %5081 = vdwg.mxu0
    %5082 = vrot.lane.b32.xlu0 %v4856, 112
    %v5083 = vpop.permute.xlu0 %5082
    %v5086 = vsel %vm358, %v5028, 0
    %5088 = vmatpush.msra.mxu0 0.0
    %5089 = vmatpush.msra.mxu0 0.0
    %5090 = vmatpush.msra.mxu0 0.0
    %5091 = vmatpush.msra.mxu0 0.0
    %5092 = vmatpush.msra.mxu0 0.0
    %5093 = vmatpush.msra.mxu0 0.0
    %5094 = vmatpush.msra.mxu0 0.0
    %5095 = vmatpush.msra.mxu0 0.0
    %5096 = vmatpush.msra.mxu0 0.0
    %5097 = vmatpush.msra.mxu0 0.0
    %5098 = vmatpush.msra.mxu0 0.0
    %5099 = vmatpush.msra.mxu0 0.0
    %5100 = vmatpush.msra.mxu0 0.0
    %5101 = vmatpush.msra.mxu0 0.0
    %5102 = vmatpush.msra.mxu0 0.0
    %5103 = vmatpush.msra.mxu0 %v5083
    %5104 = vmatmul.f32.gmra.mxu0 %v5086
    %v5105 = vpop.f32.mrf.mxu0
    %v5106 = vadd.f32 0.0, %v5105
    %5107 = vdwg.mxu0
    %5108 = vrot.lane.b32.xlu0 %v4876, 112
    %v5109 = vpop.permute.xlu0 %5108
    %v5112 = vsel %vm358, %v5029, 0
    %5114 = vmatpush.msra.mxu0 0.0
    %5115 = vmatpush.msra.mxu0 0.0
    %5116 = vmatpush.msra.mxu0 0.0
    %5117 = vmatpush.msra.mxu0 0.0
    %5118 = vmatpush.msra.mxu0 0.0
    %5119 = vmatpush.msra.mxu0 0.0
    %5120 = vmatpush.msra.mxu0 0.0
    %5121 = vmatpush.msra.mxu0 0.0
    %5122 = vmatpush.msra.mxu0 0.0
    %5123 = vmatpush.msra.mxu0 0.0
    %5124 = vmatpush.msra.mxu0 0.0
    %5125 = vmatpush.msra.mxu0 0.0
    %5126 = vmatpush.msra.mxu0 0.0
    %5127 = vmatpush.msra.mxu0 0.0
    %5128 = vmatpush.msra.mxu0 0.0
    %5129 = vmatpush.msra.mxu0 %v5109
    %5130 = vmatmul.f32.gmra.mxu0 %v5112
    %v5131 = vpop.f32.mrf.mxu0
    %v5132 = vadd.f32 0.0, %v5131
    %5133 = vdwg.mxu0
    %v5135 = vsel %vm358, %v5054, 0
    %5137 = vmatpush.msra.mxu0 0.0
    %5138 = vmatpush.msra.mxu0 0.0
    %5139 = vmatpush.msra.mxu0 0.0
    %5140 = vmatpush.msra.mxu0 0.0
    %5141 = vmatpush.msra.mxu0 0.0
    %5142 = vmatpush.msra.mxu0 0.0
    %5143 = vmatpush.msra.mxu0 0.0
    %5144 = vmatpush.msra.mxu0 0.0
    %5145 = vmatpush.msra.mxu0 0.0
    %5146 = vmatpush.msra.mxu0 0.0
    %5147 = vmatpush.msra.mxu0 0.0
    %5148 = vmatpush.msra.mxu0 0.0
    %5149 = vmatpush.msra.mxu0 0.0
    %5150 = vmatpush.msra.mxu0 0.0
    %5151 = vmatpush.msra.mxu0 0.0
    %5152 = vmatpush.msra.mxu0 %v1262
    %5153 = vmatmul.f32.gmra.mxu0 %v5135
    %v5154 = vpop.f32.mrf.mxu0
    %v5155 = vadd.f32 0.0, %v5154
    %5156 = vdwg.mxu0
    %v5158 = vsel %vm358, %v5080, 0
    %5160 = vmatpush.msra.mxu0 0.0
    %5161 = vmatpush.msra.mxu0 0.0
    %5162 = vmatpush.msra.mxu0 0.0
    %5163 = vmatpush.msra.mxu0 0.0
    %5164 = vmatpush.msra.mxu0 0.0
    %5165 = vmatpush.msra.mxu0 0.0
    %5166 = vmatpush.msra.mxu0 0.0
    %5167 = vmatpush.msra.mxu0 0.0
    %5168 = vmatpush.msra.mxu0 0.0
    %5169 = vmatpush.msra.mxu0 0.0
    %5170 = vmatpush.msra.mxu0 0.0
    %5171 = vmatpush.msra.mxu0 0.0
    %5172 = vmatpush.msra.mxu0 0.0
    %5173 = vmatpush.msra.mxu0 0.0
    %5174 = vmatpush.msra.mxu0 0.0
    %5175 = vmatpush.msra.mxu0 %v1263
    %5176 = vmatmul.f32.gmra.mxu0 %v5158
    %v5177 = vpop.f32.mrf.mxu0
    %v5178 = vadd.f32 0.0, %v5177
    %5179 = vdwg.mxu0
    %v5181 = vsel %vm358, %v5106, 0
    %5183 = vmatpush.msra.mxu0 0.0
    %5184 = vmatpush.msra.mxu0 0.0
    %5185 = vmatpush.msra.mxu0 0.0
    %5186 = vmatpush.msra.mxu0 0.0
    %5187 = vmatpush.msra.mxu0 0.0
    %5188 = vmatpush.msra.mxu0 0.0
    %5189 = vmatpush.msra.mxu0 0.0
    %5190 = vmatpush.msra.mxu0 0.0
    %5191 = vmatpush.msra.mxu0 0.0
    %5192 = vmatpush.msra.mxu0 0.0
    %5193 = vmatpush.msra.mxu0 0.0
    %5194 = vmatpush.msra.mxu0 0.0
    %5195 = vmatpush.msra.mxu0 0.0
    %5196 = vmatpush.msra.mxu0 0.0
    %5197 = vmatpush.msra.mxu0 0.0
    %5198 = vmatpush.msra.mxu0 %v1264
    %5199 = vmatmul.f32.gmra.mxu0 %v5181
    %v5200 = vpop.f32.mrf.mxu0
    %v5201 = vadd.f32 0.0, %v5200
    %5202 = vdwg.mxu0
    %v5204 = vsel %vm358, %v5132, 0
    %5206 = vmatpush.msra.mxu0 0.0
    %5207 = vmatpush.msra.mxu0 0.0
    %5208 = vmatpush.msra.mxu0 0.0
    %5209 = vmatpush.msra.mxu0 0.0
    %5210 = vmatpush.msra.mxu0 0.0
    %5211 = vmatpush.msra.mxu0 0.0
    %5212 = vmatpush.msra.mxu0 0.0
    %5213 = vmatpush.msra.mxu0 0.0
    %5214 = vmatpush.msra.mxu0 0.0
    %5215 = vmatpush.msra.mxu0 0.0
    %5216 = vmatpush.msra.mxu0 0.0
    %5217 = vmatpush.msra.mxu0 0.0
    %5218 = vmatpush.msra.mxu0 0.0
    %5219 = vmatpush.msra.mxu0 0.0
    %5220 = vmatpush.msra.mxu0 0.0
    %5221 = vmatpush.msra.mxu0 %v1265
    %5222 = vmatmul.f32.gmra.mxu0 %v5204
    %v5223 = vpop.f32.mrf.mxu0
    %v5224 = vadd.f32 0.0, %v5223
    %5225 = vdwg.mxu0
    %v5226 = vsel %vm176, %v5155, 0.0
    %v5227 = vsel %vm176, %v5178, 0.0
    %v5228 = vadd.f32 %v5226, %v5227
    %v5229 = vsel %vm176, %v5201, 0.0
    %v5230 = vadd.f32 %v5228, %v5229
    %v5231 = vsel %vm176, %v5224, 0.0
    %v5232 = vadd.f32 %v5230, %v5231
    %v5233 = vadd.f32 %v5232, %v1368
    %v5234 = vadd.f32 %v4754, %v5233
    %v5235 = vsel %vm176, %v5234, 0.0
    %5236 = vadd.xlane.f32.xlu0 %v5235
    %v5237 = vpop.xlane.xlu0 %5236
    %v5238 = vmul.f32 %v5237, %v186
    %v5239 = vsub.f32 %v5234, %v5238
    %v5240 = vmul.f32 %v5239, %v5239
    %v5241 = vsel %vm176, %v5240, 0.0
    %5242 = vadd.xlane.f32.xlu0 %v5241
    %v5243 = vpop.xlane.xlu0 %5242
    %v5244 = vmul.f32 %v5243, %v199
    %v5245 = vmul.f32 %v1387, %v5239
    %v5246 = vrsqrt.pop %v5244
    %v5247 = vmul.f32 %v5246, %v5244
    %v5248 = vmul.f32 %v5247, %v5246
    %v5249 = vmul.f32 0.5, %v5248
    %v5250 = vsub.f32 1.5, %v5249
    %v5251 = vmul.f32 %v5246, %v5250
    %v5252 = vmul.f32 %v5244, %v5251
    %vm5253 = vcmp.eq.f32.partialorder %v5244, inf
    %v5254 = vsel %vm5253, %v5244, %v5252
    %vm5255 = vcmp.eq.f32.partialorder %v5244, 0.0
    %v5256 = vand.u32 %v5244, 2147483648
    %v5257 = vsel %vm5255, %v5256, %v5254
    %v5258 = vadd.f32 %v5257, 1e-06
    %v5259 = vrcp.pop %v5258
    %v5260 = vmul.f32 %v5258, %v5259
    %v5261 = vsub.f32 1.0, %v5260
    %v5262 = vmul.f32 %v5259, %v5261
    %v5263 = vadd.f32 %v5259, %v5262
    %vm5264 = vweird.f32 %v5258
    %vm5265 = vweird.f32 %v5259
    %vm5266 = vmor %vm5264, %vm5265
    %v5267 = vsel %vm5266, %v5259, %v5263
    %v5268 = vand.u32 2147483647, %v5258
    %vm5269 = vcmp.eq.f32.partialorder %v5268, 8.507059e+37
    %v5270 = vand.u32 %v5258, 2147483648
    %v5271 = vor.u32 1.1754944e-38, %v5270
    %v5272 = vsel %vm5269, %v5271, %v5267
    %v5273 = vmul.f32 %v5245, %v5272
    %v5274 = vadd.f32 %v5273, %v1419
    %v5276 = vsel %vm176, %v5274, 0
    %5278 = vmatpush.msra.mxu0 0.0
    %5279 = vmatpush.msra.mxu0 0.0
    %5280 = vmatpush.msra.mxu0 0.0
    %5281 = vmatpush.msra.mxu0 0.0
    %5282 = vmatpush.msra.mxu0 0.0
    %5283 = vmatpush.msra.mxu0 0.0
    %5284 = vmatpush.msra.mxu0 0.0
    %5285 = vmatpush.msra.mxu0 0.0
    %5286 = vmatpush.msra.mxu0 0.0
    %5287 = vmatpush.msra.mxu0 0.0
    %5288 = vmatpush.msra.mxu0 0.0
    %5289 = vmatpush.msra.mxu0 0.0
    %5290 = vmatpush.msra.mxu0 %v1426
    %5291 = vmatpush.msra.mxu0 %v1425
    %5292 = vmatpush.msra.mxu0 %v1424
    %5293 = vmatpush.msra.mxu0 %v1423
    %5294 = vmatmul.f32.gmra.mxu0 %v5276
    %v5295 = vpop.f32.mrf.mxu0
    %v5296 = vadd.f32 %v1441, %v5295
    %5297 = vdwg.mxu0
    %v5298 = vmax.f32 %v5296, 0.0
    %v5300 = vsel %vm813, %v5298, 0
    %5302 = vmatpush.msra.mxu0 0.0
    %5303 = vmatpush.msra.mxu0 0.0
    %5304 = vmatpush.msra.mxu0 0.0
    %5305 = vmatpush.msra.mxu0 0.0
    %5306 = vmatpush.msra.mxu0 0.0
    %5307 = vmatpush.msra.mxu0 0.0
    %5308 = vmatpush.msra.mxu0 0.0
    %5309 = vmatpush.msra.mxu0 0.0
    %5310 = vmatpush.msra.mxu0 %v1437
    %5311 = vmatpush.msra.mxu0 %v1436
    %5312 = vmatpush.msra.mxu0 %v1435
    %5313 = vmatpush.msra.mxu0 %v1434
    %5314 = vmatpush.msra.mxu0 %v1433
    %5315 = vmatpush.msra.mxu0 %v1432
    %5316 = vmatpush.msra.mxu0 %v1431
    %5317 = vmatpush.msra.mxu0 %v1430
    %5318 = vmatmul.f32.gmra.mxu0 %v5300
    %v5319 = vpop.f32.mrf.mxu0
    %v5320 = vadd.f32 %v1468, %v5319
    %5321 = vdwg.mxu0
    %v5322 = vadd.f32 %v5234, %v5320
    %v5323 = vsel %vm176, %v5322, 0.0
    %5324 = vadd.xlane.f32.xlu0 %v5323
    %v5325 = vpop.xlane.xlu0 %5324
    %v5326 = vmul.f32 %v5325, %v186
    %v5327 = vsub.f32 %v5322, %v5326
    %v5328 = vmul.f32 %v5327, %v5327
    %v5329 = vsel %vm176, %v5328, 0.0
    %5330 = vadd.xlane.f32.xlu0 %v5329
    %v5331 = vpop.xlane.xlu0 %5330
    %v5332 = vmul.f32 %v5331, %v199
    %v5333 = vmul.f32 %v1507, %v5327
    %v5334 = vrsqrt.pop %v5332
    %v5335 = vmul.f32 %v5334, %v5332
    %v5336 = vmul.f32 %v5335, %v5334
    %v5337 = vmul.f32 0.5, %v5336
    %v5338 = vsub.f32 1.5, %v5337
    %v5339 = vmul.f32 %v5334, %v5338
    %v5340 = vmul.f32 %v5332, %v5339
    %vm5341 = vcmp.eq.f32.partialorder %v5332, inf
    %v5342 = vsel %vm5341, %v5332, %v5340
    %vm5343 = vcmp.eq.f32.partialorder %v5332, 0.0
    %v5344 = vand.u32 %v5332, 2147483648
    %v5345 = vsel %vm5343, %v5344, %v5342
    %v5346 = vadd.f32 %v5345, 1e-06
    %v5347 = vrcp.pop %v5346
    %v5348 = vmul.f32 %v5346, %v5347
    %v5349 = vsub.f32 1.0, %v5348
    %v5350 = vmul.f32 %v5347, %v5349
    %v5351 = vadd.f32 %v5347, %v5350
    %vm5352 = vweird.f32 %v5346
    %vm5353 = vweird.f32 %v5347
    %vm5354 = vmor %vm5352, %vm5353
    %v5355 = vsel %vm5354, %v5347, %v5351
    %v5356 = vand.u32 2147483647, %v5346
    %vm5357 = vcmp.eq.f32.partialorder %v5356, 8.507059e+37
    %v5358 = vand.u32 %v5346, 2147483648
    %v5359 = vor.u32 1.1754944e-38, %v5358
    %v5360 = vsel %vm5357, %v5359, %v5355
    %v5361 = vmul.f32 %v5333, %v5360
    %v5362 = vadd.f32 %v5361, %v1539
    %s5363 = scalar_lea.vmem %s3, 8
    %v5364 = vld [vmem:[%s5363] sm:$0xff]
    %v5365 = vsel %vm176, %v5364, 0.0
    %5366 = vadd.xlane.f32.xlu0 %v5365
    %v5367 = vpop.xlane.xlu0 %5366
    %v5368 = vmul.f32 %v5367, %v186
    %v5369 = vsub.f32 %v5364, %v5368
    %v5370 = vmul.f32 %v5369, %v5369
    %v5371 = vsel %vm176, %v5370, 0.0
    %5372 = vadd.xlane.f32.xlu0 %v5371
    %v5373 = vpop.xlane.xlu0 %5372
    %v5374 = vmul.f32 %v5373, %v199
    %v5375 = vmul.f32 %v1556, %v5369
    %v5376 = vrsqrt.pop %v5374
    %v5377 = vmul.f32 %v5376, %v5374
    %v5378 = vmul.f32 %v5377, %v5376
    %v5379 = vmul.f32 0.5, %v5378
    %v5380 = vsub.f32 1.5, %v5379
    %v5381 = vmul.f32 %v5376, %v5380
    %v5382 = vmul.f32 %v5374, %v5381
    %vm5383 = vcmp.eq.f32.partialorder %v5374, inf
    %v5384 = vsel %vm5383, %v5374, %v5382
    %vm5385 = vcmp.eq.f32.partialorder %v5374, 0.0
    %v5386 = vand.u32 %v5374, 2147483648
    %v5387 = vsel %vm5385, %v5386, %v5384
    %v5388 = vadd.f32 %v5387, 1e-06
    %v5389 = vrcp.pop %v5388
    %v5390 = vmul.f32 %v5388, %v5389
    %v5391 = vsub.f32 1.0, %v5390
    %v5392 = vmul.f32 %v5389, %v5391
    %v5393 = vadd.f32 %v5389, %v5392
    %vm5394 = vweird.f32 %v5388
    %vm5395 = vweird.f32 %v5389
    %vm5396 = vmor %vm5394, %vm5395
    %v5397 = vsel %vm5396, %v5389, %v5393
    %v5398 = vand.u32 2147483647, %v5388
    %vm5399 = vcmp.eq.f32.partialorder %v5398, 8.507059e+37
    %v5400 = vand.u32 %v5388, 2147483648
    %v5401 = vor.u32 1.1754944e-38, %v5400
    %v5402 = vsel %vm5399, %v5401, %v5397
    %v5403 = vmul.f32 %v5375, %v5402
    %v5404 = vadd.f32 %v5403, %v1588
    %v5406 = vsel %vm176, %v5404, 0
    %5408 = vmatpush.msra.mxu0 0.0
    %5409 = vmatpush.msra.mxu0 0.0
    %5410 = vmatpush.msra.mxu0 0.0
    %5411 = vmatpush.msra.mxu0 0.0
    %5412 = vmatpush.msra.mxu0 0.0
    %5413 = vmatpush.msra.mxu0 0.0
    %5414 = vmatpush.msra.mxu0 0.0
    %5415 = vmatpush.msra.mxu0 0.0
    %5416 = vmatpush.msra.mxu0 0.0
    %5417 = vmatpush.msra.mxu0 0.0
    %5418 = vmatpush.msra.mxu0 0.0
    %5419 = vmatpush.msra.mxu0 0.0
    %5420 = vmatpush.msra.mxu0 %v1594
    %5421 = vmatpush.msra.mxu0 %v1593
    %5422 = vmatpush.msra.mxu0 %v1592
    %5423 = vmatpush.msra.mxu0 %v1591
    %5424 = vmatmul.f32.gmra.mxu0 %v5406
    %v5425 = vpop.f32.mrf.mxu0
    %v5426 = vadd.f32 %v1615, %v5425
    %5427 = vdwg.mxu0
    %5428 = vmatpush.msra.mxu0 0.0
    %5429 = vmatpush.msra.mxu0 0.0
    %5430 = vmatpush.msra.mxu0 0.0
    %5431 = vmatpush.msra.mxu0 0.0
    %5432 = vmatpush.msra.mxu0 0.0
    %5433 = vmatpush.msra.mxu0 0.0
    %5434 = vmatpush.msra.mxu0 0.0
    %5435 = vmatpush.msra.mxu0 0.0
    %5436 = vmatpush.msra.mxu0 0.0
    %5437 = vmatpush.msra.mxu0 0.0
    %5438 = vmatpush.msra.mxu0 0.0
    %5439 = vmatpush.msra.mxu0 0.0
    %5440 = vmatpush.msra.mxu0 %v1598
    %5441 = vmatpush.msra.mxu0 %v1597
    %5442 = vmatpush.msra.mxu0 %v1596
    %5443 = vmatpush.msra.mxu0 %v1595
    %5444 = vmatmul.f32.gmra.mxu0 %v5406
    %v5445 = vpop.f32.mrf.mxu0
    %v5446 = vadd.f32 %v1616, %v5445
    %5447 = vdwg.mxu0
    %5448 = vmatpush.msra.mxu0 0.0
    %5449 = vmatpush.msra.mxu0 0.0
    %5450 = vmatpush.msra.mxu0 0.0
    %5451 = vmatpush.msra.mxu0 0.0
    %5452 = vmatpush.msra.mxu0 0.0
    %5453 = vmatpush.msra.mxu0 0.0
    %5454 = vmatpush.msra.mxu0 0.0
    %5455 = vmatpush.msra.mxu0 0.0
    %5456 = vmatpush.msra.mxu0 0.0
    %5457 = vmatpush.msra.mxu0 0.0
    %5458 = vmatpush.msra.mxu0 0.0
    %5459 = vmatpush.msra.mxu0 0.0
    %5460 = vmatpush.msra.mxu0 %v1602
    %5461 = vmatpush.msra.mxu0 %v1601
    %5462 = vmatpush.msra.mxu0 %v1600
    %5463 = vmatpush.msra.mxu0 %v1599
    %5464 = vmatmul.f32.gmra.mxu0 %v5406
    %v5465 = vpop.f32.mrf.mxu0
    %v5466 = vadd.f32 %v1617, %v5465
    %5467 = vdwg.mxu0
    %5468 = vmatpush.msra.mxu0 0.0
    %5469 = vmatpush.msra.mxu0 0.0
    %5470 = vmatpush.msra.mxu0 0.0
    %5471 = vmatpush.msra.mxu0 0.0
    %5472 = vmatpush.msra.mxu0 0.0
    %5473 = vmatpush.msra.mxu0 0.0
    %5474 = vmatpush.msra.mxu0 0.0
    %5475 = vmatpush.msra.mxu0 0.0
    %5476 = vmatpush.msra.mxu0 0.0
    %5477 = vmatpush.msra.mxu0 0.0
    %5478 = vmatpush.msra.mxu0 0.0
    %5479 = vmatpush.msra.mxu0 0.0
    %5480 = vmatpush.msra.mxu0 %v1606
    %5481 = vmatpush.msra.mxu0 %v1605
    %5482 = vmatpush.msra.mxu0 %v1604
    %5483 = vmatpush.msra.mxu0 %v1603
    %5484 = vmatmul.f32.gmra.mxu0 %v5406
    %v5485 = vpop.f32.mrf.mxu0
    %v5486 = vadd.f32 %v1618, %v5485
    %5487 = vdwg.mxu0
    %5489 = vrot.lane.b32.xlu0 %v5426, 120
    %v5490 = vpop.permute.xlu0 %5489
    %v5491 = vsel %vm358, %v5426, 0
    %v5493 = vsel %vm358, %v5490, 0
    %5495 = vmatpush.xpose.msra.mxu0 0.0
    %5496 = vmatpush.xpose.msra.mxu0 0.0
    %5497 = vmatpush.xpose.msra.mxu0 0.0
    %5498 = vmatpush.xpose.msra.mxu0 0.0
    %5499 = vmatpush.xpose.msra.mxu0 0.0
    %5500 = vmatpush.xpose.msra.mxu0 0.0
    %5501 = vmatpush.xpose.msra.mxu0 0.0
    %5502 = vmatpush.xpose.msra.mxu0 0.0
    %5503 = vmatpush.xpose.msra.mxu0 0.0
    %5504 = vmatpush.xpose.msra.mxu0 0.0
    %5505 = vmatpush.xpose.msra.mxu0 0.0
    %5506 = vmatpush.xpose.msra.mxu0 0.0
    %5507 = vmatpush.xpose.msra.mxu0 0.0
    %5508 = vmatpush.xpose.msra.mxu0 0.0
    %5509 = vmatpush.xpose.msra.mxu0 0.0
    %5510 = vmatpush.xpose.msra.mxu0 %v5493
    %5511 = vmatmul.f32.gmra.mxu0 %v5491
    %v5512 = vpop.f32.mrf.mxu0
    %v5513 = vadd.f32 %v4181, %v5512
    %5514 = vdwg.mxu0
    %5516 = vrot.lane.b32.xlu0 %v5446, 120
    %v5517 = vpop.permute.xlu0 %5516
    %v5518 = vsel %vm358, %v5446, 0
    %v5520 = vsel %vm358, %v5517, 0
    %5522 = vmatpush.xpose.msra.mxu0 0.0
    %5523 = vmatpush.xpose.msra.mxu0 0.0
    %5524 = vmatpush.xpose.msra.mxu0 0.0
    %5525 = vmatpush.xpose.msra.mxu0 0.0
    %5526 = vmatpush.xpose.msra.mxu0 0.0
    %5527 = vmatpush.xpose.msra.mxu0 0.0
    %5528 = vmatpush.xpose.msra.mxu0 0.0
    %5529 = vmatpush.xpose.msra.mxu0 0.0
    %5530 = vmatpush.xpose.msra.mxu0 0.0
    %5531 = vmatpush.xpose.msra.mxu0 0.0
    %5532 = vmatpush.xpose.msra.mxu0 0.0
    %5533 = vmatpush.xpose.msra.mxu0 0.0
    %5534 = vmatpush.xpose.msra.mxu0 0.0
    %5535 = vmatpush.xpose.msra.mxu0 0.0
    %5536 = vmatpush.xpose.msra.mxu0 0.0
    %5537 = vmatpush.xpose.msra.mxu0 %v5520
    %5538 = vmatmul.f32.gmra.mxu0 %v5518
    %v5539 = vpop.f32.mrf.mxu0
    %v5540 = vadd.f32 %v4181, %v5539
    %5541 = vdwg.mxu0
    %5543 = vrot.lane.b32.xlu0 %v5466, 120
    %v5544 = vpop.permute.xlu0 %5543
    %v5545 = vsel %vm358, %v5466, 0
    %v5547 = vsel %vm358, %v5544, 0
    %5549 = vmatpush.xpose.msra.mxu0 0.0
    %5550 = vmatpush.xpose.msra.mxu0 0.0
    %5551 = vmatpush.xpose.msra.mxu0 0.0
    %5552 = vmatpush.xpose.msra.mxu0 0.0
    %5553 = vmatpush.xpose.msra.mxu0 0.0
    %5554 = vmatpush.xpose.msra.mxu0 0.0
    %5555 = vmatpush.xpose.msra.mxu0 0.0
    %5556 = vmatpush.xpose.msra.mxu0 0.0
    %5557 = vmatpush.xpose.msra.mxu0 0.0
    %5558 = vmatpush.xpose.msra.mxu0 0.0
    %5559 = vmatpush.xpose.msra.mxu0 0.0
    %5560 = vmatpush.xpose.msra.mxu0 0.0
    %5561 = vmatpush.xpose.msra.mxu0 0.0
    %5562 = vmatpush.xpose.msra.mxu0 0.0
    %5563 = vmatpush.xpose.msra.mxu0 0.0
    %5564 = vmatpush.xpose.msra.mxu0 %v5547
    %5565 = vmatmul.f32.gmra.mxu0 %v5545
    %v5566 = vpop.f32.mrf.mxu0
    %v5567 = vadd.f32 %v4181, %v5566
    %5568 = vdwg.mxu0
    %5570 = vrot.lane.b32.xlu0 %v5486, 120
    %v5571 = vpop.permute.xlu0 %5570
    %v5572 = vsel %vm358, %v5486, 0
    %v5574 = vsel %vm358, %v5571, 0
    %5576 = vmatpush.xpose.msra.mxu0 0.0
    %5577 = vmatpush.xpose.msra.mxu0 0.0
    %5578 = vmatpush.xpose.msra.mxu0 0.0
    %5579 = vmatpush.xpose.msra.mxu0 0.0
    %5580 = vmatpush.xpose.msra.mxu0 0.0
    %5581 = vmatpush.xpose.msra.mxu0 0.0
    %5582 = vmatpush.xpose.msra.mxu0 0.0
    %5583 = vmatpush.xpose.msra.mxu0 0.0
    %5584 = vmatpush.xpose.msra.mxu0 0.0
    %5585 = vmatpush.xpose.msra.mxu0 0.0
    %5586 = vmatpush.xpose.msra.mxu0 0.0
    %5587 = vmatpush.xpose.msra.mxu0 0.0
    %5588 = vmatpush.xpose.msra.mxu0 0.0
    %5589 = vmatpush.xpose.msra.mxu0 0.0
    %5590 = vmatpush.xpose.msra.mxu0 0.0
    %5591 = vmatpush.xpose.msra.mxu0 %v5574
    %5592 = vmatmul.f32.gmra.mxu0 %v5572
    %v5593 = vpop.f32.mrf.mxu0
    %v5594 = vadd.f32 %v4181, %v5593
    %5595 = vdwg.mxu0
    %v5596 = vsel %vm358, %v5513, -inf
    %5597 = vmax.xlane.f32.xlu0 %v5596
    %v5598 = vpop.xlane.xlu0 %5597
    %v5599 = vsel %vm358, %v5540, -inf
    %5600 = vmax.xlane.f32.xlu0 %v5599
    %v5601 = vpop.xlane.xlu0 %5600
    %v5602 = vsel %vm358, %v5567, -inf
    %5603 = vmax.xlane.f32.xlu0 %v5602
    %v5604 = vpop.xlane.xlu0 %5603
    %v5605 = vsel %vm358, %v5594, -inf
    %5606 = vmax.xlane.f32.xlu0 %v5605
    %v5607 = vpop.xlane.xlu0 %5606
    %v5608 = vsub.f32 %v5513, %v5598
    %v5609 = vsub.f32 %v5540, %v5601
    %v5610 = vsub.f32 %v5567, %v5604
    %v5611 = vsub.f32 %v5594, %v5607
    %v5612 = vmul.f32 %v5608, 1.442695
    %v5613 = vpow.pop %v5612
    %v5614 = vmul.f32 %v5609, 1.442695
    %v5615 = vpow.pop %v5614
    %v5616 = vmul.f32 %v5610, 1.442695
    %v5617 = vpow.pop %v5616
    %v5618 = vmul.f32 %v5611, 1.442695
    %v5619 = vpow.pop %v5618
    %v5620 = vsel %vm358, %v5613, 0.0
    %5621 = vadd.xlane.f32.xlu0 %v5620
    %v5622 = vpop.xlane.xlu0 %5621
    %v5623 = vsel %vm358, %v5615, 0.0
    %5624 = vadd.xlane.f32.xlu0 %v5623
    %v5625 = vpop.xlane.xlu0 %5624
    %v5626 = vsel %vm358, %v5617, 0.0
    %5627 = vadd.xlane.f32.xlu0 %v5626
    %v5628 = vpop.xlane.xlu0 %5627
    %v5629 = vsel %vm358, %v5619, 0.0
    %5630 = vadd.xlane.f32.xlu0 %v5629
    %v5631 = vpop.xlane.xlu0 %5630
    %v5632 = vrcp.pop %v5622
    %v5633 = vrcp.pop %v5625
    %v5634 = vrcp.pop %v5628
    %v5635 = vrcp.pop %v5631
    %v5636 = vmul.f32 %v5613, %v5632
    %v5637 = vmul.f32 %v5615, %v5633
    %v5638 = vmul.f32 %v5617, %v5634
    %v5639 = vmul.f32 %v5619, %v5635
    %5640 = vrot.lane.b32.xlu0 %v5426, 112
    %v5641 = vpop.permute.xlu0 %5640
    %v5644 = vsel %vm358, %v5636, 0
    %5646 = vmatpush.msra.mxu0 0.0
    %5647 = vmatpush.msra.mxu0 0.0
    %5648 = vmatpush.msra.mxu0 0.0
    %5649 = vmatpush.msra.mxu0 0.0
    %5650 = vmatpush.msra.mxu0 0.0
    %5651 = vmatpush.msra.mxu0 0.0
    %5652 = vmatpush.msra.mxu0 0.0
    %5653 = vmatpush.msra.mxu0 0.0
    %5654 = vmatpush.msra.mxu0 0.0
    %5655 = vmatpush.msra.mxu0 0.0
    %5656 = vmatpush.msra.mxu0 0.0
    %5657 = vmatpush.msra.mxu0 0.0
    %5658 = vmatpush.msra.mxu0 0.0
    %5659 = vmatpush.msra.mxu0 0.0
    %5660 = vmatpush.msra.mxu0 0.0
    %5661 = vmatpush.msra.mxu0 %v5641
    %5662 = vmatmul.f32.gmra.mxu0 %v5644
    %v5663 = vpop.f32.mrf.mxu0
    %v5664 = vadd.f32 0.0, %v5663
    %5665 = vdwg.mxu0
    %5666 = vrot.lane.b32.xlu0 %v5446, 112
    %v5667 = vpop.permute.xlu0 %5666
    %v5670 = vsel %vm358, %v5637, 0
    %5672 = vmatpush.msra.mxu0 0.0
    %5673 = vmatpush.msra.mxu0 0.0
    %5674 = vmatpush.msra.mxu0 0.0
    %5675 = vmatpush.msra.mxu0 0.0
    %5676 = vmatpush.msra.mxu0 0.0
    %5677 = vmatpush.msra.mxu0 0.0
    %5678 = vmatpush.msra.mxu0 0.0
    %5679 = vmatpush.msra.mxu0 0.0
    %5680 = vmatpush.msra.mxu0 0.0
    %5681 = vmatpush.msra.mxu0 0.0
    %5682 = vmatpush.msra.mxu0 0.0
    %5683 = vmatpush.msra.mxu0 0.0
    %5684 = vmatpush.msra.mxu0 0.0
    %5685 = vmatpush.msra.mxu0 0.0
    %5686 = vmatpush.msra.mxu0 0.0
    %5687 = vmatpush.msra.mxu0 %v5667
    %5688 = vmatmul.f32.gmra.mxu0 %v5670
    %v5689 = vpop.f32.mrf.mxu0
    %v5690 = vadd.f32 0.0, %v5689
    %5691 = vdwg.mxu0
    %5692 = vrot.lane.b32.xlu0 %v5466, 112
    %v5693 = vpop.permute.xlu0 %5692
    %v5696 = vsel %vm358, %v5638, 0
    %5698 = vmatpush.msra.mxu0 0.0
    %5699 = vmatpush.msra.mxu0 0.0
    %5700 = vmatpush.msra.mxu0 0.0
    %5701 = vmatpush.msra.mxu0 0.0
    %5702 = vmatpush.msra.mxu0 0.0
    %5703 = vmatpush.msra.mxu0 0.0
    %5704 = vmatpush.msra.mxu0 0.0
    %5705 = vmatpush.msra.mxu0 0.0
    %5706 = vmatpush.msra.mxu0 0.0
    %5707 = vmatpush.msra.mxu0 0.0
    %5708 = vmatpush.msra.mxu0 0.0
    %5709 = vmatpush.msra.mxu0 0.0
    %5710 = vmatpush.msra.mxu0 0.0
    %5711 = vmatpush.msra.mxu0 0.0
    %5712 = vmatpush.msra.mxu0 0.0
    %5713 = vmatpush.msra.mxu0 %v5693
    %5714 = vmatmul.f32.gmra.mxu0 %v5696
    %v5715 = vpop.f32.mrf.mxu0
    %v5716 = vadd.f32 0.0, %v5715
    %5717 = vdwg.mxu0
    %5718 = vrot.lane.b32.xlu0 %v5486, 112
    %v5719 = vpop.permute.xlu0 %5718
    %v5722 = vsel %vm358, %v5639, 0
    %5724 = vmatpush.msra.mxu0 0.0
    %5725 = vmatpush.msra.mxu0 0.0
    %5726 = vmatpush.msra.mxu0 0.0
    %5727 = vmatpush.msra.mxu0 0.0
    %5728 = vmatpush.msra.mxu0 0.0
    %5729 = vmatpush.msra.mxu0 0.0
    %5730 = vmatpush.msra.mxu0 0.0
    %5731 = vmatpush.msra.mxu0 0.0
    %5732 = vmatpush.msra.mxu0 0.0
    %5733 = vmatpush.msra.mxu0 0.0
    %5734 = vmatpush.msra.mxu0 0.0
    %5735 = vmatpush.msra.mxu0 0.0
    %5736 = vmatpush.msra.mxu0 0.0
    %5737 = vmatpush.msra.mxu0 0.0
    %5738 = vmatpush.msra.mxu0 0.0
    %5739 = vmatpush.msra.mxu0 %v5719
    %5740 = vmatmul.f32.gmra.mxu0 %v5722
    %v5741 = vpop.f32.mrf.mxu0
    %v5742 = vadd.f32 0.0, %v5741
    %5743 = vdwg.mxu0
    %v5745 = vsel %vm358, %v5664, 0
    %5747 = vmatpush.msra.mxu0 0.0
    %5748 = vmatpush.msra.mxu0 0.0
    %5749 = vmatpush.msra.mxu0 0.0
    %5750 = vmatpush.msra.mxu0 0.0
    %5751 = vmatpush.msra.mxu0 0.0
    %5752 = vmatpush.msra.mxu0 0.0
    %5753 = vmatpush.msra.mxu0 0.0
    %5754 = vmatpush.msra.mxu0 0.0
    %5755 = vmatpush.msra.mxu0 0.0
    %5756 = vmatpush.msra.mxu0 0.0
    %5757 = vmatpush.msra.mxu0 0.0
    %5758 = vmatpush.msra.mxu0 0.0
    %5759 = vmatpush.msra.mxu0 0.0
    %5760 = vmatpush.msra.mxu0 0.0
    %5761 = vmatpush.msra.mxu0 0.0
    %5762 = vmatpush.msra.mxu0 %v1962
    %5763 = vmatmul.f32.gmra.mxu0 %v5745
    %v5764 = vpop.f32.mrf.mxu0
    %v5765 = vadd.f32 0.0, %v5764
    %5766 = vdwg.mxu0
    %v5768 = vsel %vm358, %v5690, 0
    %5770 = vmatpush.msra.mxu0 0.0
    %5771 = vmatpush.msra.mxu0 0.0
    %5772 = vmatpush.msra.mxu0 0.0
    %5773 = vmatpush.msra.mxu0 0.0
    %5774 = vmatpush.msra.mxu0 0.0
    %5775 = vmatpush.msra.mxu0 0.0
    %5776 = vmatpush.msra.mxu0 0.0
    %5777 = vmatpush.msra.mxu0 0.0
    %5778 = vmatpush.msra.mxu0 0.0
    %5779 = vmatpush.msra.mxu0 0.0
    %5780 = vmatpush.msra.mxu0 0.0
    %5781 = vmatpush.msra.mxu0 0.0
    %5782 = vmatpush.msra.mxu0 0.0
    %5783 = vmatpush.msra.mxu0 0.0
    %5784 = vmatpush.msra.mxu0 0.0
    %5785 = vmatpush.msra.mxu0 %v1963
    %5786 = vmatmul.f32.gmra.mxu0 %v5768
    %v5787 = vpop.f32.mrf.mxu0
    %v5788 = vadd.f32 0.0, %v5787
    %5789 = vdwg.mxu0
    %v5791 = vsel %vm358, %v5716, 0
    %5793 = vmatpush.msra.mxu0 0.0
    %5794 = vmatpush.msra.mxu0 0.0
    %5795 = vmatpush.msra.mxu0 0.0
    %5796 = vmatpush.msra.mxu0 0.0
    %5797 = vmatpush.msra.mxu0 0.0
    %5798 = vmatpush.msra.mxu0 0.0
    %5799 = vmatpush.msra.mxu0 0.0
    %5800 = vmatpush.msra.mxu0 0.0
    %5801 = vmatpush.msra.mxu0 0.0
    %5802 = vmatpush.msra.mxu0 0.0
    %5803 = vmatpush.msra.mxu0 0.0
    %5804 = vmatpush.msra.mxu0 0.0
    %5805 = vmatpush.msra.mxu0 0.0
    %5806 = vmatpush.msra.mxu0 0.0
    %5807 = vmatpush.msra.mxu0 0.0
    %5808 = vmatpush.msra.mxu0 %v1964
    %5809 = vmatmul.f32.gmra.mxu0 %v5791
    %v5810 = vpop.f32.mrf.mxu0
    %v5811 = vadd.f32 0.0, %v5810
    %5812 = vdwg.mxu0
    %v5814 = vsel %vm358, %v5742, 0
    %5816 = vmatpush.msra.mxu0 0.0
    %5817 = vmatpush.msra.mxu0 0.0
    %5818 = vmatpush.msra.mxu0 0.0
    %5819 = vmatpush.msra.mxu0 0.0
    %5820 = vmatpush.msra.mxu0 0.0
    %5821 = vmatpush.msra.mxu0 0.0
    %5822 = vmatpush.msra.mxu0 0.0
    %5823 = vmatpush.msra.mxu0 0.0
    %5824 = vmatpush.msra.mxu0 0.0
    %5825 = vmatpush.msra.mxu0 0.0
    %5826 = vmatpush.msra.mxu0 0.0
    %5827 = vmatpush.msra.mxu0 0.0
    %5828 = vmatpush.msra.mxu0 0.0
    %5829 = vmatpush.msra.mxu0 0.0
    %5830 = vmatpush.msra.mxu0 0.0
    %5831 = vmatpush.msra.mxu0 %v1965
    %5832 = vmatmul.f32.gmra.mxu0 %v5814
    %v5833 = vpop.f32.mrf.mxu0
    %v5834 = vadd.f32 0.0, %v5833
    %5835 = vdwg.mxu0
    %v5836 = vsel %vm176, %v5765, 0.0
    %v5837 = vsel %vm176, %v5788, 0.0
    %v5838 = vadd.f32 %v5836, %v5837
    %v5839 = vsel %vm176, %v5811, 0.0
    %v5840 = vadd.f32 %v5838, %v5839
    %v5841 = vsel %vm176, %v5834, 0.0
    %v5842 = vadd.f32 %v5840, %v5841
    %v5843 = vadd.f32 %v5842, %v2067
    %v5844 = vadd.f32 %v5364, %v5843
    %v5845 = vsel %vm176, %v5844, 0.0
    %5846 = vadd.xlane.f32.xlu0 %v5845
    %v5847 = vpop.xlane.xlu0 %5846
    %v5848 = vmul.f32 %v5847, %v186
    %v5849 = vsub.f32 %v5844, %v5848
    %v5850 = vmul.f32 %v5849, %v5849
    %v5851 = vsel %vm176, %v5850, 0.0
    %5852 = vadd.xlane.f32.xlu0 %v5851
    %v5853 = vpop.xlane.xlu0 %5852
    %v5854 = vmul.f32 %v5853, %v199
    %v5855 = vmul.f32 %v2084, %v5849
    %v5856 = vrsqrt.pop %v5854
    %v5857 = vmul.f32 %v5856, %v5854
    %v5858 = vmul.f32 %v5857, %v5856
    %v5859 = vmul.f32 0.5, %v5858
    %v5860 = vsub.f32 1.5, %v5859
    %v5861 = vmul.f32 %v5856, %v5860
    %v5862 = vmul.f32 %v5854, %v5861
    %vm5863 = vcmp.eq.f32.partialorder %v5854, inf
    %v5864 = vsel %vm5863, %v5854, %v5862
    %vm5865 = vcmp.eq.f32.partialorder %v5854, 0.0
    %v5866 = vand.u32 %v5854, 2147483648
    %v5867 = vsel %vm5865, %v5866, %v5864
    %v5868 = vadd.f32 %v5867, 1e-06
    %v5869 = vrcp.pop %v5868
    %v5870 = vmul.f32 %v5868, %v5869
    %v5871 = vsub.f32 1.0, %v5870
    %v5872 = vmul.f32 %v5869, %v5871
    %v5873 = vadd.f32 %v5869, %v5872
    %vm5874 = vweird.f32 %v5868
    %vm5875 = vweird.f32 %v5869
    %vm5876 = vmor %vm5874, %vm5875
    %v5877 = vsel %vm5876, %v5869, %v5873
    %v5878 = vand.u32 2147483647, %v5868
    %vm5879 = vcmp.eq.f32.partialorder %v5878, 8.507059e+37
    %v5880 = vand.u32 %v5868, 2147483648
    %v5881 = vor.u32 1.1754944e-38, %v5880
    %v5882 = vsel %vm5879, %v5881, %v5877
    %v5883 = vmul.f32 %v5855, %v5882
    %v5884 = vadd.f32 %v5883, %v2116
    %v5886 = vsel %vm176, %v5884, 0
    %5888 = vmatpush.msra.mxu0 0.0
    %5889 = vmatpush.msra.mxu0 0.0
    %5890 = vmatpush.msra.mxu0 0.0
    %5891 = vmatpush.msra.mxu0 0.0
    %5892 = vmatpush.msra.mxu0 0.0
    %5893 = vmatpush.msra.mxu0 0.0
    %5894 = vmatpush.msra.mxu0 0.0
    %5895 = vmatpush.msra.mxu0 0.0
    %5896 = vmatpush.msra.mxu0 0.0
    %5897 = vmatpush.msra.mxu0 0.0
    %5898 = vmatpush.msra.mxu0 0.0
    %5899 = vmatpush.msra.mxu0 0.0
    %5900 = vmatpush.msra.mxu0 %v2122
    %5901 = vmatpush.msra.mxu0 %v2121
    %5902 = vmatpush.msra.mxu0 %v2120
    %5903 = vmatpush.msra.mxu0 %v2119
    %5904 = vmatmul.f32.gmra.mxu0 %v5886
    %v5905 = vpop.f32.mrf.mxu0
    %v5906 = vadd.f32 %v2143, %v5905
    %5907 = vdwg.mxu0
    %5908 = vmatpush.msra.mxu0 0.0
    %5909 = vmatpush.msra.mxu0 0.0
    %5910 = vmatpush.msra.mxu0 0.0
    %5911 = vmatpush.msra.mxu0 0.0
    %5912 = vmatpush.msra.mxu0 0.0
    %5913 = vmatpush.msra.mxu0 0.0
    %5914 = vmatpush.msra.mxu0 0.0
    %5915 = vmatpush.msra.mxu0 0.0
    %5916 = vmatpush.msra.mxu0 0.0
    %5917 = vmatpush.msra.mxu0 0.0
    %5918 = vmatpush.msra.mxu0 0.0
    %5919 = vmatpush.msra.mxu0 0.0
    %5920 = vmatpush.msra.mxu0 %v2126
    %5921 = vmatpush.msra.mxu0 %v2125
    %5922 = vmatpush.msra.mxu0 %v2124
    %5923 = vmatpush.msra.mxu0 %v2123
    %5924 = vmatmul.f32.gmra.mxu0 %v5886
    %v5925 = vpop.f32.mrf.mxu0
    %v5926 = vadd.f32 %v2144, %v5925
    %5927 = vdwg.mxu0
    %5928 = vmatpush.msra.mxu0 0.0
    %5929 = vmatpush.msra.mxu0 0.0
    %5930 = vmatpush.msra.mxu0 0.0
    %5931 = vmatpush.msra.mxu0 0.0
    %5932 = vmatpush.msra.mxu0 0.0
    %5933 = vmatpush.msra.mxu0 0.0
    %5934 = vmatpush.msra.mxu0 0.0
    %5935 = vmatpush.msra.mxu0 0.0
    %5936 = vmatpush.msra.mxu0 0.0
    %5937 = vmatpush.msra.mxu0 0.0
    %5938 = vmatpush.msra.mxu0 0.0
    %5939 = vmatpush.msra.mxu0 0.0
    %5940 = vmatpush.msra.mxu0 %v2130
    %5941 = vmatpush.msra.mxu0 %v2129
    %5942 = vmatpush.msra.mxu0 %v2128
    %5943 = vmatpush.msra.mxu0 %v2127
    %5944 = vmatmul.f32.gmra.mxu0 %v5886
    %v5945 = vpop.f32.mrf.mxu0
    %v5946 = vadd.f32 %v2145, %v5945
    %5947 = vdwg.mxu0
    %5948 = vmatpush.msra.mxu0 0.0
    %5949 = vmatpush.msra.mxu0 0.0
    %5950 = vmatpush.msra.mxu0 0.0
    %5951 = vmatpush.msra.mxu0 0.0
    %5952 = vmatpush.msra.mxu0 0.0
    %5953 = vmatpush.msra.mxu0 0.0
    %5954 = vmatpush.msra.mxu0 0.0
    %5955 = vmatpush.msra.mxu0 0.0
    %5956 = vmatpush.msra.mxu0 0.0
    %5957 = vmatpush.msra.mxu0 0.0
    %5958 = vmatpush.msra.mxu0 0.0
    %5959 = vmatpush.msra.mxu0 0.0
    %5960 = vmatpush.msra.mxu0 %v2134
    %5961 = vmatpush.msra.mxu0 %v2133
    %5962 = vmatpush.msra.mxu0 %v2132
    %5963 = vmatpush.msra.mxu0 %v2131
    %5964 = vmatmul.f32.gmra.mxu0 %v5886
    %v5965 = vpop.f32.mrf.mxu0
    %v5966 = vadd.f32 %v2146, %v5965
    %5967 = vdwg.mxu0
    %v5969 = vsel %vm176, %v5362, 0
    %5971 = vmatpush.msra.mxu0 0.0
    %5972 = vmatpush.msra.mxu0 0.0
    %5973 = vmatpush.msra.mxu0 0.0
    %5974 = vmatpush.msra.mxu0 0.0
    %5975 = vmatpush.msra.mxu0 0.0
    %5976 = vmatpush.msra.mxu0 0.0
    %5977 = vmatpush.msra.mxu0 0.0
    %5978 = vmatpush.msra.mxu0 0.0
    %5979 = vmatpush.msra.mxu0 0.0
    %5980 = vmatpush.msra.mxu0 0.0
    %5981 = vmatpush.msra.mxu0 0.0
    %5982 = vmatpush.msra.mxu0 0.0
    %5983 = vmatpush.msra.mxu0 %v2237
    %5984 = vmatpush.msra.mxu0 %v2236
    %5985 = vmatpush.msra.mxu0 %v2235
    %5986 = vmatpush.msra.mxu0 %v2234
    %5987 = vmatmul.f32.gmra.mxu0 %v5969
    %v5988 = vpop.f32.mrf.mxu0
    %v5989 = vadd.f32 %v2258, %v5988
    %5990 = vdwg.mxu0
    %5991 = vmatpush.msra.mxu0 0.0
    %5992 = vmatpush.msra.mxu0 0.0
    %5993 = vmatpush.msra.mxu0 0.0
    %5994 = vmatpush.msra.mxu0 0.0
    %5995 = vmatpush.msra.mxu0 0.0
    %5996 = vmatpush.msra.mxu0 0.0
    %5997 = vmatpush.msra.mxu0 0.0
    %5998 = vmatpush.msra.mxu0 0.0
    %5999 = vmatpush.msra.mxu0 0.0
    %6000 = vmatpush.msra.mxu0 0.0
    %6001 = vmatpush.msra.mxu0 0.0
    %6002 = vmatpush.msra.mxu0 0.0
    %6003 = vmatpush.msra.mxu0 %v2241
    %6004 = vmatpush.msra.mxu0 %v2240
    %6005 = vmatpush.msra.mxu0 %v2239
    %6006 = vmatpush.msra.mxu0 %v2238
    %6007 = vmatmul.f32.gmra.mxu0 %v5969
    %v6008 = vpop.f32.mrf.mxu0
    %v6009 = vadd.f32 %v2259, %v6008
    %6010 = vdwg.mxu0
    %6011 = vmatpush.msra.mxu0 0.0
    %6012 = vmatpush.msra.mxu0 0.0
    %6013 = vmatpush.msra.mxu0 0.0
    %6014 = vmatpush.msra.mxu0 0.0
    %6015 = vmatpush.msra.mxu0 0.0
    %6016 = vmatpush.msra.mxu0 0.0
    %6017 = vmatpush.msra.mxu0 0.0
    %6018 = vmatpush.msra.mxu0 0.0
    %6019 = vmatpush.msra.mxu0 0.0
    %6020 = vmatpush.msra.mxu0 0.0
    %6021 = vmatpush.msra.mxu0 0.0
    %6022 = vmatpush.msra.mxu0 0.0
    %6023 = vmatpush.msra.mxu0 %v2245
    %6024 = vmatpush.msra.mxu0 %v2244
    %6025 = vmatpush.msra.mxu0 %v2243
    %6026 = vmatpush.msra.mxu0 %v2242
    %6027 = vmatmul.f32.gmra.mxu0 %v5969
    %v6028 = vpop.f32.mrf.mxu0
    %v6029 = vadd.f32 %v2260, %v6028
    %6030 = vdwg.mxu0
    %6031 = vmatpush.msra.mxu0 0.0
    %6032 = vmatpush.msra.mxu0 0.0
    %6033 = vmatpush.msra.mxu0 0.0
    %6034 = vmatpush.msra.mxu0 0.0
    %6035 = vmatpush.msra.mxu0 0.0
    %6036 = vmatpush.msra.mxu0 0.0
    %6037 = vmatpush.msra.mxu0 0.0
    %6038 = vmatpush.msra.mxu0 0.0
    %6039 = vmatpush.msra.mxu0 0.0
    %6040 = vmatpush.msra.mxu0 0.0
    %6041 = vmatpush.msra.mxu0 0.0
    %6042 = vmatpush.msra.mxu0 0.0
    %6043 = vmatpush.msra.mxu0 %v2249
    %6044 = vmatpush.msra.mxu0 %v2248
    %6045 = vmatpush.msra.mxu0 %v2247
    %6046 = vmatpush.msra.mxu0 %v2246
    %6047 = vmatmul.f32.gmra.mxu0 %v5969
    %v6048 = vpop.f32.mrf.mxu0
    %v6049 = vadd.f32 %v2261, %v6048
    %6050 = vdwg.mxu0
    %v6052 = vsel %vm358, %v5906, 0
    %v6055 = vsel %vm358, %v5989, 0
    %6057 = vmatpush.xpose.msra.mxu0 0.0
    %6058 = vmatpush.xpose.msra.mxu0 0.0
    %6059 = vmatpush.xpose.msra.mxu0 0.0
    %6060 = vmatpush.xpose.msra.mxu0 0.0
    %6061 = vmatpush.xpose.msra.mxu0 0.0
    %6062 = vmatpush.xpose.msra.mxu0 0.0
    %6063 = vmatpush.xpose.msra.mxu0 0.0
    %6064 = vmatpush.xpose.msra.mxu0 0.0
    %6065 = vmatpush.xpose.msra.mxu0 0.0
    %6066 = vmatpush.xpose.msra.mxu0 0.0
    %6067 = vmatpush.xpose.msra.mxu0 0.0
    %6068 = vmatpush.xpose.msra.mxu0 0.0
    %6069 = vmatpush.xpose.msra.mxu0 0.0
    %6070 = vmatpush.xpose.msra.mxu0 0.0
    %6071 = vmatpush.xpose.msra.mxu0 0.0
    %6072 = vmatpush.xpose.msra.mxu0 %v6055
    %6073 = vmatmul.f32.gmra.mxu0 %v6052
    %v6074 = vpop.f32.mrf.mxu0
    %v6075 = vadd.f32 %v4308, %v6074
    %6076 = vdwg.mxu0
    %v6078 = vsel %vm358, %v5926, 0
    %v6081 = vsel %vm358, %v6009, 0
    %6083 = vmatpush.xpose.msra.mxu0 0.0
    %6084 = vmatpush.xpose.msra.mxu0 0.0
    %6085 = vmatpush.xpose.msra.mxu0 0.0
    %6086 = vmatpush.xpose.msra.mxu0 0.0
    %6087 = vmatpush.xpose.msra.mxu0 0.0
    %6088 = vmatpush.xpose.msra.mxu0 0.0
    %6089 = vmatpush.xpose.msra.mxu0 0.0
    %6090 = vmatpush.xpose.msra.mxu0 0.0
    %6091 = vmatpush.xpose.msra.mxu0 0.0
    %6092 = vmatpush.xpose.msra.mxu0 0.0
    %6093 = vmatpush.xpose.msra.mxu0 0.0
    %6094 = vmatpush.xpose.msra.mxu0 0.0
    %6095 = vmatpush.xpose.msra.mxu0 0.0
    %6096 = vmatpush.xpose.msra.mxu0 0.0
    %6097 = vmatpush.xpose.msra.mxu0 0.0
    %6098 = vmatpush.xpose.msra.mxu0 %v6081
    %6099 = vmatmul.f32.gmra.mxu0 %v6078
    %v6100 = vpop.f32.mrf.mxu0
    %v6101 = vadd.f32 %v4308, %v6100
    %6102 = vdwg.mxu0
    %v6104 = vsel %vm358, %v5946, 0
    %v6107 = vsel %vm358, %v6029, 0
    %6109 = vmatpush.xpose.msra.mxu0 0.0
    %6110 = vmatpush.xpose.msra.mxu0 0.0
    %6111 = vmatpush.xpose.msra.mxu0 0.0
    %6112 = vmatpush.xpose.msra.mxu0 0.0
    %6113 = vmatpush.xpose.msra.mxu0 0.0
    %6114 = vmatpush.xpose.msra.mxu0 0.0
    %6115 = vmatpush.xpose.msra.mxu0 0.0
    %6116 = vmatpush.xpose.msra.mxu0 0.0
    %6117 = vmatpush.xpose.msra.mxu0 0.0
    %6118 = vmatpush.xpose.msra.mxu0 0.0
    %6119 = vmatpush.xpose.msra.mxu0 0.0
    %6120 = vmatpush.xpose.msra.mxu0 0.0
    %6121 = vmatpush.xpose.msra.mxu0 0.0
    %6122 = vmatpush.xpose.msra.mxu0 0.0
    %6123 = vmatpush.xpose.msra.mxu0 0.0
    %6124 = vmatpush.xpose.msra.mxu0 %v6107
    %6125 = vmatmul.f32.gmra.mxu0 %v6104
    %v6126 = vpop.f32.mrf.mxu0
    %v6127 = vadd.f32 %v4308, %v6126
    %6128 = vdwg.mxu0
    %v6130 = vsel %vm358, %v5966, 0
    %v6133 = vsel %vm358, %v6049, 0
    %6135 = vmatpush.xpose.msra.mxu0 0.0
    %6136 = vmatpush.xpose.msra.mxu0 0.0
    %6137 = vmatpush.xpose.msra.mxu0 0.0
    %6138 = vmatpush.xpose.msra.mxu0 0.0
    %6139 = vmatpush.xpose.msra.mxu0 0.0
    %6140 = vmatpush.xpose.msra.mxu0 0.0
    %6141 = vmatpush.xpose.msra.mxu0 0.0
    %6142 = vmatpush.xpose.msra.mxu0 0.0
    %6143 = vmatpush.xpose.msra.mxu0 0.0
    %6144 = vmatpush.xpose.msra.mxu0 0.0
    %6145 = vmatpush.xpose.msra.mxu0 0.0
    %6146 = vmatpush.xpose.msra.mxu0 0.0
    %6147 = vmatpush.xpose.msra.mxu0 0.0
    %6148 = vmatpush.xpose.msra.mxu0 0.0
    %6149 = vmatpush.xpose.msra.mxu0 0.0
    %6150 = vmatpush.xpose.msra.mxu0 %v6133
    %6151 = vmatmul.f32.gmra.mxu0 %v6130
    %v6152 = vpop.f32.mrf.mxu0
    %v6153 = vadd.f32 %v4308, %v6152
    %6154 = vdwg.mxu0
    %v6155 = vsel %vm358, %v6075, -inf
    %6156 = vmax.xlane.f32.xlu0 %v6155
    %v6157 = vpop.xlane.xlu0 %6156
    %v6158 = vsel %vm358, %v6101, -inf
    %6159 = vmax.xlane.f32.xlu0 %v6158
    %v6160 = vpop.xlane.xlu0 %6159
    %v6161 = vsel %vm358, %v6127, -inf
    %6162 = vmax.xlane.f32.xlu0 %v6161
    %v6163 = vpop.xlane.xlu0 %6162
    %v6164 = vsel %vm358, %v6153, -inf
    %6165 = vmax.xlane.f32.xlu0 %v6164
    %v6166 = vpop.xlane.xlu0 %6165
    %v6167 = vsub.f32 %v6075, %v6157
    %v6168 = vsub.f32 %v6101, %v6160
    %v6169 = vsub.f32 %v6127, %v6163
    %v6170 = vsub.f32 %v6153, %v6166
    %v6171 = vmul.f32 %v6167, 1.442695
    %v6172 = vpow.pop %v6171
    %v6173 = vmul.f32 %v6168, 1.442695
    %v6174 = vpow.pop %v6173
    %v6175 = vmul.f32 %v6169, 1.442695
    %v6176 = vpow.pop %v6175
    %v6177 = vmul.f32 %v6170, 1.442695
    %v6178 = vpow.pop %v6177
    %v6179 = vsel %vm358, %v6172, 0.0
    %6180 = vadd.xlane.f32.xlu0 %v6179
    %v6181 = vpop.xlane.xlu0 %6180
    %v6182 = vsel %vm358, %v6174, 0.0
    %6183 = vadd.xlane.f32.xlu0 %v6182
    %v6184 = vpop.xlane.xlu0 %6183
    %v6185 = vsel %vm358, %v6176, 0.0
    %6186 = vadd.xlane.f32.xlu0 %v6185
    %v6187 = vpop.xlane.xlu0 %6186
    %v6188 = vsel %vm358, %v6178, 0.0
    %6189 = vadd.xlane.f32.xlu0 %v6188
    %v6190 = vpop.xlane.xlu0 %6189
    %v6191 = vrcp.pop %v6181
    %v6192 = vrcp.pop %v6184
    %v6193 = vrcp.pop %v6187
    %v6194 = vrcp.pop %v6190
    %v6195 = vmul.f32 %v6172, %v6191
    %v6196 = vmul.f32 %v6174, %v6192
    %v6197 = vmul.f32 %v6176, %v6193
    %v6198 = vmul.f32 %v6178, %v6194
    %6199 = vrot.lane.b32.xlu0 %v5989, 120
    %v6200 = vpop.permute.xlu0 %6199
    %v6203 = vsel %vm358, %v6195, 0
    %6205 = vmatpush.msra.mxu0 0.0
    %6206 = vmatpush.msra.mxu0 0.0
    %6207 = vmatpush.msra.mxu0 0.0
    %6208 = vmatpush.msra.mxu0 0.0
    %6209 = vmatpush.msra.mxu0 0.0
    %6210 = vmatpush.msra.mxu0 0.0
    %6211 = vmatpush.msra.mxu0 0.0
    %6212 = vmatpush.msra.mxu0 0.0
    %6213 = vmatpush.msra.mxu0 0.0
    %6214 = vmatpush.msra.mxu0 0.0
    %6215 = vmatpush.msra.mxu0 0.0
    %6216 = vmatpush.msra.mxu0 0.0
    %6217 = vmatpush.msra.mxu0 0.0
    %6218 = vmatpush.msra.mxu0 0.0
    %6219 = vmatpush.msra.mxu0 0.0
    %6220 = vmatpush.msra.mxu0 %v6200
    %6221 = vmatmul.f32.gmra.mxu0 %v6203
    %v6222 = vpop.f32.mrf.mxu0
    %v6223 = vadd.f32 0.0, %v6222
    %6224 = vdwg.mxu0
    %6225 = vrot.lane.b32.xlu0 %v6009, 120
    %v6226 = vpop.permute.xlu0 %6225
    %v6229 = vsel %vm358, %v6196, 0
    %6231 = vmatpush.msra.mxu0 0.0
    %6232 = vmatpush.msra.mxu0 0.0
    %6233 = vmatpush.msra.mxu0 0.0
    %6234 = vmatpush.msra.mxu0 0.0
    %6235 = vmatpush.msra.mxu0 0.0
    %6236 = vmatpush.msra.mxu0 0.0
    %6237 = vmatpush.msra.mxu0 0.0
    %6238 = vmatpush.msra.mxu0 0.0
    %6239 = vmatpush.msra.mxu0 0.0
    %6240 = vmatpush.msra.mxu0 0.0
    %6241 = vmatpush.msra.mxu0 0.0
    %6242 = vmatpush.msra.mxu0 0.0
    %6243 = vmatpush.msra.mxu0 0.0
    %6244 = vmatpush.msra.mxu0 0.0
    %6245 = vmatpush.msra.mxu0 0.0
    %6246 = vmatpush.msra.mxu0 %v6226
    %6247 = vmatmul.f32.gmra.mxu0 %v6229
    %v6248 = vpop.f32.mrf.mxu0
    %v6249 = vadd.f32 0.0, %v6248
    %6250 = vdwg.mxu0
    %6251 = vrot.lane.b32.xlu0 %v6029, 120
    %v6252 = vpop.permute.xlu0 %6251
    %v6255 = vsel %vm358, %v6197, 0
    %6257 = vmatpush.msra.mxu0 0.0
    %6258 = vmatpush.msra.mxu0 0.0
    %6259 = vmatpush.msra.mxu0 0.0
    %6260 = vmatpush.msra.mxu0 0.0
    %6261 = vmatpush.msra.mxu0 0.0
    %6262 = vmatpush.msra.mxu0 0.0
    %6263 = vmatpush.msra.mxu0 0.0
    %6264 = vmatpush.msra.mxu0 0.0
    %6265 = vmatpush.msra.mxu0 0.0
    %6266 = vmatpush.msra.mxu0 0.0
    %6267 = vmatpush.msra.mxu0 0.0
    %6268 = vmatpush.msra.mxu0 0.0
    %6269 = vmatpush.msra.mxu0 0.0
    %6270 = vmatpush.msra.mxu0 0.0
    %6271 = vmatpush.msra.mxu0 0.0
    %6272 = vmatpush.msra.mxu0 %v6252
    %6273 = vmatmul.f32.gmra.mxu0 %v6255
    %v6274 = vpop.f32.mrf.mxu0
    %v6275 = vadd.f32 0.0, %v6274
    %6276 = vdwg.mxu0
    %6277 = vrot.lane.b32.xlu0 %v6049, 120
    %v6278 = vpop.permute.xlu0 %6277
    %v6281 = vsel %vm358, %v6198, 0
    %6283 = vmatpush.msra.mxu0 0.0
    %6284 = vmatpush.msra.mxu0 0.0
    %6285 = vmatpush.msra.mxu0 0.0
    %6286 = vmatpush.msra.mxu0 0.0
    %6287 = vmatpush.msra.mxu0 0.0
    %6288 = vmatpush.msra.mxu0 0.0
    %6289 = vmatpush.msra.mxu0 0.0
    %6290 = vmatpush.msra.mxu0 0.0
    %6291 = vmatpush.msra.mxu0 0.0
    %6292 = vmatpush.msra.mxu0 0.0
    %6293 = vmatpush.msra.mxu0 0.0
    %6294 = vmatpush.msra.mxu0 0.0
    %6295 = vmatpush.msra.mxu0 0.0
    %6296 = vmatpush.msra.mxu0 0.0
    %6297 = vmatpush.msra.mxu0 0.0
    %6298 = vmatpush.msra.mxu0 %v6278
    %6299 = vmatmul.f32.gmra.mxu0 %v6281
    %v6300 = vpop.f32.mrf.mxu0
    %v6301 = vadd.f32 0.0, %v6300
    %6302 = vdwg.mxu0
    %v6304 = vsel %vm358, %v6223, 0
    %6306 = vmatpush.msra.mxu0 0.0
    %6307 = vmatpush.msra.mxu0 0.0
    %6308 = vmatpush.msra.mxu0 0.0
    %6309 = vmatpush.msra.mxu0 0.0
    %6310 = vmatpush.msra.mxu0 0.0
    %6311 = vmatpush.msra.mxu0 0.0
    %6312 = vmatpush.msra.mxu0 0.0
    %6313 = vmatpush.msra.mxu0 0.0
    %6314 = vmatpush.msra.mxu0 0.0
    %6315 = vmatpush.msra.mxu0 0.0
    %6316 = vmatpush.msra.mxu0 0.0
    %6317 = vmatpush.msra.mxu0 0.0
    %6318 = vmatpush.msra.mxu0 0.0
    %6319 = vmatpush.msra.mxu0 0.0
    %6320 = vmatpush.msra.mxu0 0.0
    %6321 = vmatpush.msra.mxu0 %v2601
    %6322 = vmatmul.f32.gmra.mxu0 %v6304
    %v6323 = vpop.f32.mrf.mxu0
    %v6324 = vadd.f32 0.0, %v6323
    %6325 = vdwg.mxu0
    %v6327 = vsel %vm358, %v6249, 0
    %6329 = vmatpush.msra.mxu0 0.0
    %6330 = vmatpush.msra.mxu0 0.0
    %6331 = vmatpush.msra.mxu0 0.0
    %6332 = vmatpush.msra.mxu0 0.0
    %6333 = vmatpush.msra.mxu0 0.0
    %6334 = vmatpush.msra.mxu0 0.0
    %6335 = vmatpush.msra.mxu0 0.0
    %6336 = vmatpush.msra.mxu0 0.0
    %6337 = vmatpush.msra.mxu0 0.0
    %6338 = vmatpush.msra.mxu0 0.0
    %6339 = vmatpush.msra.mxu0 0.0
    %6340 = vmatpush.msra.mxu0 0.0
    %6341 = vmatpush.msra.mxu0 0.0
    %6342 = vmatpush.msra.mxu0 0.0
    %6343 = vmatpush.msra.mxu0 0.0
    %6344 = vmatpush.msra.mxu0 %v2602
    %6345 = vmatmul.f32.gmra.mxu0 %v6327
    %v6346 = vpop.f32.mrf.mxu0
    %v6347 = vadd.f32 0.0, %v6346
    %6348 = vdwg.mxu0
    %v6350 = vsel %vm358, %v6275, 0
    %6352 = vmatpush.msra.mxu0 0.0
    %6353 = vmatpush.msra.mxu0 0.0
    %6354 = vmatpush.msra.mxu0 0.0
    %6355 = vmatpush.msra.mxu0 0.0
    %6356 = vmatpush.msra.mxu0 0.0
    %6357 = vmatpush.msra.mxu0 0.0
    %6358 = vmatpush.msra.mxu0 0.0
    %6359 = vmatpush.msra.mxu0 0.0
    %6360 = vmatpush.msra.mxu0 0.0
    %6361 = vmatpush.msra.mxu0 0.0
    %6362 = vmatpush.msra.mxu0 0.0
    %6363 = vmatpush.msra.mxu0 0.0
    %6364 = vmatpush.msra.mxu0 0.0
    %6365 = vmatpush.msra.mxu0 0.0
    %6366 = vmatpush.msra.mxu0 0.0
    %6367 = vmatpush.msra.mxu0 %v2603
    %6368 = vmatmul.f32.gmra.mxu0 %v6350
    %v6369 = vpop.f32.mrf.mxu0
    %v6370 = vadd.f32 0.0, %v6369
    %6371 = vdwg.mxu0
    %v6373 = vsel %vm358, %v6301, 0
    %6375 = vmatpush.msra.mxu0 0.0
    %6376 = vmatpush.msra.mxu0 0.0
    %6377 = vmatpush.msra.mxu0 0.0
    %6378 = vmatpush.msra.mxu0 0.0
    %6379 = vmatpush.msra.mxu0 0.0
    %6380 = vmatpush.msra.mxu0 0.0
    %6381 = vmatpush.msra.mxu0 0.0
    %6382 = vmatpush.msra.mxu0 0.0
    %6383 = vmatpush.msra.mxu0 0.0
    %6384 = vmatpush.msra.mxu0 0.0
    %6385 = vmatpush.msra.mxu0 0.0
    %6386 = vmatpush.msra.mxu0 0.0
    %6387 = vmatpush.msra.mxu0 0.0
    %6388 = vmatpush.msra.mxu0 0.0
    %6389 = vmatpush.msra.mxu0 0.0
    %6390 = vmatpush.msra.mxu0 %v2604
    %6391 = vmatmul.f32.gmra.mxu0 %v6373
    %v6392 = vpop.f32.mrf.mxu0
    %v6393 = vadd.f32 0.0, %v6392
    %6394 = vdwg.mxu0
    %v6395 = vsel %vm176, %v6324, 0.0
    %v6396 = vsel %vm176, %v6347, 0.0
    %v6397 = vadd.f32 %v6395, %v6396
    %v6398 = vsel %vm176, %v6370, 0.0
    %v6399 = vadd.f32 %v6397, %v6398
    %v6400 = vsel %vm176, %v6393, 0.0
    %v6401 = vadd.f32 %v6399, %v6400
    %v6402 = vadd.f32 %v6401, %v2706
    %v6403 = vadd.f32 %v5844, %v6402
    %v6404 = vsel %vm176, %v6403, 0.0
    %6405 = vadd.xlane.f32.xlu0 %v6404
    %v6406 = vpop.xlane.xlu0 %6405
    %v6407 = vmul.f32 %v6406, %v186
    %v6408 = vsub.f32 %v6403, %v6407
    %v6409 = vmul.f32 %v6408, %v6408
    %v6410 = vsel %vm176, %v6409, 0.0
    %6411 = vadd.xlane.f32.xlu0 %v6410
    %v6412 = vpop.xlane.xlu0 %6411
    %v6413 = vmul.f32 %v6412, %v199
    %v6414 = vmul.f32 %v2723, %v6408
    %v6415 = vrsqrt.pop %v6413
    %v6416 = vmul.f32 %v6415, %v6413
    %v6417 = vmul.f32 %v6416, %v6415
    %v6418 = vmul.f32 0.5, %v6417
    %v6419 = vsub.f32 1.5, %v6418
    %v6420 = vmul.f32 %v6415, %v6419
    %v6421 = vmul.f32 %v6413, %v6420
    %vm6422 = vcmp.eq.f32.partialorder %v6413, inf
    %v6423 = vsel %vm6422, %v6413, %v6421
    %vm6424 = vcmp.eq.f32.partialorder %v6413, 0.0
    %v6425 = vand.u32 %v6413, 2147483648
    %v6426 = vsel %vm6424, %v6425, %v6423
    %v6427 = vadd.f32 %v6426, 1e-06
    %v6428 = vrcp.pop %v6427
    %v6429 = vmul.f32 %v6427, %v6428
    %v6430 = vsub.f32 1.0, %v6429
    %v6431 = vmul.f32 %v6428, %v6430
    %v6432 = vadd.f32 %v6428, %v6431
    %vm6433 = vweird.f32 %v6427
    %vm6434 = vweird.f32 %v6428
    %vm6435 = vmor %vm6433, %vm6434
    %v6436 = vsel %vm6435, %v6428, %v6432
    %v6437 = vand.u32 2147483647, %v6427
    %vm6438 = vcmp.eq.f32.partialorder %v6437, 8.507059e+37
    %v6439 = vand.u32 %v6427, 2147483648
    %v6440 = vor.u32 1.1754944e-38, %v6439
    %v6441 = vsel %vm6438, %v6440, %v6436
    %v6442 = vmul.f32 %v6414, %v6441
    %v6443 = vadd.f32 %v6442, %v2755
    %v6445 = vsel %vm176, %v6443, 0
    %6447 = vmatpush.msra.mxu0 0.0
    %6448 = vmatpush.msra.mxu0 0.0
    %6449 = vmatpush.msra.mxu0 0.0
    %6450 = vmatpush.msra.mxu0 0.0
    %6451 = vmatpush.msra.mxu0 0.0
    %6452 = vmatpush.msra.mxu0 0.0
    %6453 = vmatpush.msra.mxu0 0.0
    %6454 = vmatpush.msra.mxu0 0.0
    %6455 = vmatpush.msra.mxu0 0.0
    %6456 = vmatpush.msra.mxu0 0.0
    %6457 = vmatpush.msra.mxu0 0.0
    %6458 = vmatpush.msra.mxu0 0.0
    %6459 = vmatpush.msra.mxu0 %v2761
    %6460 = vmatpush.msra.mxu0 %v2760
    %6461 = vmatpush.msra.mxu0 %v2759
    %6462 = vmatpush.msra.mxu0 %v2758
    %6463 = vmatmul.f32.gmra.mxu0 %v6445
    %v6464 = vpop.f32.mrf.mxu0
    %v6465 = vadd.f32 %v2773, %v6464
    %6466 = vdwg.mxu0
    %v6467 = vmax.f32 %v6465, 0.0
    %v6469 = vsel %vm813, %v6467, 0
    %6471 = vmatpush.msra.mxu0 0.0
    %6472 = vmatpush.msra.mxu0 0.0
    %6473 = vmatpush.msra.mxu0 0.0
    %6474 = vmatpush.msra.mxu0 0.0
    %6475 = vmatpush.msra.mxu0 0.0
    %6476 = vmatpush.msra.mxu0 0.0
    %6477 = vmatpush.msra.mxu0 0.0
    %6478 = vmatpush.msra.mxu0 0.0
    %6479 = vmatpush.msra.mxu0 %v2770
    %6480 = vmatpush.msra.mxu0 %v2769
    %6481 = vmatpush.msra.mxu0 %v2768
    %6482 = vmatpush.msra.mxu0 %v2767
    %6483 = vmatpush.msra.mxu0 %v2766
    %6484 = vmatpush.msra.mxu0 %v2765
    %6485 = vmatpush.msra.mxu0 %v2764
    %6486 = vmatpush.msra.mxu0 %v2763
    %6487 = vmatmul.f32.gmra.mxu0 %v6469
    %v6488 = vpop.f32.mrf.mxu0
    %v6489 = vadd.f32 %v2800, %v6488
    %6490 = vdwg.mxu0
    %v6491 = vadd.f32 %v6403, %v6489
    %v6492 = vsel %vm176, %v6491, 0.0
    %6493 = vadd.xlane.f32.xlu0 %v6492
    %v6494 = vpop.xlane.xlu0 %6493
    %v6495 = vmul.f32 %v6494, %v186
    %v6496 = vsub.f32 %v6491, %v6495
    %v6497 = vmul.f32 %v6496, %v6496
    %v6498 = vsel %vm176, %v6497, 0.0
    %6499 = vadd.xlane.f32.xlu0 %v6498
    %v6500 = vpop.xlane.xlu0 %6499
    %v6501 = vmul.f32 %v6500, %v199
    %v6502 = vmul.f32 %v2841, %v6496
    %v6503 = vrsqrt.pop %v6501
    %v6504 = vmul.f32 %v6503, %v6501
    %v6505 = vmul.f32 %v6504, %v6503
    %v6506 = vmul.f32 0.5, %v6505
    %v6507 = vsub.f32 1.5, %v6506
    %v6508 = vmul.f32 %v6503, %v6507
    %v6509 = vmul.f32 %v6501, %v6508
    %vm6510 = vcmp.eq.f32.partialorder %v6501, inf
    %v6511 = vsel %vm6510, %v6501, %v6509
    %vm6512 = vcmp.eq.f32.partialorder %v6501, 0.0
    %v6513 = vand.u32 %v6501, 2147483648
    %v6514 = vsel %vm6512, %v6513, %v6511
    %v6515 = vadd.f32 %v6514, 1e-06
    %v6516 = vrcp.pop %v6515
    %v6517 = vmul.f32 %v6515, %v6516
    %v6518 = vsub.f32 1.0, %v6517
    %v6519 = vmul.f32 %v6516, %v6518
    %v6520 = vadd.f32 %v6516, %v6519
    %vm6521 = vweird.f32 %v6515
    %vm6522 = vweird.f32 %v6516
    %vm6523 = vmor %vm6521, %vm6522
    %v6524 = vsel %vm6523, %v6516, %v6520
    %v6525 = vand.u32 2147483647, %v6515
    %vm6526 = vcmp.eq.f32.partialorder %v6525, 8.507059e+37
    %v6527 = vand.u32 %v6515, 2147483648
    %v6528 = vor.u32 1.1754944e-38, %v6527
    %v6529 = vsel %vm6526, %v6528, %v6524
    %v6530 = vmul.f32 %v6502, %v6529
    %v6531 = vadd.f32 %v6530, %v2873
    %v6533 = vsel %vm176, %v6531, 0
    %6535 = vmatpush.msra.mxu0 0.0
    %6536 = vmatpush.msra.mxu0 0.0
    %6537 = vmatpush.msra.mxu0 0.0
    %6538 = vmatpush.msra.mxu0 0.0
    %6539 = vmatpush.msra.mxu0 0.0
    %6540 = vmatpush.msra.mxu0 0.0
    %6541 = vmatpush.msra.mxu0 0.0
    %6542 = vmatpush.msra.mxu0 0.0
    %6543 = vmatpush.msra.mxu0 0.0
    %6544 = vmatpush.msra.mxu0 0.0
    %6545 = vmatpush.msra.mxu0 0.0
    %6546 = vmatpush.msra.mxu0 0.0
    %6547 = vmatpush.msra.mxu0 %v2880
    %6548 = vmatpush.msra.mxu0 %v2879
    %6549 = vmatpush.msra.mxu0 %v2878
    %6550 = vmatpush.msra.mxu0 %v2877
    %6551 = vmatmul.f32.gmra.mxu0 %v6533
    %v6552 = vpop.f32.mrf.mxu0
    %v6553 = vadd.f32 %v2902, %v6552
    %6554 = vdwg.mxu0
    %6555 = vmatpush.msra.mxu0 0.0
    %6556 = vmatpush.msra.mxu0 0.0
    %6557 = vmatpush.msra.mxu0 0.0
    %6558 = vmatpush.msra.mxu0 0.0
    %6559 = vmatpush.msra.mxu0 0.0
    %6560 = vmatpush.msra.mxu0 0.0
    %6561 = vmatpush.msra.mxu0 0.0
    %6562 = vmatpush.msra.mxu0 0.0
    %6563 = vmatpush.msra.mxu0 0.0
    %6564 = vmatpush.msra.mxu0 0.0
    %6565 = vmatpush.msra.mxu0 0.0
    %6566 = vmatpush.msra.mxu0 0.0
    %6567 = vmatpush.msra.mxu0 %v2884
    %6568 = vmatpush.msra.mxu0 %v2883
    %6569 = vmatpush.msra.mxu0 %v2882
    %6570 = vmatpush.msra.mxu0 %v2881
    %6571 = vmatmul.f32.gmra.mxu0 %v6533
    %v6572 = vpop.f32.mrf.mxu0
    %v6573 = vadd.f32 %v2903, %v6572
    %6574 = vdwg.mxu0
    %6575 = vmatpush.msra.mxu0 0.0
    %6576 = vmatpush.msra.mxu0 0.0
    %6577 = vmatpush.msra.mxu0 0.0
    %6578 = vmatpush.msra.mxu0 0.0
    %6579 = vmatpush.msra.mxu0 0.0
    %6580 = vmatpush.msra.mxu0 0.0
    %6581 = vmatpush.msra.mxu0 0.0
    %6582 = vmatpush.msra.mxu0 0.0
    %6583 = vmatpush.msra.mxu0 0.0
    %6584 = vmatpush.msra.mxu0 0.0
    %6585 = vmatpush.msra.mxu0 0.0
    %6586 = vmatpush.msra.mxu0 0.0
    %6587 = vmatpush.msra.mxu0 %v2888
    %6588 = vmatpush.msra.mxu0 %v2887
    %6589 = vmatpush.msra.mxu0 %v2886
    %6590 = vmatpush.msra.mxu0 %v2885
    %6591 = vmatmul.f32.gmra.mxu0 %v6533
    %v6592 = vpop.f32.mrf.mxu0
    %v6593 = vadd.f32 %v2904, %v6592
    %6594 = vdwg.mxu0
    %6595 = vmatpush.msra.mxu0 0.0
    %6596 = vmatpush.msra.mxu0 0.0
    %6597 = vmatpush.msra.mxu0 0.0
    %6598 = vmatpush.msra.mxu0 0.0
    %6599 = vmatpush.msra.mxu0 0.0
    %6600 = vmatpush.msra.mxu0 0.0
    %6601 = vmatpush.msra.mxu0 0.0
    %6602 = vmatpush.msra.mxu0 0.0
    %6603 = vmatpush.msra.mxu0 0.0
    %6604 = vmatpush.msra.mxu0 0.0
    %6605 = vmatpush.msra.mxu0 0.0
    %6606 = vmatpush.msra.mxu0 0.0
    %6607 = vmatpush.msra.mxu0 %v2892
    %6608 = vmatpush.msra.mxu0 %v2891
    %6609 = vmatpush.msra.mxu0 %v2890
    %6610 = vmatpush.msra.mxu0 %v2889
    %6611 = vmatmul.f32.gmra.mxu0 %v6533
    %v6612 = vpop.f32.mrf.mxu0
    %v6613 = vadd.f32 %v2905, %v6612
    %6614 = vdwg.mxu0
    %6616 = vrot.lane.b32.xlu0 %v6553, 120
    %v6617 = vpop.permute.xlu0 %6616
    %v6618 = vsel %vm358, %v6553, 0
    %v6620 = vsel %vm358, %v6617, 0
    %6622 = vmatpush.xpose.msra.mxu0 0.0
    %6623 = vmatpush.xpose.msra.mxu0 0.0
    %6624 = vmatpush.xpose.msra.mxu0 0.0
    %6625 = vmatpush.xpose.msra.mxu0 0.0
    %6626 = vmatpush.xpose.msra.mxu0 0.0
    %6627 = vmatpush.xpose.msra.mxu0 0.0
    %6628 = vmatpush.xpose.msra.mxu0 0.0
    %6629 = vmatpush.xpose.msra.mxu0 0.0
    %6630 = vmatpush.xpose.msra.mxu0 0.0
    %6631 = vmatpush.xpose.msra.mxu0 0.0
    %6632 = vmatpush.xpose.msra.mxu0 0.0
    %6633 = vmatpush.xpose.msra.mxu0 0.0
    %6634 = vmatpush.xpose.msra.mxu0 0.0
    %6635 = vmatpush.xpose.msra.mxu0 0.0
    %6636 = vmatpush.xpose.msra.mxu0 0.0
    %6637 = vmatpush.xpose.msra.mxu0 %v6620
    %6638 = vmatmul.f32.gmra.mxu0 %v6618
    %v6639 = vpop.f32.mrf.mxu0
    %v6640 = vadd.f32 %v4181, %v6639
    %6641 = vdwg.mxu0
    %6643 = vrot.lane.b32.xlu0 %v6573, 120
    %v6644 = vpop.permute.xlu0 %6643
    %v6645 = vsel %vm358, %v6573, 0
    %v6647 = vsel %vm358, %v6644, 0
    %6649 = vmatpush.xpose.msra.mxu0 0.0
    %6650 = vmatpush.xpose.msra.mxu0 0.0
    %6651 = vmatpush.xpose.msra.mxu0 0.0
    %6652 = vmatpush.xpose.msra.mxu0 0.0
    %6653 = vmatpush.xpose.msra.mxu0 0.0
    %6654 = vmatpush.xpose.msra.mxu0 0.0
    %6655 = vmatpush.xpose.msra.mxu0 0.0
    %6656 = vmatpush.xpose.msra.mxu0 0.0
    %6657 = vmatpush.xpose.msra.mxu0 0.0
    %6658 = vmatpush.xpose.msra.mxu0 0.0
    %6659 = vmatpush.xpose.msra.mxu0 0.0
    %6660 = vmatpush.xpose.msra.mxu0 0.0
    %6661 = vmatpush.xpose.msra.mxu0 0.0
    %6662 = vmatpush.xpose.msra.mxu0 0.0
    %6663 = vmatpush.xpose.msra.mxu0 0.0
    %6664 = vmatpush.xpose.msra.mxu0 %v6647
    %6665 = vmatmul.f32.gmra.mxu0 %v6645
    %v6666 = vpop.f32.mrf.mxu0
    %v6667 = vadd.f32 %v4181, %v6666
    %6668 = vdwg.mxu0
    %6670 = vrot.lane.b32.xlu0 %v6593, 120
    %v6671 = vpop.permute.xlu0 %6670
    %v6672 = vsel %vm358, %v6593, 0
    %v6674 = vsel %vm358, %v6671, 0
    %6676 = vmatpush.xpose.msra.mxu0 0.0
    %6677 = vmatpush.xpose.msra.mxu0 0.0
    %6678 = vmatpush.xpose.msra.mxu0 0.0
    %6679 = vmatpush.xpose.msra.mxu0 0.0
    %6680 = vmatpush.xpose.msra.mxu0 0.0
    %6681 = vmatpush.xpose.msra.mxu0 0.0
    %6682 = vmatpush.xpose.msra.mxu0 0.0
    %6683 = vmatpush.xpose.msra.mxu0 0.0
    %6684 = vmatpush.xpose.msra.mxu0 0.0
    %6685 = vmatpush.xpose.msra.mxu0 0.0
    %6686 = vmatpush.xpose.msra.mxu0 0.0
    %6687 = vmatpush.xpose.msra.mxu0 0.0
    %6688 = vmatpush.xpose.msra.mxu0 0.0
    %6689 = vmatpush.xpose.msra.mxu0 0.0
    %6690 = vmatpush.xpose.msra.mxu0 0.0
    %6691 = vmatpush.xpose.msra.mxu0 %v6674
    %6692 = vmatmul.f32.gmra.mxu0 %v6672
    %v6693 = vpop.f32.mrf.mxu0
    %v6694 = vadd.f32 %v4181, %v6693
    %6695 = vdwg.mxu0
    %6697 = vrot.lane.b32.xlu0 %v6613, 120
    %v6698 = vpop.permute.xlu0 %6697
    %v6699 = vsel %vm358, %v6613, 0
    %v6701 = vsel %vm358, %v6698, 0
    %6703 = vmatpush.xpose.msra.mxu0 0.0
    %6704 = vmatpush.xpose.msra.mxu0 0.0
    %6705 = vmatpush.xpose.msra.mxu0 0.0
    %6706 = vmatpush.xpose.msra.mxu0 0.0
    %6707 = vmatpush.xpose.msra.mxu0 0.0
    %6708 = vmatpush.xpose.msra.mxu0 0.0
    %6709 = vmatpush.xpose.msra.mxu0 0.0
    %6710 = vmatpush.xpose.msra.mxu0 0.0
    %6711 = vmatpush.xpose.msra.mxu0 0.0
    %6712 = vmatpush.xpose.msra.mxu0 0.0
    %6713 = vmatpush.xpose.msra.mxu0 0.0
    %6714 = vmatpush.xpose.msra.mxu0 0.0
    %6715 = vmatpush.xpose.msra.mxu0 0.0
    %6716 = vmatpush.xpose.msra.mxu0 0.0
    %6717 = vmatpush.xpose.msra.mxu0 0.0
    %6718 = vmatpush.xpose.msra.mxu0 %v6701
    %6719 = vmatmul.f32.gmra.mxu0 %v6699
    %v6720 = vpop.f32.mrf.mxu0
    %v6721 = vadd.f32 %v4181, %v6720
    %6722 = vdwg.mxu0
    %v6723 = vsel %vm358, %v6640, -inf
    %6724 = vmax.xlane.f32.xlu0 %v6723
    %v6725 = vpop.xlane.xlu0 %6724
    %v6726 = vsel %vm358, %v6667, -inf
    %6727 = vmax.xlane.f32.xlu0 %v6726
    %v6728 = vpop.xlane.xlu0 %6727
    %v6729 = vsel %vm358, %v6694, -inf
    %6730 = vmax.xlane.f32.xlu0 %v6729
    %v6731 = vpop.xlane.xlu0 %6730
    %v6732 = vsel %vm358, %v6721, -inf
    %6733 = vmax.xlane.f32.xlu0 %v6732
    %v6734 = vpop.xlane.xlu0 %6733
    %v6735 = vsub.f32 %v6640, %v6725
    %v6736 = vsub.f32 %v6667, %v6728
    %v6737 = vsub.f32 %v6694, %v6731
    %v6738 = vsub.f32 %v6721, %v6734
    %v6739 = vmul.f32 %v6735, 1.442695
    %v6740 = vpow.pop %v6739
    %v6741 = vmul.f32 %v6736, 1.442695
    %v6742 = vpow.pop %v6741
    %v6743 = vmul.f32 %v6737, 1.442695
    %v6744 = vpow.pop %v6743
    %v6745 = vmul.f32 %v6738, 1.442695
    %v6746 = vpow.pop %v6745
    %v6747 = vsel %vm358, %v6740, 0.0
    %6748 = vadd.xlane.f32.xlu0 %v6747
    %v6749 = vpop.xlane.xlu0 %6748
    %v6750 = vsel %vm358, %v6742, 0.0
    %6751 = vadd.xlane.f32.xlu0 %v6750
    %v6752 = vpop.xlane.xlu0 %6751
    %v6753 = vsel %vm358, %v6744, 0.0
    %6754 = vadd.xlane.f32.xlu0 %v6753
    %v6755 = vpop.xlane.xlu0 %6754
    %v6756 = vsel %vm358, %v6746, 0.0
    %6757 = vadd.xlane.f32.xlu0 %v6756
    %v6758 = vpop.xlane.xlu0 %6757
    %v6759 = vrcp.pop %v6749
    %v6760 = vrcp.pop %v6752
    %v6761 = vrcp.pop %v6755
    %v6762 = vrcp.pop %v6758
    %v6763 = vmul.f32 %v6740, %v6759
    %v6764 = vmul.f32 %v6742, %v6760
    %v6765 = vmul.f32 %v6744, %v6761
    %v6766 = vmul.f32 %v6746, %v6762
    %6767 = vrot.lane.b32.xlu0 %v6553, 112
    %v6768 = vpop.permute.xlu0 %6767
    %v6771 = vsel %vm358, %v6763, 0
    %6773 = vmatpush.msra.mxu0 0.0
    %6774 = vmatpush.msra.mxu0 0.0
    %6775 = vmatpush.msra.mxu0 0.0
    %6776 = vmatpush.msra.mxu0 0.0
    %6777 = vmatpush.msra.mxu0 0.0
    %6778 = vmatpush.msra.mxu0 0.0
    %6779 = vmatpush.msra.mxu0 0.0
    %6780 = vmatpush.msra.mxu0 0.0
    %6781 = vmatpush.msra.mxu0 0.0
    %6782 = vmatpush.msra.mxu0 0.0
    %6783 = vmatpush.msra.mxu0 0.0
    %6784 = vmatpush.msra.mxu0 0.0
    %6785 = vmatpush.msra.mxu0 0.0
    %6786 = vmatpush.msra.mxu0 0.0
    %6787 = vmatpush.msra.mxu0 0.0
    %6788 = vmatpush.msra.mxu0 %v6768
    %6789 = vmatmul.f32.gmra.mxu0 %v6771
    %v6790 = vpop.f32.mrf.mxu0
    %v6791 = vadd.f32 0.0, %v6790
    %6792 = vdwg.mxu0
    %6793 = vrot.lane.b32.xlu0 %v6573, 112
    %v6794 = vpop.permute.xlu0 %6793
    %v6797 = vsel %vm358, %v6764, 0
    %6799 = vmatpush.msra.mxu0 0.0
    %6800 = vmatpush.msra.mxu0 0.0
    %6801 = vmatpush.msra.mxu0 0.0
    %6802 = vmatpush.msra.mxu0 0.0
    %6803 = vmatpush.msra.mxu0 0.0
    %6804 = vmatpush.msra.mxu0 0.0
    %6805 = vmatpush.msra.mxu0 0.0
    %6806 = vmatpush.msra.mxu0 0.0
    %6807 = vmatpush.msra.mxu0 0.0
    %6808 = vmatpush.msra.mxu0 0.0
    %6809 = vmatpush.msra.mxu0 0.0
    %6810 = vmatpush.msra.mxu0 0.0
    %6811 = vmatpush.msra.mxu0 0.0
    %6812 = vmatpush.msra.mxu0 0.0
    %6813 = vmatpush.msra.mxu0 0.0
    %6814 = vmatpush.msra.mxu0 %v6794
    %6815 = vmatmul.f32.gmra.mxu0 %v6797
    %v6816 = vpop.f32.mrf.mxu0
    %v6817 = vadd.f32 0.0, %v6816
    %6818 = vdwg.mxu0
    %6819 = vrot.lane.b32.xlu0 %v6593, 112
    %v6820 = vpop.permute.xlu0 %6819
    %v6823 = vsel %vm358, %v6765, 0
    %6825 = vmatpush.msra.mxu0 0.0
    %6826 = vmatpush.msra.mxu0 0.0
    %6827 = vmatpush.msra.mxu0 0.0
    %6828 = vmatpush.msra.mxu0 0.0
    %6829 = vmatpush.msra.mxu0 0.0
    %6830 = vmatpush.msra.mxu0 0.0
    %6831 = vmatpush.msra.mxu0 0.0
    %6832 = vmatpush.msra.mxu0 0.0
    %6833 = vmatpush.msra.mxu0 0.0
    %6834 = vmatpush.msra.mxu0 0.0
    %6835 = vmatpush.msra.mxu0 0.0
    %6836 = vmatpush.msra.mxu0 0.0
    %6837 = vmatpush.msra.mxu0 0.0
    %6838 = vmatpush.msra.mxu0 0.0
    %6839 = vmatpush.msra.mxu0 0.0
    %6840 = vmatpush.msra.mxu0 %v6820
    %6841 = vmatmul.f32.gmra.mxu0 %v6823
    %v6842 = vpop.f32.mrf.mxu0
    %v6843 = vadd.f32 0.0, %v6842
    %6844 = vdwg.mxu0
    %6845 = vrot.lane.b32.xlu0 %v6613, 112
    %v6846 = vpop.permute.xlu0 %6845
    %v6849 = vsel %vm358, %v6766, 0
    %6851 = vmatpush.msra.mxu0 0.0
    %6852 = vmatpush.msra.mxu0 0.0
    %6853 = vmatpush.msra.mxu0 0.0
    %6854 = vmatpush.msra.mxu0 0.0
    %6855 = vmatpush.msra.mxu0 0.0
    %6856 = vmatpush.msra.mxu0 0.0
    %6857 = vmatpush.msra.mxu0 0.0
    %6858 = vmatpush.msra.mxu0 0.0
    %6859 = vmatpush.msra.mxu0 0.0
    %6860 = vmatpush.msra.mxu0 0.0
    %6861 = vmatpush.msra.mxu0 0.0
    %6862 = vmatpush.msra.mxu0 0.0
    %6863 = vmatpush.msra.mxu0 0.0
    %6864 = vmatpush.msra.mxu0 0.0
    %6865 = vmatpush.msra.mxu0 0.0
    %6866 = vmatpush.msra.mxu0 %v6846
    %6867 = vmatmul.f32.gmra.mxu0 %v6849
    %v6868 = vpop.f32.mrf.mxu0
    %v6869 = vadd.f32 0.0, %v6868
    %6870 = vdwg.mxu0
    %v6872 = vsel %vm358, %v6791, 0
    %6874 = vmatpush.msra.mxu0 0.0
    %6875 = vmatpush.msra.mxu0 0.0
    %6876 = vmatpush.msra.mxu0 0.0
    %6877 = vmatpush.msra.mxu0 0.0
    %6878 = vmatpush.msra.mxu0 0.0
    %6879 = vmatpush.msra.mxu0 0.0
    %6880 = vmatpush.msra.mxu0 0.0
    %6881 = vmatpush.msra.mxu0 0.0
    %6882 = vmatpush.msra.mxu0 0.0
    %6883 = vmatpush.msra.mxu0 0.0
    %6884 = vmatpush.msra.mxu0 0.0
    %6885 = vmatpush.msra.mxu0 0.0
    %6886 = vmatpush.msra.mxu0 0.0
    %6887 = vmatpush.msra.mxu0 0.0
    %6888 = vmatpush.msra.mxu0 0.0
    %6889 = vmatpush.msra.mxu0 %v3250
    %6890 = vmatmul.f32.gmra.mxu0 %v6872
    %v6891 = vpop.f32.mrf.mxu0
    %v6892 = vadd.f32 0.0, %v6891
    %6893 = vdwg.mxu0
    %v6895 = vsel %vm358, %v6817, 0
    %6897 = vmatpush.msra.mxu0 0.0
    %6898 = vmatpush.msra.mxu0 0.0
    %6899 = vmatpush.msra.mxu0 0.0
    %6900 = vmatpush.msra.mxu0 0.0
    %6901 = vmatpush.msra.mxu0 0.0
    %6902 = vmatpush.msra.mxu0 0.0
    %6903 = vmatpush.msra.mxu0 0.0
    %6904 = vmatpush.msra.mxu0 0.0
    %6905 = vmatpush.msra.mxu0 0.0
    %6906 = vmatpush.msra.mxu0 0.0
    %6907 = vmatpush.msra.mxu0 0.0
    %6908 = vmatpush.msra.mxu0 0.0
    %6909 = vmatpush.msra.mxu0 0.0
    %6910 = vmatpush.msra.mxu0 0.0
    %6911 = vmatpush.msra.mxu0 0.0
    %6912 = vmatpush.msra.mxu0 %v3251
    %6913 = vmatmul.f32.gmra.mxu0 %v6895
    %v6914 = vpop.f32.mrf.mxu0
    %v6915 = vadd.f32 0.0, %v6914
    %6916 = vdwg.mxu0
    %v6918 = vsel %vm358, %v6843, 0
    %6920 = vmatpush.msra.mxu0 0.0
    %6921 = vmatpush.msra.mxu0 0.0
    %6922 = vmatpush.msra.mxu0 0.0
    %6923 = vmatpush.msra.mxu0 0.0
    %6924 = vmatpush.msra.mxu0 0.0
    %6925 = vmatpush.msra.mxu0 0.0
    %6926 = vmatpush.msra.mxu0 0.0
    %6927 = vmatpush.msra.mxu0 0.0
    %6928 = vmatpush.msra.mxu0 0.0
    %6929 = vmatpush.msra.mxu0 0.0
    %6930 = vmatpush.msra.mxu0 0.0
    %6931 = vmatpush.msra.mxu0 0.0
    %6932 = vmatpush.msra.mxu0 0.0
    %6933 = vmatpush.msra.mxu0 0.0
    %6934 = vmatpush.msra.mxu0 0.0
    %6935 = vmatpush.msra.mxu0 %v3252
    %6936 = vmatmul.f32.gmra.mxu0 %v6918
    %v6937 = vpop.f32.mrf.mxu0
    %v6938 = vadd.f32 0.0, %v6937
    %6939 = vdwg.mxu0
    %v6941 = vsel %vm358, %v6869, 0
    %6943 = vmatpush.msra.mxu0 0.0
    %6944 = vmatpush.msra.mxu0 0.0
    %6945 = vmatpush.msra.mxu0 0.0
    %6946 = vmatpush.msra.mxu0 0.0
    %6947 = vmatpush.msra.mxu0 0.0
    %6948 = vmatpush.msra.mxu0 0.0
    %6949 = vmatpush.msra.mxu0 0.0
    %6950 = vmatpush.msra.mxu0 0.0
    %6951 = vmatpush.msra.mxu0 0.0
    %6952 = vmatpush.msra.mxu0 0.0
    %6953 = vmatpush.msra.mxu0 0.0
    %6954 = vmatpush.msra.mxu0 0.0
    %6955 = vmatpush.msra.mxu0 0.0
    %6956 = vmatpush.msra.mxu0 0.0
    %6957 = vmatpush.msra.mxu0 0.0
    %6958 = vmatpush.msra.mxu0 %v3253
    %6959 = vmatmul.f32.gmra.mxu0 %v6941
    %v6960 = vpop.f32.mrf.mxu0
    %v6961 = vadd.f32 0.0, %v6960
    %6962 = vdwg.mxu0
    %v6963 = vsel %vm176, %v6892, 0.0
    %v6964 = vsel %vm176, %v6915, 0.0
    %v6965 = vadd.f32 %v6963, %v6964
    %v6966 = vsel %vm176, %v6938, 0.0
    %v6967 = vadd.f32 %v6965, %v6966
    %v6968 = vsel %vm176, %v6961, 0.0
    %v6969 = vadd.f32 %v6967, %v6968
    %v6970 = vadd.f32 %v6969, %v3356
    %v6971 = vadd.f32 %v6491, %v6970
    %v6972 = vsel %vm176, %v6971, 0.0
    %6973 = vadd.xlane.f32.xlu0 %v6972
    %v6974 = vpop.xlane.xlu0 %6973
    %v6975 = vmul.f32 %v6974, %v186
    %v6976 = vsub.f32 %v6971, %v6975
    %v6977 = vmul.f32 %v6976, %v6976
    %v6978 = vsel %vm176, %v6977, 0.0
    %6979 = vadd.xlane.f32.xlu0 %v6978
    %v6980 = vpop.xlane.xlu0 %6979
    %v6981 = vmul.f32 %v6980, %v199
    %v6982 = vmul.f32 %v3375, %v6976
    %v6983 = vrsqrt.pop %v6981
    %v6984 = vmul.f32 %v6983, %v6981
    %v6985 = vmul.f32 %v6984, %v6983
    %v6986 = vmul.f32 0.5, %v6985
    %v6987 = vsub.f32 1.5, %v6986
    %v6988 = vmul.f32 %v6983, %v6987
    %v6989 = vmul.f32 %v6981, %v6988
    %vm6990 = vcmp.eq.f32.partialorder %v6981, inf
    %v6991 = vsel %vm6990, %v6981, %v6989
    %vm6992 = vcmp.eq.f32.partialorder %v6981, 0.0
    %v6993 = vand.u32 %v6981, 2147483648
    %v6994 = vsel %vm6992, %v6993, %v6991
    %v6995 = vadd.f32 %v6994, 1e-06
    %v6996 = vrcp.pop %v6995
    %v6997 = vmul.f32 %v6995, %v6996
    %v6998 = vsub.f32 1.0, %v6997
    %v6999 = vmul.f32 %v6996, %v6998
    %v7000 = vadd.f32 %v6996, %v6999
    %vm7001 = vweird.f32 %v6995
    %vm7002 = vweird.f32 %v6996
    %vm7003 = vmor %vm7001, %vm7002
    %v7004 = vsel %vm7003, %v6996, %v7000
    %v7005 = vand.u32 2147483647, %v6995
    %vm7006 = vcmp.eq.f32.partialorder %v7005, 8.507059e+37
    %v7007 = vand.u32 %v6995, 2147483648
    %v7008 = vor.u32 1.1754944e-38, %v7007
    %v7009 = vsel %vm7006, %v7008, %v7004
    %v7010 = vmul.f32 %v6982, %v7009
    %v7011 = vadd.f32 %v7010, %v3407
    %v7013 = vsel %vm176, %v7011, 0
    %7015 = vmatpush.msra.mxu0 0.0
    %7016 = vmatpush.msra.mxu0 0.0
    %7017 = vmatpush.msra.mxu0 0.0
    %7018 = vmatpush.msra.mxu0 0.0
    %7019 = vmatpush.msra.mxu0 0.0
    %7020 = vmatpush.msra.mxu0 0.0
    %7021 = vmatpush.msra.mxu0 0.0
    %7022 = vmatpush.msra.mxu0 0.0
    %7023 = vmatpush.msra.mxu0 0.0
    %7024 = vmatpush.msra.mxu0 0.0
    %7025 = vmatpush.msra.mxu0 0.0
    %7026 = vmatpush.msra.mxu0 0.0
    %7027 = vmatpush.msra.mxu0 %v3414
    %7028 = vmatpush.msra.mxu0 %v3413
    %7029 = vmatpush.msra.mxu0 %v3412
    %7030 = vmatpush.msra.mxu0 %v3411
    %7031 = vmatmul.f32.gmra.mxu0 %v7013
    %v7032 = vpop.f32.mrf.mxu0
    %v7033 = vadd.f32 %v3436, %v7032
    %7034 = vdwg.mxu0
    %7035 = vmatpush.msra.mxu0 0.0
    %7036 = vmatpush.msra.mxu0 0.0
    %7037 = vmatpush.msra.mxu0 0.0
    %7038 = vmatpush.msra.mxu0 0.0
    %7039 = vmatpush.msra.mxu0 0.0
    %7040 = vmatpush.msra.mxu0 0.0
    %7041 = vmatpush.msra.mxu0 0.0
    %7042 = vmatpush.msra.mxu0 0.0
    %7043 = vmatpush.msra.mxu0 0.0
    %7044 = vmatpush.msra.mxu0 0.0
    %7045 = vmatpush.msra.mxu0 0.0
    %7046 = vmatpush.msra.mxu0 0.0
    %7047 = vmatpush.msra.mxu0 %v3418
    %7048 = vmatpush.msra.mxu0 %v3417
    %7049 = vmatpush.msra.mxu0 %v3416
    %7050 = vmatpush.msra.mxu0 %v3415
    %7051 = vmatmul.f32.gmra.mxu0 %v7013
    %v7052 = vpop.f32.mrf.mxu0
    %v7053 = vadd.f32 %v3437, %v7052
    %7054 = vdwg.mxu0
    %7055 = vmatpush.msra.mxu0 0.0
    %7056 = vmatpush.msra.mxu0 0.0
    %7057 = vmatpush.msra.mxu0 0.0
    %7058 = vmatpush.msra.mxu0 0.0
    %7059 = vmatpush.msra.mxu0 0.0
    %7060 = vmatpush.msra.mxu0 0.0
    %7061 = vmatpush.msra.mxu0 0.0
    %7062 = vmatpush.msra.mxu0 0.0
    %7063 = vmatpush.msra.mxu0 0.0
    %7064 = vmatpush.msra.mxu0 0.0
    %7065 = vmatpush.msra.mxu0 0.0
    %7066 = vmatpush.msra.mxu0 0.0
    %7067 = vmatpush.msra.mxu0 %v3422
    %7068 = vmatpush.msra.mxu0 %v3421
    %7069 = vmatpush.msra.mxu0 %v3420
    %7070 = vmatpush.msra.mxu0 %v3419
    %7071 = vmatmul.f32.gmra.mxu0 %v7013
    %v7072 = vpop.f32.mrf.mxu0
    %v7073 = vadd.f32 %v3438, %v7072
    %7074 = vdwg.mxu0
    %7075 = vmatpush.msra.mxu0 0.0
    %7076 = vmatpush.msra.mxu0 0.0
    %7077 = vmatpush.msra.mxu0 0.0
    %7078 = vmatpush.msra.mxu0 0.0
    %7079 = vmatpush.msra.mxu0 0.0
    %7080 = vmatpush.msra.mxu0 0.0
    %7081 = vmatpush.msra.mxu0 0.0
    %7082 = vmatpush.msra.mxu0 0.0
    %7083 = vmatpush.msra.mxu0 0.0
    %7084 = vmatpush.msra.mxu0 0.0
    %7085 = vmatpush.msra.mxu0 0.0
    %7086 = vmatpush.msra.mxu0 0.0
    %7087 = vmatpush.msra.mxu0 %v3426
    %7088 = vmatpush.msra.mxu0 %v3425
    %7089 = vmatpush.msra.mxu0 %v3424
    %7090 = vmatpush.msra.mxu0 %v3423
    %7091 = vmatmul.f32.gmra.mxu0 %v7013
    %v7092 = vpop.f32.mrf.mxu0
    %v7093 = vadd.f32 %v3439, %v7092
    %7094 = vdwg.mxu0
    %7095 = vmatpush.msra.mxu0 0.0
    %7096 = vmatpush.msra.mxu0 0.0
    %7097 = vmatpush.msra.mxu0 0.0
    %7098 = vmatpush.msra.mxu0 0.0
    %7099 = vmatpush.msra.mxu0 0.0
    %7100 = vmatpush.msra.mxu0 0.0
    %7101 = vmatpush.msra.mxu0 0.0
    %7102 = vmatpush.msra.mxu0 0.0
    %7103 = vmatpush.msra.mxu0 0.0
    %7104 = vmatpush.msra.mxu0 0.0
    %7105 = vmatpush.msra.mxu0 0.0
    %7106 = vmatpush.msra.mxu0 0.0
    %7107 = vmatpush.msra.mxu0 %v3531
    %7108 = vmatpush.msra.mxu0 %v3530
    %7109 = vmatpush.msra.mxu0 %v3529
    %7110 = vmatpush.msra.mxu0 %v3528
    %7111 = vmatmul.f32.gmra.mxu0 %v5969
    %v7112 = vpop.f32.mrf.mxu0
    %v7113 = vadd.f32 %v3553, %v7112
    %7114 = vdwg.mxu0
    %7115 = vmatpush.msra.mxu0 0.0
    %7116 = vmatpush.msra.mxu0 0.0
    %7117 = vmatpush.msra.mxu0 0.0
    %7118 = vmatpush.msra.mxu0 0.0
    %7119 = vmatpush.msra.mxu0 0.0
    %7120 = vmatpush.msra.mxu0 0.0
    %7121 = vmatpush.msra.mxu0 0.0
    %7122 = vmatpush.msra.mxu0 0.0
    %7123 = vmatpush.msra.mxu0 0.0
    %7124 = vmatpush.msra.mxu0 0.0
    %7125 = vmatpush.msra.mxu0 0.0
    %7126 = vmatpush.msra.mxu0 0.0
    %7127 = vmatpush.msra.mxu0 %v3535
    %7128 = vmatpush.msra.mxu0 %v3534
    %7129 = vmatpush.msra.mxu0 %v3533
    %7130 = vmatpush.msra.mxu0 %v3532
    %7131 = vmatmul.f32.gmra.mxu0 %v5969
    %v7132 = vpop.f32.mrf.mxu0
    %v7133 = vadd.f32 %v3554, %v7132
    %7134 = vdwg.mxu0
    %7135 = vmatpush.msra.mxu0 0.0
    %7136 = vmatpush.msra.mxu0 0.0
    %7137 = vmatpush.msra.mxu0 0.0
    %7138 = vmatpush.msra.mxu0 0.0
    %7139 = vmatpush.msra.mxu0 0.0
    %7140 = vmatpush.msra.mxu0 0.0
    %7141 = vmatpush.msra.mxu0 0.0
    %7142 = vmatpush.msra.mxu0 0.0
    %7143 = vmatpush.msra.mxu0 0.0
    %7144 = vmatpush.msra.mxu0 0.0
    %7145 = vmatpush.msra.mxu0 0.0
    %7146 = vmatpush.msra.mxu0 0.0
    %7147 = vmatpush.msra.mxu0 %v3539
    %7148 = vmatpush.msra.mxu0 %v3538
    %7149 = vmatpush.msra.mxu0 %v3537
    %7150 = vmatpush.msra.mxu0 %v3536
    %7151 = vmatmul.f32.gmra.mxu0 %v5969
    %v7152 = vpop.f32.mrf.mxu0
    %v7153 = vadd.f32 %v3555, %v7152
    %7154 = vdwg.mxu0
    %7155 = vmatpush.msra.mxu0 0.0
    %7156 = vmatpush.msra.mxu0 0.0
    %7157 = vmatpush.msra.mxu0 0.0
    %7158 = vmatpush.msra.mxu0 0.0
    %7159 = vmatpush.msra.mxu0 0.0
    %7160 = vmatpush.msra.mxu0 0.0
    %7161 = vmatpush.msra.mxu0 0.0
    %7162 = vmatpush.msra.mxu0 0.0
    %7163 = vmatpush.msra.mxu0 0.0
    %7164 = vmatpush.msra.mxu0 0.0
    %7165 = vmatpush.msra.mxu0 0.0
    %7166 = vmatpush.msra.mxu0 0.0
    %7167 = vmatpush.msra.mxu0 %v3543
    %7168 = vmatpush.msra.mxu0 %v3542
    %7169 = vmatpush.msra.mxu0 %v3541
    %7170 = vmatpush.msra.mxu0 %v3540
    %7171 = vmatmul.f32.gmra.mxu0 %v5969
    %v7172 = vpop.f32.mrf.mxu0
    %v7173 = vadd.f32 %v3556, %v7172
    %7174 = vdwg.mxu0
    %v7176 = vsel %vm358, %v7033, 0
    %v7179 = vsel %vm358, %v7113, 0
    %7181 = vmatpush.xpose.msra.mxu0 0.0
    %7182 = vmatpush.xpose.msra.mxu0 0.0
    %7183 = vmatpush.xpose.msra.mxu0 0.0
    %7184 = vmatpush.xpose.msra.mxu0 0.0
    %7185 = vmatpush.xpose.msra.mxu0 0.0
    %7186 = vmatpush.xpose.msra.mxu0 0.0
    %7187 = vmatpush.xpose.msra.mxu0 0.0
    %7188 = vmatpush.xpose.msra.mxu0 0.0
    %7189 = vmatpush.xpose.msra.mxu0 0.0
    %7190 = vmatpush.xpose.msra.mxu0 0.0
    %7191 = vmatpush.xpose.msra.mxu0 0.0
    %7192 = vmatpush.xpose.msra.mxu0 0.0
    %7193 = vmatpush.xpose.msra.mxu0 0.0
    %7194 = vmatpush.xpose.msra.mxu0 0.0
    %7195 = vmatpush.xpose.msra.mxu0 0.0
    %7196 = vmatpush.xpose.msra.mxu0 %v7179
    %7197 = vmatmul.f32.gmra.mxu0 %v7176
    %v7198 = vpop.f32.mrf.mxu0
    %v7199 = vadd.f32 %v4308, %v7198
    %7200 = vdwg.mxu0
    %v7202 = vsel %vm358, %v7053, 0
    %v7205 = vsel %vm358, %v7133, 0
    %7207 = vmatpush.xpose.msra.mxu0 0.0
    %7208 = vmatpush.xpose.msra.mxu0 0.0
    %7209 = vmatpush.xpose.msra.mxu0 0.0
    %7210 = vmatpush.xpose.msra.mxu0 0.0
    %7211 = vmatpush.xpose.msra.mxu0 0.0
    %7212 = vmatpush.xpose.msra.mxu0 0.0
    %7213 = vmatpush.xpose.msra.mxu0 0.0
    %7214 = vmatpush.xpose.msra.mxu0 0.0
    %7215 = vmatpush.xpose.msra.mxu0 0.0
    %7216 = vmatpush.xpose.msra.mxu0 0.0
    %7217 = vmatpush.xpose.msra.mxu0 0.0
    %7218 = vmatpush.xpose.msra.mxu0 0.0
    %7219 = vmatpush.xpose.msra.mxu0 0.0
    %7220 = vmatpush.xpose.msra.mxu0 0.0
    %7221 = vmatpush.xpose.msra.mxu0 0.0
    %7222 = vmatpush.xpose.msra.mxu0 %v7205
    %7223 = vmatmul.f32.gmra.mxu0 %v7202
    %v7224 = vpop.f32.mrf.mxu0
    %v7225 = vadd.f32 %v4308, %v7224
    %7226 = vdwg.mxu0
    %v7228 = vsel %vm358, %v7073, 0
    %v7231 = vsel %vm358, %v7153, 0
    %7233 = vmatpush.xpose.msra.mxu0 0.0
    %7234 = vmatpush.xpose.msra.mxu0 0.0
    %7235 = vmatpush.xpose.msra.mxu0 0.0
    %7236 = vmatpush.xpose.msra.mxu0 0.0
    %7237 = vmatpush.xpose.msra.mxu0 0.0
    %7238 = vmatpush.xpose.msra.mxu0 0.0
    %7239 = vmatpush.xpose.msra.mxu0 0.0
    %7240 = vmatpush.xpose.msra.mxu0 0.0
    %7241 = vmatpush.xpose.msra.mxu0 0.0
    %7242 = vmatpush.xpose.msra.mxu0 0.0
    %7243 = vmatpush.xpose.msra.mxu0 0.0
    %7244 = vmatpush.xpose.msra.mxu0 0.0
    %7245 = vmatpush.xpose.msra.mxu0 0.0
    %7246 = vmatpush.xpose.msra.mxu0 0.0
    %7247 = vmatpush.xpose.msra.mxu0 0.0
    %7248 = vmatpush.xpose.msra.mxu0 %v7231
    %7249 = vmatmul.f32.gmra.mxu0 %v7228
    %v7250 = vpop.f32.mrf.mxu0
    %v7251 = vadd.f32 %v4308, %v7250
    %7252 = vdwg.mxu0
    %v7254 = vsel %vm358, %v7093, 0
    %v7257 = vsel %vm358, %v7173, 0
    %7259 = vmatpush.xpose.msra.mxu0 0.0
    %7260 = vmatpush.xpose.msra.mxu0 0.0
    %7261 = vmatpush.xpose.msra.mxu0 0.0
    %7262 = vmatpush.xpose.msra.mxu0 0.0
    %7263 = vmatpush.xpose.msra.mxu0 0.0
    %7264 = vmatpush.xpose.msra.mxu0 0.0
    %7265 = vmatpush.xpose.msra.mxu0 0.0
    %7266 = vmatpush.xpose.msra.mxu0 0.0
    %7267 = vmatpush.xpose.msra.mxu0 0.0
    %7268 = vmatpush.xpose.msra.mxu0 0.0
    %7269 = vmatpush.xpose.msra.mxu0 0.0
    %7270 = vmatpush.xpose.msra.mxu0 0.0
    %7271 = vmatpush.xpose.msra.mxu0 0.0
    %7272 = vmatpush.xpose.msra.mxu0 0.0
    %7273 = vmatpush.xpose.msra.mxu0 0.0
    %7274 = vmatpush.xpose.msra.mxu0 %v7257
    %7275 = vmatmul.f32.gmra.mxu0 %v7254
    %v7276 = vpop.f32.mrf.mxu0
    %v7277 = vadd.f32 %v4308, %v7276
    %7278 = vdwg.mxu0
    %v7279 = vsel %vm358, %v7199, -inf
    %7280 = vmax.xlane.f32.xlu0 %v7279
    %v7281 = vpop.xlane.xlu0 %7280
    %v7282 = vsel %vm358, %v7225, -inf
    %7283 = vmax.xlane.f32.xlu0 %v7282
    %v7284 = vpop.xlane.xlu0 %7283
    %v7285 = vsel %vm358, %v7251, -inf
    %7286 = vmax.xlane.f32.xlu0 %v7285
    %v7287 = vpop.xlane.xlu0 %7286
    %v7288 = vsel %vm358, %v7277, -inf
    %7289 = vmax.xlane.f32.xlu0 %v7288
    %v7290 = vpop.xlane.xlu0 %7289
    %v7291 = vsub.f32 %v7199, %v7281
    %v7292 = vsub.f32 %v7225, %v7284
    %v7293 = vsub.f32 %v7251, %v7287
    %v7294 = vsub.f32 %v7277, %v7290
    %v7295 = vmul.f32 %v7291, 1.442695
    %v7296 = vpow.pop %v7295
    %v7297 = vmul.f32 %v7292, 1.442695
    %v7298 = vpow.pop %v7297
    %v7299 = vmul.f32 %v7293, 1.442695
    %v7300 = vpow.pop %v7299
    %v7301 = vmul.f32 %v7294, 1.442695
    %v7302 = vpow.pop %v7301
    %v7303 = vsel %vm358, %v7296, 0.0
    %7304 = vadd.xlane.f32.xlu0 %v7303
    %v7305 = vpop.xlane.xlu0 %7304
    %v7306 = vsel %vm358, %v7298, 0.0
    %7307 = vadd.xlane.f32.xlu0 %v7306
    %v7308 = vpop.xlane.xlu0 %7307
    %v7309 = vsel %vm358, %v7300, 0.0
    %7310 = vadd.xlane.f32.xlu0 %v7309
    %v7311 = vpop.xlane.xlu0 %7310
    %v7312 = vsel %vm358, %v7302, 0.0
    %7313 = vadd.xlane.f32.xlu0 %v7312
    %v7314 = vpop.xlane.xlu0 %7313
    %v7315 = vrcp.pop %v7305
    %v7316 = vrcp.pop %v7308
    %v7317 = vrcp.pop %v7311
    %v7318 = vrcp.pop %v7314
    %v7319 = vmul.f32 %v7296, %v7315
    %v7320 = vmul.f32 %v7298, %v7316
    %v7321 = vmul.f32 %v7300, %v7317
    %v7322 = vmul.f32 %v7302, %v7318
    %7323 = vrot.lane.b32.xlu0 %v7113, 120
    %v7324 = vpop.permute.xlu0 %7323
    %v7327 = vsel %vm358, %v7319, 0
    %7329 = vmatpush.msra.mxu0 0.0
    %7330 = vmatpush.msra.mxu0 0.0
    %7331 = vmatpush.msra.mxu0 0.0
    %7332 = vmatpush.msra.mxu0 0.0
    %7333 = vmatpush.msra.mxu0 0.0
    %7334 = vmatpush.msra.mxu0 0.0
    %7335 = vmatpush.msra.mxu0 0.0
    %7336 = vmatpush.msra.mxu0 0.0
    %7337 = vmatpush.msra.mxu0 0.0
    %7338 = vmatpush.msra.mxu0 0.0
    %7339 = vmatpush.msra.mxu0 0.0
    %7340 = vmatpush.msra.mxu0 0.0
    %7341 = vmatpush.msra.mxu0 0.0
    %7342 = vmatpush.msra.mxu0 0.0
    %7343 = vmatpush.msra.mxu0 0.0
    %7344 = vmatpush.msra.mxu0 %v7324
    %7345 = vmatmul.f32.gmra.mxu0 %v7327
    %v7346 = vpop.f32.mrf.mxu0
    %v7347 = vadd.f32 0.0, %v7346
    %7348 = vdwg.mxu0
    %7349 = vrot.lane.b32.xlu0 %v7133, 120
    %v7350 = vpop.permute.xlu0 %7349
    %v7353 = vsel %vm358, %v7320, 0
    %7355 = vmatpush.msra.mxu0 0.0
    %7356 = vmatpush.msra.mxu0 0.0
    %7357 = vmatpush.msra.mxu0 0.0
    %7358 = vmatpush.msra.mxu0 0.0
    %7359 = vmatpush.msra.mxu0 0.0
    %7360 = vmatpush.msra.mxu0 0.0
    %7361 = vmatpush.msra.mxu0 0.0
    %7362 = vmatpush.msra.mxu0 0.0
    %7363 = vmatpush.msra.mxu0 0.0
    %7364 = vmatpush.msra.mxu0 0.0
    %7365 = vmatpush.msra.mxu0 0.0
    %7366 = vmatpush.msra.mxu0 0.0
    %7367 = vmatpush.msra.mxu0 0.0
    %7368 = vmatpush.msra.mxu0 0.0
    %7369 = vmatpush.msra.mxu0 0.0
    %7370 = vmatpush.msra.mxu0 %v7350
    %7371 = vmatmul.f32.gmra.mxu0 %v7353
    %v7372 = vpop.f32.mrf.mxu0
    %v7373 = vadd.f32 0.0, %v7372
    %7374 = vdwg.mxu0
    %7375 = vrot.lane.b32.xlu0 %v7153, 120
    %v7376 = vpop.permute.xlu0 %7375
    %v7379 = vsel %vm358, %v7321, 0
    %7381 = vmatpush.msra.mxu0 0.0
    %7382 = vmatpush.msra.mxu0 0.0
    %7383 = vmatpush.msra.mxu0 0.0
    %7384 = vmatpush.msra.mxu0 0.0
    %7385 = vmatpush.msra.mxu0 0.0
    %7386 = vmatpush.msra.mxu0 0.0
    %7387 = vmatpush.msra.mxu0 0.0
    %7388 = vmatpush.msra.mxu0 0.0
    %7389 = vmatpush.msra.mxu0 0.0
    %7390 = vmatpush.msra.mxu0 0.0
    %7391 = vmatpush.msra.mxu0 0.0
    %7392 = vmatpush.msra.mxu0 0.0
    %7393 = vmatpush.msra.mxu0 0.0
    %7394 = vmatpush.msra.mxu0 0.0
    %7395 = vmatpush.msra.mxu0 0.0
    %7396 = vmatpush.msra.mxu0 %v7376
    %7397 = vmatmul.f32.gmra.mxu0 %v7379
    %v7398 = vpop.f32.mrf.mxu0
    %v7399 = vadd.f32 0.0, %v7398
    %7400 = vdwg.mxu0
    %7401 = vrot.lane.b32.xlu0 %v7173, 120
    %v7402 = vpop.permute.xlu0 %7401
    %v7405 = vsel %vm358, %v7322, 0
    %7407 = vmatpush.msra.mxu0 0.0
    %7408 = vmatpush.msra.mxu0 0.0
    %7409 = vmatpush.msra.mxu0 0.0
    %7410 = vmatpush.msra.mxu0 0.0
    %7411 = vmatpush.msra.mxu0 0.0
    %7412 = vmatpush.msra.mxu0 0.0
    %7413 = vmatpush.msra.mxu0 0.0
    %7414 = vmatpush.msra.mxu0 0.0
    %7415 = vmatpush.msra.mxu0 0.0
    %7416 = vmatpush.msra.mxu0 0.0
    %7417 = vmatpush.msra.mxu0 0.0
    %7418 = vmatpush.msra.mxu0 0.0
    %7419 = vmatpush.msra.mxu0 0.0
    %7420 = vmatpush.msra.mxu0 0.0
    %7421 = vmatpush.msra.mxu0 0.0
    %7422 = vmatpush.msra.mxu0 %v7402
    %7423 = vmatmul.f32.gmra.mxu0 %v7405
    %v7424 = vpop.f32.mrf.mxu0
    %v7425 = vadd.f32 0.0, %v7424
    %7426 = vdwg.mxu0
    %v7428 = vsel %vm358, %v7347, 0
    %7430 = vmatpush.msra.mxu0 0.0
    %7431 = vmatpush.msra.mxu0 0.0
    %7432 = vmatpush.msra.mxu0 0.0
    %7433 = vmatpush.msra.mxu0 0.0
    %7434 = vmatpush.msra.mxu0 0.0
    %7435 = vmatpush.msra.mxu0 0.0
    %7436 = vmatpush.msra.mxu0 0.0
    %7437 = vmatpush.msra.mxu0 0.0
    %7438 = vmatpush.msra.mxu0 0.0
    %7439 = vmatpush.msra.mxu0 0.0
    %7440 = vmatpush.msra.mxu0 0.0
    %7441 = vmatpush.msra.mxu0 0.0
    %7442 = vmatpush.msra.mxu0 0.0
    %7443 = vmatpush.msra.mxu0 0.0
    %7444 = vmatpush.msra.mxu0 0.0
    %7445 = vmatpush.msra.mxu0 %v3894
    %7446 = vmatmul.f32.gmra.mxu0 %v7428
    %v7447 = vpop.f32.mrf.mxu0
    %v7448 = vadd.f32 0.0, %v7447
    %7449 = vdwg.mxu0
    %v7451 = vsel %vm358, %v7373, 0
    %7453 = vmatpush.msra.mxu0 0.0
    %7454 = vmatpush.msra.mxu0 0.0
    %7455 = vmatpush.msra.mxu0 0.0
    %7456 = vmatpush.msra.mxu0 0.0
    %7457 = vmatpush.msra.mxu0 0.0
    %7458 = vmatpush.msra.mxu0 0.0
    %7459 = vmatpush.msra.mxu0 0.0
    %7460 = vmatpush.msra.mxu0 0.0
    %7461 = vmatpush.msra.mxu0 0.0
    %7462 = vmatpush.msra.mxu0 0.0
    %7463 = vmatpush.msra.mxu0 0.0
    %7464 = vmatpush.msra.mxu0 0.0
    %7465 = vmatpush.msra.mxu0 0.0
    %7466 = vmatpush.msra.mxu0 0.0
    %7467 = vmatpush.msra.mxu0 0.0
    %7468 = vmatpush.msra.mxu0 %v3895
    %7469 = vmatmul.f32.gmra.mxu0 %v7451
    %v7470 = vpop.f32.mrf.mxu0
    %v7471 = vadd.f32 0.0, %v7470
    %7472 = vdwg.mxu0
    %v7474 = vsel %vm358, %v7399, 0
    %7476 = vmatpush.msra.mxu0 0.0
    %7477 = vmatpush.msra.mxu0 0.0
    %7478 = vmatpush.msra.mxu0 0.0
    %7479 = vmatpush.msra.mxu0 0.0
    %7480 = vmatpush.msra.mxu0 0.0
    %7481 = vmatpush.msra.mxu0 0.0
    %7482 = vmatpush.msra.mxu0 0.0
    %7483 = vmatpush.msra.mxu0 0.0
    %7484 = vmatpush.msra.mxu0 0.0
    %7485 = vmatpush.msra.mxu0 0.0
    %7486 = vmatpush.msra.mxu0 0.0
    %7487 = vmatpush.msra.mxu0 0.0
    %7488 = vmatpush.msra.mxu0 0.0
    %7489 = vmatpush.msra.mxu0 0.0
    %7490 = vmatpush.msra.mxu0 0.0
    %7491 = vmatpush.msra.mxu0 %v3896
    %7492 = vmatmul.f32.gmra.mxu0 %v7474
    %v7493 = vpop.f32.mrf.mxu0
    %v7494 = vadd.f32 0.0, %v7493
    %7495 = vdwg.mxu0
    %v7497 = vsel %vm358, %v7425, 0
    %7499 = vmatpush.msra.mxu0 0.0
    %7500 = vmatpush.msra.mxu0 0.0
    %7501 = vmatpush.msra.mxu0 0.0
    %7502 = vmatpush.msra.mxu0 0.0
    %7503 = vmatpush.msra.mxu0 0.0
    %7504 = vmatpush.msra.mxu0 0.0
    %7505 = vmatpush.msra.mxu0 0.0
    %7506 = vmatpush.msra.mxu0 0.0
    %7507 = vmatpush.msra.mxu0 0.0
    %7508 = vmatpush.msra.mxu0 0.0
    %7509 = vmatpush.msra.mxu0 0.0
    %7510 = vmatpush.msra.mxu0 0.0
    %7511 = vmatpush.msra.mxu0 0.0
    %7512 = vmatpush.msra.mxu0 0.0
    %7513 = vmatpush.msra.mxu0 0.0
    %7514 = vmatpush.msra.mxu0 %v3897
    %7515 = vmatmul.f32.gmra.mxu0 %v7497
    %v7516 = vpop.f32.mrf.mxu0
    %v7517 = vadd.f32 0.0, %v7516
    %7518 = vdwg.mxu0
    %v7519 = vsel %vm176, %v7448, 0.0
    %v7520 = vsel %vm176, %v7471, 0.0
    %v7521 = vadd.f32 %v7519, %v7520
    %v7522 = vsel %vm176, %v7494, 0.0
    %v7523 = vadd.f32 %v7521, %v7522
    %v7524 = vsel %vm176, %v7517, 0.0
    %v7525 = vadd.f32 %v7523, %v7524
    %v7526 = vadd.f32 %v7525, %v4000
    %v7527 = vadd.f32 %v6971, %v7526
    %v7528 = vsel %vm176, %v7527, 0.0
    %7529 = vadd.xlane.f32.xlu0 %v7528
    %v7530 = vpop.xlane.xlu0 %7529
    %v7531 = vmul.f32 %v7530, %v186
    %v7532 = vsub.f32 %v7527, %v7531
    %v7533 = vmul.f32 %v7532, %v7532
    %v7534 = vsel %vm176, %v7533, 0.0
    %7535 = vadd.xlane.f32.xlu0 %v7534
    %v7536 = vpop.xlane.xlu0 %7535
    %v7537 = vmul.f32 %v7536, %v199
    %v7538 = vmul.f32 %v4019, %v7532
    %v7539 = vrsqrt.pop %v7537
    %v7540 = vmul.f32 %v7539, %v7537
    %v7541 = vmul.f32 %v7540, %v7539
    %v7542 = vmul.f32 0.5, %v7541
    %v7543 = vsub.f32 1.5, %v7542
    %v7544 = vmul.f32 %v7539, %v7543
    %v7545 = vmul.f32 %v7537, %v7544
    %vm7546 = vcmp.eq.f32.partialorder %v7537, inf
    %v7547 = vsel %vm7546, %v7537, %v7545
    %vm7548 = vcmp.eq.f32.partialorder %v7537, 0.0
    %v7549 = vand.u32 %v7537, 2147483648
    %v7550 = vsel %vm7548, %v7549, %v7547
    %v7551 = vadd.f32 %v7550, 1e-06
    %v7552 = vrcp.pop %v7551
    %v7553 = vmul.f32 %v7551, %v7552
    %v7554 = vsub.f32 1.0, %v7553
    %v7555 = vmul.f32 %v7552, %v7554
    %v7556 = vadd.f32 %v7552, %v7555
    %vm7557 = vweird.f32 %v7551
    %vm7558 = vweird.f32 %v7552
    %vm7559 = vmor %vm7557, %vm7558
    %v7560 = vsel %vm7559, %v7552, %v7556
    %v7561 = vand.u32 2147483647, %v7551
    %vm7562 = vcmp.eq.f32.partialorder %v7561, 8.507059e+37
    %v7563 = vand.u32 %v7551, 2147483648
    %v7564 = vor.u32 1.1754944e-38, %v7563
    %v7565 = vsel %vm7562, %v7564, %v7560
    %v7566 = vmul.f32 %v7538, %v7565
    %v7567 = vadd.f32 %v7566, %v4051
    %v7569 = vsel %vm176, %v7567, 0
    %7571 = vmatpush.msra.mxu0 0.0
    %7572 = vmatpush.msra.mxu0 0.0
    %7573 = vmatpush.msra.mxu0 0.0
    %7574 = vmatpush.msra.mxu0 0.0
    %7575 = vmatpush.msra.mxu0 0.0
    %7576 = vmatpush.msra.mxu0 0.0
    %7577 = vmatpush.msra.mxu0 0.0
    %7578 = vmatpush.msra.mxu0 0.0
    %7579 = vmatpush.msra.mxu0 0.0
    %7580 = vmatpush.msra.mxu0 0.0
    %7581 = vmatpush.msra.mxu0 0.0
    %7582 = vmatpush.msra.mxu0 0.0
    %7583 = vmatpush.msra.mxu0 %v4058
    %7584 = vmatpush.msra.mxu0 %v4057
    %7585 = vmatpush.msra.mxu0 %v4056
    %7586 = vmatpush.msra.mxu0 %v4055
    %7587 = vmatmul.f32.gmra.mxu0 %v7569
    %v7588 = vpop.f32.mrf.mxu0
    %v7589 = vadd.f32 %v4073, %v7588
    %7590 = vdwg.mxu0
    %v7591 = vmax.f32 %v7589, 0.0
    %v7593 = vsel %vm813, %v7591, 0
    %7595 = vmatpush.msra.mxu0 0.0
    %7596 = vmatpush.msra.mxu0 0.0
    %7597 = vmatpush.msra.mxu0 0.0
    %7598 = vmatpush.msra.mxu0 0.0
    %7599 = vmatpush.msra.mxu0 0.0
    %7600 = vmatpush.msra.mxu0 0.0
    %7601 = vmatpush.msra.mxu0 0.0
    %7602 = vmatpush.msra.mxu0 0.0
    %7603 = vmatpush.msra.mxu0 %v4069
    %7604 = vmatpush.msra.mxu0 %v4068
    %7605 = vmatpush.msra.mxu0 %v4067
    %7606 = vmatpush.msra.mxu0 %v4066
    %7607 = vmatpush.msra.mxu0 %v4065
    %7608 = vmatpush.msra.mxu0 %v4064
    %7609 = vmatpush.msra.mxu0 %v4063
    %7610 = vmatpush.msra.mxu0 %v4062
    %7611 = vmatmul.f32.gmra.mxu0 %v7593
    %v7612 = vpop.f32.mrf.mxu0
    %v7613 = vadd.f32 %v4100, %v7612
    %7614 = vdwg.mxu0
    %v7615 = vadd.f32 %v7527, %v7613
    %v7616 = vsel %vm176, %v7615, 0.0
    %7617 = vadd.xlane.f32.xlu0 %v7616
    %v7618 = vpop.xlane.xlu0 %7617
    %v7619 = vmul.f32 %v7618, %v186
    %v7620 = vsub.f32 %v7615, %v7619
    %v7621 = vmul.f32 %v7620, %v7620
    %v7622 = vsel %vm176, %v7621, 0.0
    %7623 = vadd.xlane.f32.xlu0 %v7622
    %v7624 = vpop.xlane.xlu0 %7623
    %v7625 = vmul.f32 %v7624, %v199
    %v7626 = vmul.f32 %v4139, %v7620
    %v7627 = vrsqrt.pop %v7625
    %v7628 = vmul.f32 %v7627, %v7625
    %v7629 = vmul.f32 %v7628, %v7627
    %v7630 = vmul.f32 0.5, %v7629
    %v7631 = vsub.f32 1.5, %v7630
    %v7632 = vmul.f32 %v7627, %v7631
    %v7633 = vmul.f32 %v7625, %v7632
    %vm7634 = vcmp.eq.f32.partialorder %v7625, inf
    %v7635 = vsel %vm7634, %v7625, %v7633
    %vm7636 = vcmp.eq.f32.partialorder %v7625, 0.0
    %v7637 = vand.u32 %v7625, 2147483648
    %v7638 = vsel %vm7636, %v7637, %v7635
    %v7639 = vadd.f32 %v7638, 1e-06
    %v7640 = vrcp.pop %v7639
    %v7641 = vmul.f32 %v7639, %v7640
    %v7642 = vsub.f32 1.0, %v7641
    %v7643 = vmul.f32 %v7640, %v7642
    %v7644 = vadd.f32 %v7640, %v7643
    %vm7645 = vweird.f32 %v7639
    %vm7646 = vweird.f32 %v7640
    %vm7647 = vmor %vm7645, %vm7646
    %v7648 = vsel %vm7647, %v7640, %v7644
    %v7649 = vand.u32 2147483647, %v7639
    %vm7650 = vcmp.eq.f32.partialorder %v7649, 8.507059e+37
    %v7651 = vand.u32 %v7639, 2147483648
    %v7652 = vor.u32 1.1754944e-38, %v7651
    %v7653 = vsel %vm7650, %v7652, %v7648
    %v7654 = vmul.f32 %v7626, %v7653
    %v7655 = vadd.f32 %v7654, %v4171
    %7656 = vst.msk [vmem:[#allocation2] sm:$0xff] %vm176, %v4173
    %7657 = vst.msk [vmem:[#allocation2 + $0x8] sm:$0xff] %vm176, %v7655
    // Predicated region
    $region162: #{tpu_custom_call.1} parent=1 // pred_check
      _
    $region163: #{tpu_custom_call.1} parent=1 // pred_check_branch
      %7659 = sbr.rel (0) target = $region165
    $region164: #{tpu_custom_call.1} parent=1 // pred_region
      %7661 = vsyncadd [#allocation3], 0
      %s7662 = sshll.u32 [#allocation2], 4
      %s7663 = int_to_ptr.vmem [resolvable:$true] %s7662
      %s7664 = sshll.u32 %s81, 4
      %s7665 = int_to_ptr.hbm [resolvable:$true] %s7664
      %7670 = dma.vmem_to_hbm [thread:$0]  %s7663, 256, %s7665, [#allocation3], 128, 128, 8
    $region165: #{tpu_custom_call.1} parent=1 // pred_fallthru
      _
    // Predicated region
    $region166: #{tpu_custom_call.1} parent=1 // pred_check
      _
    $region167: #{tpu_custom_call.1} parent=1 // pred_check_branch
      %7672 = sbr.rel (0) target = $region169
    $region168: #{tpu_custom_call.1} parent=1 // pred_region
      %7674 = dma.done [#allocation3], 256
    $region169: #{tpu_custom_call.1} parent=1 // pred_fallthru
      _
    %7675 = vsyncpa [#allocation3], 1

</llo_original>
